<compile_context>
chip_gen: v6e
topology: v6e:2x2x1
jax: 0.10.0
libtpu: 0.0.40
codegen_flags: <defaults>
</compile_context>

<pallas_src>
import numpy as np
import jax
import jax.numpy as jnp
from jax.experimental import pallas as pl
from jax.experimental.pallas import tpu as pltpu

_SUBLANE = 8
_LANE = 128


def _round_up(x: int, m: int) -> int:
    return ((x + m - 1) // m) * m


def _linear_resize_matrix(in_size: int, out_size: int) -> np.ndarray:
    """Row-stochastic (out_size, in_size) matrix for 1-D linear interp, align_corners=True."""
    W = np.zeros((out_size, in_size), dtype=np.float32)
    for i in range(out_size):
        src = i * (in_size - 1) / (out_size - 1) if out_size > 1 else 0.0
        i0 = int(np.floor(src))
        i1 = min(i0 + 1, in_size - 1)
        w1 = src - i0
        W[i, i0] += 1.0 - w1
        W[i, i1] += w1
    return W


def _padded_tile_bytes(rows: int, cols: int, itemsize: int = 4) -> int:
    """VMEM footprint of a 2-D (rows, cols) tile after (8, 128) layout padding."""
    return _round_up(max(rows, 1), _SUBLANE) * _round_up(max(cols, 1), _LANE) * itemsize


def _vmem_budget():
    """(tiling budget, vmem_limit_bytes) sized to the chip generation."""
    cap = 64 * 1024 * 1024          # conservative fallback (v7x-sized VMEM)
    try:
        cap = int(pltpu.get_tpu_info().vmem_capacity_bytes) or cap
    except Exception:
        pass
    # v5e/v6e (128 MiB): 64 MiB tiling budget, 96 MiB scoped limit.
    # v7x   ( 64 MiB): 32 MiB tiling budget, 48 MiB scoped limit.
    return cap // 2, (cap * 3) // 4


def _choose_batch_block(B, H_in, W_in, H_out, W_out, budget, itemsize=4):
    """Rows of the N*C batch dim processed per grid step."""
    per_row = (
        2 * (_padded_tile_bytes(H_in, W_in, itemsize)          # input tile (double-buffered)
             + _padded_tile_bytes(H_out, W_out, itemsize))     # output tile (double-buffered)
        + _padded_tile_bytes(H_out, W_in, itemsize)            # intermediate (vregs)
        + _padded_tile_bytes(H_out, H_in, itemsize)            # broadcast wy copy
        + _padded_tile_bytes(W_in, W_out, itemsize)            # broadcast wxT copy
    )
    bb = max(_SUBLANE, (budget // per_row) // _SUBLANE * _SUBLANE)
    bb = min(bb, 512)                        # bound the batched-matmul code size
    bb = min(bb, _round_up(B, _SUBLANE))
    # Split the grid (so v7x's two TensorCores each get a share) only when each
    # step still moves >= ~1 MiB of input; on single-TC v5e/v6e one big block
    # per call is strictly better (grid is a serial loop there).
    in_row_bytes = H_in * W_in * itemsize
    if B * in_row_bytes >= 2 * (1 << 20):
        half = _round_up((B + 1) // 2, _SUBLANE)
        if half * in_row_bytes >= (1 << 20):
            bb = min(bb, half)
    return bb


def _resize_kernel(wy_ref, wxt_ref, x_ref, o_ref):
    # wy_ref : (H_out, H_in)   -- rescale factor already folded in
    # wxt_ref: (W_in, W_out)
    # x_ref  : (bb, H_in, W_in)          o_ref: (bb, H_out, W_out)
    x = x_ref[...]
    bb = x.shape[0]
    wy = jnp.broadcast_to(wy_ref[...], (bb,) + wy_ref.shape)     # (bb, H_out, H_in)
    wxt = jnp.broadcast_to(wxt_ref[...], (bb,) + wxt_ref.shape)  # (bb, W_in, W_out)
    # H-contraction: (bb, H_out, H_in) @ (bb, H_in, W_in) -> (bb, H_out, W_in)
    t = jax.lax.dot_general(
        wy, x, (((2,), (1,)), ((0,), (0,))),
        precision=jax.lax.Precision.HIGHEST,
        preferred_element_type=jnp.float32,
    ).astype(x.dtype)
    # W-contraction: (bb, H_out, W_in) @ (bb, W_in, W_out) -> (bb, H_out, W_out)
    o = jax.lax.dot_general(
        t, wxt, (((2,), (1,)), ((0,), (0,))),
        precision=jax.lax.Precision.HIGHEST,
        preferred_element_type=jnp.float32,
    )
    o_ref[...] = o.astype(o_ref.dtype)


def resize_transform(x, vel_resize: float = 1.0, out_shape=None):
    """Pallas equivalent of ResizeTransform.forward for nb_dims=2 ('bilinear')."""
    factor = 1.0 / vel_resize
    if factor == 1.0:
        # Matches PyTorch: with factor == 1 neither branch runs (even if out_shape is set).
        return x

    N, C, H_in, W_in = x.shape
    if out_shape is not None:
        H_out, W_out = out_shape
    else:
        H_out = int(np.floor(H_in * factor))
        W_out = int(np.floor(W_in * factor))

    # Host-side numpy weights; factor folded into the H weight in f32, cast last.
    wy = jnp.asarray(np.float32(factor) * _linear_resize_matrix(H_in, H_out)).astype(x.dtype)
    wxt = jnp.asarray(_linear_resize_matrix(W_in, W_out).T).astype(x.dtype)

    B = N * C
    x3 = x.reshape(B, H_in, W_in)           # metadata-only reshape (no HBM traffic)

    budget, vmem_limit = _vmem_budget()
    itemsize = int(jnp.dtype(x.dtype).itemsize)
    bb = _choose_batch_block(B, H_in, W_in, H_out, W_out, budget, itemsize)

    out = pl.pallas_call(
        _resize_kernel,
        out_shape=jax.ShapeDtypeStruct((B, H_out, W_out), x.dtype),
        grid=(pl.cdiv(B, bb),),
        in_specs=[
            pl.BlockSpec((H_out, H_in), lambda b: (0, 0)),      # wy : resident in VMEM
            pl.BlockSpec((W_in, W_out), lambda b: (0, 0)),      # wxT: resident in VMEM
            pl.BlockSpec((bb, H_in, W_in), lambda b: (b, 0, 0)),
        ],
        out_specs=pl.BlockSpec((bb, H_out, W_out), lambda b: (b, 0, 0)),
        compiler_params=pltpu.CompilerParams(
            dimension_semantics=("parallel",),
            vmem_limit_bytes=int(vmem_limit),
        ),
    )(wy, wxt, x3)

    return out.reshape(N, C, H_out, W_out)  # metadata-only reshape


def _reference(x_np: np.ndarray, vel_resize: float) -> np.ndarray:
    f = 1.0 / vel_resize
    n, c, h, w = x_np.shape
    ho, wo = int(np.floor(h * f)), int(np.floor(w * f))
    Wy = _linear_resize_matrix(h, ho)
    Wx = _linear_resize_matrix(w, wo)
    return f * np.einsum("oh,nchw,pw->ncop", Wy, x_np.astype(np.float64), Wx)


if __name__ == "__main__":
    key = jax.random.PRNGKey(0)
    # Small NCHW vector field: batch=2, channels=4, spatial=16x16.
    x = jax.random.normal(key, (2, 4, 16, 16), dtype=jnp.float32)
    x_np = np.asarray(x)

    # vel_resize=2.0 -> factor=0.5 (<1): interpolate down to 8x8, then scale by 0.5.
    y = jax.block_until_ready(resize_transform(x, vel_resize=2.0))
    assert y.shape == (2, 4, 8, 8), y.shape
    np.testing.assert_allclose(np.asarray(y), _reference(x_np, 2.0), rtol=1e-4, atol=1e-4)

    # vel_resize=0.5 -> factor=2.0 (>1): scale by 2.0, then interpolate up to 32x32.
    y2 = jax.block_until_ready(resize_transform(x, vel_resize=0.5))
    assert y2.shape == (2, 4, 32, 32), y2.shape
    np.testing.assert_allclose(np.asarray(y2), _reference(x_np, 0.5), rtol=1e-4, atol=1e-4)

    print("KERNEL_OK")
</pallas_src>

<mosaic_0001>
module attributes {stable_mosaic.version = 11 : i64} {
  func.func @_resize_kernel(%arg0: i32, %arg1: memref<8x16xf32, #tpu.memory_space<vmem>>, %arg2: memref<16x8xf32, #tpu.memory_space<vmem>>, %arg3: memref<8x16x16xf32, #tpu.memory_space<vmem>>, %arg4: memref<8x8x8xf32, #tpu.memory_space<vmem>>) attributes {dimension_semantics = [#tpu.dimension_semantics<parallel>], iteration_bounds = array<i64: 1>, scalar_prefetch = 0 : i64, scratch_operands = 0 : i64, tpu.core_type = #tpu.core_type<tc>, window_params = [{pipeline_mode = #tpu.pipeline_mode<synchronous>, transform_indices = @transform_0, window_bounds = array<i64: 8, 16>}, {pipeline_mode = #tpu.pipeline_mode<synchronous>, transform_indices = @transform_1, window_bounds = array<i64: 16, 8>}, {transform_indices = @transform_2, window_bounds = array<i64: 8, 16, 16>}, {transform_indices = @transform_3, window_bounds = array<i64: 8, 8, 8>}]} {
    %c0 = arith.constant 0 : index
    %c0_0 = arith.constant 0 : index
    %c0_1 = arith.constant 0 : index
    %0 = vector.load %arg3[%c0, %c0_0, %c0_1] : memref<8x16x16xf32, #tpu.memory_space<vmem>>, vector<8x16x16xf32>
    %c0_2 = arith.constant 0 : index
    %c0_3 = arith.constant 0 : index
    %1 = vector.load %arg1[%c0_2, %c0_3] : memref<8x16xf32, #tpu.memory_space<vmem>>, vector<8x16xf32>
    %2 = vector.shape_cast %1 : vector<8x16xf32> to vector<1x8x16xf32>
    %3 = vector.broadcast %2 : vector<1x8x16xf32> to vector<8x8x16xf32>
    %c0_4 = arith.constant 0 : index
    %c0_5 = arith.constant 0 : index
    %4 = vector.load %arg2[%c0_4, %c0_5] : memref<16x8xf32, #tpu.memory_space<vmem>>, vector<16x8xf32>
    %5 = vector.shape_cast %4 : vector<16x8xf32> to vector<1x16x8xf32>
    %6 = vector.broadcast %5 : vector<1x16x8xf32> to vector<8x16x8xf32>
    %cst = arith.constant dense<0.000000e+00> : vector<8x8x16xf32>
    %7 = tpu.matmul %3, %0, %cst {dimension_numbers = #tpu.dot_dimension_numbers<[2], [1], [1], [2], [0, 0, 0, 1, 1, 2], [0], [0]>, precision = #tpu.contract_precision<fp32>} : vector<8x8x16xf32>, vector<8x16x16xf32>, vector<8x8x16xf32> -> vector<8x8x16xf32>
    %cst_6 = arith.constant dense<0.000000e+00> : vector<8x8x8xf32>
    %8 = tpu.matmul %7, %6, %cst_6 {dimension_numbers = #tpu.dot_dimension_numbers<[2], [1], [1], [2], [0, 0, 0, 1, 1, 2], [0], [0]>, precision = #tpu.contract_precision<fp32>} : vector<8x8x16xf32>, vector<8x16x8xf32>, vector<8x8x8xf32> -> vector<8x8x8xf32>
    %c0_7 = arith.constant 0 : index
    %c0_8 = arith.constant 0 : index
    %c0_9 = arith.constant 0 : index
    %9 = vector.load %arg4[%c0_7, %c0_8, %c0_9] : memref<8x8x8xf32, #tpu.memory_space<vmem>>, vector<8x8x8xf32>
    tpu.vector_store %arg4[%c0_7, %c0_8, %c0_9], %8 {strides = array<i32>} : memref<8x8x8xf32, #tpu.memory_space<vmem>>, vector<8x8x8xf32>,
    return
  }
  func.func @transform_0(%arg0: i32) -> (i32, i32) {
    %c0_i32 = arith.constant 0 : i32
    %c0_i32_0 = arith.constant 0 : i32
    %c0_i32_1 = arith.constant 0 : i32
    return %c0_i32, %c0_i32_0 : i32, i32
  }
  func.func @transform_1(%arg0: i32) -> (i32, i32) {
    %c0_i32 = arith.constant 0 : i32
    %c0_i32_0 = arith.constant 0 : i32
    %c0_i32_1 = arith.constant 0 : i32
    return %c0_i32, %c0_i32_0 : i32, i32
  }
  func.func @transform_2(%arg0: i32) -> (i32, i32, i32) {
    %c0_i32 = arith.constant 0 : i32
    %c0_i32_0 = arith.constant 0 : i32
    %c0_i32_1 = arith.constant 0 : i32
    return %arg0, %c0_i32, %c0_i32_0 : i32, i32, i32
  }
  func.func @transform_3(%arg0: i32) -> (i32, i32, i32) {
    %c0_i32 = arith.constant 0 : i32
    %c0_i32_0 = arith.constant 0 : i32
    %c0_i32_1 = arith.constant 0 : i32
    return %arg0, %c0_i32, %c0_i32_0 : i32, i32, i32
  }
}

</mosaic_0001>

<llo_original>
// kernel: tpu_custom_call.1
$region0: #{tpu_custom_call.1}
  #allocation0 [shape = 'u32[]', space=smem, size = 0x4, offset = 0x4, fixed_abs, tag = 'smem constant byte address 0x4 - core index']
  #allocation1 [shape = 'u32[144,128]{1,0:T(1,128)}', space=vmem, size = 0x12000, scoped, tag = 'internal scratch']
  %s0 = inlined_call_operand.vmem [shape: f32[8,16], index: 0, kind: input, shape index: {}]
  %s1 = inlined_call_operand.vmem [shape: f32[16,8], index: 1, kind: input, shape index: {}]
  %s2 = inlined_call_operand.hbm [shape: f32[8,16,16], index: 2, kind: input, shape index: {}]
  %s3 = inlined_call_operand.hbm [shape: f32[8,8,8], index: 3, kind: output, shape index: {}]
  %s4 = sld [smem:[#allocation0]]
  $region26: #{tpu_custom_call.1} parent=0
    _
  %s6 = ssub.s32 1, %s4
  %s7 = scalar_select 0, %s6, %s4
  $region1: #{tpu_custom_call.1} parent=0
    #allocation2 [shape = 'u8[65536]{0}', space=vmem, size = 0x10000, scoped, tag = 'input window, operand 2, single buffered']
    #allocation3 [shape = 's32[1]{0}', space=sflag, size = 0x4, scoped, tag = 'scoped memory for tpu_custom_call.1']
    #allocation4 [shape = 's32[1]{0}', space=sflag, size = 0x4, scoped, tag = 'scoped memory for tpu_custom_call.1']
    #allocation5 [shape = 'u8[32768]{0}', space=vmem, size = 0x8000, scoped, tag = 'output window, operand 0, single buffered']
    %8 = vsyncpa [#allocation3], 0
    %9 = vsyncpa [#allocation4], 0
    // Predicated region
    $region2: #{tpu_custom_call.1} parent=1 // pred_check
      _
    $region3: #{tpu_custom_call.1} parent=1 // pred_check_branch
      %11 = sbr.rel (0) target = $region5
    $region4: #{tpu_custom_call.1} parent=1 // pred_region
      _
    $region5: #{tpu_custom_call.1} parent=1 // pred_fallthru
      _
    // Predicated region
    $region6: #{tpu_custom_call.1} parent=1 // pred_check
      _
    $region7: #{tpu_custom_call.1} parent=1 // pred_check_branch
      %13 = sbr.rel (0) target = $region9
    $region8: #{tpu_custom_call.1} parent=1 // pred_region
      _
    $region9: #{tpu_custom_call.1} parent=1 // pred_fallthru
      _
    // Predicated region
    $region10: #{tpu_custom_call.1} parent=1 // pred_check
      _
    $region11: #{tpu_custom_call.1} parent=1 // pred_check_branch
      %15 = sbr.rel (0) target = $region13
    $region12: #{tpu_custom_call.1} parent=1 // pred_region
      %s17 = ssub.s32 2048, 2048
      %18 = vsyncadd [#allocation3], %s17
      %s19 = sshll.u32 [#allocation2], 4
      %s20 = int_to_ptr.vmem [resolvable:$true] %s19
      %25 = dma.hbm_to_vmem [thread:$0]  %s2, 2048, %s20, [#allocation3], 128, 128, 8
    $region13: #{tpu_custom_call.1} parent=1 // pred_fallthru
      _
    // Predicated region
    $region14: #{tpu_custom_call.1} parent=1 // pred_check
      _
    $region15: #{tpu_custom_call.1} parent=1 // pred_check_branch
      %27 = sbr.rel (0) target = $region17
    $region16: #{tpu_custom_call.1} parent=1 // pred_region
      %28 = dma.done [#allocation3], 2048
    $region17: #{tpu_custom_call.1} parent=1 // pred_fallthru
      _
    %v29 = vld [vmem:[#allocation2] sm:$0xff]
    %v30 = vld [vmem:[#allocation2 + $0x8] sm:$0xff]
    %v31 = vld [vmem:[#allocation2 + $0x10] sm:$0xff]
    %v32 = vld [vmem:[#allocation2 + $0x18] sm:$0xff]
    %v33 = vld [vmem:[#allocation2 + $0x20] sm:$0xff]
    %v34 = vld [vmem:[#allocation2 + $0x28] sm:$0xff]
    %v35 = vld [vmem:[#allocation2 + $0x30] sm:$0xff]
    %v36 = vld [vmem:[#allocation2 + $0x38] sm:$0xff]
    %v37 = vld [vmem:[#allocation2 + $0x40] sm:$0xff]
    %v38 = vld [vmem:[#allocation2 + $0x48] sm:$0xff]
    %v39 = vld [vmem:[#allocation2 + $0x50] sm:$0xff]
    %v40 = vld [vmem:[#allocation2 + $0x58] sm:$0xff]
    %v41 = vld [vmem:[#allocation2 + $0x60] sm:$0xff]
    %v42 = vld [vmem:[#allocation2 + $0x68] sm:$0xff]
    %v43 = vld [vmem:[#allocation2 + $0x70] sm:$0xff]
    %v44 = vld [vmem:[#allocation2 + $0x78] sm:$0xff]
    %v45 = vld [vmem:[%s0] sm:$0xff]
    %v46 = vld [vmem:[%s1] sm:$0xff]
    %v47 = vld [vmem:[%s1 + $0x8] sm:$0xff]
    %vm48 = vcmask 130048
    %v50 = vsel %vm48, %v45, 0
    %52 = vmatprep.subr.mxu0 0.0
    %53 = vmatpush1.msra.mxu0 0.0
    %54 = vmatprep.subr.mxu0 0.0
    %55 = vmatpush1.msra.mxu0 0.0
    %56 = vmatprep.subr.mxu0 0.0
    %57 = vmatpush1.msra.mxu0 0.0
    %58 = vmatprep.subr.mxu0 0.0
    %59 = vmatpush1.msra.mxu0 0.0
    %60 = vmatprep.subr.mxu0 0.0
    %61 = vmatpush1.msra.mxu0 0.0
    %62 = vmatprep.subr.mxu0 0.0
    %63 = vmatpush1.msra.mxu0 0.0
    %64 = vmatprep.subr.mxu0 0.0
    %65 = vmatpush1.msra.mxu0 0.0
    %66 = vmatprep.subr.mxu0 0.0
    %67 = vmatpush1.msra.mxu0 0.0
    %68 = vmatprep.subr.mxu0 0.0
    %69 = vmatpush1.msra.mxu0 0.0
    %70 = vmatprep.subr.mxu0 0.0
    %71 = vmatpush1.msra.mxu0 0.0
    %72 = vmatprep.subr.mxu0 0.0
    %73 = vmatpush1.msra.mxu0 0.0
    %74 = vmatprep.subr.mxu0 0.0
    %75 = vmatpush1.msra.mxu0 0.0
    %76 = vmatprep.subr.mxu0 0.0
    %77 = vmatpush1.msra.mxu0 0.0
    %78 = vmatprep.subr.mxu0 0.0
    %79 = vmatpush1.msra.mxu0 0.0
    %80 = vmatprep.subr.mxu0 0.0
    %v81 = vand.u32 %v30, 4294901760
    %82 = vmatpush1.msra.mxu0 %v81
    %83 = vmatprep.subr.mxu0 0.0
    %v84 = vand.u32 %v29, 4294901760
    %85 = vmatpush1.msra.mxu0 %v84
    %86 = vmatprep.subr.mxu0 0.0
    %87 = vmatpush2.msra.mxu0 0.0
    %88 = vmatprep.subr.mxu0 0.0
    %89 = vmatpush2.msra.mxu0 0.0
    %90 = vmatprep.subr.mxu0 0.0
    %91 = vmatpush2.msra.mxu0 0.0
    %92 = vmatprep.subr.mxu0 0.0
    %93 = vmatpush2.msra.mxu0 0.0
    %94 = vmatprep.subr.mxu0 0.0
    %95 = vmatpush2.msra.mxu0 0.0
    %96 = vmatprep.subr.mxu0 0.0
    %97 = vmatpush2.msra.mxu0 0.0
    %98 = vmatprep.subr.mxu0 0.0
    %99 = vmatpush2.msra.mxu0 0.0
    %100 = vmatprep.subr.mxu0 0.0
    %101 = vmatpush2.msra.mxu0 0.0
    %102 = vmatprep.subr.mxu0 0.0
    %103 = vmatpush2.msra.mxu0 0.0
    %104 = vmatprep.subr.mxu0 0.0
    %105 = vmatpush2.msra.mxu0 0.0
    %106 = vmatprep.subr.mxu0 0.0
    %107 = vmatpush2.msra.mxu0 0.0
    %108 = vmatprep.subr.mxu0 0.0
    %109 = vmatpush2.msra.mxu0 0.0
    %110 = vmatprep.subr.mxu0 0.0
    %111 = vmatpush2.msra.mxu0 0.0
    %112 = vmatprep.subr.mxu0 0.0
    %113 = vmatpush2.msra.mxu0 0.0
    %114 = vmatprep.subr.mxu0 0.0
    %115 = vmatpush2.msra.mxu0 0.0
    %116 = vmatprep.subr.mxu0 0.0
    %117 = vmatpush2.msra.mxu0 0.0
    %118 = vmatprep.mubr.f32.mxu0 0.0
    %v119 = vand.u32 %v50, 4294901760
    %v120 = vsub.f32 %v50, %v119
    %v121 = vand.u32 %v120, 4294901760
    %v122 = vsub.f32 %v120, %v121
    %v123 = vand.u32 %v122, 4294901760
    %124 = vmatmul.mubr.f32.gmra.mxu0 %v123
    %v125 = vpop.f32.mrf.mxu0
    %v126 = vadd.f32 0.0, %v125
    %v127 = vpop.f32.mrf.mxu0
    %128 = vdwg.mxu0
    %129 = vmatprep.subr.mxu0 0.0
    %130 = vmatpush1.msra.mxu0 0.0
    %131 = vmatprep.subr.mxu0 0.0
    %132 = vmatpush1.msra.mxu0 0.0
    %133 = vmatprep.subr.mxu0 0.0
    %134 = vmatpush1.msra.mxu0 0.0
    %135 = vmatprep.subr.mxu0 0.0
    %136 = vmatpush1.msra.mxu0 0.0
    %137 = vmatprep.subr.mxu0 0.0
    %138 = vmatpush1.msra.mxu0 0.0
    %139 = vmatprep.subr.mxu0 0.0
    %140 = vmatpush1.msra.mxu0 0.0
    %141 = vmatprep.subr.mxu0 0.0
    %142 = vmatpush1.msra.mxu0 0.0
    %143 = vmatprep.subr.mxu0 0.0
    %144 = vmatpush1.msra.mxu0 0.0
    %145 = vmatprep.subr.mxu0 0.0
    %146 = vmatpush1.msra.mxu0 0.0
    %147 = vmatprep.subr.mxu0 0.0
    %148 = vmatpush1.msra.mxu0 0.0
    %149 = vmatprep.subr.mxu0 0.0
    %150 = vmatpush1.msra.mxu0 0.0
    %151 = vmatprep.subr.mxu0 0.0
    %152 = vmatpush1.msra.mxu0 0.0
    %153 = vmatprep.subr.mxu0 0.0
    %154 = vmatpush1.msra.mxu0 0.0
    %155 = vmatprep.subr.mxu0 0.0
    %156 = vmatpush1.msra.mxu0 0.0
    %157 = vmatprep.subr.mxu0 0.0
    %v158 = vand.u32 %v30, 4294901760
    %v159 = vsub.f32 %v30, %v158
    %v160 = vand.u32 %v159, 4294901760
    %v161 = vsub.f32 %v159, %v160
    %v162 = vand.u32 %v161, 4294901760
    %163 = vmatpush1.msra.mxu0 %v162
    %164 = vmatprep.subr.mxu0 0.0
    %v165 = vand.u32 %v29, 4294901760
    %v166 = vsub.f32 %v29, %v165
    %v167 = vand.u32 %v166, 4294901760
    %v168 = vsub.f32 %v166, %v167
    %v169 = vand.u32 %v168, 4294901760
    %170 = vmatpush1.msra.mxu0 %v169
    %171 = vmatprep.subr.mxu0 0.0
    %172 = vmatpush2.msra.mxu0 0.0
    %173 = vmatprep.subr.mxu0 0.0
    %174 = vmatpush2.msra.mxu0 0.0
    %175 = vmatprep.subr.mxu0 0.0
    %176 = vmatpush2.msra.mxu0 0.0
    %177 = vmatprep.subr.mxu0 0.0
    %178 = vmatpush2.msra.mxu0 0.0
    %179 = vmatprep.subr.mxu0 0.0
    %180 = vmatpush2.msra.mxu0 0.0
    %181 = vmatprep.subr.mxu0 0.0
    %182 = vmatpush2.msra.mxu0 0.0
    %183 = vmatprep.subr.mxu0 0.0
    %184 = vmatpush2.msra.mxu0 0.0
    %185 = vmatprep.subr.mxu0 0.0
    %186 = vmatpush2.msra.mxu0 0.0
    %187 = vmatprep.subr.mxu0 0.0
    %188 = vmatpush2.msra.mxu0 0.0
    %189 = vmatprep.subr.mxu0 0.0
    %190 = vmatpush2.msra.mxu0 0.0
    %191 = vmatprep.subr.mxu0 0.0
    %192 = vmatpush2.msra.mxu0 0.0
    %193 = vmatprep.subr.mxu0 0.0
    %194 = vmatpush2.msra.mxu0 0.0
    %195 = vmatprep.subr.mxu0 0.0
    %196 = vmatpush2.msra.mxu0 0.0
    %197 = vmatprep.subr.mxu0 0.0
    %198 = vmatpush2.msra.mxu0 0.0
    %199 = vmatprep.subr.mxu0 0.0
    %200 = vmatpush2.msra.mxu0 0.0
    %201 = vmatprep.subr.mxu0 0.0
    %202 = vmatpush2.msra.mxu0 0.0
    %203 = vmatprep.mubr.f32.mxu0 0.0
    %v204 = vand.u32 %v50, 4294901760
    %205 = vmatmul.mubr.f32.gmra.mxu0 %v204
    %v206 = vpop.f32.mrf.mxu0
    %v207 = vadd.f32 %v126, %v206
    %v208 = vpop.f32.mrf.mxu0
    %209 = vdwg.mxu0
    %210 = vmatprep.subr.mxu0 0.0
    %211 = vmatpush1.msra.mxu0 0.0
    %212 = vmatprep.subr.mxu0 0.0
    %213 = vmatpush1.msra.mxu0 0.0
    %214 = vmatprep.subr.mxu0 0.0
    %215 = vmatpush1.msra.mxu0 0.0
    %216 = vmatprep.subr.mxu0 0.0
    %217 = vmatpush1.msra.mxu0 0.0
    %218 = vmatprep.subr.mxu0 0.0
    %219 = vmatpush1.msra.mxu0 0.0
    %220 = vmatprep.subr.mxu0 0.0
    %221 = vmatpush1.msra.mxu0 0.0
    %222 = vmatprep.subr.mxu0 0.0
    %223 = vmatpush1.msra.mxu0 0.0
    %224 = vmatprep.subr.mxu0 0.0
    %225 = vmatpush1.msra.mxu0 0.0
    %226 = vmatprep.subr.mxu0 0.0
    %227 = vmatpush1.msra.mxu0 0.0
    %228 = vmatprep.subr.mxu0 0.0
    %229 = vmatpush1.msra.mxu0 0.0
    %230 = vmatprep.subr.mxu0 0.0
    %231 = vmatpush1.msra.mxu0 0.0
    %232 = vmatprep.subr.mxu0 0.0
    %233 = vmatpush1.msra.mxu0 0.0
    %234 = vmatprep.subr.mxu0 0.0
    %235 = vmatpush1.msra.mxu0 0.0
    %236 = vmatprep.subr.mxu0 0.0
    %237 = vmatpush1.msra.mxu0 0.0
    %238 = vmatprep.subr.mxu0 0.0
    %v239 = vand.u32 %v30, 4294901760
    %v240 = vsub.f32 %v30, %v239
    %241 = vmatpush1.msra.mxu0 %v240
    %242 = vmatprep.subr.mxu0 0.0
    %v243 = vand.u32 %v29, 4294901760
    %v244 = vsub.f32 %v29, %v243
    %245 = vmatpush1.msra.mxu0 %v244
    %246 = vmatprep.subr.mxu0 0.0
    %247 = vmatpush2.msra.mxu0 0.0
    %248 = vmatprep.subr.mxu0 0.0
    %249 = vmatpush2.msra.mxu0 0.0
    %250 = vmatprep.subr.mxu0 0.0
    %251 = vmatpush2.msra.mxu0 0.0
    %252 = vmatprep.subr.mxu0 0.0
    %253 = vmatpush2.msra.mxu0 0.0
    %254 = vmatprep.subr.mxu0 0.0
    %255 = vmatpush2.msra.mxu0 0.0
    %256 = vmatprep.subr.mxu0 0.0
    %257 = vmatpush2.msra.mxu0 0.0
    %258 = vmatprep.subr.mxu0 0.0
    %259 = vmatpush2.msra.mxu0 0.0
    %260 = vmatprep.subr.mxu0 0.0
    %261 = vmatpush2.msra.mxu0 0.0
    %262 = vmatprep.subr.mxu0 0.0
    %263 = vmatpush2.msra.mxu0 0.0
    %264 = vmatprep.subr.mxu0 0.0
    %265 = vmatpush2.msra.mxu0 0.0
    %266 = vmatprep.subr.mxu0 0.0
    %267 = vmatpush2.msra.mxu0 0.0
    %268 = vmatprep.subr.mxu0 0.0
    %269 = vmatpush2.msra.mxu0 0.0
    %270 = vmatprep.subr.mxu0 0.0
    %271 = vmatpush2.msra.mxu0 0.0
    %272 = vmatprep.subr.mxu0 0.0
    %273 = vmatpush2.msra.mxu0 0.0
    %274 = vmatprep.subr.mxu0 0.0
    %275 = vmatpush2.msra.mxu0 0.0
    %276 = vmatprep.subr.mxu0 0.0
    %277 = vmatpush2.msra.mxu0 0.0
    %278 = vmatprep.mubr.f32.mxu0 0.0
    %v279 = vand.u32 %v50, 4294901760
    %v280 = vsub.f32 %v50, %v279
    %281 = vmatmul.mubr.f32.gmra.mxu0 %v280
    %v282 = vpop.f32.mrf.mxu0
    %v283 = vadd.f32 %v207, %v282
    %v284 = vpop.f32.mrf.mxu0
    %285 = vdwg.mxu0
    %286 = vmatprep.subr.mxu0 0.0
    %287 = vmatpush1.msra.mxu0 0.0
    %288 = vmatprep.subr.mxu0 0.0
    %289 = vmatpush1.msra.mxu0 0.0
    %290 = vmatprep.subr.mxu0 0.0
    %291 = vmatpush1.msra.mxu0 0.0
    %292 = vmatprep.subr.mxu0 0.0
    %293 = vmatpush1.msra.mxu0 0.0
    %294 = vmatprep.subr.mxu0 0.0
    %295 = vmatpush1.msra.mxu0 0.0
    %296 = vmatprep.subr.mxu0 0.0
    %297 = vmatpush1.msra.mxu0 0.0
    %298 = vmatprep.subr.mxu0 0.0
    %299 = vmatpush1.msra.mxu0 0.0
    %300 = vmatprep.subr.mxu0 0.0
    %301 = vmatpush1.msra.mxu0 0.0
    %302 = vmatprep.subr.mxu0 0.0
    %303 = vmatpush1.msra.mxu0 0.0
    %304 = vmatprep.subr.mxu0 0.0
    %305 = vmatpush1.msra.mxu0 0.0
    %306 = vmatprep.subr.mxu0 0.0
    %307 = vmatpush1.msra.mxu0 0.0
    %308 = vmatprep.subr.mxu0 0.0
    %309 = vmatpush1.msra.mxu0 0.0
    %310 = vmatprep.subr.mxu0 0.0
    %311 = vmatpush1.msra.mxu0 0.0
    %312 = vmatprep.subr.mxu0 0.0
    %313 = vmatpush1.msra.mxu0 0.0
    %314 = vmatprep.subr.mxu0 0.0
    %v315 = vand.u32 %v30, 4294901760
    %316 = vmatpush1.msra.mxu0 %v315
    %317 = vmatprep.subr.mxu0 0.0
    %v318 = vand.u32 %v29, 4294901760
    %319 = vmatpush1.msra.mxu0 %v318
    %320 = vmatprep.subr.mxu0 0.0
    %321 = vmatpush2.msra.mxu0 0.0
    %322 = vmatprep.subr.mxu0 0.0
    %323 = vmatpush2.msra.mxu0 0.0
    %324 = vmatprep.subr.mxu0 0.0
    %325 = vmatpush2.msra.mxu0 0.0
    %326 = vmatprep.subr.mxu0 0.0
    %327 = vmatpush2.msra.mxu0 0.0
    %328 = vmatprep.subr.mxu0 0.0
    %329 = vmatpush2.msra.mxu0 0.0
    %330 = vmatprep.subr.mxu0 0.0
    %331 = vmatpush2.msra.mxu0 0.0
    %332 = vmatprep.subr.mxu0 0.0
    %333 = vmatpush2.msra.mxu0 0.0
    %334 = vmatprep.subr.mxu0 0.0
    %335 = vmatpush2.msra.mxu0 0.0
    %336 = vmatprep.subr.mxu0 0.0
    %337 = vmatpush2.msra.mxu0 0.0
    %338 = vmatprep.subr.mxu0 0.0
    %339 = vmatpush2.msra.mxu0 0.0
    %340 = vmatprep.subr.mxu0 0.0
    %341 = vmatpush2.msra.mxu0 0.0
    %342 = vmatprep.subr.mxu0 0.0
    %343 = vmatpush2.msra.mxu0 0.0
    %344 = vmatprep.subr.mxu0 0.0
    %345 = vmatpush2.msra.mxu0 0.0
    %346 = vmatprep.subr.mxu0 0.0
    %347 = vmatpush2.msra.mxu0 0.0
    %348 = vmatprep.subr.mxu0 0.0
    %349 = vmatpush2.msra.mxu0 0.0
    %350 = vmatprep.subr.mxu0 0.0
    %351 = vmatpush2.msra.mxu0 0.0
    %352 = vmatprep.mubr.f32.mxu0 0.0
    %v353 = vand.u32 %v50, 4294901760
    %v354 = vsub.f32 %v50, %v353
    %v355 = vand.u32 %v354, 4294901760
    %356 = vmatmul.mubr.f32.gmra.mxu0 %v355
    %v357 = vpop.f32.mrf.mxu0
    %v358 = vadd.f32 %v283, %v357
    %v359 = vpop.f32.mrf.mxu0
    %360 = vdwg.mxu0
    %361 = vmatprep.subr.mxu0 0.0
    %362 = vmatpush1.msra.mxu0 0.0
    %363 = vmatprep.subr.mxu0 0.0
    %364 = vmatpush1.msra.mxu0 0.0
    %365 = vmatprep.subr.mxu0 0.0
    %366 = vmatpush1.msra.mxu0 0.0
    %367 = vmatprep.subr.mxu0 0.0
    %368 = vmatpush1.msra.mxu0 0.0
    %369 = vmatprep.subr.mxu0 0.0
    %370 = vmatpush1.msra.mxu0 0.0
    %371 = vmatprep.subr.mxu0 0.0
    %372 = vmatpush1.msra.mxu0 0.0
    %373 = vmatprep.subr.mxu0 0.0
    %374 = vmatpush1.msra.mxu0 0.0
    %375 = vmatprep.subr.mxu0 0.0
    %376 = vmatpush1.msra.mxu0 0.0
    %377 = vmatprep.subr.mxu0 0.0
    %378 = vmatpush1.msra.mxu0 0.0
    %379 = vmatprep.subr.mxu0 0.0
    %380 = vmatpush1.msra.mxu0 0.0
    %381 = vmatprep.subr.mxu0 0.0
    %382 = vmatpush1.msra.mxu0 0.0
    %383 = vmatprep.subr.mxu0 0.0
    %384 = vmatpush1.msra.mxu0 0.0
    %385 = vmatprep.subr.mxu0 0.0
    %386 = vmatpush1.msra.mxu0 0.0
    %387 = vmatprep.subr.mxu0 0.0
    %388 = vmatpush1.msra.mxu0 0.0
    %389 = vmatprep.subr.mxu0 0.0
    %v390 = vand.u32 %v30, 4294901760
    %v391 = vsub.f32 %v30, %v390
    %v392 = vand.u32 %v391, 4294901760
    %393 = vmatpush1.msra.mxu0 %v392
    %394 = vmatprep.subr.mxu0 0.0
    %v395 = vand.u32 %v29, 4294901760
    %v396 = vsub.f32 %v29, %v395
    %v397 = vand.u32 %v396, 4294901760
    %398 = vmatpush1.msra.mxu0 %v397
    %399 = vmatprep.subr.mxu0 0.0
    %400 = vmatpush2.msra.mxu0 0.0
    %401 = vmatprep.subr.mxu0 0.0
    %402 = vmatpush2.msra.mxu0 0.0
    %403 = vmatprep.subr.mxu0 0.0
    %404 = vmatpush2.msra.mxu0 0.0
    %405 = vmatprep.subr.mxu0 0.0
    %406 = vmatpush2.msra.mxu0 0.0
    %407 = vmatprep.subr.mxu0 0.0
    %408 = vmatpush2.msra.mxu0 0.0
    %409 = vmatprep.subr.mxu0 0.0
    %410 = vmatpush2.msra.mxu0 0.0
    %411 = vmatprep.subr.mxu0 0.0
    %412 = vmatpush2.msra.mxu0 0.0
    %413 = vmatprep.subr.mxu0 0.0
    %414 = vmatpush2.msra.mxu0 0.0
    %415 = vmatprep.subr.mxu0 0.0
    %416 = vmatpush2.msra.mxu0 0.0
    %417 = vmatprep.subr.mxu0 0.0
    %418 = vmatpush2.msra.mxu0 0.0
    %419 = vmatprep.subr.mxu0 0.0
    %420 = vmatpush2.msra.mxu0 0.0
    %421 = vmatprep.subr.mxu0 0.0
    %422 = vmatpush2.msra.mxu0 0.0
    %423 = vmatprep.subr.mxu0 0.0
    %424 = vmatpush2.msra.mxu0 0.0
    %425 = vmatprep.subr.mxu0 0.0
    %426 = vmatpush2.msra.mxu0 0.0
    %427 = vmatprep.subr.mxu0 0.0
    %428 = vmatpush2.msra.mxu0 0.0
    %429 = vmatprep.subr.mxu0 0.0
    %430 = vmatpush2.msra.mxu0 0.0
    %431 = vmatprep.mubr.f32.mxu0 0.0
    %v432 = vand.u32 %v50, 4294901760
    %433 = vmatmul.mubr.f32.gmra.mxu0 %v432
    %v434 = vpop.f32.mrf.mxu0
    %v435 = vadd.f32 %v358, %v434
    %v436 = vpop.f32.mrf.mxu0
    %437 = vdwg.mxu0
    %438 = vmatprep.subr.mxu0 0.0
    %439 = vmatpush1.msra.mxu0 0.0
    %440 = vmatprep.subr.mxu0 0.0
    %441 = vmatpush1.msra.mxu0 0.0
    %442 = vmatprep.subr.mxu0 0.0
    %443 = vmatpush1.msra.mxu0 0.0
    %444 = vmatprep.subr.mxu0 0.0
    %445 = vmatpush1.msra.mxu0 0.0
    %446 = vmatprep.subr.mxu0 0.0
    %447 = vmatpush1.msra.mxu0 0.0
    %448 = vmatprep.subr.mxu0 0.0
    %449 = vmatpush1.msra.mxu0 0.0
    %450 = vmatprep.subr.mxu0 0.0
    %451 = vmatpush1.msra.mxu0 0.0
    %452 = vmatprep.subr.mxu0 0.0
    %453 = vmatpush1.msra.mxu0 0.0
    %454 = vmatprep.subr.mxu0 0.0
    %455 = vmatpush1.msra.mxu0 0.0
    %456 = vmatprep.subr.mxu0 0.0
    %457 = vmatpush1.msra.mxu0 0.0
    %458 = vmatprep.subr.mxu0 0.0
    %459 = vmatpush1.msra.mxu0 0.0
    %460 = vmatprep.subr.mxu0 0.0
    %461 = vmatpush1.msra.mxu0 0.0
    %462 = vmatprep.subr.mxu0 0.0
    %463 = vmatpush1.msra.mxu0 0.0
    %464 = vmatprep.subr.mxu0 0.0
    %465 = vmatpush1.msra.mxu0 0.0
    %466 = vmatprep.subr.mxu0 0.0
    %v467 = vand.u32 %v30, 4294901760
    %468 = vmatpush1.msra.mxu0 %v467
    %469 = vmatprep.subr.mxu0 0.0
    %v470 = vand.u32 %v29, 4294901760
    %471 = vmatpush1.msra.mxu0 %v470
    %472 = vmatprep.subr.mxu0 0.0
    %473 = vmatpush2.msra.mxu0 0.0
    %474 = vmatprep.subr.mxu0 0.0
    %475 = vmatpush2.msra.mxu0 0.0
    %476 = vmatprep.subr.mxu0 0.0
    %477 = vmatpush2.msra.mxu0 0.0
    %478 = vmatprep.subr.mxu0 0.0
    %479 = vmatpush2.msra.mxu0 0.0
    %480 = vmatprep.subr.mxu0 0.0
    %481 = vmatpush2.msra.mxu0 0.0
    %482 = vmatprep.subr.mxu0 0.0
    %483 = vmatpush2.msra.mxu0 0.0
    %484 = vmatprep.subr.mxu0 0.0
    %485 = vmatpush2.msra.mxu0 0.0
    %486 = vmatprep.subr.mxu0 0.0
    %487 = vmatpush2.msra.mxu0 0.0
    %488 = vmatprep.subr.mxu0 0.0
    %489 = vmatpush2.msra.mxu0 0.0
    %490 = vmatprep.subr.mxu0 0.0
    %491 = vmatpush2.msra.mxu0 0.0
    %492 = vmatprep.subr.mxu0 0.0
    %493 = vmatpush2.msra.mxu0 0.0
    %494 = vmatprep.subr.mxu0 0.0
    %495 = vmatpush2.msra.mxu0 0.0
    %496 = vmatprep.subr.mxu0 0.0
    %497 = vmatpush2.msra.mxu0 0.0
    %498 = vmatprep.subr.mxu0 0.0
    %499 = vmatpush2.msra.mxu0 0.0
    %500 = vmatprep.subr.mxu0 0.0
    %501 = vmatpush2.msra.mxu0 0.0
    %502 = vmatprep.subr.mxu0 0.0
    %503 = vmatpush2.msra.mxu0 0.0
    %504 = vmatprep.mubr.f32.mxu0 0.0
    %v505 = vand.u32 %v50, 4294901760
    %506 = vmatmul.mubr.f32.gmra.mxu0 %v505
    %v507 = vpop.f32.mrf.mxu0
    %v508 = vadd.f32 %v435, %v507
    %v509 = vpop.f32.mrf.mxu0
    %510 = vdwg.mxu0
    %511 = vmatprep.subr.mxu0 0.0
    %512 = vmatpush1.msra.mxu0 0.0
    %513 = vmatprep.subr.mxu0 0.0
    %514 = vmatpush1.msra.mxu0 0.0
    %515 = vmatprep.subr.mxu0 0.0
    %516 = vmatpush1.msra.mxu0 0.0
    %517 = vmatprep.subr.mxu0 0.0
    %518 = vmatpush1.msra.mxu0 0.0
    %519 = vmatprep.subr.mxu0 0.0
    %520 = vmatpush1.msra.mxu0 0.0
    %521 = vmatprep.subr.mxu0 0.0
    %522 = vmatpush1.msra.mxu0 0.0
    %523 = vmatprep.subr.mxu0 0.0
    %524 = vmatpush1.msra.mxu0 0.0
    %525 = vmatprep.subr.mxu0 0.0
    %526 = vmatpush1.msra.mxu0 0.0
    %527 = vmatprep.subr.mxu0 0.0
    %528 = vmatpush1.msra.mxu0 0.0
    %529 = vmatprep.subr.mxu0 0.0
    %530 = vmatpush1.msra.mxu0 0.0
    %531 = vmatprep.subr.mxu0 0.0
    %532 = vmatpush1.msra.mxu0 0.0
    %533 = vmatprep.subr.mxu0 0.0
    %534 = vmatpush1.msra.mxu0 0.0
    %535 = vmatprep.subr.mxu0 0.0
    %536 = vmatpush1.msra.mxu0 0.0
    %537 = vmatprep.subr.mxu0 0.0
    %538 = vmatpush1.msra.mxu0 0.0
    %539 = vmatprep.subr.mxu0 0.0
    %v540 = vand.u32 %v32, 4294901760
    %541 = vmatpush1.msra.mxu0 %v540
    %542 = vmatprep.subr.mxu0 0.0
    %v543 = vand.u32 %v31, 4294901760
    %544 = vmatpush1.msra.mxu0 %v543
    %545 = vmatprep.subr.mxu0 0.0
    %546 = vmatpush2.msra.mxu0 0.0
    %547 = vmatprep.subr.mxu0 0.0
    %548 = vmatpush2.msra.mxu0 0.0
    %549 = vmatprep.subr.mxu0 0.0
    %550 = vmatpush2.msra.mxu0 0.0
    %551 = vmatprep.subr.mxu0 0.0
    %552 = vmatpush2.msra.mxu0 0.0
    %553 = vmatprep.subr.mxu0 0.0
    %554 = vmatpush2.msra.mxu0 0.0
    %555 = vmatprep.subr.mxu0 0.0
    %556 = vmatpush2.msra.mxu0 0.0
    %557 = vmatprep.subr.mxu0 0.0
    %558 = vmatpush2.msra.mxu0 0.0
    %559 = vmatprep.subr.mxu0 0.0
    %560 = vmatpush2.msra.mxu0 0.0
    %561 = vmatprep.subr.mxu0 0.0
    %562 = vmatpush2.msra.mxu0 0.0
    %563 = vmatprep.subr.mxu0 0.0
    %564 = vmatpush2.msra.mxu0 0.0
    %565 = vmatprep.subr.mxu0 0.0
    %566 = vmatpush2.msra.mxu0 0.0
    %567 = vmatprep.subr.mxu0 0.0
    %568 = vmatpush2.msra.mxu0 0.0
    %569 = vmatprep.subr.mxu0 0.0
    %570 = vmatpush2.msra.mxu0 0.0
    %571 = vmatprep.subr.mxu0 0.0
    %572 = vmatpush2.msra.mxu0 0.0
    %573 = vmatprep.subr.mxu0 0.0
    %574 = vmatpush2.msra.mxu0 0.0
    %575 = vmatprep.subr.mxu0 0.0
    %576 = vmatpush2.msra.mxu0 0.0
    %577 = vmatprep.mubr.f32.mxu0 0.0
    %v578 = vand.u32 %v50, 4294901760
    %v579 = vsub.f32 %v50, %v578
    %v580 = vand.u32 %v579, 4294901760
    %v581 = vsub.f32 %v579, %v580
    %v582 = vand.u32 %v581, 4294901760
    %583 = vmatmul.mubr.f32.gmra.mxu0 %v582
    %v584 = vpop.f32.mrf.mxu0
    %v585 = vadd.f32 0.0, %v584
    %v586 = vpop.f32.mrf.mxu0
    %587 = vdwg.mxu0
    %588 = vmatprep.subr.mxu0 0.0
    %589 = vmatpush1.msra.mxu0 0.0
    %590 = vmatprep.subr.mxu0 0.0
    %591 = vmatpush1.msra.mxu0 0.0
    %592 = vmatprep.subr.mxu0 0.0
    %593 = vmatpush1.msra.mxu0 0.0
    %594 = vmatprep.subr.mxu0 0.0
    %595 = vmatpush1.msra.mxu0 0.0
    %596 = vmatprep.subr.mxu0 0.0
    %597 = vmatpush1.msra.mxu0 0.0
    %598 = vmatprep.subr.mxu0 0.0
    %599 = vmatpush1.msra.mxu0 0.0
    %600 = vmatprep.subr.mxu0 0.0
    %601 = vmatpush1.msra.mxu0 0.0
    %602 = vmatprep.subr.mxu0 0.0
    %603 = vmatpush1.msra.mxu0 0.0
    %604 = vmatprep.subr.mxu0 0.0
    %605 = vmatpush1.msra.mxu0 0.0
    %606 = vmatprep.subr.mxu0 0.0
    %607 = vmatpush1.msra.mxu0 0.0
    %608 = vmatprep.subr.mxu0 0.0
    %609 = vmatpush1.msra.mxu0 0.0
    %610 = vmatprep.subr.mxu0 0.0
    %611 = vmatpush1.msra.mxu0 0.0
    %612 = vmatprep.subr.mxu0 0.0
    %613 = vmatpush1.msra.mxu0 0.0
    %614 = vmatprep.subr.mxu0 0.0
    %615 = vmatpush1.msra.mxu0 0.0
    %616 = vmatprep.subr.mxu0 0.0
    %v617 = vand.u32 %v32, 4294901760
    %v618 = vsub.f32 %v32, %v617
    %v619 = vand.u32 %v618, 4294901760
    %v620 = vsub.f32 %v618, %v619
    %v621 = vand.u32 %v620, 4294901760
    %622 = vmatpush1.msra.mxu0 %v621
    %623 = vmatprep.subr.mxu0 0.0
    %v624 = vand.u32 %v31, 4294901760
    %v625 = vsub.f32 %v31, %v624
    %v626 = vand.u32 %v625, 4294901760
    %v627 = vsub.f32 %v625, %v626
    %v628 = vand.u32 %v627, 4294901760
    %629 = vmatpush1.msra.mxu0 %v628
    %630 = vmatprep.subr.mxu0 0.0
    %631 = vmatpush2.msra.mxu0 0.0
    %632 = vmatprep.subr.mxu0 0.0
    %633 = vmatpush2.msra.mxu0 0.0
    %634 = vmatprep.subr.mxu0 0.0
    %635 = vmatpush2.msra.mxu0 0.0
    %636 = vmatprep.subr.mxu0 0.0
    %637 = vmatpush2.msra.mxu0 0.0
    %638 = vmatprep.subr.mxu0 0.0
    %639 = vmatpush2.msra.mxu0 0.0
    %640 = vmatprep.subr.mxu0 0.0
    %641 = vmatpush2.msra.mxu0 0.0
    %642 = vmatprep.subr.mxu0 0.0
    %643 = vmatpush2.msra.mxu0 0.0
    %644 = vmatprep.subr.mxu0 0.0
    %645 = vmatpush2.msra.mxu0 0.0
    %646 = vmatprep.subr.mxu0 0.0
    %647 = vmatpush2.msra.mxu0 0.0
    %648 = vmatprep.subr.mxu0 0.0
    %649 = vmatpush2.msra.mxu0 0.0
    %650 = vmatprep.subr.mxu0 0.0
    %651 = vmatpush2.msra.mxu0 0.0
    %652 = vmatprep.subr.mxu0 0.0
    %653 = vmatpush2.msra.mxu0 0.0
    %654 = vmatprep.subr.mxu0 0.0
    %655 = vmatpush2.msra.mxu0 0.0
    %656 = vmatprep.subr.mxu0 0.0
    %657 = vmatpush2.msra.mxu0 0.0
    %658 = vmatprep.subr.mxu0 0.0
    %659 = vmatpush2.msra.mxu0 0.0
    %660 = vmatprep.subr.mxu0 0.0
    %661 = vmatpush2.msra.mxu0 0.0
    %662 = vmatprep.mubr.f32.mxu0 0.0
    %v663 = vand.u32 %v50, 4294901760
    %664 = vmatmul.mubr.f32.gmra.mxu0 %v663
    %v665 = vpop.f32.mrf.mxu0
    %v666 = vadd.f32 %v585, %v665
    %v667 = vpop.f32.mrf.mxu0
    %668 = vdwg.mxu0
    %669 = vmatprep.subr.mxu0 0.0
    %670 = vmatpush1.msra.mxu0 0.0
    %671 = vmatprep.subr.mxu0 0.0
    %672 = vmatpush1.msra.mxu0 0.0
    %673 = vmatprep.subr.mxu0 0.0
    %674 = vmatpush1.msra.mxu0 0.0
    %675 = vmatprep.subr.mxu0 0.0
    %676 = vmatpush1.msra.mxu0 0.0
    %677 = vmatprep.subr.mxu0 0.0
    %678 = vmatpush1.msra.mxu0 0.0
    %679 = vmatprep.subr.mxu0 0.0
    %680 = vmatpush1.msra.mxu0 0.0
    %681 = vmatprep.subr.mxu0 0.0
    %682 = vmatpush1.msra.mxu0 0.0
    %683 = vmatprep.subr.mxu0 0.0
    %684 = vmatpush1.msra.mxu0 0.0
    %685 = vmatprep.subr.mxu0 0.0
    %686 = vmatpush1.msra.mxu0 0.0
    %687 = vmatprep.subr.mxu0 0.0
    %688 = vmatpush1.msra.mxu0 0.0
    %689 = vmatprep.subr.mxu0 0.0
    %690 = vmatpush1.msra.mxu0 0.0
    %691 = vmatprep.subr.mxu0 0.0
    %692 = vmatpush1.msra.mxu0 0.0
    %693 = vmatprep.subr.mxu0 0.0
    %694 = vmatpush1.msra.mxu0 0.0
    %695 = vmatprep.subr.mxu0 0.0
    %696 = vmatpush1.msra.mxu0 0.0
    %697 = vmatprep.subr.mxu0 0.0
    %v698 = vand.u32 %v32, 4294901760
    %v699 = vsub.f32 %v32, %v698
    %700 = vmatpush1.msra.mxu0 %v699
    %701 = vmatprep.subr.mxu0 0.0
    %v702 = vand.u32 %v31, 4294901760
    %v703 = vsub.f32 %v31, %v702
    %704 = vmatpush1.msra.mxu0 %v703
    %705 = vmatprep.subr.mxu0 0.0
    %706 = vmatpush2.msra.mxu0 0.0
    %707 = vmatprep.subr.mxu0 0.0
    %708 = vmatpush2.msra.mxu0 0.0
    %709 = vmatprep.subr.mxu0 0.0
    %710 = vmatpush2.msra.mxu0 0.0
    %711 = vmatprep.subr.mxu0 0.0
    %712 = vmatpush2.msra.mxu0 0.0
    %713 = vmatprep.subr.mxu0 0.0
    %714 = vmatpush2.msra.mxu0 0.0
    %715 = vmatprep.subr.mxu0 0.0
    %716 = vmatpush2.msra.mxu0 0.0
    %717 = vmatprep.subr.mxu0 0.0
    %718 = vmatpush2.msra.mxu0 0.0
    %719 = vmatprep.subr.mxu0 0.0
    %720 = vmatpush2.msra.mxu0 0.0
    %721 = vmatprep.subr.mxu0 0.0
    %722 = vmatpush2.msra.mxu0 0.0
    %723 = vmatprep.subr.mxu0 0.0
    %724 = vmatpush2.msra.mxu0 0.0
    %725 = vmatprep.subr.mxu0 0.0
    %726 = vmatpush2.msra.mxu0 0.0
    %727 = vmatprep.subr.mxu0 0.0
    %728 = vmatpush2.msra.mxu0 0.0
    %729 = vmatprep.subr.mxu0 0.0
    %730 = vmatpush2.msra.mxu0 0.0
    %731 = vmatprep.subr.mxu0 0.0
    %732 = vmatpush2.msra.mxu0 0.0
    %733 = vmatprep.subr.mxu0 0.0
    %734 = vmatpush2.msra.mxu0 0.0
    %735 = vmatprep.subr.mxu0 0.0
    %736 = vmatpush2.msra.mxu0 0.0
    %737 = vmatprep.mubr.f32.mxu0 0.0
    %v738 = vand.u32 %v50, 4294901760
    %v739 = vsub.f32 %v50, %v738
    %740 = vmatmul.mubr.f32.gmra.mxu0 %v739
    %v741 = vpop.f32.mrf.mxu0
    %v742 = vadd.f32 %v666, %v741
    %v743 = vpop.f32.mrf.mxu0
    %744 = vdwg.mxu0
    %745 = vmatprep.subr.mxu0 0.0
    %746 = vmatpush1.msra.mxu0 0.0
    %747 = vmatprep.subr.mxu0 0.0
    %748 = vmatpush1.msra.mxu0 0.0
    %749 = vmatprep.subr.mxu0 0.0
    %750 = vmatpush1.msra.mxu0 0.0
    %751 = vmatprep.subr.mxu0 0.0
    %752 = vmatpush1.msra.mxu0 0.0
    %753 = vmatprep.subr.mxu0 0.0
    %754 = vmatpush1.msra.mxu0 0.0
    %755 = vmatprep.subr.mxu0 0.0
    %756 = vmatpush1.msra.mxu0 0.0
    %757 = vmatprep.subr.mxu0 0.0
    %758 = vmatpush1.msra.mxu0 0.0
    %759 = vmatprep.subr.mxu0 0.0
    %760 = vmatpush1.msra.mxu0 0.0
    %761 = vmatprep.subr.mxu0 0.0
    %762 = vmatpush1.msra.mxu0 0.0
    %763 = vmatprep.subr.mxu0 0.0
    %764 = vmatpush1.msra.mxu0 0.0
    %765 = vmatprep.subr.mxu0 0.0
    %766 = vmatpush1.msra.mxu0 0.0
    %767 = vmatprep.subr.mxu0 0.0
    %768 = vmatpush1.msra.mxu0 0.0
    %769 = vmatprep.subr.mxu0 0.0
    %770 = vmatpush1.msra.mxu0 0.0
    %771 = vmatprep.subr.mxu0 0.0
    %772 = vmatpush1.msra.mxu0 0.0
    %773 = vmatprep.subr.mxu0 0.0
    %v774 = vand.u32 %v32, 4294901760
    %775 = vmatpush1.msra.mxu0 %v774
    %776 = vmatprep.subr.mxu0 0.0
    %v777 = vand.u32 %v31, 4294901760
    %778 = vmatpush1.msra.mxu0 %v777
    %779 = vmatprep.subr.mxu0 0.0
    %780 = vmatpush2.msra.mxu0 0.0
    %781 = vmatprep.subr.mxu0 0.0
    %782 = vmatpush2.msra.mxu0 0.0
    %783 = vmatprep.subr.mxu0 0.0
    %784 = vmatpush2.msra.mxu0 0.0
    %785 = vmatprep.subr.mxu0 0.0
    %786 = vmatpush2.msra.mxu0 0.0
    %787 = vmatprep.subr.mxu0 0.0
    %788 = vmatpush2.msra.mxu0 0.0
    %789 = vmatprep.subr.mxu0 0.0
    %790 = vmatpush2.msra.mxu0 0.0
    %791 = vmatprep.subr.mxu0 0.0
    %792 = vmatpush2.msra.mxu0 0.0
    %793 = vmatprep.subr.mxu0 0.0
    %794 = vmatpush2.msra.mxu0 0.0
    %795 = vmatprep.subr.mxu0 0.0
    %796 = vmatpush2.msra.mxu0 0.0
    %797 = vmatprep.subr.mxu0 0.0
    %798 = vmatpush2.msra.mxu0 0.0
    %799 = vmatprep.subr.mxu0 0.0
    %800 = vmatpush2.msra.mxu0 0.0
    %801 = vmatprep.subr.mxu0 0.0
    %802 = vmatpush2.msra.mxu0 0.0
    %803 = vmatprep.subr.mxu0 0.0
    %804 = vmatpush2.msra.mxu0 0.0
    %805 = vmatprep.subr.mxu0 0.0
    %806 = vmatpush2.msra.mxu0 0.0
    %807 = vmatprep.subr.mxu0 0.0
    %808 = vmatpush2.msra.mxu0 0.0
    %809 = vmatprep.subr.mxu0 0.0
    %810 = vmatpush2.msra.mxu0 0.0
    %811 = vmatprep.mubr.f32.mxu0 0.0
    %v812 = vand.u32 %v50, 4294901760
    %v813 = vsub.f32 %v50, %v812
    %v814 = vand.u32 %v813, 4294901760
    %815 = vmatmul.mubr.f32.gmra.mxu0 %v814
    %v816 = vpop.f32.mrf.mxu0
    %v817 = vadd.f32 %v742, %v816
    %v818 = vpop.f32.mrf.mxu0
    %819 = vdwg.mxu0
    %820 = vmatprep.subr.mxu0 0.0
    %821 = vmatpush1.msra.mxu0 0.0
    %822 = vmatprep.subr.mxu0 0.0
    %823 = vmatpush1.msra.mxu0 0.0
    %824 = vmatprep.subr.mxu0 0.0
    %825 = vmatpush1.msra.mxu0 0.0
    %826 = vmatprep.subr.mxu0 0.0
    %827 = vmatpush1.msra.mxu0 0.0
    %828 = vmatprep.subr.mxu0 0.0
    %829 = vmatpush1.msra.mxu0 0.0
    %830 = vmatprep.subr.mxu0 0.0
    %831 = vmatpush1.msra.mxu0 0.0
    %832 = vmatprep.subr.mxu0 0.0
    %833 = vmatpush1.msra.mxu0 0.0
    %834 = vmatprep.subr.mxu0 0.0
    %835 = vmatpush1.msra.mxu0 0.0
    %836 = vmatprep.subr.mxu0 0.0
    %837 = vmatpush1.msra.mxu0 0.0
    %838 = vmatprep.subr.mxu0 0.0
    %839 = vmatpush1.msra.mxu0 0.0
    %840 = vmatprep.subr.mxu0 0.0
    %841 = vmatpush1.msra.mxu0 0.0
    %842 = vmatprep.subr.mxu0 0.0
    %843 = vmatpush1.msra.mxu0 0.0
    %844 = vmatprep.subr.mxu0 0.0
    %845 = vmatpush1.msra.mxu0 0.0
    %846 = vmatprep.subr.mxu0 0.0
    %847 = vmatpush1.msra.mxu0 0.0
    %848 = vmatprep.subr.mxu0 0.0
    %v849 = vand.u32 %v32, 4294901760
    %v850 = vsub.f32 %v32, %v849
    %v851 = vand.u32 %v850, 4294901760
    %852 = vmatpush1.msra.mxu0 %v851
    %853 = vmatprep.subr.mxu0 0.0
    %v854 = vand.u32 %v31, 4294901760
    %v855 = vsub.f32 %v31, %v854
    %v856 = vand.u32 %v855, 4294901760
    %857 = vmatpush1.msra.mxu0 %v856
    %858 = vmatprep.subr.mxu0 0.0
    %859 = vmatpush2.msra.mxu0 0.0
    %860 = vmatprep.subr.mxu0 0.0
    %861 = vmatpush2.msra.mxu0 0.0
    %862 = vmatprep.subr.mxu0 0.0
    %863 = vmatpush2.msra.mxu0 0.0
    %864 = vmatprep.subr.mxu0 0.0
    %865 = vmatpush2.msra.mxu0 0.0
    %866 = vmatprep.subr.mxu0 0.0
    %867 = vmatpush2.msra.mxu0 0.0
    %868 = vmatprep.subr.mxu0 0.0
    %869 = vmatpush2.msra.mxu0 0.0
    %870 = vmatprep.subr.mxu0 0.0
    %871 = vmatpush2.msra.mxu0 0.0
    %872 = vmatprep.subr.mxu0 0.0
    %873 = vmatpush2.msra.mxu0 0.0
    %874 = vmatprep.subr.mxu0 0.0
    %875 = vmatpush2.msra.mxu0 0.0
    %876 = vmatprep.subr.mxu0 0.0
    %877 = vmatpush2.msra.mxu0 0.0
    %878 = vmatprep.subr.mxu0 0.0
    %879 = vmatpush2.msra.mxu0 0.0
    %880 = vmatprep.subr.mxu0 0.0
    %881 = vmatpush2.msra.mxu0 0.0
    %882 = vmatprep.subr.mxu0 0.0
    %883 = vmatpush2.msra.mxu0 0.0
    %884 = vmatprep.subr.mxu0 0.0
    %885 = vmatpush2.msra.mxu0 0.0
    %886 = vmatprep.subr.mxu0 0.0
    %887 = vmatpush2.msra.mxu0 0.0
    %888 = vmatprep.subr.mxu0 0.0
    %889 = vmatpush2.msra.mxu0 0.0
    %890 = vmatprep.mubr.f32.mxu0 0.0
    %v891 = vand.u32 %v50, 4294901760
    %892 = vmatmul.mubr.f32.gmra.mxu0 %v891
    %v893 = vpop.f32.mrf.mxu0
    %v894 = vadd.f32 %v817, %v893
    %v895 = vpop.f32.mrf.mxu0
    %896 = vdwg.mxu0
    %897 = vmatprep.subr.mxu0 0.0
    %898 = vmatpush1.msra.mxu0 0.0
    %899 = vmatprep.subr.mxu0 0.0
    %900 = vmatpush1.msra.mxu0 0.0
    %901 = vmatprep.subr.mxu0 0.0
    %902 = vmatpush1.msra.mxu0 0.0
    %903 = vmatprep.subr.mxu0 0.0
    %904 = vmatpush1.msra.mxu0 0.0
    %905 = vmatprep.subr.mxu0 0.0
    %906 = vmatpush1.msra.mxu0 0.0
    %907 = vmatprep.subr.mxu0 0.0
    %908 = vmatpush1.msra.mxu0 0.0
    %909 = vmatprep.subr.mxu0 0.0
    %910 = vmatpush1.msra.mxu0 0.0
    %911 = vmatprep.subr.mxu0 0.0
    %912 = vmatpush1.msra.mxu0 0.0
    %913 = vmatprep.subr.mxu0 0.0
    %914 = vmatpush1.msra.mxu0 0.0
    %915 = vmatprep.subr.mxu0 0.0
    %916 = vmatpush1.msra.mxu0 0.0
    %917 = vmatprep.subr.mxu0 0.0
    %918 = vmatpush1.msra.mxu0 0.0
    %919 = vmatprep.subr.mxu0 0.0
    %920 = vmatpush1.msra.mxu0 0.0
    %921 = vmatprep.subr.mxu0 0.0
    %922 = vmatpush1.msra.mxu0 0.0
    %923 = vmatprep.subr.mxu0 0.0
    %924 = vmatpush1.msra.mxu0 0.0
    %925 = vmatprep.subr.mxu0 0.0
    %v926 = vand.u32 %v32, 4294901760
    %927 = vmatpush1.msra.mxu0 %v926
    %928 = vmatprep.subr.mxu0 0.0
    %v929 = vand.u32 %v31, 4294901760
    %930 = vmatpush1.msra.mxu0 %v929
    %931 = vmatprep.subr.mxu0 0.0
    %932 = vmatpush2.msra.mxu0 0.0
    %933 = vmatprep.subr.mxu0 0.0
    %934 = vmatpush2.msra.mxu0 0.0
    %935 = vmatprep.subr.mxu0 0.0
    %936 = vmatpush2.msra.mxu0 0.0
    %937 = vmatprep.subr.mxu0 0.0
    %938 = vmatpush2.msra.mxu0 0.0
    %939 = vmatprep.subr.mxu0 0.0
    %940 = vmatpush2.msra.mxu0 0.0
    %941 = vmatprep.subr.mxu0 0.0
    %942 = vmatpush2.msra.mxu0 0.0
    %943 = vmatprep.subr.mxu0 0.0
    %944 = vmatpush2.msra.mxu0 0.0
    %945 = vmatprep.subr.mxu0 0.0
    %946 = vmatpush2.msra.mxu0 0.0
    %947 = vmatprep.subr.mxu0 0.0
    %948 = vmatpush2.msra.mxu0 0.0
    %949 = vmatprep.subr.mxu0 0.0
    %950 = vmatpush2.msra.mxu0 0.0
    %951 = vmatprep.subr.mxu0 0.0
    %952 = vmatpush2.msra.mxu0 0.0
    %953 = vmatprep.subr.mxu0 0.0
    %954 = vmatpush2.msra.mxu0 0.0
    %955 = vmatprep.subr.mxu0 0.0
    %956 = vmatpush2.msra.mxu0 0.0
    %957 = vmatprep.subr.mxu0 0.0
    %958 = vmatpush2.msra.mxu0 0.0
    %959 = vmatprep.subr.mxu0 0.0
    %960 = vmatpush2.msra.mxu0 0.0
    %961 = vmatprep.subr.mxu0 0.0
    %962 = vmatpush2.msra.mxu0 0.0
    %963 = vmatprep.mubr.f32.mxu0 0.0
    %v964 = vand.u32 %v50, 4294901760
    %965 = vmatmul.mubr.f32.gmra.mxu0 %v964
    %v966 = vpop.f32.mrf.mxu0
    %v967 = vadd.f32 %v894, %v966
    %v968 = vpop.f32.mrf.mxu0
    %969 = vdwg.mxu0
    %970 = vmatprep.subr.mxu0 0.0
    %971 = vmatpush1.msra.mxu0 0.0
    %972 = vmatprep.subr.mxu0 0.0
    %973 = vmatpush1.msra.mxu0 0.0
    %974 = vmatprep.subr.mxu0 0.0
    %975 = vmatpush1.msra.mxu0 0.0
    %976 = vmatprep.subr.mxu0 0.0
    %977 = vmatpush1.msra.mxu0 0.0
    %978 = vmatprep.subr.mxu0 0.0
    %979 = vmatpush1.msra.mxu0 0.0
    %980 = vmatprep.subr.mxu0 0.0
    %981 = vmatpush1.msra.mxu0 0.0
    %982 = vmatprep.subr.mxu0 0.0
    %983 = vmatpush1.msra.mxu0 0.0
    %984 = vmatprep.subr.mxu0 0.0
    %985 = vmatpush1.msra.mxu0 0.0
    %986 = vmatprep.subr.mxu0 0.0
    %987 = vmatpush1.msra.mxu0 0.0
    %988 = vmatprep.subr.mxu0 0.0
    %989 = vmatpush1.msra.mxu0 0.0
    %990 = vmatprep.subr.mxu0 0.0
    %991 = vmatpush1.msra.mxu0 0.0
    %992 = vmatprep.subr.mxu0 0.0
    %993 = vmatpush1.msra.mxu0 0.0
    %994 = vmatprep.subr.mxu0 0.0
    %995 = vmatpush1.msra.mxu0 0.0
    %996 = vmatprep.subr.mxu0 0.0
    %997 = vmatpush1.msra.mxu0 0.0
    %998 = vmatprep.subr.mxu0 0.0
    %v999 = vand.u32 %v34, 4294901760
    %1000 = vmatpush1.msra.mxu0 %v999
    %1001 = vmatprep.subr.mxu0 0.0
    %v1002 = vand.u32 %v33, 4294901760
    %1003 = vmatpush1.msra.mxu0 %v1002
    %1004 = vmatprep.subr.mxu0 0.0
    %1005 = vmatpush2.msra.mxu0 0.0
    %1006 = vmatprep.subr.mxu0 0.0
    %1007 = vmatpush2.msra.mxu0 0.0
    %1008 = vmatprep.subr.mxu0 0.0
    %1009 = vmatpush2.msra.mxu0 0.0
    %1010 = vmatprep.subr.mxu0 0.0
    %1011 = vmatpush2.msra.mxu0 0.0
    %1012 = vmatprep.subr.mxu0 0.0
    %1013 = vmatpush2.msra.mxu0 0.0
    %1014 = vmatprep.subr.mxu0 0.0
    %1015 = vmatpush2.msra.mxu0 0.0
    %1016 = vmatprep.subr.mxu0 0.0
    %1017 = vmatpush2.msra.mxu0 0.0
    %1018 = vmatprep.subr.mxu0 0.0
    %1019 = vmatpush2.msra.mxu0 0.0
    %1020 = vmatprep.subr.mxu0 0.0
    %1021 = vmatpush2.msra.mxu0 0.0
    %1022 = vmatprep.subr.mxu0 0.0
    %1023 = vmatpush2.msra.mxu0 0.0
    %1024 = vmatprep.subr.mxu0 0.0
    %1025 = vmatpush2.msra.mxu0 0.0
    %1026 = vmatprep.subr.mxu0 0.0
    %1027 = vmatpush2.msra.mxu0 0.0
    %1028 = vmatprep.subr.mxu0 0.0
    %1029 = vmatpush2.msra.mxu0 0.0
    %1030 = vmatprep.subr.mxu0 0.0
    %1031 = vmatpush2.msra.mxu0 0.0
    %1032 = vmatprep.subr.mxu0 0.0
    %1033 = vmatpush2.msra.mxu0 0.0
    %1034 = vmatprep.subr.mxu0 0.0
    %1035 = vmatpush2.msra.mxu0 0.0
    %1036 = vmatprep.mubr.f32.mxu0 0.0
    %v1037 = vand.u32 %v50, 4294901760
    %v1038 = vsub.f32 %v50, %v1037
    %v1039 = vand.u32 %v1038, 4294901760
    %v1040 = vsub.f32 %v1038, %v1039
    %v1041 = vand.u32 %v1040, 4294901760
    %1042 = vmatmul.mubr.f32.gmra.mxu0 %v1041
    %v1043 = vpop.f32.mrf.mxu0
    %v1044 = vadd.f32 0.0, %v1043
    %v1045 = vpop.f32.mrf.mxu0
    %1046 = vdwg.mxu0
    %1047 = vmatprep.subr.mxu0 0.0
    %1048 = vmatpush1.msra.mxu0 0.0
    %1049 = vmatprep.subr.mxu0 0.0
    %1050 = vmatpush1.msra.mxu0 0.0
    %1051 = vmatprep.subr.mxu0 0.0
    %1052 = vmatpush1.msra.mxu0 0.0
    %1053 = vmatprep.subr.mxu0 0.0
    %1054 = vmatpush1.msra.mxu0 0.0
    %1055 = vmatprep.subr.mxu0 0.0
    %1056 = vmatpush1.msra.mxu0 0.0
    %1057 = vmatprep.subr.mxu0 0.0
    %1058 = vmatpush1.msra.mxu0 0.0
    %1059 = vmatprep.subr.mxu0 0.0
    %1060 = vmatpush1.msra.mxu0 0.0
    %1061 = vmatprep.subr.mxu0 0.0
    %1062 = vmatpush1.msra.mxu0 0.0
    %1063 = vmatprep.subr.mxu0 0.0
    %1064 = vmatpush1.msra.mxu0 0.0
    %1065 = vmatprep.subr.mxu0 0.0
    %1066 = vmatpush1.msra.mxu0 0.0
    %1067 = vmatprep.subr.mxu0 0.0
    %1068 = vmatpush1.msra.mxu0 0.0
    %1069 = vmatprep.subr.mxu0 0.0
    %1070 = vmatpush1.msra.mxu0 0.0
    %1071 = vmatprep.subr.mxu0 0.0
    %1072 = vmatpush1.msra.mxu0 0.0
    %1073 = vmatprep.subr.mxu0 0.0
    %1074 = vmatpush1.msra.mxu0 0.0
    %1075 = vmatprep.subr.mxu0 0.0
    %v1076 = vand.u32 %v34, 4294901760
    %v1077 = vsub.f32 %v34, %v1076
    %v1078 = vand.u32 %v1077, 4294901760
    %v1079 = vsub.f32 %v1077, %v1078
    %v1080 = vand.u32 %v1079, 4294901760
    %1081 = vmatpush1.msra.mxu0 %v1080
    %1082 = vmatprep.subr.mxu0 0.0
    %v1083 = vand.u32 %v33, 4294901760
    %v1084 = vsub.f32 %v33, %v1083
    %v1085 = vand.u32 %v1084, 4294901760
    %v1086 = vsub.f32 %v1084, %v1085
    %v1087 = vand.u32 %v1086, 4294901760
    %1088 = vmatpush1.msra.mxu0 %v1087
    %1089 = vmatprep.subr.mxu0 0.0
    %1090 = vmatpush2.msra.mxu0 0.0
    %1091 = vmatprep.subr.mxu0 0.0
    %1092 = vmatpush2.msra.mxu0 0.0
    %1093 = vmatprep.subr.mxu0 0.0
    %1094 = vmatpush2.msra.mxu0 0.0
    %1095 = vmatprep.subr.mxu0 0.0
    %1096 = vmatpush2.msra.mxu0 0.0
    %1097 = vmatprep.subr.mxu0 0.0
    %1098 = vmatpush2.msra.mxu0 0.0
    %1099 = vmatprep.subr.mxu0 0.0
    %1100 = vmatpush2.msra.mxu0 0.0
    %1101 = vmatprep.subr.mxu0 0.0
    %1102 = vmatpush2.msra.mxu0 0.0
    %1103 = vmatprep.subr.mxu0 0.0
    %1104 = vmatpush2.msra.mxu0 0.0
    %1105 = vmatprep.subr.mxu0 0.0
    %1106 = vmatpush2.msra.mxu0 0.0
    %1107 = vmatprep.subr.mxu0 0.0
    %1108 = vmatpush2.msra.mxu0 0.0
    %1109 = vmatprep.subr.mxu0 0.0
    %1110 = vmatpush2.msra.mxu0 0.0
    %1111 = vmatprep.subr.mxu0 0.0
    %1112 = vmatpush2.msra.mxu0 0.0
    %1113 = vmatprep.subr.mxu0 0.0
    %1114 = vmatpush2.msra.mxu0 0.0
    %1115 = vmatprep.subr.mxu0 0.0
    %1116 = vmatpush2.msra.mxu0 0.0
    %1117 = vmatprep.subr.mxu0 0.0
    %1118 = vmatpush2.msra.mxu0 0.0
    %1119 = vmatprep.subr.mxu0 0.0
    %1120 = vmatpush2.msra.mxu0 0.0
    %1121 = vmatprep.mubr.f32.mxu0 0.0
    %v1122 = vand.u32 %v50, 4294901760
    %1123 = vmatmul.mubr.f32.gmra.mxu0 %v1122
    %v1124 = vpop.f32.mrf.mxu0
    %v1125 = vadd.f32 %v1044, %v1124
    %v1126 = vpop.f32.mrf.mxu0
    %1127 = vdwg.mxu0
    %1128 = vmatprep.subr.mxu0 0.0
    %1129 = vmatpush1.msra.mxu0 0.0
    %1130 = vmatprep.subr.mxu0 0.0
    %1131 = vmatpush1.msra.mxu0 0.0
    %1132 = vmatprep.subr.mxu0 0.0
    %1133 = vmatpush1.msra.mxu0 0.0
    %1134 = vmatprep.subr.mxu0 0.0
    %1135 = vmatpush1.msra.mxu0 0.0
    %1136 = vmatprep.subr.mxu0 0.0
    %1137 = vmatpush1.msra.mxu0 0.0
    %1138 = vmatprep.subr.mxu0 0.0
    %1139 = vmatpush1.msra.mxu0 0.0
    %1140 = vmatprep.subr.mxu0 0.0
    %1141 = vmatpush1.msra.mxu0 0.0
    %1142 = vmatprep.subr.mxu0 0.0
    %1143 = vmatpush1.msra.mxu0 0.0
    %1144 = vmatprep.subr.mxu0 0.0
    %1145 = vmatpush1.msra.mxu0 0.0
    %1146 = vmatprep.subr.mxu0 0.0
    %1147 = vmatpush1.msra.mxu0 0.0
    %1148 = vmatprep.subr.mxu0 0.0
    %1149 = vmatpush1.msra.mxu0 0.0
    %1150 = vmatprep.subr.mxu0 0.0
    %1151 = vmatpush1.msra.mxu0 0.0
    %1152 = vmatprep.subr.mxu0 0.0
    %1153 = vmatpush1.msra.mxu0 0.0
    %1154 = vmatprep.subr.mxu0 0.0
    %1155 = vmatpush1.msra.mxu0 0.0
    %1156 = vmatprep.subr.mxu0 0.0
    %v1157 = vand.u32 %v34, 4294901760
    %v1158 = vsub.f32 %v34, %v1157
    %1159 = vmatpush1.msra.mxu0 %v1158
    %1160 = vmatprep.subr.mxu0 0.0
    %v1161 = vand.u32 %v33, 4294901760
    %v1162 = vsub.f32 %v33, %v1161
    %1163 = vmatpush1.msra.mxu0 %v1162
    %1164 = vmatprep.subr.mxu0 0.0
    %1165 = vmatpush2.msra.mxu0 0.0
    %1166 = vmatprep.subr.mxu0 0.0
    %1167 = vmatpush2.msra.mxu0 0.0
    %1168 = vmatprep.subr.mxu0 0.0
    %1169 = vmatpush2.msra.mxu0 0.0
    %1170 = vmatprep.subr.mxu0 0.0
    %1171 = vmatpush2.msra.mxu0 0.0
    %1172 = vmatprep.subr.mxu0 0.0
    %1173 = vmatpush2.msra.mxu0 0.0
    %1174 = vmatprep.subr.mxu0 0.0
    %1175 = vmatpush2.msra.mxu0 0.0
    %1176 = vmatprep.subr.mxu0 0.0
    %1177 = vmatpush2.msra.mxu0 0.0
    %1178 = vmatprep.subr.mxu0 0.0
    %1179 = vmatpush2.msra.mxu0 0.0
    %1180 = vmatprep.subr.mxu0 0.0
    %1181 = vmatpush2.msra.mxu0 0.0
    %1182 = vmatprep.subr.mxu0 0.0
    %1183 = vmatpush2.msra.mxu0 0.0
    %1184 = vmatprep.subr.mxu0 0.0
    %1185 = vmatpush2.msra.mxu0 0.0
    %1186 = vmatprep.subr.mxu0 0.0
    %1187 = vmatpush2.msra.mxu0 0.0
    %1188 = vmatprep.subr.mxu0 0.0
    %1189 = vmatpush2.msra.mxu0 0.0
    %1190 = vmatprep.subr.mxu0 0.0
    %1191 = vmatpush2.msra.mxu0 0.0
    %1192 = vmatprep.subr.mxu0 0.0
    %1193 = vmatpush2.msra.mxu0 0.0
    %1194 = vmatprep.subr.mxu0 0.0
    %1195 = vmatpush2.msra.mxu0 0.0
    %1196 = vmatprep.mubr.f32.mxu0 0.0
    %v1197 = vand.u32 %v50, 4294901760
    %v1198 = vsub.f32 %v50, %v1197
    %1199 = vmatmul.mubr.f32.gmra.mxu0 %v1198
    %v1200 = vpop.f32.mrf.mxu0
    %v1201 = vadd.f32 %v1125, %v1200
    %v1202 = vpop.f32.mrf.mxu0
    %1203 = vdwg.mxu0
    %1204 = vmatprep.subr.mxu0 0.0
    %1205 = vmatpush1.msra.mxu0 0.0
    %1206 = vmatprep.subr.mxu0 0.0
    %1207 = vmatpush1.msra.mxu0 0.0
    %1208 = vmatprep.subr.mxu0 0.0
    %1209 = vmatpush1.msra.mxu0 0.0
    %1210 = vmatprep.subr.mxu0 0.0
    %1211 = vmatpush1.msra.mxu0 0.0
    %1212 = vmatprep.subr.mxu0 0.0
    %1213 = vmatpush1.msra.mxu0 0.0
    %1214 = vmatprep.subr.mxu0 0.0
    %1215 = vmatpush1.msra.mxu0 0.0
    %1216 = vmatprep.subr.mxu0 0.0
    %1217 = vmatpush1.msra.mxu0 0.0
    %1218 = vmatprep.subr.mxu0 0.0
    %1219 = vmatpush1.msra.mxu0 0.0
    %1220 = vmatprep.subr.mxu0 0.0
    %1221 = vmatpush1.msra.mxu0 0.0
    %1222 = vmatprep.subr.mxu0 0.0
    %1223 = vmatpush1.msra.mxu0 0.0
    %1224 = vmatprep.subr.mxu0 0.0
    %1225 = vmatpush1.msra.mxu0 0.0
    %1226 = vmatprep.subr.mxu0 0.0
    %1227 = vmatpush1.msra.mxu0 0.0
    %1228 = vmatprep.subr.mxu0 0.0
    %1229 = vmatpush1.msra.mxu0 0.0
    %1230 = vmatprep.subr.mxu0 0.0
    %1231 = vmatpush1.msra.mxu0 0.0
    %1232 = vmatprep.subr.mxu0 0.0
    %v1233 = vand.u32 %v34, 4294901760
    %1234 = vmatpush1.msra.mxu0 %v1233
    %1235 = vmatprep.subr.mxu0 0.0
    %v1236 = vand.u32 %v33, 4294901760
    %1237 = vmatpush1.msra.mxu0 %v1236
    %1238 = vmatprep.subr.mxu0 0.0
    %1239 = vmatpush2.msra.mxu0 0.0
    %1240 = vmatprep.subr.mxu0 0.0
    %1241 = vmatpush2.msra.mxu0 0.0
    %1242 = vmatprep.subr.mxu0 0.0
    %1243 = vmatpush2.msra.mxu0 0.0
    %1244 = vmatprep.subr.mxu0 0.0
    %1245 = vmatpush2.msra.mxu0 0.0
    %1246 = vmatprep.subr.mxu0 0.0
    %1247 = vmatpush2.msra.mxu0 0.0
    %1248 = vmatprep.subr.mxu0 0.0
    %1249 = vmatpush2.msra.mxu0 0.0
    %1250 = vmatprep.subr.mxu0 0.0
    %1251 = vmatpush2.msra.mxu0 0.0
    %1252 = vmatprep.subr.mxu0 0.0
    %1253 = vmatpush2.msra.mxu0 0.0
    %1254 = vmatprep.subr.mxu0 0.0
    %1255 = vmatpush2.msra.mxu0 0.0
    %1256 = vmatprep.subr.mxu0 0.0
    %1257 = vmatpush2.msra.mxu0 0.0
    %1258 = vmatprep.subr.mxu0 0.0
    %1259 = vmatpush2.msra.mxu0 0.0
    %1260 = vmatprep.subr.mxu0 0.0
    %1261 = vmatpush2.msra.mxu0 0.0
    %1262 = vmatprep.subr.mxu0 0.0
    %1263 = vmatpush2.msra.mxu0 0.0
    %1264 = vmatprep.subr.mxu0 0.0
    %1265 = vmatpush2.msra.mxu0 0.0
    %1266 = vmatprep.subr.mxu0 0.0
    %1267 = vmatpush2.msra.mxu0 0.0
    %1268 = vmatprep.subr.mxu0 0.0
    %1269 = vmatpush2.msra.mxu0 0.0
    %1270 = vmatprep.mubr.f32.mxu0 0.0
    %v1271 = vand.u32 %v50, 4294901760
    %v1272 = vsub.f32 %v50, %v1271
    %v1273 = vand.u32 %v1272, 4294901760
    %1274 = vmatmul.mubr.f32.gmra.mxu0 %v1273
    %v1275 = vpop.f32.mrf.mxu0
    %v1276 = vadd.f32 %v1201, %v1275
    %v1277 = vpop.f32.mrf.mxu0
    %1278 = vdwg.mxu0
    %1279 = vmatprep.subr.mxu0 0.0
    %1280 = vmatpush1.msra.mxu0 0.0
    %1281 = vmatprep.subr.mxu0 0.0
    %1282 = vmatpush1.msra.mxu0 0.0
    %1283 = vmatprep.subr.mxu0 0.0
    %1284 = vmatpush1.msra.mxu0 0.0
    %1285 = vmatprep.subr.mxu0 0.0
    %1286 = vmatpush1.msra.mxu0 0.0
    %1287 = vmatprep.subr.mxu0 0.0
    %1288 = vmatpush1.msra.mxu0 0.0
    %1289 = vmatprep.subr.mxu0 0.0
    %1290 = vmatpush1.msra.mxu0 0.0
    %1291 = vmatprep.subr.mxu0 0.0
    %1292 = vmatpush1.msra.mxu0 0.0
    %1293 = vmatprep.subr.mxu0 0.0
    %1294 = vmatpush1.msra.mxu0 0.0
    %1295 = vmatprep.subr.mxu0 0.0
    %1296 = vmatpush1.msra.mxu0 0.0
    %1297 = vmatprep.subr.mxu0 0.0
    %1298 = vmatpush1.msra.mxu0 0.0
    %1299 = vmatprep.subr.mxu0 0.0
    %1300 = vmatpush1.msra.mxu0 0.0
    %1301 = vmatprep.subr.mxu0 0.0
    %1302 = vmatpush1.msra.mxu0 0.0
    %1303 = vmatprep.subr.mxu0 0.0
    %1304 = vmatpush1.msra.mxu0 0.0
    %1305 = vmatprep.subr.mxu0 0.0
    %1306 = vmatpush1.msra.mxu0 0.0
    %1307 = vmatprep.subr.mxu0 0.0
    %v1308 = vand.u32 %v34, 4294901760
    %v1309 = vsub.f32 %v34, %v1308
    %v1310 = vand.u32 %v1309, 4294901760
    %1311 = vmatpush1.msra.mxu0 %v1310
    %1312 = vmatprep.subr.mxu0 0.0
    %v1313 = vand.u32 %v33, 4294901760
    %v1314 = vsub.f32 %v33, %v1313
    %v1315 = vand.u32 %v1314, 4294901760
    %1316 = vmatpush1.msra.mxu0 %v1315
    %1317 = vmatprep.subr.mxu0 0.0
    %1318 = vmatpush2.msra.mxu0 0.0
    %1319 = vmatprep.subr.mxu0 0.0
    %1320 = vmatpush2.msra.mxu0 0.0
    %1321 = vmatprep.subr.mxu0 0.0
    %1322 = vmatpush2.msra.mxu0 0.0
    %1323 = vmatprep.subr.mxu0 0.0
    %1324 = vmatpush2.msra.mxu0 0.0
    %1325 = vmatprep.subr.mxu0 0.0
    %1326 = vmatpush2.msra.mxu0 0.0
    %1327 = vmatprep.subr.mxu0 0.0
    %1328 = vmatpush2.msra.mxu0 0.0
    %1329 = vmatprep.subr.mxu0 0.0
    %1330 = vmatpush2.msra.mxu0 0.0
    %1331 = vmatprep.subr.mxu0 0.0
    %1332 = vmatpush2.msra.mxu0 0.0
    %1333 = vmatprep.subr.mxu0 0.0
    %1334 = vmatpush2.msra.mxu0 0.0
    %1335 = vmatprep.subr.mxu0 0.0
    %1336 = vmatpush2.msra.mxu0 0.0
    %1337 = vmatprep.subr.mxu0 0.0
    %1338 = vmatpush2.msra.mxu0 0.0
    %1339 = vmatprep.subr.mxu0 0.0
    %1340 = vmatpush2.msra.mxu0 0.0
    %1341 = vmatprep.subr.mxu0 0.0
    %1342 = vmatpush2.msra.mxu0 0.0
    %1343 = vmatprep.subr.mxu0 0.0
    %1344 = vmatpush2.msra.mxu0 0.0
    %1345 = vmatprep.subr.mxu0 0.0
    %1346 = vmatpush2.msra.mxu0 0.0
    %1347 = vmatprep.subr.mxu0 0.0
    %1348 = vmatpush2.msra.mxu0 0.0
    %1349 = vmatprep.mubr.f32.mxu0 0.0
    %v1350 = vand.u32 %v50, 4294901760
    %1351 = vmatmul.mubr.f32.gmra.mxu0 %v1350
    %v1352 = vpop.f32.mrf.mxu0
    %v1353 = vadd.f32 %v1276, %v1352
    %v1354 = vpop.f32.mrf.mxu0
    %1355 = vdwg.mxu0
    %1356 = vmatprep.subr.mxu0 0.0
    %1357 = vmatpush1.msra.mxu0 0.0
    %1358 = vmatprep.subr.mxu0 0.0
    %1359 = vmatpush1.msra.mxu0 0.0
    %1360 = vmatprep.subr.mxu0 0.0
    %1361 = vmatpush1.msra.mxu0 0.0
    %1362 = vmatprep.subr.mxu0 0.0
    %1363 = vmatpush1.msra.mxu0 0.0
    %1364 = vmatprep.subr.mxu0 0.0
    %1365 = vmatpush1.msra.mxu0 0.0
    %1366 = vmatprep.subr.mxu0 0.0
    %1367 = vmatpush1.msra.mxu0 0.0
    %1368 = vmatprep.subr.mxu0 0.0
    %1369 = vmatpush1.msra.mxu0 0.0
    %1370 = vmatprep.subr.mxu0 0.0
    %1371 = vmatpush1.msra.mxu0 0.0
    %1372 = vmatprep.subr.mxu0 0.0
    %1373 = vmatpush1.msra.mxu0 0.0
    %1374 = vmatprep.subr.mxu0 0.0
    %1375 = vmatpush1.msra.mxu0 0.0
    %1376 = vmatprep.subr.mxu0 0.0
    %1377 = vmatpush1.msra.mxu0 0.0
    %1378 = vmatprep.subr.mxu0 0.0
    %1379 = vmatpush1.msra.mxu0 0.0
    %1380 = vmatprep.subr.mxu0 0.0
    %1381 = vmatpush1.msra.mxu0 0.0
    %1382 = vmatprep.subr.mxu0 0.0
    %1383 = vmatpush1.msra.mxu0 0.0
    %1384 = vmatprep.subr.mxu0 0.0
    %v1385 = vand.u32 %v34, 4294901760
    %1386 = vmatpush1.msra.mxu0 %v1385
    %1387 = vmatprep.subr.mxu0 0.0
    %v1388 = vand.u32 %v33, 4294901760
    %1389 = vmatpush1.msra.mxu0 %v1388
    %1390 = vmatprep.subr.mxu0 0.0
    %1391 = vmatpush2.msra.mxu0 0.0
    %1392 = vmatprep.subr.mxu0 0.0
    %1393 = vmatpush2.msra.mxu0 0.0
    %1394 = vmatprep.subr.mxu0 0.0
    %1395 = vmatpush2.msra.mxu0 0.0
    %1396 = vmatprep.subr.mxu0 0.0
    %1397 = vmatpush2.msra.mxu0 0.0
    %1398 = vmatprep.subr.mxu0 0.0
    %1399 = vmatpush2.msra.mxu0 0.0
    %1400 = vmatprep.subr.mxu0 0.0
    %1401 = vmatpush2.msra.mxu0 0.0
    %1402 = vmatprep.subr.mxu0 0.0
    %1403 = vmatpush2.msra.mxu0 0.0
    %1404 = vmatprep.subr.mxu0 0.0
    %1405 = vmatpush2.msra.mxu0 0.0
    %1406 = vmatprep.subr.mxu0 0.0
    %1407 = vmatpush2.msra.mxu0 0.0
    %1408 = vmatprep.subr.mxu0 0.0
    %1409 = vmatpush2.msra.mxu0 0.0
    %1410 = vmatprep.subr.mxu0 0.0
    %1411 = vmatpush2.msra.mxu0 0.0
    %1412 = vmatprep.subr.mxu0 0.0
    %1413 = vmatpush2.msra.mxu0 0.0
    %1414 = vmatprep.subr.mxu0 0.0
    %1415 = vmatpush2.msra.mxu0 0.0
    %1416 = vmatprep.subr.mxu0 0.0
    %1417 = vmatpush2.msra.mxu0 0.0
    %1418 = vmatprep.subr.mxu0 0.0
    %1419 = vmatpush2.msra.mxu0 0.0
    %1420 = vmatprep.subr.mxu0 0.0
    %1421 = vmatpush2.msra.mxu0 0.0
    %1422 = vmatprep.mubr.f32.mxu0 0.0
    %v1423 = vand.u32 %v50, 4294901760
    %1424 = vmatmul.mubr.f32.gmra.mxu0 %v1423
    %v1425 = vpop.f32.mrf.mxu0
    %v1426 = vadd.f32 %v1353, %v1425
    %v1427 = vpop.f32.mrf.mxu0
    %1428 = vdwg.mxu0
    %1429 = vmatprep.subr.mxu0 0.0
    %1430 = vmatpush1.msra.mxu0 0.0
    %1431 = vmatprep.subr.mxu0 0.0
    %1432 = vmatpush1.msra.mxu0 0.0
    %1433 = vmatprep.subr.mxu0 0.0
    %1434 = vmatpush1.msra.mxu0 0.0
    %1435 = vmatprep.subr.mxu0 0.0
    %1436 = vmatpush1.msra.mxu0 0.0
    %1437 = vmatprep.subr.mxu0 0.0
    %1438 = vmatpush1.msra.mxu0 0.0
    %1439 = vmatprep.subr.mxu0 0.0
    %1440 = vmatpush1.msra.mxu0 0.0
    %1441 = vmatprep.subr.mxu0 0.0
    %1442 = vmatpush1.msra.mxu0 0.0
    %1443 = vmatprep.subr.mxu0 0.0
    %1444 = vmatpush1.msra.mxu0 0.0
    %1445 = vmatprep.subr.mxu0 0.0
    %1446 = vmatpush1.msra.mxu0 0.0
    %1447 = vmatprep.subr.mxu0 0.0
    %1448 = vmatpush1.msra.mxu0 0.0
    %1449 = vmatprep.subr.mxu0 0.0
    %1450 = vmatpush1.msra.mxu0 0.0
    %1451 = vmatprep.subr.mxu0 0.0
    %1452 = vmatpush1.msra.mxu0 0.0
    %1453 = vmatprep.subr.mxu0 0.0
    %1454 = vmatpush1.msra.mxu0 0.0
    %1455 = vmatprep.subr.mxu0 0.0
    %1456 = vmatpush1.msra.mxu0 0.0
    %1457 = vmatprep.subr.mxu0 0.0
    %v1458 = vand.u32 %v36, 4294901760
    %1459 = vmatpush1.msra.mxu0 %v1458
    %1460 = vmatprep.subr.mxu0 0.0
    %v1461 = vand.u32 %v35, 4294901760
    %1462 = vmatpush1.msra.mxu0 %v1461
    %1463 = vmatprep.subr.mxu0 0.0
    %1464 = vmatpush2.msra.mxu0 0.0
    %1465 = vmatprep.subr.mxu0 0.0
    %1466 = vmatpush2.msra.mxu0 0.0
    %1467 = vmatprep.subr.mxu0 0.0
    %1468 = vmatpush2.msra.mxu0 0.0
    %1469 = vmatprep.subr.mxu0 0.0
    %1470 = vmatpush2.msra.mxu0 0.0
    %1471 = vmatprep.subr.mxu0 0.0
    %1472 = vmatpush2.msra.mxu0 0.0
    %1473 = vmatprep.subr.mxu0 0.0
    %1474 = vmatpush2.msra.mxu0 0.0
    %1475 = vmatprep.subr.mxu0 0.0
    %1476 = vmatpush2.msra.mxu0 0.0
    %1477 = vmatprep.subr.mxu0 0.0
    %1478 = vmatpush2.msra.mxu0 0.0
    %1479 = vmatprep.subr.mxu0 0.0
    %1480 = vmatpush2.msra.mxu0 0.0
    %1481 = vmatprep.subr.mxu0 0.0
    %1482 = vmatpush2.msra.mxu0 0.0
    %1483 = vmatprep.subr.mxu0 0.0
    %1484 = vmatpush2.msra.mxu0 0.0
    %1485 = vmatprep.subr.mxu0 0.0
    %1486 = vmatpush2.msra.mxu0 0.0
    %1487 = vmatprep.subr.mxu0 0.0
    %1488 = vmatpush2.msra.mxu0 0.0
    %1489 = vmatprep.subr.mxu0 0.0
    %1490 = vmatpush2.msra.mxu0 0.0
    %1491 = vmatprep.subr.mxu0 0.0
    %1492 = vmatpush2.msra.mxu0 0.0
    %1493 = vmatprep.subr.mxu0 0.0
    %1494 = vmatpush2.msra.mxu0 0.0
    %1495 = vmatprep.mubr.f32.mxu0 0.0
    %v1496 = vand.u32 %v50, 4294901760
    %v1497 = vsub.f32 %v50, %v1496
    %v1498 = vand.u32 %v1497, 4294901760
    %v1499 = vsub.f32 %v1497, %v1498
    %v1500 = vand.u32 %v1499, 4294901760
    %1501 = vmatmul.mubr.f32.gmra.mxu0 %v1500
    %v1502 = vpop.f32.mrf.mxu0
    %v1503 = vadd.f32 0.0, %v1502
    %v1504 = vpop.f32.mrf.mxu0
    %1505 = vdwg.mxu0
    %1506 = vmatprep.subr.mxu0 0.0
    %1507 = vmatpush1.msra.mxu0 0.0
    %1508 = vmatprep.subr.mxu0 0.0
    %1509 = vmatpush1.msra.mxu0 0.0
    %1510 = vmatprep.subr.mxu0 0.0
    %1511 = vmatpush1.msra.mxu0 0.0
    %1512 = vmatprep.subr.mxu0 0.0
    %1513 = vmatpush1.msra.mxu0 0.0
    %1514 = vmatprep.subr.mxu0 0.0
    %1515 = vmatpush1.msra.mxu0 0.0
    %1516 = vmatprep.subr.mxu0 0.0
    %1517 = vmatpush1.msra.mxu0 0.0
    %1518 = vmatprep.subr.mxu0 0.0
    %1519 = vmatpush1.msra.mxu0 0.0
    %1520 = vmatprep.subr.mxu0 0.0
    %1521 = vmatpush1.msra.mxu0 0.0
    %1522 = vmatprep.subr.mxu0 0.0
    %1523 = vmatpush1.msra.mxu0 0.0
    %1524 = vmatprep.subr.mxu0 0.0
    %1525 = vmatpush1.msra.mxu0 0.0
    %1526 = vmatprep.subr.mxu0 0.0
    %1527 = vmatpush1.msra.mxu0 0.0
    %1528 = vmatprep.subr.mxu0 0.0
    %1529 = vmatpush1.msra.mxu0 0.0
    %1530 = vmatprep.subr.mxu0 0.0
    %1531 = vmatpush1.msra.mxu0 0.0
    %1532 = vmatprep.subr.mxu0 0.0
    %1533 = vmatpush1.msra.mxu0 0.0
    %1534 = vmatprep.subr.mxu0 0.0
    %v1535 = vand.u32 %v36, 4294901760
    %v1536 = vsub.f32 %v36, %v1535
    %v1537 = vand.u32 %v1536, 4294901760
    %v1538 = vsub.f32 %v1536, %v1537
    %v1539 = vand.u32 %v1538, 4294901760
    %1540 = vmatpush1.msra.mxu0 %v1539
    %1541 = vmatprep.subr.mxu0 0.0
    %v1542 = vand.u32 %v35, 4294901760
    %v1543 = vsub.f32 %v35, %v1542
    %v1544 = vand.u32 %v1543, 4294901760
    %v1545 = vsub.f32 %v1543, %v1544
    %v1546 = vand.u32 %v1545, 4294901760
    %1547 = vmatpush1.msra.mxu0 %v1546
    %1548 = vmatprep.subr.mxu0 0.0
    %1549 = vmatpush2.msra.mxu0 0.0
    %1550 = vmatprep.subr.mxu0 0.0
    %1551 = vmatpush2.msra.mxu0 0.0
    %1552 = vmatprep.subr.mxu0 0.0
    %1553 = vmatpush2.msra.mxu0 0.0
    %1554 = vmatprep.subr.mxu0 0.0
    %1555 = vmatpush2.msra.mxu0 0.0
    %1556 = vmatprep.subr.mxu0 0.0
    %1557 = vmatpush2.msra.mxu0 0.0
    %1558 = vmatprep.subr.mxu0 0.0
    %1559 = vmatpush2.msra.mxu0 0.0
    %1560 = vmatprep.subr.mxu0 0.0
    %1561 = vmatpush2.msra.mxu0 0.0
    %1562 = vmatprep.subr.mxu0 0.0
    %1563 = vmatpush2.msra.mxu0 0.0
    %1564 = vmatprep.subr.mxu0 0.0
    %1565 = vmatpush2.msra.mxu0 0.0
    %1566 = vmatprep.subr.mxu0 0.0
    %1567 = vmatpush2.msra.mxu0 0.0
    %1568 = vmatprep.subr.mxu0 0.0
    %1569 = vmatpush2.msra.mxu0 0.0
    %1570 = vmatprep.subr.mxu0 0.0
    %1571 = vmatpush2.msra.mxu0 0.0
    %1572 = vmatprep.subr.mxu0 0.0
    %1573 = vmatpush2.msra.mxu0 0.0
    %1574 = vmatprep.subr.mxu0 0.0
    %1575 = vmatpush2.msra.mxu0 0.0
    %1576 = vmatprep.subr.mxu0 0.0
    %1577 = vmatpush2.msra.mxu0 0.0
    %1578 = vmatprep.subr.mxu0 0.0
    %1579 = vmatpush2.msra.mxu0 0.0
    %1580 = vmatprep.mubr.f32.mxu0 0.0
    %v1581 = vand.u32 %v50, 4294901760
    %1582 = vmatmul.mubr.f32.gmra.mxu0 %v1581
    %v1583 = vpop.f32.mrf.mxu0
    %v1584 = vadd.f32 %v1503, %v1583
    %v1585 = vpop.f32.mrf.mxu0
    %1586 = vdwg.mxu0
    %1587 = vmatprep.subr.mxu0 0.0
    %1588 = vmatpush1.msra.mxu0 0.0
    %1589 = vmatprep.subr.mxu0 0.0
    %1590 = vmatpush1.msra.mxu0 0.0
    %1591 = vmatprep.subr.mxu0 0.0
    %1592 = vmatpush1.msra.mxu0 0.0
    %1593 = vmatprep.subr.mxu0 0.0
    %1594 = vmatpush1.msra.mxu0 0.0
    %1595 = vmatprep.subr.mxu0 0.0
    %1596 = vmatpush1.msra.mxu0 0.0
    %1597 = vmatprep.subr.mxu0 0.0
    %1598 = vmatpush1.msra.mxu0 0.0
    %1599 = vmatprep.subr.mxu0 0.0
    %1600 = vmatpush1.msra.mxu0 0.0
    %1601 = vmatprep.subr.mxu0 0.0
    %1602 = vmatpush1.msra.mxu0 0.0
    %1603 = vmatprep.subr.mxu0 0.0
    %1604 = vmatpush1.msra.mxu0 0.0
    %1605 = vmatprep.subr.mxu0 0.0
    %1606 = vmatpush1.msra.mxu0 0.0
    %1607 = vmatprep.subr.mxu0 0.0
    %1608 = vmatpush1.msra.mxu0 0.0
    %1609 = vmatprep.subr.mxu0 0.0
    %1610 = vmatpush1.msra.mxu0 0.0
    %1611 = vmatprep.subr.mxu0 0.0
    %1612 = vmatpush1.msra.mxu0 0.0
    %1613 = vmatprep.subr.mxu0 0.0
    %1614 = vmatpush1.msra.mxu0 0.0
    %1615 = vmatprep.subr.mxu0 0.0
    %v1616 = vand.u32 %v36, 4294901760
    %v1617 = vsub.f32 %v36, %v1616
    %1618 = vmatpush1.msra.mxu0 %v1617
    %1619 = vmatprep.subr.mxu0 0.0
    %v1620 = vand.u32 %v35, 4294901760
    %v1621 = vsub.f32 %v35, %v1620
    %1622 = vmatpush1.msra.mxu0 %v1621
    %1623 = vmatprep.subr.mxu0 0.0
    %1624 = vmatpush2.msra.mxu0 0.0
    %1625 = vmatprep.subr.mxu0 0.0
    %1626 = vmatpush2.msra.mxu0 0.0
    %1627 = vmatprep.subr.mxu0 0.0
    %1628 = vmatpush2.msra.mxu0 0.0
    %1629 = vmatprep.subr.mxu0 0.0
    %1630 = vmatpush2.msra.mxu0 0.0
    %1631 = vmatprep.subr.mxu0 0.0
    %1632 = vmatpush2.msra.mxu0 0.0
    %1633 = vmatprep.subr.mxu0 0.0
    %1634 = vmatpush2.msra.mxu0 0.0
    %1635 = vmatprep.subr.mxu0 0.0
    %1636 = vmatpush2.msra.mxu0 0.0
    %1637 = vmatprep.subr.mxu0 0.0
    %1638 = vmatpush2.msra.mxu0 0.0
    %1639 = vmatprep.subr.mxu0 0.0
    %1640 = vmatpush2.msra.mxu0 0.0
    %1641 = vmatprep.subr.mxu0 0.0
    %1642 = vmatpush2.msra.mxu0 0.0
    %1643 = vmatprep.subr.mxu0 0.0
    %1644 = vmatpush2.msra.mxu0 0.0
    %1645 = vmatprep.subr.mxu0 0.0
    %1646 = vmatpush2.msra.mxu0 0.0
    %1647 = vmatprep.subr.mxu0 0.0
    %1648 = vmatpush2.msra.mxu0 0.0
    %1649 = vmatprep.subr.mxu0 0.0
    %1650 = vmatpush2.msra.mxu0 0.0
    %1651 = vmatprep.subr.mxu0 0.0
    %1652 = vmatpush2.msra.mxu0 0.0
    %1653 = vmatprep.subr.mxu0 0.0
    %1654 = vmatpush2.msra.mxu0 0.0
    %1655 = vmatprep.mubr.f32.mxu0 0.0
    %v1656 = vand.u32 %v50, 4294901760
    %v1657 = vsub.f32 %v50, %v1656
    %1658 = vmatmul.mubr.f32.gmra.mxu0 %v1657
    %v1659 = vpop.f32.mrf.mxu0
    %v1660 = vadd.f32 %v1584, %v1659
    %v1661 = vpop.f32.mrf.mxu0
    %1662 = vdwg.mxu0
    %1663 = vmatprep.subr.mxu0 0.0
    %1664 = vmatpush1.msra.mxu0 0.0
    %1665 = vmatprep.subr.mxu0 0.0
    %1666 = vmatpush1.msra.mxu0 0.0
    %1667 = vmatprep.subr.mxu0 0.0
    %1668 = vmatpush1.msra.mxu0 0.0
    %1669 = vmatprep.subr.mxu0 0.0
    %1670 = vmatpush1.msra.mxu0 0.0
    %1671 = vmatprep.subr.mxu0 0.0
    %1672 = vmatpush1.msra.mxu0 0.0
    %1673 = vmatprep.subr.mxu0 0.0
    %1674 = vmatpush1.msra.mxu0 0.0
    %1675 = vmatprep.subr.mxu0 0.0
    %1676 = vmatpush1.msra.mxu0 0.0
    %1677 = vmatprep.subr.mxu0 0.0
    %1678 = vmatpush1.msra.mxu0 0.0
    %1679 = vmatprep.subr.mxu0 0.0
    %1680 = vmatpush1.msra.mxu0 0.0
    %1681 = vmatprep.subr.mxu0 0.0
    %1682 = vmatpush1.msra.mxu0 0.0
    %1683 = vmatprep.subr.mxu0 0.0
    %1684 = vmatpush1.msra.mxu0 0.0
    %1685 = vmatprep.subr.mxu0 0.0
    %1686 = vmatpush1.msra.mxu0 0.0
    %1687 = vmatprep.subr.mxu0 0.0
    %1688 = vmatpush1.msra.mxu0 0.0
    %1689 = vmatprep.subr.mxu0 0.0
    %1690 = vmatpush1.msra.mxu0 0.0
    %1691 = vmatprep.subr.mxu0 0.0
    %v1692 = vand.u32 %v36, 4294901760
    %1693 = vmatpush1.msra.mxu0 %v1692
    %1694 = vmatprep.subr.mxu0 0.0
    %v1695 = vand.u32 %v35, 4294901760
    %1696 = vmatpush1.msra.mxu0 %v1695
    %1697 = vmatprep.subr.mxu0 0.0
    %1698 = vmatpush2.msra.mxu0 0.0
    %1699 = vmatprep.subr.mxu0 0.0
    %1700 = vmatpush2.msra.mxu0 0.0
    %1701 = vmatprep.subr.mxu0 0.0
    %1702 = vmatpush2.msra.mxu0 0.0
    %1703 = vmatprep.subr.mxu0 0.0
    %1704 = vmatpush2.msra.mxu0 0.0
    %1705 = vmatprep.subr.mxu0 0.0
    %1706 = vmatpush2.msra.mxu0 0.0
    %1707 = vmatprep.subr.mxu0 0.0
    %1708 = vmatpush2.msra.mxu0 0.0
    %1709 = vmatprep.subr.mxu0 0.0
    %1710 = vmatpush2.msra.mxu0 0.0
    %1711 = vmatprep.subr.mxu0 0.0
    %1712 = vmatpush2.msra.mxu0 0.0
    %1713 = vmatprep.subr.mxu0 0.0
    %1714 = vmatpush2.msra.mxu0 0.0
    %1715 = vmatprep.subr.mxu0 0.0
    %1716 = vmatpush2.msra.mxu0 0.0
    %1717 = vmatprep.subr.mxu0 0.0
    %1718 = vmatpush2.msra.mxu0 0.0
    %1719 = vmatprep.subr.mxu0 0.0
    %1720 = vmatpush2.msra.mxu0 0.0
    %1721 = vmatprep.subr.mxu0 0.0
    %1722 = vmatpush2.msra.mxu0 0.0
    %1723 = vmatprep.subr.mxu0 0.0
    %1724 = vmatpush2.msra.mxu0 0.0
    %1725 = vmatprep.subr.mxu0 0.0
    %1726 = vmatpush2.msra.mxu0 0.0
    %1727 = vmatprep.subr.mxu0 0.0
    %1728 = vmatpush2.msra.mxu0 0.0
    %1729 = vmatprep.mubr.f32.mxu0 0.0
    %v1730 = vand.u32 %v50, 4294901760
    %v1731 = vsub.f32 %v50, %v1730
    %v1732 = vand.u32 %v1731, 4294901760
    %1733 = vmatmul.mubr.f32.gmra.mxu0 %v1732
    %v1734 = vpop.f32.mrf.mxu0
    %v1735 = vadd.f32 %v1660, %v1734
    %v1736 = vpop.f32.mrf.mxu0
    %1737 = vdwg.mxu0
    %1738 = vmatprep.subr.mxu0 0.0
    %1739 = vmatpush1.msra.mxu0 0.0
    %1740 = vmatprep.subr.mxu0 0.0
    %1741 = vmatpush1.msra.mxu0 0.0
    %1742 = vmatprep.subr.mxu0 0.0
    %1743 = vmatpush1.msra.mxu0 0.0
    %1744 = vmatprep.subr.mxu0 0.0
    %1745 = vmatpush1.msra.mxu0 0.0
    %1746 = vmatprep.subr.mxu0 0.0
    %1747 = vmatpush1.msra.mxu0 0.0
    %1748 = vmatprep.subr.mxu0 0.0
    %1749 = vmatpush1.msra.mxu0 0.0
    %1750 = vmatprep.subr.mxu0 0.0
    %1751 = vmatpush1.msra.mxu0 0.0
    %1752 = vmatprep.subr.mxu0 0.0
    %1753 = vmatpush1.msra.mxu0 0.0
    %1754 = vmatprep.subr.mxu0 0.0
    %1755 = vmatpush1.msra.mxu0 0.0
    %1756 = vmatprep.subr.mxu0 0.0
    %1757 = vmatpush1.msra.mxu0 0.0
    %1758 = vmatprep.subr.mxu0 0.0
    %1759 = vmatpush1.msra.mxu0 0.0
    %1760 = vmatprep.subr.mxu0 0.0
    %1761 = vmatpush1.msra.mxu0 0.0
    %1762 = vmatprep.subr.mxu0 0.0
    %1763 = vmatpush1.msra.mxu0 0.0
    %1764 = vmatprep.subr.mxu0 0.0
    %1765 = vmatpush1.msra.mxu0 0.0
    %1766 = vmatprep.subr.mxu0 0.0
    %v1767 = vand.u32 %v36, 4294901760
    %v1768 = vsub.f32 %v36, %v1767
    %v1769 = vand.u32 %v1768, 4294901760
    %1770 = vmatpush1.msra.mxu0 %v1769
    %1771 = vmatprep.subr.mxu0 0.0
    %v1772 = vand.u32 %v35, 4294901760
    %v1773 = vsub.f32 %v35, %v1772
    %v1774 = vand.u32 %v1773, 4294901760
    %1775 = vmatpush1.msra.mxu0 %v1774
    %1776 = vmatprep.subr.mxu0 0.0
    %1777 = vmatpush2.msra.mxu0 0.0
    %1778 = vmatprep.subr.mxu0 0.0
    %1779 = vmatpush2.msra.mxu0 0.0
    %1780 = vmatprep.subr.mxu0 0.0
    %1781 = vmatpush2.msra.mxu0 0.0
    %1782 = vmatprep.subr.mxu0 0.0
    %1783 = vmatpush2.msra.mxu0 0.0
    %1784 = vmatprep.subr.mxu0 0.0
    %1785 = vmatpush2.msra.mxu0 0.0
    %1786 = vmatprep.subr.mxu0 0.0
    %1787 = vmatpush2.msra.mxu0 0.0
    %1788 = vmatprep.subr.mxu0 0.0
    %1789 = vmatpush2.msra.mxu0 0.0
    %1790 = vmatprep.subr.mxu0 0.0
    %1791 = vmatpush2.msra.mxu0 0.0
    %1792 = vmatprep.subr.mxu0 0.0
    %1793 = vmatpush2.msra.mxu0 0.0
    %1794 = vmatprep.subr.mxu0 0.0
    %1795 = vmatpush2.msra.mxu0 0.0
    %1796 = vmatprep.subr.mxu0 0.0
    %1797 = vmatpush2.msra.mxu0 0.0
    %1798 = vmatprep.subr.mxu0 0.0
    %1799 = vmatpush2.msra.mxu0 0.0
    %1800 = vmatprep.subr.mxu0 0.0
    %1801 = vmatpush2.msra.mxu0 0.0
    %1802 = vmatprep.subr.mxu0 0.0
    %1803 = vmatpush2.msra.mxu0 0.0
    %1804 = vmatprep.subr.mxu0 0.0
    %1805 = vmatpush2.msra.mxu0 0.0
    %1806 = vmatprep.subr.mxu0 0.0
    %1807 = vmatpush2.msra.mxu0 0.0
    %1808 = vmatprep.mubr.f32.mxu0 0.0
    %v1809 = vand.u32 %v50, 4294901760
    %1810 = vmatmul.mubr.f32.gmra.mxu0 %v1809
    %v1811 = vpop.f32.mrf.mxu0
    %v1812 = vadd.f32 %v1735, %v1811
    %v1813 = vpop.f32.mrf.mxu0
    %1814 = vdwg.mxu0
    %1815 = vmatprep.subr.mxu0 0.0
    %1816 = vmatpush1.msra.mxu0 0.0
    %1817 = vmatprep.subr.mxu0 0.0
    %1818 = vmatpush1.msra.mxu0 0.0
    %1819 = vmatprep.subr.mxu0 0.0
    %1820 = vmatpush1.msra.mxu0 0.0
    %1821 = vmatprep.subr.mxu0 0.0
    %1822 = vmatpush1.msra.mxu0 0.0
    %1823 = vmatprep.subr.mxu0 0.0
    %1824 = vmatpush1.msra.mxu0 0.0
    %1825 = vmatprep.subr.mxu0 0.0
    %1826 = vmatpush1.msra.mxu0 0.0
    %1827 = vmatprep.subr.mxu0 0.0
    %1828 = vmatpush1.msra.mxu0 0.0
    %1829 = vmatprep.subr.mxu0 0.0
    %1830 = vmatpush1.msra.mxu0 0.0
    %1831 = vmatprep.subr.mxu0 0.0
    %1832 = vmatpush1.msra.mxu0 0.0
    %1833 = vmatprep.subr.mxu0 0.0
    %1834 = vmatpush1.msra.mxu0 0.0
    %1835 = vmatprep.subr.mxu0 0.0
    %1836 = vmatpush1.msra.mxu0 0.0
    %1837 = vmatprep.subr.mxu0 0.0
    %1838 = vmatpush1.msra.mxu0 0.0
    %1839 = vmatprep.subr.mxu0 0.0
    %1840 = vmatpush1.msra.mxu0 0.0
    %1841 = vmatprep.subr.mxu0 0.0
    %1842 = vmatpush1.msra.mxu0 0.0
    %1843 = vmatprep.subr.mxu0 0.0
    %v1844 = vand.u32 %v36, 4294901760
    %1845 = vmatpush1.msra.mxu0 %v1844
    %1846 = vmatprep.subr.mxu0 0.0
    %v1847 = vand.u32 %v35, 4294901760
    %1848 = vmatpush1.msra.mxu0 %v1847
    %1849 = vmatprep.subr.mxu0 0.0
    %1850 = vmatpush2.msra.mxu0 0.0
    %1851 = vmatprep.subr.mxu0 0.0
    %1852 = vmatpush2.msra.mxu0 0.0
    %1853 = vmatprep.subr.mxu0 0.0
    %1854 = vmatpush2.msra.mxu0 0.0
    %1855 = vmatprep.subr.mxu0 0.0
    %1856 = vmatpush2.msra.mxu0 0.0
    %1857 = vmatprep.subr.mxu0 0.0
    %1858 = vmatpush2.msra.mxu0 0.0
    %1859 = vmatprep.subr.mxu0 0.0
    %1860 = vmatpush2.msra.mxu0 0.0
    %1861 = vmatprep.subr.mxu0 0.0
    %1862 = vmatpush2.msra.mxu0 0.0
    %1863 = vmatprep.subr.mxu0 0.0
    %1864 = vmatpush2.msra.mxu0 0.0
    %1865 = vmatprep.subr.mxu0 0.0
    %1866 = vmatpush2.msra.mxu0 0.0
    %1867 = vmatprep.subr.mxu0 0.0
    %1868 = vmatpush2.msra.mxu0 0.0
    %1869 = vmatprep.subr.mxu0 0.0
    %1870 = vmatpush2.msra.mxu0 0.0
    %1871 = vmatprep.subr.mxu0 0.0
    %1872 = vmatpush2.msra.mxu0 0.0
    %1873 = vmatprep.subr.mxu0 0.0
    %1874 = vmatpush2.msra.mxu0 0.0
    %1875 = vmatprep.subr.mxu0 0.0
    %1876 = vmatpush2.msra.mxu0 0.0
    %1877 = vmatprep.subr.mxu0 0.0
    %1878 = vmatpush2.msra.mxu0 0.0
    %1879 = vmatprep.subr.mxu0 0.0
    %1880 = vmatpush2.msra.mxu0 0.0
    %1881 = vmatprep.mubr.f32.mxu0 0.0
    %v1882 = vand.u32 %v50, 4294901760
    %1883 = vmatmul.mubr.f32.gmra.mxu0 %v1882
    %v1884 = vpop.f32.mrf.mxu0
    %v1885 = vadd.f32 %v1812, %v1884
    %v1886 = vpop.f32.mrf.mxu0
    %1887 = vdwg.mxu0
    %1888 = vmatprep.subr.mxu0 0.0
    %1889 = vmatpush1.msra.mxu0 0.0
    %1890 = vmatprep.subr.mxu0 0.0
    %1891 = vmatpush1.msra.mxu0 0.0
    %1892 = vmatprep.subr.mxu0 0.0
    %1893 = vmatpush1.msra.mxu0 0.0
    %1894 = vmatprep.subr.mxu0 0.0
    %1895 = vmatpush1.msra.mxu0 0.0
    %1896 = vmatprep.subr.mxu0 0.0
    %1897 = vmatpush1.msra.mxu0 0.0
    %1898 = vmatprep.subr.mxu0 0.0
    %1899 = vmatpush1.msra.mxu0 0.0
    %1900 = vmatprep.subr.mxu0 0.0
    %1901 = vmatpush1.msra.mxu0 0.0
    %1902 = vmatprep.subr.mxu0 0.0
    %1903 = vmatpush1.msra.mxu0 0.0
    %1904 = vmatprep.subr.mxu0 0.0
    %1905 = vmatpush1.msra.mxu0 0.0
    %1906 = vmatprep.subr.mxu0 0.0
    %1907 = vmatpush1.msra.mxu0 0.0
    %1908 = vmatprep.subr.mxu0 0.0
    %1909 = vmatpush1.msra.mxu0 0.0
    %1910 = vmatprep.subr.mxu0 0.0
    %1911 = vmatpush1.msra.mxu0 0.0
    %1912 = vmatprep.subr.mxu0 0.0
    %1913 = vmatpush1.msra.mxu0 0.0
    %1914 = vmatprep.subr.mxu0 0.0
    %1915 = vmatpush1.msra.mxu0 0.0
    %1916 = vmatprep.subr.mxu0 0.0
    %v1917 = vand.u32 %v38, 4294901760
    %1918 = vmatpush1.msra.mxu0 %v1917
    %1919 = vmatprep.subr.mxu0 0.0
    %v1920 = vand.u32 %v37, 4294901760
    %1921 = vmatpush1.msra.mxu0 %v1920
    %1922 = vmatprep.subr.mxu0 0.0
    %1923 = vmatpush2.msra.mxu0 0.0
    %1924 = vmatprep.subr.mxu0 0.0
    %1925 = vmatpush2.msra.mxu0 0.0
    %1926 = vmatprep.subr.mxu0 0.0
    %1927 = vmatpush2.msra.mxu0 0.0
    %1928 = vmatprep.subr.mxu0 0.0
    %1929 = vmatpush2.msra.mxu0 0.0
    %1930 = vmatprep.subr.mxu0 0.0
    %1931 = vmatpush2.msra.mxu0 0.0
    %1932 = vmatprep.subr.mxu0 0.0
    %1933 = vmatpush2.msra.mxu0 0.0
    %1934 = vmatprep.subr.mxu0 0.0
    %1935 = vmatpush2.msra.mxu0 0.0
    %1936 = vmatprep.subr.mxu0 0.0
    %1937 = vmatpush2.msra.mxu0 0.0
    %1938 = vmatprep.subr.mxu0 0.0
    %1939 = vmatpush2.msra.mxu0 0.0
    %1940 = vmatprep.subr.mxu0 0.0
    %1941 = vmatpush2.msra.mxu0 0.0
    %1942 = vmatprep.subr.mxu0 0.0
    %1943 = vmatpush2.msra.mxu0 0.0
    %1944 = vmatprep.subr.mxu0 0.0
    %1945 = vmatpush2.msra.mxu0 0.0
    %1946 = vmatprep.subr.mxu0 0.0
    %1947 = vmatpush2.msra.mxu0 0.0
    %1948 = vmatprep.subr.mxu0 0.0
    %1949 = vmatpush2.msra.mxu0 0.0
    %1950 = vmatprep.subr.mxu0 0.0
    %1951 = vmatpush2.msra.mxu0 0.0
    %1952 = vmatprep.subr.mxu0 0.0
    %1953 = vmatpush2.msra.mxu0 0.0
    %1954 = vmatprep.mubr.f32.mxu0 0.0
    %v1955 = vand.u32 %v50, 4294901760
    %v1956 = vsub.f32 %v50, %v1955
    %v1957 = vand.u32 %v1956, 4294901760
    %v1958 = vsub.f32 %v1956, %v1957
    %v1959 = vand.u32 %v1958, 4294901760
    %1960 = vmatmul.mubr.f32.gmra.mxu0 %v1959
    %v1961 = vpop.f32.mrf.mxu0
    %v1962 = vadd.f32 0.0, %v1961
    %v1963 = vpop.f32.mrf.mxu0
    %1964 = vdwg.mxu0
    %1965 = vmatprep.subr.mxu0 0.0
    %1966 = vmatpush1.msra.mxu0 0.0
    %1967 = vmatprep.subr.mxu0 0.0
    %1968 = vmatpush1.msra.mxu0 0.0
    %1969 = vmatprep.subr.mxu0 0.0
    %1970 = vmatpush1.msra.mxu0 0.0
    %1971 = vmatprep.subr.mxu0 0.0
    %1972 = vmatpush1.msra.mxu0 0.0
    %1973 = vmatprep.subr.mxu0 0.0
    %1974 = vmatpush1.msra.mxu0 0.0
    %1975 = vmatprep.subr.mxu0 0.0
    %1976 = vmatpush1.msra.mxu0 0.0
    %1977 = vmatprep.subr.mxu0 0.0
    %1978 = vmatpush1.msra.mxu0 0.0
    %1979 = vmatprep.subr.mxu0 0.0
    %1980 = vmatpush1.msra.mxu0 0.0
    %1981 = vmatprep.subr.mxu0 0.0
    %1982 = vmatpush1.msra.mxu0 0.0
    %1983 = vmatprep.subr.mxu0 0.0
    %1984 = vmatpush1.msra.mxu0 0.0
    %1985 = vmatprep.subr.mxu0 0.0
    %1986 = vmatpush1.msra.mxu0 0.0
    %1987 = vmatprep.subr.mxu0 0.0
    %1988 = vmatpush1.msra.mxu0 0.0
    %1989 = vmatprep.subr.mxu0 0.0
    %1990 = vmatpush1.msra.mxu0 0.0
    %1991 = vmatprep.subr.mxu0 0.0
    %1992 = vmatpush1.msra.mxu0 0.0
    %1993 = vmatprep.subr.mxu0 0.0
    %v1994 = vand.u32 %v38, 4294901760
    %v1995 = vsub.f32 %v38, %v1994
    %v1996 = vand.u32 %v1995, 4294901760
    %v1997 = vsub.f32 %v1995, %v1996
    %v1998 = vand.u32 %v1997, 4294901760
    %1999 = vmatpush1.msra.mxu0 %v1998
    %2000 = vmatprep.subr.mxu0 0.0
    %v2001 = vand.u32 %v37, 4294901760
    %v2002 = vsub.f32 %v37, %v2001
    %v2003 = vand.u32 %v2002, 4294901760
    %v2004 = vsub.f32 %v2002, %v2003
    %v2005 = vand.u32 %v2004, 4294901760
    %2006 = vmatpush1.msra.mxu0 %v2005
    %2007 = vmatprep.subr.mxu0 0.0
    %2008 = vmatpush2.msra.mxu0 0.0
    %2009 = vmatprep.subr.mxu0 0.0
    %2010 = vmatpush2.msra.mxu0 0.0
    %2011 = vmatprep.subr.mxu0 0.0
    %2012 = vmatpush2.msra.mxu0 0.0
    %2013 = vmatprep.subr.mxu0 0.0
    %2014 = vmatpush2.msra.mxu0 0.0
    %2015 = vmatprep.subr.mxu0 0.0
    %2016 = vmatpush2.msra.mxu0 0.0
    %2017 = vmatprep.subr.mxu0 0.0
    %2018 = vmatpush2.msra.mxu0 0.0
    %2019 = vmatprep.subr.mxu0 0.0
    %2020 = vmatpush2.msra.mxu0 0.0
    %2021 = vmatprep.subr.mxu0 0.0
    %2022 = vmatpush2.msra.mxu0 0.0
    %2023 = vmatprep.subr.mxu0 0.0
    %2024 = vmatpush2.msra.mxu0 0.0
    %2025 = vmatprep.subr.mxu0 0.0
    %2026 = vmatpush2.msra.mxu0 0.0
    %2027 = vmatprep.subr.mxu0 0.0
    %2028 = vmatpush2.msra.mxu0 0.0
    %2029 = vmatprep.subr.mxu0 0.0
    %2030 = vmatpush2.msra.mxu0 0.0
    %2031 = vmatprep.subr.mxu0 0.0
    %2032 = vmatpush2.msra.mxu0 0.0
    %2033 = vmatprep.subr.mxu0 0.0
    %2034 = vmatpush2.msra.mxu0 0.0
    %2035 = vmatprep.subr.mxu0 0.0
    %2036 = vmatpush2.msra.mxu0 0.0
    %2037 = vmatprep.subr.mxu0 0.0
    %2038 = vmatpush2.msra.mxu0 0.0
    %2039 = vmatprep.mubr.f32.mxu0 0.0
    %v2040 = vand.u32 %v50, 4294901760
    %2041 = vmatmul.mubr.f32.gmra.mxu0 %v2040
    %v2042 = vpop.f32.mrf.mxu0
    %v2043 = vadd.f32 %v1962, %v2042
    %v2044 = vpop.f32.mrf.mxu0
    %2045 = vdwg.mxu0
    %2046 = vmatprep.subr.mxu0 0.0
    %2047 = vmatpush1.msra.mxu0 0.0
    %2048 = vmatprep.subr.mxu0 0.0
    %2049 = vmatpush1.msra.mxu0 0.0
    %2050 = vmatprep.subr.mxu0 0.0
    %2051 = vmatpush1.msra.mxu0 0.0
    %2052 = vmatprep.subr.mxu0 0.0
    %2053 = vmatpush1.msra.mxu0 0.0
    %2054 = vmatprep.subr.mxu0 0.0
    %2055 = vmatpush1.msra.mxu0 0.0
    %2056 = vmatprep.subr.mxu0 0.0
    %2057 = vmatpush1.msra.mxu0 0.0
    %2058 = vmatprep.subr.mxu0 0.0
    %2059 = vmatpush1.msra.mxu0 0.0
    %2060 = vmatprep.subr.mxu0 0.0
    %2061 = vmatpush1.msra.mxu0 0.0
    %2062 = vmatprep.subr.mxu0 0.0
    %2063 = vmatpush1.msra.mxu0 0.0
    %2064 = vmatprep.subr.mxu0 0.0
    %2065 = vmatpush1.msra.mxu0 0.0
    %2066 = vmatprep.subr.mxu0 0.0
    %2067 = vmatpush1.msra.mxu0 0.0
    %2068 = vmatprep.subr.mxu0 0.0
    %2069 = vmatpush1.msra.mxu0 0.0
    %2070 = vmatprep.subr.mxu0 0.0
    %2071 = vmatpush1.msra.mxu0 0.0
    %2072 = vmatprep.subr.mxu0 0.0
    %2073 = vmatpush1.msra.mxu0 0.0
    %2074 = vmatprep.subr.mxu0 0.0
    %v2075 = vand.u32 %v38, 4294901760
    %v2076 = vsub.f32 %v38, %v2075
    %2077 = vmatpush1.msra.mxu0 %v2076
    %2078 = vmatprep.subr.mxu0 0.0
    %v2079 = vand.u32 %v37, 4294901760
    %v2080 = vsub.f32 %v37, %v2079
    %2081 = vmatpush1.msra.mxu0 %v2080
    %2082 = vmatprep.subr.mxu0 0.0
    %2083 = vmatpush2.msra.mxu0 0.0
    %2084 = vmatprep.subr.mxu0 0.0
    %2085 = vmatpush2.msra.mxu0 0.0
    %2086 = vmatprep.subr.mxu0 0.0
    %2087 = vmatpush2.msra.mxu0 0.0
    %2088 = vmatprep.subr.mxu0 0.0
    %2089 = vmatpush2.msra.mxu0 0.0
    %2090 = vmatprep.subr.mxu0 0.0
    %2091 = vmatpush2.msra.mxu0 0.0
    %2092 = vmatprep.subr.mxu0 0.0
    %2093 = vmatpush2.msra.mxu0 0.0
    %2094 = vmatprep.subr.mxu0 0.0
    %2095 = vmatpush2.msra.mxu0 0.0
    %2096 = vmatprep.subr.mxu0 0.0
    %2097 = vmatpush2.msra.mxu0 0.0
    %2098 = vmatprep.subr.mxu0 0.0
    %2099 = vmatpush2.msra.mxu0 0.0
    %2100 = vmatprep.subr.mxu0 0.0
    %2101 = vmatpush2.msra.mxu0 0.0
    %2102 = vmatprep.subr.mxu0 0.0
    %2103 = vmatpush2.msra.mxu0 0.0
    %2104 = vmatprep.subr.mxu0 0.0
    %2105 = vmatpush2.msra.mxu0 0.0
    %2106 = vmatprep.subr.mxu0 0.0
    %2107 = vmatpush2.msra.mxu0 0.0
    %2108 = vmatprep.subr.mxu0 0.0
    %2109 = vmatpush2.msra.mxu0 0.0
    %2110 = vmatprep.subr.mxu0 0.0
    %2111 = vmatpush2.msra.mxu0 0.0
    %2112 = vmatprep.subr.mxu0 0.0
    %2113 = vmatpush2.msra.mxu0 0.0
    %2114 = vmatprep.mubr.f32.mxu0 0.0
    %v2115 = vand.u32 %v50, 4294901760
    %v2116 = vsub.f32 %v50, %v2115
    %2117 = vmatmul.mubr.f32.gmra.mxu0 %v2116
    %v2118 = vpop.f32.mrf.mxu0
    %v2119 = vadd.f32 %v2043, %v2118
    %v2120 = vpop.f32.mrf.mxu0
    %2121 = vdwg.mxu0
    %2122 = vmatprep.subr.mxu0 0.0
    %2123 = vmatpush1.msra.mxu0 0.0
    %2124 = vmatprep.subr.mxu0 0.0
    %2125 = vmatpush1.msra.mxu0 0.0
    %2126 = vmatprep.subr.mxu0 0.0
    %2127 = vmatpush1.msra.mxu0 0.0
    %2128 = vmatprep.subr.mxu0 0.0
    %2129 = vmatpush1.msra.mxu0 0.0
    %2130 = vmatprep.subr.mxu0 0.0
    %2131 = vmatpush1.msra.mxu0 0.0
    %2132 = vmatprep.subr.mxu0 0.0
    %2133 = vmatpush1.msra.mxu0 0.0
    %2134 = vmatprep.subr.mxu0 0.0
    %2135 = vmatpush1.msra.mxu0 0.0
    %2136 = vmatprep.subr.mxu0 0.0
    %2137 = vmatpush1.msra.mxu0 0.0
    %2138 = vmatprep.subr.mxu0 0.0
    %2139 = vmatpush1.msra.mxu0 0.0
    %2140 = vmatprep.subr.mxu0 0.0
    %2141 = vmatpush1.msra.mxu0 0.0
    %2142 = vmatprep.subr.mxu0 0.0
    %2143 = vmatpush1.msra.mxu0 0.0
    %2144 = vmatprep.subr.mxu0 0.0
    %2145 = vmatpush1.msra.mxu0 0.0
    %2146 = vmatprep.subr.mxu0 0.0
    %2147 = vmatpush1.msra.mxu0 0.0
    %2148 = vmatprep.subr.mxu0 0.0
    %2149 = vmatpush1.msra.mxu0 0.0
    %2150 = vmatprep.subr.mxu0 0.0
    %v2151 = vand.u32 %v38, 4294901760
    %2152 = vmatpush1.msra.mxu0 %v2151
    %2153 = vmatprep.subr.mxu0 0.0
    %v2154 = vand.u32 %v37, 4294901760
    %2155 = vmatpush1.msra.mxu0 %v2154
    %2156 = vmatprep.subr.mxu0 0.0
    %2157 = vmatpush2.msra.mxu0 0.0
    %2158 = vmatprep.subr.mxu0 0.0
    %2159 = vmatpush2.msra.mxu0 0.0
    %2160 = vmatprep.subr.mxu0 0.0
    %2161 = vmatpush2.msra.mxu0 0.0
    %2162 = vmatprep.subr.mxu0 0.0
    %2163 = vmatpush2.msra.mxu0 0.0
    %2164 = vmatprep.subr.mxu0 0.0
    %2165 = vmatpush2.msra.mxu0 0.0
    %2166 = vmatprep.subr.mxu0 0.0
    %2167 = vmatpush2.msra.mxu0 0.0
    %2168 = vmatprep.subr.mxu0 0.0
    %2169 = vmatpush2.msra.mxu0 0.0
    %2170 = vmatprep.subr.mxu0 0.0
    %2171 = vmatpush2.msra.mxu0 0.0
    %2172 = vmatprep.subr.mxu0 0.0
    %2173 = vmatpush2.msra.mxu0 0.0
    %2174 = vmatprep.subr.mxu0 0.0
    %2175 = vmatpush2.msra.mxu0 0.0
    %2176 = vmatprep.subr.mxu0 0.0
    %2177 = vmatpush2.msra.mxu0 0.0
    %2178 = vmatprep.subr.mxu0 0.0
    %2179 = vmatpush2.msra.mxu0 0.0
    %2180 = vmatprep.subr.mxu0 0.0
    %2181 = vmatpush2.msra.mxu0 0.0
    %2182 = vmatprep.subr.mxu0 0.0
    %2183 = vmatpush2.msra.mxu0 0.0
    %2184 = vmatprep.subr.mxu0 0.0
    %2185 = vmatpush2.msra.mxu0 0.0
    %2186 = vmatprep.subr.mxu0 0.0
    %2187 = vmatpush2.msra.mxu0 0.0
    %2188 = vmatprep.mubr.f32.mxu0 0.0
    %v2189 = vand.u32 %v50, 4294901760
    %v2190 = vsub.f32 %v50, %v2189
    %v2191 = vand.u32 %v2190, 4294901760
    %2192 = vmatmul.mubr.f32.gmra.mxu0 %v2191
    %v2193 = vpop.f32.mrf.mxu0
    %v2194 = vadd.f32 %v2119, %v2193
    %v2195 = vpop.f32.mrf.mxu0
    %2196 = vdwg.mxu0
    %2197 = vmatprep.subr.mxu0 0.0
    %2198 = vmatpush1.msra.mxu0 0.0
    %2199 = vmatprep.subr.mxu0 0.0
    %2200 = vmatpush1.msra.mxu0 0.0
    %2201 = vmatprep.subr.mxu0 0.0
    %2202 = vmatpush1.msra.mxu0 0.0
    %2203 = vmatprep.subr.mxu0 0.0
    %2204 = vmatpush1.msra.mxu0 0.0
    %2205 = vmatprep.subr.mxu0 0.0
    %2206 = vmatpush1.msra.mxu0 0.0
    %2207 = vmatprep.subr.mxu0 0.0
    %2208 = vmatpush1.msra.mxu0 0.0
    %2209 = vmatprep.subr.mxu0 0.0
    %2210 = vmatpush1.msra.mxu0 0.0
    %2211 = vmatprep.subr.mxu0 0.0
    %2212 = vmatpush1.msra.mxu0 0.0
    %2213 = vmatprep.subr.mxu0 0.0
    %2214 = vmatpush1.msra.mxu0 0.0
    %2215 = vmatprep.subr.mxu0 0.0
    %2216 = vmatpush1.msra.mxu0 0.0
    %2217 = vmatprep.subr.mxu0 0.0
    %2218 = vmatpush1.msra.mxu0 0.0
    %2219 = vmatprep.subr.mxu0 0.0
    %2220 = vmatpush1.msra.mxu0 0.0
    %2221 = vmatprep.subr.mxu0 0.0
    %2222 = vmatpush1.msra.mxu0 0.0
    %2223 = vmatprep.subr.mxu0 0.0
    %2224 = vmatpush1.msra.mxu0 0.0
    %2225 = vmatprep.subr.mxu0 0.0
    %v2226 = vand.u32 %v38, 4294901760
    %v2227 = vsub.f32 %v38, %v2226
    %v2228 = vand.u32 %v2227, 4294901760
    %2229 = vmatpush1.msra.mxu0 %v2228
    %2230 = vmatprep.subr.mxu0 0.0
    %v2231 = vand.u32 %v37, 4294901760
    %v2232 = vsub.f32 %v37, %v2231
    %v2233 = vand.u32 %v2232, 4294901760
    %2234 = vmatpush1.msra.mxu0 %v2233
    %2235 = vmatprep.subr.mxu0 0.0
    %2236 = vmatpush2.msra.mxu0 0.0
    %2237 = vmatprep.subr.mxu0 0.0
    %2238 = vmatpush2.msra.mxu0 0.0
    %2239 = vmatprep.subr.mxu0 0.0
    %2240 = vmatpush2.msra.mxu0 0.0
    %2241 = vmatprep.subr.mxu0 0.0
    %2242 = vmatpush2.msra.mxu0 0.0
    %2243 = vmatprep.subr.mxu0 0.0
    %2244 = vmatpush2.msra.mxu0 0.0
    %2245 = vmatprep.subr.mxu0 0.0
    %2246 = vmatpush2.msra.mxu0 0.0
    %2247 = vmatprep.subr.mxu0 0.0
    %2248 = vmatpush2.msra.mxu0 0.0
    %2249 = vmatprep.subr.mxu0 0.0
    %2250 = vmatpush2.msra.mxu0 0.0
    %2251 = vmatprep.subr.mxu0 0.0
    %2252 = vmatpush2.msra.mxu0 0.0
    %2253 = vmatprep.subr.mxu0 0.0
    %2254 = vmatpush2.msra.mxu0 0.0
    %2255 = vmatprep.subr.mxu0 0.0
    %2256 = vmatpush2.msra.mxu0 0.0
    %2257 = vmatprep.subr.mxu0 0.0
    %2258 = vmatpush2.msra.mxu0 0.0
    %2259 = vmatprep.subr.mxu0 0.0
    %2260 = vmatpush2.msra.mxu0 0.0
    %2261 = vmatprep.subr.mxu0 0.0
    %2262 = vmatpush2.msra.mxu0 0.0
    %2263 = vmatprep.subr.mxu0 0.0
    %2264 = vmatpush2.msra.mxu0 0.0
    %2265 = vmatprep.subr.mxu0 0.0
    %2266 = vmatpush2.msra.mxu0 0.0
    %2267 = vmatprep.mubr.f32.mxu0 0.0
    %v2268 = vand.u32 %v50, 4294901760
    %2269 = vmatmul.mubr.f32.gmra.mxu0 %v2268
    %v2270 = vpop.f32.mrf.mxu0
    %v2271 = vadd.f32 %v2194, %v2270
    %v2272 = vpop.f32.mrf.mxu0
    %2273 = vdwg.mxu0
    %2274 = vmatprep.subr.mxu0 0.0
    %2275 = vmatpush1.msra.mxu0 0.0
    %2276 = vmatprep.subr.mxu0 0.0
    %2277 = vmatpush1.msra.mxu0 0.0
    %2278 = vmatprep.subr.mxu0 0.0
    %2279 = vmatpush1.msra.mxu0 0.0
    %2280 = vmatprep.subr.mxu0 0.0
    %2281 = vmatpush1.msra.mxu0 0.0
    %2282 = vmatprep.subr.mxu0 0.0
    %2283 = vmatpush1.msra.mxu0 0.0
    %2284 = vmatprep.subr.mxu0 0.0
    %2285 = vmatpush1.msra.mxu0 0.0
    %2286 = vmatprep.subr.mxu0 0.0
    %2287 = vmatpush1.msra.mxu0 0.0
    %2288 = vmatprep.subr.mxu0 0.0
    %2289 = vmatpush1.msra.mxu0 0.0
    %2290 = vmatprep.subr.mxu0 0.0
    %2291 = vmatpush1.msra.mxu0 0.0
    %2292 = vmatprep.subr.mxu0 0.0
    %2293 = vmatpush1.msra.mxu0 0.0
    %2294 = vmatprep.subr.mxu0 0.0
    %2295 = vmatpush1.msra.mxu0 0.0
    %2296 = vmatprep.subr.mxu0 0.0
    %2297 = vmatpush1.msra.mxu0 0.0
    %2298 = vmatprep.subr.mxu0 0.0
    %2299 = vmatpush1.msra.mxu0 0.0
    %2300 = vmatprep.subr.mxu0 0.0
    %2301 = vmatpush1.msra.mxu0 0.0
    %2302 = vmatprep.subr.mxu0 0.0
    %v2303 = vand.u32 %v38, 4294901760
    %2304 = vmatpush1.msra.mxu0 %v2303
    %2305 = vmatprep.subr.mxu0 0.0
    %v2306 = vand.u32 %v37, 4294901760
    %2307 = vmatpush1.msra.mxu0 %v2306
    %2308 = vmatprep.subr.mxu0 0.0
    %2309 = vmatpush2.msra.mxu0 0.0
    %2310 = vmatprep.subr.mxu0 0.0
    %2311 = vmatpush2.msra.mxu0 0.0
    %2312 = vmatprep.subr.mxu0 0.0
    %2313 = vmatpush2.msra.mxu0 0.0
    %2314 = vmatprep.subr.mxu0 0.0
    %2315 = vmatpush2.msra.mxu0 0.0
    %2316 = vmatprep.subr.mxu0 0.0
    %2317 = vmatpush2.msra.mxu0 0.0
    %2318 = vmatprep.subr.mxu0 0.0
    %2319 = vmatpush2.msra.mxu0 0.0
    %2320 = vmatprep.subr.mxu0 0.0
    %2321 = vmatpush2.msra.mxu0 0.0
    %2322 = vmatprep.subr.mxu0 0.0
    %2323 = vmatpush2.msra.mxu0 0.0
    %2324 = vmatprep.subr.mxu0 0.0
    %2325 = vmatpush2.msra.mxu0 0.0
    %2326 = vmatprep.subr.mxu0 0.0
    %2327 = vmatpush2.msra.mxu0 0.0
    %2328 = vmatprep.subr.mxu0 0.0
    %2329 = vmatpush2.msra.mxu0 0.0
    %2330 = vmatprep.subr.mxu0 0.0
    %2331 = vmatpush2.msra.mxu0 0.0
    %2332 = vmatprep.subr.mxu0 0.0
    %2333 = vmatpush2.msra.mxu0 0.0
    %2334 = vmatprep.subr.mxu0 0.0
    %2335 = vmatpush2.msra.mxu0 0.0
    %2336 = vmatprep.subr.mxu0 0.0
    %2337 = vmatpush2.msra.mxu0 0.0
    %2338 = vmatprep.subr.mxu0 0.0
    %2339 = vmatpush2.msra.mxu0 0.0
    %2340 = vmatprep.mubr.f32.mxu0 0.0
    %v2341 = vand.u32 %v50, 4294901760
    %2342 = vmatmul.mubr.f32.gmra.mxu0 %v2341
    %v2343 = vpop.f32.mrf.mxu0
    %v2344 = vadd.f32 %v2271, %v2343
    %v2345 = vpop.f32.mrf.mxu0
    %2346 = vdwg.mxu0
    %2347 = vmatprep.subr.mxu0 0.0
    %2348 = vmatpush1.msra.mxu0 0.0
    %2349 = vmatprep.subr.mxu0 0.0
    %2350 = vmatpush1.msra.mxu0 0.0
    %2351 = vmatprep.subr.mxu0 0.0
    %2352 = vmatpush1.msra.mxu0 0.0
    %2353 = vmatprep.subr.mxu0 0.0
    %2354 = vmatpush1.msra.mxu0 0.0
    %2355 = vmatprep.subr.mxu0 0.0
    %2356 = vmatpush1.msra.mxu0 0.0
    %2357 = vmatprep.subr.mxu0 0.0
    %2358 = vmatpush1.msra.mxu0 0.0
    %2359 = vmatprep.subr.mxu0 0.0
    %2360 = vmatpush1.msra.mxu0 0.0
    %2361 = vmatprep.subr.mxu0 0.0
    %2362 = vmatpush1.msra.mxu0 0.0
    %2363 = vmatprep.subr.mxu0 0.0
    %2364 = vmatpush1.msra.mxu0 0.0
    %2365 = vmatprep.subr.mxu0 0.0
    %2366 = vmatpush1.msra.mxu0 0.0
    %2367 = vmatprep.subr.mxu0 0.0
    %2368 = vmatpush1.msra.mxu0 0.0
    %2369 = vmatprep.subr.mxu0 0.0
    %2370 = vmatpush1.msra.mxu0 0.0
    %2371 = vmatprep.subr.mxu0 0.0
    %2372 = vmatpush1.msra.mxu0 0.0
    %2373 = vmatprep.subr.mxu0 0.0
    %2374 = vmatpush1.msra.mxu0 0.0
    %2375 = vmatprep.subr.mxu0 0.0
    %v2376 = vand.u32 %v40, 4294901760
    %2377 = vmatpush1.msra.mxu0 %v2376
    %2378 = vmatprep.subr.mxu0 0.0
    %v2379 = vand.u32 %v39, 4294901760
    %2380 = vmatpush1.msra.mxu0 %v2379
    %2381 = vmatprep.subr.mxu0 0.0
    %2382 = vmatpush2.msra.mxu0 0.0
    %2383 = vmatprep.subr.mxu0 0.0
    %2384 = vmatpush2.msra.mxu0 0.0
    %2385 = vmatprep.subr.mxu0 0.0
    %2386 = vmatpush2.msra.mxu0 0.0
    %2387 = vmatprep.subr.mxu0 0.0
    %2388 = vmatpush2.msra.mxu0 0.0
    %2389 = vmatprep.subr.mxu0 0.0
    %2390 = vmatpush2.msra.mxu0 0.0
    %2391 = vmatprep.subr.mxu0 0.0
    %2392 = vmatpush2.msra.mxu0 0.0
    %2393 = vmatprep.subr.mxu0 0.0
    %2394 = vmatpush2.msra.mxu0 0.0
    %2395 = vmatprep.subr.mxu0 0.0
    %2396 = vmatpush2.msra.mxu0 0.0
    %2397 = vmatprep.subr.mxu0 0.0
    %2398 = vmatpush2.msra.mxu0 0.0
    %2399 = vmatprep.subr.mxu0 0.0
    %2400 = vmatpush2.msra.mxu0 0.0
    %2401 = vmatprep.subr.mxu0 0.0
    %2402 = vmatpush2.msra.mxu0 0.0
    %2403 = vmatprep.subr.mxu0 0.0
    %2404 = vmatpush2.msra.mxu0 0.0
    %2405 = vmatprep.subr.mxu0 0.0
    %2406 = vmatpush2.msra.mxu0 0.0
    %2407 = vmatprep.subr.mxu0 0.0
    %2408 = vmatpush2.msra.mxu0 0.0
    %2409 = vmatprep.subr.mxu0 0.0
    %2410 = vmatpush2.msra.mxu0 0.0
    %2411 = vmatprep.subr.mxu0 0.0
    %2412 = vmatpush2.msra.mxu0 0.0
    %2413 = vmatprep.mubr.f32.mxu0 0.0
    %v2414 = vand.u32 %v50, 4294901760
    %v2415 = vsub.f32 %v50, %v2414
    %v2416 = vand.u32 %v2415, 4294901760
    %v2417 = vsub.f32 %v2415, %v2416
    %v2418 = vand.u32 %v2417, 4294901760
    %2419 = vmatmul.mubr.f32.gmra.mxu0 %v2418
    %v2420 = vpop.f32.mrf.mxu0
    %v2421 = vadd.f32 0.0, %v2420
    %v2422 = vpop.f32.mrf.mxu0
    %2423 = vdwg.mxu0
    %2424 = vmatprep.subr.mxu0 0.0
    %2425 = vmatpush1.msra.mxu0 0.0
    %2426 = vmatprep.subr.mxu0 0.0
    %2427 = vmatpush1.msra.mxu0 0.0
    %2428 = vmatprep.subr.mxu0 0.0
    %2429 = vmatpush1.msra.mxu0 0.0
    %2430 = vmatprep.subr.mxu0 0.0
    %2431 = vmatpush1.msra.mxu0 0.0
    %2432 = vmatprep.subr.mxu0 0.0
    %2433 = vmatpush1.msra.mxu0 0.0
    %2434 = vmatprep.subr.mxu0 0.0
    %2435 = vmatpush1.msra.mxu0 0.0
    %2436 = vmatprep.subr.mxu0 0.0
    %2437 = vmatpush1.msra.mxu0 0.0
    %2438 = vmatprep.subr.mxu0 0.0
    %2439 = vmatpush1.msra.mxu0 0.0
    %2440 = vmatprep.subr.mxu0 0.0
    %2441 = vmatpush1.msra.mxu0 0.0
    %2442 = vmatprep.subr.mxu0 0.0
    %2443 = vmatpush1.msra.mxu0 0.0
    %2444 = vmatprep.subr.mxu0 0.0
    %2445 = vmatpush1.msra.mxu0 0.0
    %2446 = vmatprep.subr.mxu0 0.0
    %2447 = vmatpush1.msra.mxu0 0.0
    %2448 = vmatprep.subr.mxu0 0.0
    %2449 = vmatpush1.msra.mxu0 0.0
    %2450 = vmatprep.subr.mxu0 0.0
    %2451 = vmatpush1.msra.mxu0 0.0
    %2452 = vmatprep.subr.mxu0 0.0
    %v2453 = vand.u32 %v40, 4294901760
    %v2454 = vsub.f32 %v40, %v2453
    %v2455 = vand.u32 %v2454, 4294901760
    %v2456 = vsub.f32 %v2454, %v2455
    %v2457 = vand.u32 %v2456, 4294901760
    %2458 = vmatpush1.msra.mxu0 %v2457
    %2459 = vmatprep.subr.mxu0 0.0
    %v2460 = vand.u32 %v39, 4294901760
    %v2461 = vsub.f32 %v39, %v2460
    %v2462 = vand.u32 %v2461, 4294901760
    %v2463 = vsub.f32 %v2461, %v2462
    %v2464 = vand.u32 %v2463, 4294901760
    %2465 = vmatpush1.msra.mxu0 %v2464
    %2466 = vmatprep.subr.mxu0 0.0
    %2467 = vmatpush2.msra.mxu0 0.0
    %2468 = vmatprep.subr.mxu0 0.0
    %2469 = vmatpush2.msra.mxu0 0.0
    %2470 = vmatprep.subr.mxu0 0.0
    %2471 = vmatpush2.msra.mxu0 0.0
    %2472 = vmatprep.subr.mxu0 0.0
    %2473 = vmatpush2.msra.mxu0 0.0
    %2474 = vmatprep.subr.mxu0 0.0
    %2475 = vmatpush2.msra.mxu0 0.0
    %2476 = vmatprep.subr.mxu0 0.0
    %2477 = vmatpush2.msra.mxu0 0.0
    %2478 = vmatprep.subr.mxu0 0.0
    %2479 = vmatpush2.msra.mxu0 0.0
    %2480 = vmatprep.subr.mxu0 0.0
    %2481 = vmatpush2.msra.mxu0 0.0
    %2482 = vmatprep.subr.mxu0 0.0
    %2483 = vmatpush2.msra.mxu0 0.0
    %2484 = vmatprep.subr.mxu0 0.0
    %2485 = vmatpush2.msra.mxu0 0.0
    %2486 = vmatprep.subr.mxu0 0.0
    %2487 = vmatpush2.msra.mxu0 0.0
    %2488 = vmatprep.subr.mxu0 0.0
    %2489 = vmatpush2.msra.mxu0 0.0
    %2490 = vmatprep.subr.mxu0 0.0
    %2491 = vmatpush2.msra.mxu0 0.0
    %2492 = vmatprep.subr.mxu0 0.0
    %2493 = vmatpush2.msra.mxu0 0.0
    %2494 = vmatprep.subr.mxu0 0.0
    %2495 = vmatpush2.msra.mxu0 0.0
    %2496 = vmatprep.subr.mxu0 0.0
    %2497 = vmatpush2.msra.mxu0 0.0
    %2498 = vmatprep.mubr.f32.mxu0 0.0
    %v2499 = vand.u32 %v50, 4294901760
    %2500 = vmatmul.mubr.f32.gmra.mxu0 %v2499
    %v2501 = vpop.f32.mrf.mxu0
    %v2502 = vadd.f32 %v2421, %v2501
    %v2503 = vpop.f32.mrf.mxu0
    %2504 = vdwg.mxu0
    %2505 = vmatprep.subr.mxu0 0.0
    %2506 = vmatpush1.msra.mxu0 0.0
    %2507 = vmatprep.subr.mxu0 0.0
    %2508 = vmatpush1.msra.mxu0 0.0
    %2509 = vmatprep.subr.mxu0 0.0
    %2510 = vmatpush1.msra.mxu0 0.0
    %2511 = vmatprep.subr.mxu0 0.0
    %2512 = vmatpush1.msra.mxu0 0.0
    %2513 = vmatprep.subr.mxu0 0.0
    %2514 = vmatpush1.msra.mxu0 0.0
    %2515 = vmatprep.subr.mxu0 0.0
    %2516 = vmatpush1.msra.mxu0 0.0
    %2517 = vmatprep.subr.mxu0 0.0
    %2518 = vmatpush1.msra.mxu0 0.0
    %2519 = vmatprep.subr.mxu0 0.0
    %2520 = vmatpush1.msra.mxu0 0.0
    %2521 = vmatprep.subr.mxu0 0.0
    %2522 = vmatpush1.msra.mxu0 0.0
    %2523 = vmatprep.subr.mxu0 0.0
    %2524 = vmatpush1.msra.mxu0 0.0
    %2525 = vmatprep.subr.mxu0 0.0
    %2526 = vmatpush1.msra.mxu0 0.0
    %2527 = vmatprep.subr.mxu0 0.0
    %2528 = vmatpush1.msra.mxu0 0.0
    %2529 = vmatprep.subr.mxu0 0.0
    %2530 = vmatpush1.msra.mxu0 0.0
    %2531 = vmatprep.subr.mxu0 0.0
    %2532 = vmatpush1.msra.mxu0 0.0
    %2533 = vmatprep.subr.mxu0 0.0
    %v2534 = vand.u32 %v40, 4294901760
    %v2535 = vsub.f32 %v40, %v2534
    %2536 = vmatpush1.msra.mxu0 %v2535
    %2537 = vmatprep.subr.mxu0 0.0
    %v2538 = vand.u32 %v39, 4294901760
    %v2539 = vsub.f32 %v39, %v2538
    %2540 = vmatpush1.msra.mxu0 %v2539
    %2541 = vmatprep.subr.mxu0 0.0
    %2542 = vmatpush2.msra.mxu0 0.0
    %2543 = vmatprep.subr.mxu0 0.0
    %2544 = vmatpush2.msra.mxu0 0.0
    %2545 = vmatprep.subr.mxu0 0.0
    %2546 = vmatpush2.msra.mxu0 0.0
    %2547 = vmatprep.subr.mxu0 0.0
    %2548 = vmatpush2.msra.mxu0 0.0
    %2549 = vmatprep.subr.mxu0 0.0
    %2550 = vmatpush2.msra.mxu0 0.0
    %2551 = vmatprep.subr.mxu0 0.0
    %2552 = vmatpush2.msra.mxu0 0.0
    %2553 = vmatprep.subr.mxu0 0.0
    %2554 = vmatpush2.msra.mxu0 0.0
    %2555 = vmatprep.subr.mxu0 0.0
    %2556 = vmatpush2.msra.mxu0 0.0
    %2557 = vmatprep.subr.mxu0 0.0
    %2558 = vmatpush2.msra.mxu0 0.0
    %2559 = vmatprep.subr.mxu0 0.0
    %2560 = vmatpush2.msra.mxu0 0.0
    %2561 = vmatprep.subr.mxu0 0.0
    %2562 = vmatpush2.msra.mxu0 0.0
    %2563 = vmatprep.subr.mxu0 0.0
    %2564 = vmatpush2.msra.mxu0 0.0
    %2565 = vmatprep.subr.mxu0 0.0
    %2566 = vmatpush2.msra.mxu0 0.0
    %2567 = vmatprep.subr.mxu0 0.0
    %2568 = vmatpush2.msra.mxu0 0.0
    %2569 = vmatprep.subr.mxu0 0.0
    %2570 = vmatpush2.msra.mxu0 0.0
    %2571 = vmatprep.subr.mxu0 0.0
    %2572 = vmatpush2.msra.mxu0 0.0
    %2573 = vmatprep.mubr.f32.mxu0 0.0
    %v2574 = vand.u32 %v50, 4294901760
    %v2575 = vsub.f32 %v50, %v2574
    %2576 = vmatmul.mubr.f32.gmra.mxu0 %v2575
    %v2577 = vpop.f32.mrf.mxu0
    %v2578 = vadd.f32 %v2502, %v2577
    %v2579 = vpop.f32.mrf.mxu0
    %2580 = vdwg.mxu0
    %2581 = vmatprep.subr.mxu0 0.0
    %2582 = vmatpush1.msra.mxu0 0.0
    %2583 = vmatprep.subr.mxu0 0.0
    %2584 = vmatpush1.msra.mxu0 0.0
    %2585 = vmatprep.subr.mxu0 0.0
    %2586 = vmatpush1.msra.mxu0 0.0
    %2587 = vmatprep.subr.mxu0 0.0
    %2588 = vmatpush1.msra.mxu0 0.0
    %2589 = vmatprep.subr.mxu0 0.0
    %2590 = vmatpush1.msra.mxu0 0.0
    %2591 = vmatprep.subr.mxu0 0.0
    %2592 = vmatpush1.msra.mxu0 0.0
    %2593 = vmatprep.subr.mxu0 0.0
    %2594 = vmatpush1.msra.mxu0 0.0
    %2595 = vmatprep.subr.mxu0 0.0
    %2596 = vmatpush1.msra.mxu0 0.0
    %2597 = vmatprep.subr.mxu0 0.0
    %2598 = vmatpush1.msra.mxu0 0.0
    %2599 = vmatprep.subr.mxu0 0.0
    %2600 = vmatpush1.msra.mxu0 0.0
    %2601 = vmatprep.subr.mxu0 0.0
    %2602 = vmatpush1.msra.mxu0 0.0
    %2603 = vmatprep.subr.mxu0 0.0
    %2604 = vmatpush1.msra.mxu0 0.0
    %2605 = vmatprep.subr.mxu0 0.0
    %2606 = vmatpush1.msra.mxu0 0.0
    %2607 = vmatprep.subr.mxu0 0.0
    %2608 = vmatpush1.msra.mxu0 0.0
    %2609 = vmatprep.subr.mxu0 0.0
    %v2610 = vand.u32 %v40, 4294901760
    %2611 = vmatpush1.msra.mxu0 %v2610
    %2612 = vmatprep.subr.mxu0 0.0
    %v2613 = vand.u32 %v39, 4294901760
    %2614 = vmatpush1.msra.mxu0 %v2613
    %2615 = vmatprep.subr.mxu0 0.0
    %2616 = vmatpush2.msra.mxu0 0.0
    %2617 = vmatprep.subr.mxu0 0.0
    %2618 = vmatpush2.msra.mxu0 0.0
    %2619 = vmatprep.subr.mxu0 0.0
    %2620 = vmatpush2.msra.mxu0 0.0
    %2621 = vmatprep.subr.mxu0 0.0
    %2622 = vmatpush2.msra.mxu0 0.0
    %2623 = vmatprep.subr.mxu0 0.0
    %2624 = vmatpush2.msra.mxu0 0.0
    %2625 = vmatprep.subr.mxu0 0.0
    %2626 = vmatpush2.msra.mxu0 0.0
    %2627 = vmatprep.subr.mxu0 0.0
    %2628 = vmatpush2.msra.mxu0 0.0
    %2629 = vmatprep.subr.mxu0 0.0
    %2630 = vmatpush2.msra.mxu0 0.0
    %2631 = vmatprep.subr.mxu0 0.0
    %2632 = vmatpush2.msra.mxu0 0.0
    %2633 = vmatprep.subr.mxu0 0.0
    %2634 = vmatpush2.msra.mxu0 0.0
    %2635 = vmatprep.subr.mxu0 0.0
    %2636 = vmatpush2.msra.mxu0 0.0
    %2637 = vmatprep.subr.mxu0 0.0
    %2638 = vmatpush2.msra.mxu0 0.0
    %2639 = vmatprep.subr.mxu0 0.0
    %2640 = vmatpush2.msra.mxu0 0.0
    %2641 = vmatprep.subr.mxu0 0.0
    %2642 = vmatpush2.msra.mxu0 0.0
    %2643 = vmatprep.subr.mxu0 0.0
    %2644 = vmatpush2.msra.mxu0 0.0
    %2645 = vmatprep.subr.mxu0 0.0
    %2646 = vmatpush2.msra.mxu0 0.0
    %2647 = vmatprep.mubr.f32.mxu0 0.0
    %v2648 = vand.u32 %v50, 4294901760
    %v2649 = vsub.f32 %v50, %v2648
    %v2650 = vand.u32 %v2649, 4294901760
    %2651 = vmatmul.mubr.f32.gmra.mxu0 %v2650
    %v2652 = vpop.f32.mrf.mxu0
    %v2653 = vadd.f32 %v2578, %v2652
    %v2654 = vpop.f32.mrf.mxu0
    %2655 = vdwg.mxu0
    %2656 = vmatprep.subr.mxu0 0.0
    %2657 = vmatpush1.msra.mxu0 0.0
    %2658 = vmatprep.subr.mxu0 0.0
    %2659 = vmatpush1.msra.mxu0 0.0
    %2660 = vmatprep.subr.mxu0 0.0
    %2661 = vmatpush1.msra.mxu0 0.0
    %2662 = vmatprep.subr.mxu0 0.0
    %2663 = vmatpush1.msra.mxu0 0.0
    %2664 = vmatprep.subr.mxu0 0.0
    %2665 = vmatpush1.msra.mxu0 0.0
    %2666 = vmatprep.subr.mxu0 0.0
    %2667 = vmatpush1.msra.mxu0 0.0
    %2668 = vmatprep.subr.mxu0 0.0
    %2669 = vmatpush1.msra.mxu0 0.0
    %2670 = vmatprep.subr.mxu0 0.0
    %2671 = vmatpush1.msra.mxu0 0.0
    %2672 = vmatprep.subr.mxu0 0.0
    %2673 = vmatpush1.msra.mxu0 0.0
    %2674 = vmatprep.subr.mxu0 0.0
    %2675 = vmatpush1.msra.mxu0 0.0
    %2676 = vmatprep.subr.mxu0 0.0
    %2677 = vmatpush1.msra.mxu0 0.0
    %2678 = vmatprep.subr.mxu0 0.0
    %2679 = vmatpush1.msra.mxu0 0.0
    %2680 = vmatprep.subr.mxu0 0.0
    %2681 = vmatpush1.msra.mxu0 0.0
    %2682 = vmatprep.subr.mxu0 0.0
    %2683 = vmatpush1.msra.mxu0 0.0
    %2684 = vmatprep.subr.mxu0 0.0
    %v2685 = vand.u32 %v40, 4294901760
    %v2686 = vsub.f32 %v40, %v2685
    %v2687 = vand.u32 %v2686, 4294901760
    %2688 = vmatpush1.msra.mxu0 %v2687
    %2689 = vmatprep.subr.mxu0 0.0
    %v2690 = vand.u32 %v39, 4294901760
    %v2691 = vsub.f32 %v39, %v2690
    %v2692 = vand.u32 %v2691, 4294901760
    %2693 = vmatpush1.msra.mxu0 %v2692
    %2694 = vmatprep.subr.mxu0 0.0
    %2695 = vmatpush2.msra.mxu0 0.0
    %2696 = vmatprep.subr.mxu0 0.0
    %2697 = vmatpush2.msra.mxu0 0.0
    %2698 = vmatprep.subr.mxu0 0.0
    %2699 = vmatpush2.msra.mxu0 0.0
    %2700 = vmatprep.subr.mxu0 0.0
    %2701 = vmatpush2.msra.mxu0 0.0
    %2702 = vmatprep.subr.mxu0 0.0
    %2703 = vmatpush2.msra.mxu0 0.0
    %2704 = vmatprep.subr.mxu0 0.0
    %2705 = vmatpush2.msra.mxu0 0.0
    %2706 = vmatprep.subr.mxu0 0.0
    %2707 = vmatpush2.msra.mxu0 0.0
    %2708 = vmatprep.subr.mxu0 0.0
    %2709 = vmatpush2.msra.mxu0 0.0
    %2710 = vmatprep.subr.mxu0 0.0
    %2711 = vmatpush2.msra.mxu0 0.0
    %2712 = vmatprep.subr.mxu0 0.0
    %2713 = vmatpush2.msra.mxu0 0.0
    %2714 = vmatprep.subr.mxu0 0.0
    %2715 = vmatpush2.msra.mxu0 0.0
    %2716 = vmatprep.subr.mxu0 0.0
    %2717 = vmatpush2.msra.mxu0 0.0
    %2718 = vmatprep.subr.mxu0 0.0
    %2719 = vmatpush2.msra.mxu0 0.0
    %2720 = vmatprep.subr.mxu0 0.0
    %2721 = vmatpush2.msra.mxu0 0.0
    %2722 = vmatprep.subr.mxu0 0.0
    %2723 = vmatpush2.msra.mxu0 0.0
    %2724 = vmatprep.subr.mxu0 0.0
    %2725 = vmatpush2.msra.mxu0 0.0
    %2726 = vmatprep.mubr.f32.mxu0 0.0
    %v2727 = vand.u32 %v50, 4294901760
    %2728 = vmatmul.mubr.f32.gmra.mxu0 %v2727
    %v2729 = vpop.f32.mrf.mxu0
    %v2730 = vadd.f32 %v2653, %v2729
    %v2731 = vpop.f32.mrf.mxu0
    %2732 = vdwg.mxu0
    %2733 = vmatprep.subr.mxu0 0.0
    %2734 = vmatpush1.msra.mxu0 0.0
    %2735 = vmatprep.subr.mxu0 0.0
    %2736 = vmatpush1.msra.mxu0 0.0
    %2737 = vmatprep.subr.mxu0 0.0
    %2738 = vmatpush1.msra.mxu0 0.0
    %2739 = vmatprep.subr.mxu0 0.0
    %2740 = vmatpush1.msra.mxu0 0.0
    %2741 = vmatprep.subr.mxu0 0.0
    %2742 = vmatpush1.msra.mxu0 0.0
    %2743 = vmatprep.subr.mxu0 0.0
    %2744 = vmatpush1.msra.mxu0 0.0
    %2745 = vmatprep.subr.mxu0 0.0
    %2746 = vmatpush1.msra.mxu0 0.0
    %2747 = vmatprep.subr.mxu0 0.0
    %2748 = vmatpush1.msra.mxu0 0.0
    %2749 = vmatprep.subr.mxu0 0.0
    %2750 = vmatpush1.msra.mxu0 0.0
    %2751 = vmatprep.subr.mxu0 0.0
    %2752 = vmatpush1.msra.mxu0 0.0
    %2753 = vmatprep.subr.mxu0 0.0
    %2754 = vmatpush1.msra.mxu0 0.0
    %2755 = vmatprep.subr.mxu0 0.0
    %2756 = vmatpush1.msra.mxu0 0.0
    %2757 = vmatprep.subr.mxu0 0.0
    %2758 = vmatpush1.msra.mxu0 0.0
    %2759 = vmatprep.subr.mxu0 0.0
    %2760 = vmatpush1.msra.mxu0 0.0
    %2761 = vmatprep.subr.mxu0 0.0
    %v2762 = vand.u32 %v40, 4294901760
    %2763 = vmatpush1.msra.mxu0 %v2762
    %2764 = vmatprep.subr.mxu0 0.0
    %v2765 = vand.u32 %v39, 4294901760
    %2766 = vmatpush1.msra.mxu0 %v2765
    %2767 = vmatprep.subr.mxu0 0.0
    %2768 = vmatpush2.msra.mxu0 0.0
    %2769 = vmatprep.subr.mxu0 0.0
    %2770 = vmatpush2.msra.mxu0 0.0
    %2771 = vmatprep.subr.mxu0 0.0
    %2772 = vmatpush2.msra.mxu0 0.0
    %2773 = vmatprep.subr.mxu0 0.0
    %2774 = vmatpush2.msra.mxu0 0.0
    %2775 = vmatprep.subr.mxu0 0.0
    %2776 = vmatpush2.msra.mxu0 0.0
    %2777 = vmatprep.subr.mxu0 0.0
    %2778 = vmatpush2.msra.mxu0 0.0
    %2779 = vmatprep.subr.mxu0 0.0
    %2780 = vmatpush2.msra.mxu0 0.0
    %2781 = vmatprep.subr.mxu0 0.0
    %2782 = vmatpush2.msra.mxu0 0.0
    %2783 = vmatprep.subr.mxu0 0.0
    %2784 = vmatpush2.msra.mxu0 0.0
    %2785 = vmatprep.subr.mxu0 0.0
    %2786 = vmatpush2.msra.mxu0 0.0
    %2787 = vmatprep.subr.mxu0 0.0
    %2788 = vmatpush2.msra.mxu0 0.0
    %2789 = vmatprep.subr.mxu0 0.0
    %2790 = vmatpush2.msra.mxu0 0.0
    %2791 = vmatprep.subr.mxu0 0.0
    %2792 = vmatpush2.msra.mxu0 0.0
    %2793 = vmatprep.subr.mxu0 0.0
    %2794 = vmatpush2.msra.mxu0 0.0
    %2795 = vmatprep.subr.mxu0 0.0
    %2796 = vmatpush2.msra.mxu0 0.0
    %2797 = vmatprep.subr.mxu0 0.0
    %2798 = vmatpush2.msra.mxu0 0.0
    %2799 = vmatprep.mubr.f32.mxu0 0.0
    %v2800 = vand.u32 %v50, 4294901760
    %2801 = vmatmul.mubr.f32.gmra.mxu0 %v2800
    %v2802 = vpop.f32.mrf.mxu0
    %v2803 = vadd.f32 %v2730, %v2802
    %v2804 = vpop.f32.mrf.mxu0
    %2805 = vdwg.mxu0
    %2806 = vmatprep.subr.mxu0 0.0
    %2807 = vmatpush1.msra.mxu0 0.0
    %2808 = vmatprep.subr.mxu0 0.0
    %2809 = vmatpush1.msra.mxu0 0.0
    %2810 = vmatprep.subr.mxu0 0.0
    %2811 = vmatpush1.msra.mxu0 0.0
    %2812 = vmatprep.subr.mxu0 0.0
    %2813 = vmatpush1.msra.mxu0 0.0
    %2814 = vmatprep.subr.mxu0 0.0
    %2815 = vmatpush1.msra.mxu0 0.0
    %2816 = vmatprep.subr.mxu0 0.0
    %2817 = vmatpush1.msra.mxu0 0.0
    %2818 = vmatprep.subr.mxu0 0.0
    %2819 = vmatpush1.msra.mxu0 0.0
    %2820 = vmatprep.subr.mxu0 0.0
    %2821 = vmatpush1.msra.mxu0 0.0
    %2822 = vmatprep.subr.mxu0 0.0
    %2823 = vmatpush1.msra.mxu0 0.0
    %2824 = vmatprep.subr.mxu0 0.0
    %2825 = vmatpush1.msra.mxu0 0.0
    %2826 = vmatprep.subr.mxu0 0.0
    %2827 = vmatpush1.msra.mxu0 0.0
    %2828 = vmatprep.subr.mxu0 0.0
    %2829 = vmatpush1.msra.mxu0 0.0
    %2830 = vmatprep.subr.mxu0 0.0
    %2831 = vmatpush1.msra.mxu0 0.0
    %2832 = vmatprep.subr.mxu0 0.0
    %2833 = vmatpush1.msra.mxu0 0.0
    %2834 = vmatprep.subr.mxu0 0.0
    %v2835 = vand.u32 %v42, 4294901760
    %2836 = vmatpush1.msra.mxu0 %v2835
    %2837 = vmatprep.subr.mxu0 0.0
    %v2838 = vand.u32 %v41, 4294901760
    %2839 = vmatpush1.msra.mxu0 %v2838
    %2840 = vmatprep.subr.mxu0 0.0
    %2841 = vmatpush2.msra.mxu0 0.0
    %2842 = vmatprep.subr.mxu0 0.0
    %2843 = vmatpush2.msra.mxu0 0.0
    %2844 = vmatprep.subr.mxu0 0.0
    %2845 = vmatpush2.msra.mxu0 0.0
    %2846 = vmatprep.subr.mxu0 0.0
    %2847 = vmatpush2.msra.mxu0 0.0
    %2848 = vmatprep.subr.mxu0 0.0
    %2849 = vmatpush2.msra.mxu0 0.0
    %2850 = vmatprep.subr.mxu0 0.0
    %2851 = vmatpush2.msra.mxu0 0.0
    %2852 = vmatprep.subr.mxu0 0.0
    %2853 = vmatpush2.msra.mxu0 0.0
    %2854 = vmatprep.subr.mxu0 0.0
    %2855 = vmatpush2.msra.mxu0 0.0
    %2856 = vmatprep.subr.mxu0 0.0
    %2857 = vmatpush2.msra.mxu0 0.0
    %2858 = vmatprep.subr.mxu0 0.0
    %2859 = vmatpush2.msra.mxu0 0.0
    %2860 = vmatprep.subr.mxu0 0.0
    %2861 = vmatpush2.msra.mxu0 0.0
    %2862 = vmatprep.subr.mxu0 0.0
    %2863 = vmatpush2.msra.mxu0 0.0
    %2864 = vmatprep.subr.mxu0 0.0
    %2865 = vmatpush2.msra.mxu0 0.0
    %2866 = vmatprep.subr.mxu0 0.0
    %2867 = vmatpush2.msra.mxu0 0.0
    %2868 = vmatprep.subr.mxu0 0.0
    %2869 = vmatpush2.msra.mxu0 0.0
    %2870 = vmatprep.subr.mxu0 0.0
    %2871 = vmatpush2.msra.mxu0 0.0
    %2872 = vmatprep.mubr.f32.mxu0 0.0
    %v2873 = vand.u32 %v50, 4294901760
    %v2874 = vsub.f32 %v50, %v2873
    %v2875 = vand.u32 %v2874, 4294901760
    %v2876 = vsub.f32 %v2874, %v2875
    %v2877 = vand.u32 %v2876, 4294901760
    %2878 = vmatmul.mubr.f32.gmra.mxu0 %v2877
    %v2879 = vpop.f32.mrf.mxu0
    %v2880 = vadd.f32 0.0, %v2879
    %v2881 = vpop.f32.mrf.mxu0
    %2882 = vdwg.mxu0
    %2883 = vmatprep.subr.mxu0 0.0
    %2884 = vmatpush1.msra.mxu0 0.0
    %2885 = vmatprep.subr.mxu0 0.0
    %2886 = vmatpush1.msra.mxu0 0.0
    %2887 = vmatprep.subr.mxu0 0.0
    %2888 = vmatpush1.msra.mxu0 0.0
    %2889 = vmatprep.subr.mxu0 0.0
    %2890 = vmatpush1.msra.mxu0 0.0
    %2891 = vmatprep.subr.mxu0 0.0
    %2892 = vmatpush1.msra.mxu0 0.0
    %2893 = vmatprep.subr.mxu0 0.0
    %2894 = vmatpush1.msra.mxu0 0.0
    %2895 = vmatprep.subr.mxu0 0.0
    %2896 = vmatpush1.msra.mxu0 0.0
    %2897 = vmatprep.subr.mxu0 0.0
    %2898 = vmatpush1.msra.mxu0 0.0
    %2899 = vmatprep.subr.mxu0 0.0
    %2900 = vmatpush1.msra.mxu0 0.0
    %2901 = vmatprep.subr.mxu0 0.0
    %2902 = vmatpush1.msra.mxu0 0.0
    %2903 = vmatprep.subr.mxu0 0.0
    %2904 = vmatpush1.msra.mxu0 0.0
    %2905 = vmatprep.subr.mxu0 0.0
    %2906 = vmatpush1.msra.mxu0 0.0
    %2907 = vmatprep.subr.mxu0 0.0
    %2908 = vmatpush1.msra.mxu0 0.0
    %2909 = vmatprep.subr.mxu0 0.0
    %2910 = vmatpush1.msra.mxu0 0.0
    %2911 = vmatprep.subr.mxu0 0.0
    %v2912 = vand.u32 %v42, 4294901760
    %v2913 = vsub.f32 %v42, %v2912
    %v2914 = vand.u32 %v2913, 4294901760
    %v2915 = vsub.f32 %v2913, %v2914
    %v2916 = vand.u32 %v2915, 4294901760
    %2917 = vmatpush1.msra.mxu0 %v2916
    %2918 = vmatprep.subr.mxu0 0.0
    %v2919 = vand.u32 %v41, 4294901760
    %v2920 = vsub.f32 %v41, %v2919
    %v2921 = vand.u32 %v2920, 4294901760
    %v2922 = vsub.f32 %v2920, %v2921
    %v2923 = vand.u32 %v2922, 4294901760
    %2924 = vmatpush1.msra.mxu0 %v2923
    %2925 = vmatprep.subr.mxu0 0.0
    %2926 = vmatpush2.msra.mxu0 0.0
    %2927 = vmatprep.subr.mxu0 0.0
    %2928 = vmatpush2.msra.mxu0 0.0
    %2929 = vmatprep.subr.mxu0 0.0
    %2930 = vmatpush2.msra.mxu0 0.0
    %2931 = vmatprep.subr.mxu0 0.0
    %2932 = vmatpush2.msra.mxu0 0.0
    %2933 = vmatprep.subr.mxu0 0.0
    %2934 = vmatpush2.msra.mxu0 0.0
    %2935 = vmatprep.subr.mxu0 0.0
    %2936 = vmatpush2.msra.mxu0 0.0
    %2937 = vmatprep.subr.mxu0 0.0
    %2938 = vmatpush2.msra.mxu0 0.0
    %2939 = vmatprep.subr.mxu0 0.0
    %2940 = vmatpush2.msra.mxu0 0.0
    %2941 = vmatprep.subr.mxu0 0.0
    %2942 = vmatpush2.msra.mxu0 0.0
    %2943 = vmatprep.subr.mxu0 0.0
    %2944 = vmatpush2.msra.mxu0 0.0
    %2945 = vmatprep.subr.mxu0 0.0
    %2946 = vmatpush2.msra.mxu0 0.0
    %2947 = vmatprep.subr.mxu0 0.0
    %2948 = vmatpush2.msra.mxu0 0.0
    %2949 = vmatprep.subr.mxu0 0.0
    %2950 = vmatpush2.msra.mxu0 0.0
    %2951 = vmatprep.subr.mxu0 0.0
    %2952 = vmatpush2.msra.mxu0 0.0
    %2953 = vmatprep.subr.mxu0 0.0
    %2954 = vmatpush2.msra.mxu0 0.0
    %2955 = vmatprep.subr.mxu0 0.0
    %2956 = vmatpush2.msra.mxu0 0.0
    %2957 = vmatprep.mubr.f32.mxu0 0.0
    %v2958 = vand.u32 %v50, 4294901760
    %2959 = vmatmul.mubr.f32.gmra.mxu0 %v2958
    %v2960 = vpop.f32.mrf.mxu0
    %v2961 = vadd.f32 %v2880, %v2960
    %v2962 = vpop.f32.mrf.mxu0
    %2963 = vdwg.mxu0
    %2964 = vmatprep.subr.mxu0 0.0
    %2965 = vmatpush1.msra.mxu0 0.0
    %2966 = vmatprep.subr.mxu0 0.0
    %2967 = vmatpush1.msra.mxu0 0.0
    %2968 = vmatprep.subr.mxu0 0.0
    %2969 = vmatpush1.msra.mxu0 0.0
    %2970 = vmatprep.subr.mxu0 0.0
    %2971 = vmatpush1.msra.mxu0 0.0
    %2972 = vmatprep.subr.mxu0 0.0
    %2973 = vmatpush1.msra.mxu0 0.0
    %2974 = vmatprep.subr.mxu0 0.0
    %2975 = vmatpush1.msra.mxu0 0.0
    %2976 = vmatprep.subr.mxu0 0.0
    %2977 = vmatpush1.msra.mxu0 0.0
    %2978 = vmatprep.subr.mxu0 0.0
    %2979 = vmatpush1.msra.mxu0 0.0
    %2980 = vmatprep.subr.mxu0 0.0
    %2981 = vmatpush1.msra.mxu0 0.0
    %2982 = vmatprep.subr.mxu0 0.0
    %2983 = vmatpush1.msra.mxu0 0.0
    %2984 = vmatprep.subr.mxu0 0.0
    %2985 = vmatpush1.msra.mxu0 0.0
    %2986 = vmatprep.subr.mxu0 0.0
    %2987 = vmatpush1.msra.mxu0 0.0
    %2988 = vmatprep.subr.mxu0 0.0
    %2989 = vmatpush1.msra.mxu0 0.0
    %2990 = vmatprep.subr.mxu0 0.0
    %2991 = vmatpush1.msra.mxu0 0.0
    %2992 = vmatprep.subr.mxu0 0.0
    %v2993 = vand.u32 %v42, 4294901760
    %v2994 = vsub.f32 %v42, %v2993
    %2995 = vmatpush1.msra.mxu0 %v2994
    %2996 = vmatprep.subr.mxu0 0.0
    %v2997 = vand.u32 %v41, 4294901760
    %v2998 = vsub.f32 %v41, %v2997
    %2999 = vmatpush1.msra.mxu0 %v2998
    %3000 = vmatprep.subr.mxu0 0.0
    %3001 = vmatpush2.msra.mxu0 0.0
    %3002 = vmatprep.subr.mxu0 0.0
    %3003 = vmatpush2.msra.mxu0 0.0
    %3004 = vmatprep.subr.mxu0 0.0
    %3005 = vmatpush2.msra.mxu0 0.0
    %3006 = vmatprep.subr.mxu0 0.0
    %3007 = vmatpush2.msra.mxu0 0.0
    %3008 = vmatprep.subr.mxu0 0.0
    %3009 = vmatpush2.msra.mxu0 0.0
    %3010 = vmatprep.subr.mxu0 0.0
    %3011 = vmatpush2.msra.mxu0 0.0
    %3012 = vmatprep.subr.mxu0 0.0
    %3013 = vmatpush2.msra.mxu0 0.0
    %3014 = vmatprep.subr.mxu0 0.0
    %3015 = vmatpush2.msra.mxu0 0.0
    %3016 = vmatprep.subr.mxu0 0.0
    %3017 = vmatpush2.msra.mxu0 0.0
    %3018 = vmatprep.subr.mxu0 0.0
    %3019 = vmatpush2.msra.mxu0 0.0
    %3020 = vmatprep.subr.mxu0 0.0
    %3021 = vmatpush2.msra.mxu0 0.0
    %3022 = vmatprep.subr.mxu0 0.0
    %3023 = vmatpush2.msra.mxu0 0.0
    %3024 = vmatprep.subr.mxu0 0.0
    %3025 = vmatpush2.msra.mxu0 0.0
    %3026 = vmatprep.subr.mxu0 0.0
    %3027 = vmatpush2.msra.mxu0 0.0
    %3028 = vmatprep.subr.mxu0 0.0
    %3029 = vmatpush2.msra.mxu0 0.0
    %3030 = vmatprep.subr.mxu0 0.0
    %3031 = vmatpush2.msra.mxu0 0.0
    %3032 = vmatprep.mubr.f32.mxu0 0.0
    %v3033 = vand.u32 %v50, 4294901760
    %v3034 = vsub.f32 %v50, %v3033
    %3035 = vmatmul.mubr.f32.gmra.mxu0 %v3034
    %v3036 = vpop.f32.mrf.mxu0
    %v3037 = vadd.f32 %v2961, %v3036
    %v3038 = vpop.f32.mrf.mxu0
    %3039 = vdwg.mxu0
    %3040 = vmatprep.subr.mxu0 0.0
    %3041 = vmatpush1.msra.mxu0 0.0
    %3042 = vmatprep.subr.mxu0 0.0
    %3043 = vmatpush1.msra.mxu0 0.0
    %3044 = vmatprep.subr.mxu0 0.0
    %3045 = vmatpush1.msra.mxu0 0.0
    %3046 = vmatprep.subr.mxu0 0.0
    %3047 = vmatpush1.msra.mxu0 0.0
    %3048 = vmatprep.subr.mxu0 0.0
    %3049 = vmatpush1.msra.mxu0 0.0
    %3050 = vmatprep.subr.mxu0 0.0
    %3051 = vmatpush1.msra.mxu0 0.0
    %3052 = vmatprep.subr.mxu0 0.0
    %3053 = vmatpush1.msra.mxu0 0.0
    %3054 = vmatprep.subr.mxu0 0.0
    %3055 = vmatpush1.msra.mxu0 0.0
    %3056 = vmatprep.subr.mxu0 0.0
    %3057 = vmatpush1.msra.mxu0 0.0
    %3058 = vmatprep.subr.mxu0 0.0
    %3059 = vmatpush1.msra.mxu0 0.0
    %3060 = vmatprep.subr.mxu0 0.0
    %3061 = vmatpush1.msra.mxu0 0.0
    %3062 = vmatprep.subr.mxu0 0.0
    %3063 = vmatpush1.msra.mxu0 0.0
    %3064 = vmatprep.subr.mxu0 0.0
    %3065 = vmatpush1.msra.mxu0 0.0
    %3066 = vmatprep.subr.mxu0 0.0
    %3067 = vmatpush1.msra.mxu0 0.0
    %3068 = vmatprep.subr.mxu0 0.0
    %v3069 = vand.u32 %v42, 4294901760
    %3070 = vmatpush1.msra.mxu0 %v3069
    %3071 = vmatprep.subr.mxu0 0.0
    %v3072 = vand.u32 %v41, 4294901760
    %3073 = vmatpush1.msra.mxu0 %v3072
    %3074 = vmatprep.subr.mxu0 0.0
    %3075 = vmatpush2.msra.mxu0 0.0
    %3076 = vmatprep.subr.mxu0 0.0
    %3077 = vmatpush2.msra.mxu0 0.0
    %3078 = vmatprep.subr.mxu0 0.0
    %3079 = vmatpush2.msra.mxu0 0.0
    %3080 = vmatprep.subr.mxu0 0.0
    %3081 = vmatpush2.msra.mxu0 0.0
    %3082 = vmatprep.subr.mxu0 0.0
    %3083 = vmatpush2.msra.mxu0 0.0
    %3084 = vmatprep.subr.mxu0 0.0
    %3085 = vmatpush2.msra.mxu0 0.0
    %3086 = vmatprep.subr.mxu0 0.0
    %3087 = vmatpush2.msra.mxu0 0.0
    %3088 = vmatprep.subr.mxu0 0.0
    %3089 = vmatpush2.msra.mxu0 0.0
    %3090 = vmatprep.subr.mxu0 0.0
    %3091 = vmatpush2.msra.mxu0 0.0
    %3092 = vmatprep.subr.mxu0 0.0
    %3093 = vmatpush2.msra.mxu0 0.0
    %3094 = vmatprep.subr.mxu0 0.0
    %3095 = vmatpush2.msra.mxu0 0.0
    %3096 = vmatprep.subr.mxu0 0.0
    %3097 = vmatpush2.msra.mxu0 0.0
    %3098 = vmatprep.subr.mxu0 0.0
    %3099 = vmatpush2.msra.mxu0 0.0
    %3100 = vmatprep.subr.mxu0 0.0
    %3101 = vmatpush2.msra.mxu0 0.0
    %3102 = vmatprep.subr.mxu0 0.0
    %3103 = vmatpush2.msra.mxu0 0.0
    %3104 = vmatprep.subr.mxu0 0.0
    %3105 = vmatpush2.msra.mxu0 0.0
    %3106 = vmatprep.mubr.f32.mxu0 0.0
    %v3107 = vand.u32 %v50, 4294901760
    %v3108 = vsub.f32 %v50, %v3107
    %v3109 = vand.u32 %v3108, 4294901760
    %3110 = vmatmul.mubr.f32.gmra.mxu0 %v3109
    %v3111 = vpop.f32.mrf.mxu0
    %v3112 = vadd.f32 %v3037, %v3111
    %v3113 = vpop.f32.mrf.mxu0
    %3114 = vdwg.mxu0
    %3115 = vmatprep.subr.mxu0 0.0
    %3116 = vmatpush1.msra.mxu0 0.0
    %3117 = vmatprep.subr.mxu0 0.0
    %3118 = vmatpush1.msra.mxu0 0.0
    %3119 = vmatprep.subr.mxu0 0.0
    %3120 = vmatpush1.msra.mxu0 0.0
    %3121 = vmatprep.subr.mxu0 0.0
    %3122 = vmatpush1.msra.mxu0 0.0
    %3123 = vmatprep.subr.mxu0 0.0
    %3124 = vmatpush1.msra.mxu0 0.0
    %3125 = vmatprep.subr.mxu0 0.0
    %3126 = vmatpush1.msra.mxu0 0.0
    %3127 = vmatprep.subr.mxu0 0.0
    %3128 = vmatpush1.msra.mxu0 0.0
    %3129 = vmatprep.subr.mxu0 0.0
    %3130 = vmatpush1.msra.mxu0 0.0
    %3131 = vmatprep.subr.mxu0 0.0
    %3132 = vmatpush1.msra.mxu0 0.0
    %3133 = vmatprep.subr.mxu0 0.0
    %3134 = vmatpush1.msra.mxu0 0.0
    %3135 = vmatprep.subr.mxu0 0.0
    %3136 = vmatpush1.msra.mxu0 0.0
    %3137 = vmatprep.subr.mxu0 0.0
    %3138 = vmatpush1.msra.mxu0 0.0
    %3139 = vmatprep.subr.mxu0 0.0
    %3140 = vmatpush1.msra.mxu0 0.0
    %3141 = vmatprep.subr.mxu0 0.0
    %3142 = vmatpush1.msra.mxu0 0.0
    %3143 = vmatprep.subr.mxu0 0.0
    %v3144 = vand.u32 %v42, 4294901760
    %v3145 = vsub.f32 %v42, %v3144
    %v3146 = vand.u32 %v3145, 4294901760
    %3147 = vmatpush1.msra.mxu0 %v3146
    %3148 = vmatprep.subr.mxu0 0.0
    %v3149 = vand.u32 %v41, 4294901760
    %v3150 = vsub.f32 %v41, %v3149
    %v3151 = vand.u32 %v3150, 4294901760
    %3152 = vmatpush1.msra.mxu0 %v3151
    %3153 = vmatprep.subr.mxu0 0.0
    %3154 = vmatpush2.msra.mxu0 0.0
    %3155 = vmatprep.subr.mxu0 0.0
    %3156 = vmatpush2.msra.mxu0 0.0
    %3157 = vmatprep.subr.mxu0 0.0
    %3158 = vmatpush2.msra.mxu0 0.0
    %3159 = vmatprep.subr.mxu0 0.0
    %3160 = vmatpush2.msra.mxu0 0.0
    %3161 = vmatprep.subr.mxu0 0.0
    %3162 = vmatpush2.msra.mxu0 0.0
    %3163 = vmatprep.subr.mxu0 0.0
    %3164 = vmatpush2.msra.mxu0 0.0
    %3165 = vmatprep.subr.mxu0 0.0
    %3166 = vmatpush2.msra.mxu0 0.0
    %3167 = vmatprep.subr.mxu0 0.0
    %3168 = vmatpush2.msra.mxu0 0.0
    %3169 = vmatprep.subr.mxu0 0.0
    %3170 = vmatpush2.msra.mxu0 0.0
    %3171 = vmatprep.subr.mxu0 0.0
    %3172 = vmatpush2.msra.mxu0 0.0
    %3173 = vmatprep.subr.mxu0 0.0
    %3174 = vmatpush2.msra.mxu0 0.0
    %3175 = vmatprep.subr.mxu0 0.0
    %3176 = vmatpush2.msra.mxu0 0.0
    %3177 = vmatprep.subr.mxu0 0.0
    %3178 = vmatpush2.msra.mxu0 0.0
    %3179 = vmatprep.subr.mxu0 0.0
    %3180 = vmatpush2.msra.mxu0 0.0
    %3181 = vmatprep.subr.mxu0 0.0
    %3182 = vmatpush2.msra.mxu0 0.0
    %3183 = vmatprep.subr.mxu0 0.0
    %3184 = vmatpush2.msra.mxu0 0.0
    %3185 = vmatprep.mubr.f32.mxu0 0.0
    %v3186 = vand.u32 %v50, 4294901760
    %3187 = vmatmul.mubr.f32.gmra.mxu0 %v3186
    %v3188 = vpop.f32.mrf.mxu0
    %v3189 = vadd.f32 %v3112, %v3188
    %v3190 = vpop.f32.mrf.mxu0
    %3191 = vdwg.mxu0
    %3192 = vmatprep.subr.mxu0 0.0
    %3193 = vmatpush1.msra.mxu0 0.0
    %3194 = vmatprep.subr.mxu0 0.0
    %3195 = vmatpush1.msra.mxu0 0.0
    %3196 = vmatprep.subr.mxu0 0.0
    %3197 = vmatpush1.msra.mxu0 0.0
    %3198 = vmatprep.subr.mxu0 0.0
    %3199 = vmatpush1.msra.mxu0 0.0
    %3200 = vmatprep.subr.mxu0 0.0
    %3201 = vmatpush1.msra.mxu0 0.0
    %3202 = vmatprep.subr.mxu0 0.0
    %3203 = vmatpush1.msra.mxu0 0.0
    %3204 = vmatprep.subr.mxu0 0.0
    %3205 = vmatpush1.msra.mxu0 0.0
    %3206 = vmatprep.subr.mxu0 0.0
    %3207 = vmatpush1.msra.mxu0 0.0
    %3208 = vmatprep.subr.mxu0 0.0
    %3209 = vmatpush1.msra.mxu0 0.0
    %3210 = vmatprep.subr.mxu0 0.0
    %3211 = vmatpush1.msra.mxu0 0.0
    %3212 = vmatprep.subr.mxu0 0.0
    %3213 = vmatpush1.msra.mxu0 0.0
    %3214 = vmatprep.subr.mxu0 0.0
    %3215 = vmatpush1.msra.mxu0 0.0
    %3216 = vmatprep.subr.mxu0 0.0
    %3217 = vmatpush1.msra.mxu0 0.0
    %3218 = vmatprep.subr.mxu0 0.0
    %3219 = vmatpush1.msra.mxu0 0.0
    %3220 = vmatprep.subr.mxu0 0.0
    %v3221 = vand.u32 %v42, 4294901760
    %3222 = vmatpush1.msra.mxu0 %v3221
    %3223 = vmatprep.subr.mxu0 0.0
    %v3224 = vand.u32 %v41, 4294901760
    %3225 = vmatpush1.msra.mxu0 %v3224
    %3226 = vmatprep.subr.mxu0 0.0
    %3227 = vmatpush2.msra.mxu0 0.0
    %3228 = vmatprep.subr.mxu0 0.0
    %3229 = vmatpush2.msra.mxu0 0.0
    %3230 = vmatprep.subr.mxu0 0.0
    %3231 = vmatpush2.msra.mxu0 0.0
    %3232 = vmatprep.subr.mxu0 0.0
    %3233 = vmatpush2.msra.mxu0 0.0
    %3234 = vmatprep.subr.mxu0 0.0
    %3235 = vmatpush2.msra.mxu0 0.0
    %3236 = vmatprep.subr.mxu0 0.0
    %3237 = vmatpush2.msra.mxu0 0.0
    %3238 = vmatprep.subr.mxu0 0.0
    %3239 = vmatpush2.msra.mxu0 0.0
    %3240 = vmatprep.subr.mxu0 0.0
    %3241 = vmatpush2.msra.mxu0 0.0
    %3242 = vmatprep.subr.mxu0 0.0
    %3243 = vmatpush2.msra.mxu0 0.0
    %3244 = vmatprep.subr.mxu0 0.0
    %3245 = vmatpush2.msra.mxu0 0.0
    %3246 = vmatprep.subr.mxu0 0.0
    %3247 = vmatpush2.msra.mxu0 0.0
    %3248 = vmatprep.subr.mxu0 0.0
    %3249 = vmatpush2.msra.mxu0 0.0
    %3250 = vmatprep.subr.mxu0 0.0
    %3251 = vmatpush2.msra.mxu0 0.0
    %3252 = vmatprep.subr.mxu0 0.0
    %3253 = vmatpush2.msra.mxu0 0.0
    %3254 = vmatprep.subr.mxu0 0.0
    %3255 = vmatpush2.msra.mxu0 0.0
    %3256 = vmatprep.subr.mxu0 0.0
    %3257 = vmatpush2.msra.mxu0 0.0
    %3258 = vmatprep.mubr.f32.mxu0 0.0
    %v3259 = vand.u32 %v50, 4294901760
    %3260 = vmatmul.mubr.f32.gmra.mxu0 %v3259
    %v3261 = vpop.f32.mrf.mxu0
    %v3262 = vadd.f32 %v3189, %v3261
    %v3263 = vpop.f32.mrf.mxu0
    %3264 = vdwg.mxu0
    %3265 = vmatprep.subr.mxu0 0.0
    %3266 = vmatpush1.msra.mxu0 0.0
    %3267 = vmatprep.subr.mxu0 0.0
    %3268 = vmatpush1.msra.mxu0 0.0
    %3269 = vmatprep.subr.mxu0 0.0
    %3270 = vmatpush1.msra.mxu0 0.0
    %3271 = vmatprep.subr.mxu0 0.0
    %3272 = vmatpush1.msra.mxu0 0.0
    %3273 = vmatprep.subr.mxu0 0.0
    %3274 = vmatpush1.msra.mxu0 0.0
    %3275 = vmatprep.subr.mxu0 0.0
    %3276 = vmatpush1.msra.mxu0 0.0
    %3277 = vmatprep.subr.mxu0 0.0
    %3278 = vmatpush1.msra.mxu0 0.0
    %3279 = vmatprep.subr.mxu0 0.0
    %3280 = vmatpush1.msra.mxu0 0.0
    %3281 = vmatprep.subr.mxu0 0.0
    %3282 = vmatpush1.msra.mxu0 0.0
    %3283 = vmatprep.subr.mxu0 0.0
    %3284 = vmatpush1.msra.mxu0 0.0
    %3285 = vmatprep.subr.mxu0 0.0
    %3286 = vmatpush1.msra.mxu0 0.0
    %3287 = vmatprep.subr.mxu0 0.0
    %3288 = vmatpush1.msra.mxu0 0.0
    %3289 = vmatprep.subr.mxu0 0.0
    %3290 = vmatpush1.msra.mxu0 0.0
    %3291 = vmatprep.subr.mxu0 0.0
    %3292 = vmatpush1.msra.mxu0 0.0
    %3293 = vmatprep.subr.mxu0 0.0
    %v3294 = vand.u32 %v44, 4294901760
    %3295 = vmatpush1.msra.mxu0 %v3294
    %3296 = vmatprep.subr.mxu0 0.0
    %v3297 = vand.u32 %v43, 4294901760
    %3298 = vmatpush1.msra.mxu0 %v3297
    %3299 = vmatprep.subr.mxu0 0.0
    %3300 = vmatpush2.msra.mxu0 0.0
    %3301 = vmatprep.subr.mxu0 0.0
    %3302 = vmatpush2.msra.mxu0 0.0
    %3303 = vmatprep.subr.mxu0 0.0
    %3304 = vmatpush2.msra.mxu0 0.0
    %3305 = vmatprep.subr.mxu0 0.0
    %3306 = vmatpush2.msra.mxu0 0.0
    %3307 = vmatprep.subr.mxu0 0.0
    %3308 = vmatpush2.msra.mxu0 0.0
    %3309 = vmatprep.subr.mxu0 0.0
    %3310 = vmatpush2.msra.mxu0 0.0
    %3311 = vmatprep.subr.mxu0 0.0
    %3312 = vmatpush2.msra.mxu0 0.0
    %3313 = vmatprep.subr.mxu0 0.0
    %3314 = vmatpush2.msra.mxu0 0.0
    %3315 = vmatprep.subr.mxu0 0.0
    %3316 = vmatpush2.msra.mxu0 0.0
    %3317 = vmatprep.subr.mxu0 0.0
    %3318 = vmatpush2.msra.mxu0 0.0
    %3319 = vmatprep.subr.mxu0 0.0
    %3320 = vmatpush2.msra.mxu0 0.0
    %3321 = vmatprep.subr.mxu0 0.0
    %3322 = vmatpush2.msra.mxu0 0.0
    %3323 = vmatprep.subr.mxu0 0.0
    %3324 = vmatpush2.msra.mxu0 0.0
    %3325 = vmatprep.subr.mxu0 0.0
    %3326 = vmatpush2.msra.mxu0 0.0
    %3327 = vmatprep.subr.mxu0 0.0
    %3328 = vmatpush2.msra.mxu0 0.0
    %3329 = vmatprep.subr.mxu0 0.0
    %3330 = vmatpush2.msra.mxu0 0.0
    %3331 = vmatprep.mubr.f32.mxu0 0.0
    %v3332 = vand.u32 %v50, 4294901760
    %v3333 = vsub.f32 %v50, %v3332
    %v3334 = vand.u32 %v3333, 4294901760
    %v3335 = vsub.f32 %v3333, %v3334
    %v3336 = vand.u32 %v3335, 4294901760
    %3337 = vmatmul.mubr.f32.gmra.mxu0 %v3336
    %v3338 = vpop.f32.mrf.mxu0
    %v3339 = vadd.f32 0.0, %v3338
    %v3340 = vpop.f32.mrf.mxu0
    %3341 = vdwg.mxu0
    %3342 = vmatprep.subr.mxu0 0.0
    %3343 = vmatpush1.msra.mxu0 0.0
    %3344 = vmatprep.subr.mxu0 0.0
    %3345 = vmatpush1.msra.mxu0 0.0
    %3346 = vmatprep.subr.mxu0 0.0
    %3347 = vmatpush1.msra.mxu0 0.0
    %3348 = vmatprep.subr.mxu0 0.0
    %3349 = vmatpush1.msra.mxu0 0.0
    %3350 = vmatprep.subr.mxu0 0.0
    %3351 = vmatpush1.msra.mxu0 0.0
    %3352 = vmatprep.subr.mxu0 0.0
    %3353 = vmatpush1.msra.mxu0 0.0
    %3354 = vmatprep.subr.mxu0 0.0
    %3355 = vmatpush1.msra.mxu0 0.0
    %3356 = vmatprep.subr.mxu0 0.0
    %3357 = vmatpush1.msra.mxu0 0.0
    %3358 = vmatprep.subr.mxu0 0.0
    %3359 = vmatpush1.msra.mxu0 0.0
    %3360 = vmatprep.subr.mxu0 0.0
    %3361 = vmatpush1.msra.mxu0 0.0
    %3362 = vmatprep.subr.mxu0 0.0
    %3363 = vmatpush1.msra.mxu0 0.0
    %3364 = vmatprep.subr.mxu0 0.0
    %3365 = vmatpush1.msra.mxu0 0.0
    %3366 = vmatprep.subr.mxu0 0.0
    %3367 = vmatpush1.msra.mxu0 0.0
    %3368 = vmatprep.subr.mxu0 0.0
    %3369 = vmatpush1.msra.mxu0 0.0
    %3370 = vmatprep.subr.mxu0 0.0
    %v3371 = vand.u32 %v44, 4294901760
    %v3372 = vsub.f32 %v44, %v3371
    %v3373 = vand.u32 %v3372, 4294901760
    %v3374 = vsub.f32 %v3372, %v3373
    %v3375 = vand.u32 %v3374, 4294901760
    %3376 = vmatpush1.msra.mxu0 %v3375
    %3377 = vmatprep.subr.mxu0 0.0
    %v3378 = vand.u32 %v43, 4294901760
    %v3379 = vsub.f32 %v43, %v3378
    %v3380 = vand.u32 %v3379, 4294901760
    %v3381 = vsub.f32 %v3379, %v3380
    %v3382 = vand.u32 %v3381, 4294901760
    %3383 = vmatpush1.msra.mxu0 %v3382
    %3384 = vmatprep.subr.mxu0 0.0
    %3385 = vmatpush2.msra.mxu0 0.0
    %3386 = vmatprep.subr.mxu0 0.0
    %3387 = vmatpush2.msra.mxu0 0.0
    %3388 = vmatprep.subr.mxu0 0.0
    %3389 = vmatpush2.msra.mxu0 0.0
    %3390 = vmatprep.subr.mxu0 0.0
    %3391 = vmatpush2.msra.mxu0 0.0
    %3392 = vmatprep.subr.mxu0 0.0
    %3393 = vmatpush2.msra.mxu0 0.0
    %3394 = vmatprep.subr.mxu0 0.0
    %3395 = vmatpush2.msra.mxu0 0.0
    %3396 = vmatprep.subr.mxu0 0.0
    %3397 = vmatpush2.msra.mxu0 0.0
    %3398 = vmatprep.subr.mxu0 0.0
    %3399 = vmatpush2.msra.mxu0 0.0
    %3400 = vmatprep.subr.mxu0 0.0
    %3401 = vmatpush2.msra.mxu0 0.0
    %3402 = vmatprep.subr.mxu0 0.0
    %3403 = vmatpush2.msra.mxu0 0.0
    %3404 = vmatprep.subr.mxu0 0.0
    %3405 = vmatpush2.msra.mxu0 0.0
    %3406 = vmatprep.subr.mxu0 0.0
    %3407 = vmatpush2.msra.mxu0 0.0
    %3408 = vmatprep.subr.mxu0 0.0
    %3409 = vmatpush2.msra.mxu0 0.0
    %3410 = vmatprep.subr.mxu0 0.0
    %3411 = vmatpush2.msra.mxu0 0.0
    %3412 = vmatprep.subr.mxu0 0.0
    %3413 = vmatpush2.msra.mxu0 0.0
    %3414 = vmatprep.subr.mxu0 0.0
    %3415 = vmatpush2.msra.mxu0 0.0
    %3416 = vmatprep.mubr.f32.mxu0 0.0
    %v3417 = vand.u32 %v50, 4294901760
    %3418 = vmatmul.mubr.f32.gmra.mxu0 %v3417
    %v3419 = vpop.f32.mrf.mxu0
    %v3420 = vadd.f32 %v3339, %v3419
    %v3421 = vpop.f32.mrf.mxu0
    %3422 = vdwg.mxu0
    %3423 = vmatprep.subr.mxu0 0.0
    %3424 = vmatpush1.msra.mxu0 0.0
    %3425 = vmatprep.subr.mxu0 0.0
    %3426 = vmatpush1.msra.mxu0 0.0
    %3427 = vmatprep.subr.mxu0 0.0
    %3428 = vmatpush1.msra.mxu0 0.0
    %3429 = vmatprep.subr.mxu0 0.0
    %3430 = vmatpush1.msra.mxu0 0.0
    %3431 = vmatprep.subr.mxu0 0.0
    %3432 = vmatpush1.msra.mxu0 0.0
    %3433 = vmatprep.subr.mxu0 0.0
    %3434 = vmatpush1.msra.mxu0 0.0
    %3435 = vmatprep.subr.mxu0 0.0
    %3436 = vmatpush1.msra.mxu0 0.0
    %3437 = vmatprep.subr.mxu0 0.0
    %3438 = vmatpush1.msra.mxu0 0.0
    %3439 = vmatprep.subr.mxu0 0.0
    %3440 = vmatpush1.msra.mxu0 0.0
    %3441 = vmatprep.subr.mxu0 0.0
    %3442 = vmatpush1.msra.mxu0 0.0
    %3443 = vmatprep.subr.mxu0 0.0
    %3444 = vmatpush1.msra.mxu0 0.0
    %3445 = vmatprep.subr.mxu0 0.0
    %3446 = vmatpush1.msra.mxu0 0.0
    %3447 = vmatprep.subr.mxu0 0.0
    %3448 = vmatpush1.msra.mxu0 0.0
    %3449 = vmatprep.subr.mxu0 0.0
    %3450 = vmatpush1.msra.mxu0 0.0
    %3451 = vmatprep.subr.mxu0 0.0
    %v3452 = vand.u32 %v44, 4294901760
    %v3453 = vsub.f32 %v44, %v3452
    %3454 = vmatpush1.msra.mxu0 %v3453
    %3455 = vmatprep.subr.mxu0 0.0
    %v3456 = vand.u32 %v43, 4294901760
    %v3457 = vsub.f32 %v43, %v3456
    %3458 = vmatpush1.msra.mxu0 %v3457
    %3459 = vmatprep.subr.mxu0 0.0
    %3460 = vmatpush2.msra.mxu0 0.0
    %3461 = vmatprep.subr.mxu0 0.0
    %3462 = vmatpush2.msra.mxu0 0.0
    %3463 = vmatprep.subr.mxu0 0.0
    %3464 = vmatpush2.msra.mxu0 0.0
    %3465 = vmatprep.subr.mxu0 0.0
    %3466 = vmatpush2.msra.mxu0 0.0
    %3467 = vmatprep.subr.mxu0 0.0
    %3468 = vmatpush2.msra.mxu0 0.0
    %3469 = vmatprep.subr.mxu0 0.0
    %3470 = vmatpush2.msra.mxu0 0.0
    %3471 = vmatprep.subr.mxu0 0.0
    %3472 = vmatpush2.msra.mxu0 0.0
    %3473 = vmatprep.subr.mxu0 0.0
    %3474 = vmatpush2.msra.mxu0 0.0
    %3475 = vmatprep.subr.mxu0 0.0
    %3476 = vmatpush2.msra.mxu0 0.0
    %3477 = vmatprep.subr.mxu0 0.0
    %3478 = vmatpush2.msra.mxu0 0.0
    %3479 = vmatprep.subr.mxu0 0.0
    %3480 = vmatpush2.msra.mxu0 0.0
    %3481 = vmatprep.subr.mxu0 0.0
    %3482 = vmatpush2.msra.mxu0 0.0
    %3483 = vmatprep.subr.mxu0 0.0
    %3484 = vmatpush2.msra.mxu0 0.0
    %3485 = vmatprep.subr.mxu0 0.0
    %3486 = vmatpush2.msra.mxu0 0.0
    %3487 = vmatprep.subr.mxu0 0.0
    %3488 = vmatpush2.msra.mxu0 0.0
    %3489 = vmatprep.subr.mxu0 0.0
    %3490 = vmatpush2.msra.mxu0 0.0
    %3491 = vmatprep.mubr.f32.mxu0 0.0
    %v3492 = vand.u32 %v50, 4294901760
    %v3493 = vsub.f32 %v50, %v3492
    %3494 = vmatmul.mubr.f32.gmra.mxu0 %v3493
    %v3495 = vpop.f32.mrf.mxu0
    %v3496 = vadd.f32 %v3420, %v3495
    %v3497 = vpop.f32.mrf.mxu0
    %3498 = vdwg.mxu0
    %3499 = vmatprep.subr.mxu0 0.0
    %3500 = vmatpush1.msra.mxu0 0.0
    %3501 = vmatprep.subr.mxu0 0.0
    %3502 = vmatpush1.msra.mxu0 0.0
    %3503 = vmatprep.subr.mxu0 0.0
    %3504 = vmatpush1.msra.mxu0 0.0
    %3505 = vmatprep.subr.mxu0 0.0
    %3506 = vmatpush1.msra.mxu0 0.0
    %3507 = vmatprep.subr.mxu0 0.0
    %3508 = vmatpush1.msra.mxu0 0.0
    %3509 = vmatprep.subr.mxu0 0.0
    %3510 = vmatpush1.msra.mxu0 0.0
    %3511 = vmatprep.subr.mxu0 0.0
    %3512 = vmatpush1.msra.mxu0 0.0
    %3513 = vmatprep.subr.mxu0 0.0
    %3514 = vmatpush1.msra.mxu0 0.0
    %3515 = vmatprep.subr.mxu0 0.0
    %3516 = vmatpush1.msra.mxu0 0.0
    %3517 = vmatprep.subr.mxu0 0.0
    %3518 = vmatpush1.msra.mxu0 0.0
    %3519 = vmatprep.subr.mxu0 0.0
    %3520 = vmatpush1.msra.mxu0 0.0
    %3521 = vmatprep.subr.mxu0 0.0
    %3522 = vmatpush1.msra.mxu0 0.0
    %3523 = vmatprep.subr.mxu0 0.0
    %3524 = vmatpush1.msra.mxu0 0.0
    %3525 = vmatprep.subr.mxu0 0.0
    %3526 = vmatpush1.msra.mxu0 0.0
    %3527 = vmatprep.subr.mxu0 0.0
    %v3528 = vand.u32 %v44, 4294901760
    %3529 = vmatpush1.msra.mxu0 %v3528
    %3530 = vmatprep.subr.mxu0 0.0
    %v3531 = vand.u32 %v43, 4294901760
    %3532 = vmatpush1.msra.mxu0 %v3531
    %3533 = vmatprep.subr.mxu0 0.0
    %3534 = vmatpush2.msra.mxu0 0.0
    %3535 = vmatprep.subr.mxu0 0.0
    %3536 = vmatpush2.msra.mxu0 0.0
    %3537 = vmatprep.subr.mxu0 0.0
    %3538 = vmatpush2.msra.mxu0 0.0
    %3539 = vmatprep.subr.mxu0 0.0
    %3540 = vmatpush2.msra.mxu0 0.0
    %3541 = vmatprep.subr.mxu0 0.0
    %3542 = vmatpush2.msra.mxu0 0.0
    %3543 = vmatprep.subr.mxu0 0.0
    %3544 = vmatpush2.msra.mxu0 0.0
    %3545 = vmatprep.subr.mxu0 0.0
    %3546 = vmatpush2.msra.mxu0 0.0
    %3547 = vmatprep.subr.mxu0 0.0
    %3548 = vmatpush2.msra.mxu0 0.0
    %3549 = vmatprep.subr.mxu0 0.0
    %3550 = vmatpush2.msra.mxu0 0.0
    %3551 = vmatprep.subr.mxu0 0.0
    %3552 = vmatpush2.msra.mxu0 0.0
    %3553 = vmatprep.subr.mxu0 0.0
    %3554 = vmatpush2.msra.mxu0 0.0
    %3555 = vmatprep.subr.mxu0 0.0
    %3556 = vmatpush2.msra.mxu0 0.0
    %3557 = vmatprep.subr.mxu0 0.0
    %3558 = vmatpush2.msra.mxu0 0.0
    %3559 = vmatprep.subr.mxu0 0.0
    %3560 = vmatpush2.msra.mxu0 0.0
    %3561 = vmatprep.subr.mxu0 0.0
    %3562 = vmatpush2.msra.mxu0 0.0
    %3563 = vmatprep.subr.mxu0 0.0
    %3564 = vmatpush2.msra.mxu0 0.0
    %3565 = vmatprep.mubr.f32.mxu0 0.0
    %v3566 = vand.u32 %v50, 4294901760
    %v3567 = vsub.f32 %v50, %v3566
    %v3568 = vand.u32 %v3567, 4294901760
    %3569 = vmatmul.mubr.f32.gmra.mxu0 %v3568
    %v3570 = vpop.f32.mrf.mxu0
    %v3571 = vadd.f32 %v3496, %v3570
    %v3572 = vpop.f32.mrf.mxu0
    %3573 = vdwg.mxu0
    %3574 = vmatprep.subr.mxu0 0.0
    %3575 = vmatpush1.msra.mxu0 0.0
    %3576 = vmatprep.subr.mxu0 0.0
    %3577 = vmatpush1.msra.mxu0 0.0
    %3578 = vmatprep.subr.mxu0 0.0
    %3579 = vmatpush1.msra.mxu0 0.0
    %3580 = vmatprep.subr.mxu0 0.0
    %3581 = vmatpush1.msra.mxu0 0.0
    %3582 = vmatprep.subr.mxu0 0.0
    %3583 = vmatpush1.msra.mxu0 0.0
    %3584 = vmatprep.subr.mxu0 0.0
    %3585 = vmatpush1.msra.mxu0 0.0
    %3586 = vmatprep.subr.mxu0 0.0
    %3587 = vmatpush1.msra.mxu0 0.0
    %3588 = vmatprep.subr.mxu0 0.0
    %3589 = vmatpush1.msra.mxu0 0.0
    %3590 = vmatprep.subr.mxu0 0.0
    %3591 = vmatpush1.msra.mxu0 0.0
    %3592 = vmatprep.subr.mxu0 0.0
    %3593 = vmatpush1.msra.mxu0 0.0
    %3594 = vmatprep.subr.mxu0 0.0
    %3595 = vmatpush1.msra.mxu0 0.0
    %3596 = vmatprep.subr.mxu0 0.0
    %3597 = vmatpush1.msra.mxu0 0.0
    %3598 = vmatprep.subr.mxu0 0.0
    %3599 = vmatpush1.msra.mxu0 0.0
    %3600 = vmatprep.subr.mxu0 0.0
    %3601 = vmatpush1.msra.mxu0 0.0
    %3602 = vmatprep.subr.mxu0 0.0
    %v3603 = vand.u32 %v44, 4294901760
    %v3604 = vsub.f32 %v44, %v3603
    %v3605 = vand.u32 %v3604, 4294901760
    %3606 = vmatpush1.msra.mxu0 %v3605
    %3607 = vmatprep.subr.mxu0 0.0
    %v3608 = vand.u32 %v43, 4294901760
    %v3609 = vsub.f32 %v43, %v3608
    %v3610 = vand.u32 %v3609, 4294901760
    %3611 = vmatpush1.msra.mxu0 %v3610
    %3612 = vmatprep.subr.mxu0 0.0
    %3613 = vmatpush2.msra.mxu0 0.0
    %3614 = vmatprep.subr.mxu0 0.0
    %3615 = vmatpush2.msra.mxu0 0.0
    %3616 = vmatprep.subr.mxu0 0.0
    %3617 = vmatpush2.msra.mxu0 0.0
    %3618 = vmatprep.subr.mxu0 0.0
    %3619 = vmatpush2.msra.mxu0 0.0
    %3620 = vmatprep.subr.mxu0 0.0
    %3621 = vmatpush2.msra.mxu0 0.0
    %3622 = vmatprep.subr.mxu0 0.0
    %3623 = vmatpush2.msra.mxu0 0.0
    %3624 = vmatprep.subr.mxu0 0.0
    %3625 = vmatpush2.msra.mxu0 0.0
    %3626 = vmatprep.subr.mxu0 0.0
    %3627 = vmatpush2.msra.mxu0 0.0
    %3628 = vmatprep.subr.mxu0 0.0
    %3629 = vmatpush2.msra.mxu0 0.0
    %3630 = vmatprep.subr.mxu0 0.0
    %3631 = vmatpush2.msra.mxu0 0.0
    %3632 = vmatprep.subr.mxu0 0.0
    %3633 = vmatpush2.msra.mxu0 0.0
    %3634 = vmatprep.subr.mxu0 0.0
    %3635 = vmatpush2.msra.mxu0 0.0
    %3636 = vmatprep.subr.mxu0 0.0
    %3637 = vmatpush2.msra.mxu0 0.0
    %3638 = vmatprep.subr.mxu0 0.0
    %3639 = vmatpush2.msra.mxu0 0.0
    %3640 = vmatprep.subr.mxu0 0.0
    %3641 = vmatpush2.msra.mxu0 0.0
    %3642 = vmatprep.subr.mxu0 0.0
    %3643 = vmatpush2.msra.mxu0 0.0
    %3644 = vmatprep.mubr.f32.mxu0 0.0
    %v3645 = vand.u32 %v50, 4294901760
    %3646 = vmatmul.mubr.f32.gmra.mxu0 %v3645
    %v3647 = vpop.f32.mrf.mxu0
    %v3648 = vadd.f32 %v3571, %v3647
    %v3649 = vpop.f32.mrf.mxu0
    %3650 = vdwg.mxu0
    %3651 = vmatprep.subr.mxu0 0.0
    %3652 = vmatpush1.msra.mxu0 0.0
    %3653 = vmatprep.subr.mxu0 0.0
    %3654 = vmatpush1.msra.mxu0 0.0
    %3655 = vmatprep.subr.mxu0 0.0
    %3656 = vmatpush1.msra.mxu0 0.0
    %3657 = vmatprep.subr.mxu0 0.0
    %3658 = vmatpush1.msra.mxu0 0.0
    %3659 = vmatprep.subr.mxu0 0.0
    %3660 = vmatpush1.msra.mxu0 0.0
    %3661 = vmatprep.subr.mxu0 0.0
    %3662 = vmatpush1.msra.mxu0 0.0
    %3663 = vmatprep.subr.mxu0 0.0
    %3664 = vmatpush1.msra.mxu0 0.0
    %3665 = vmatprep.subr.mxu0 0.0
    %3666 = vmatpush1.msra.mxu0 0.0
    %3667 = vmatprep.subr.mxu0 0.0
    %3668 = vmatpush1.msra.mxu0 0.0
    %3669 = vmatprep.subr.mxu0 0.0
    %3670 = vmatpush1.msra.mxu0 0.0
    %3671 = vmatprep.subr.mxu0 0.0
    %3672 = vmatpush1.msra.mxu0 0.0
    %3673 = vmatprep.subr.mxu0 0.0
    %3674 = vmatpush1.msra.mxu0 0.0
    %3675 = vmatprep.subr.mxu0 0.0
    %3676 = vmatpush1.msra.mxu0 0.0
    %3677 = vmatprep.subr.mxu0 0.0
    %3678 = vmatpush1.msra.mxu0 0.0
    %3679 = vmatprep.subr.mxu0 0.0
    %v3680 = vand.u32 %v44, 4294901760
    %3681 = vmatpush1.msra.mxu0 %v3680
    %3682 = vmatprep.subr.mxu0 0.0
    %v3683 = vand.u32 %v43, 4294901760
    %3684 = vmatpush1.msra.mxu0 %v3683
    %3685 = vmatprep.subr.mxu0 0.0
    %3686 = vmatpush2.msra.mxu0 0.0
    %3687 = vmatprep.subr.mxu0 0.0
    %3688 = vmatpush2.msra.mxu0 0.0
    %3689 = vmatprep.subr.mxu0 0.0
    %3690 = vmatpush2.msra.mxu0 0.0
    %3691 = vmatprep.subr.mxu0 0.0
    %3692 = vmatpush2.msra.mxu0 0.0
    %3693 = vmatprep.subr.mxu0 0.0
    %3694 = vmatpush2.msra.mxu0 0.0
    %3695 = vmatprep.subr.mxu0 0.0
    %3696 = vmatpush2.msra.mxu0 0.0
    %3697 = vmatprep.subr.mxu0 0.0
    %3698 = vmatpush2.msra.mxu0 0.0
    %3699 = vmatprep.subr.mxu0 0.0
    %3700 = vmatpush2.msra.mxu0 0.0
    %3701 = vmatprep.subr.mxu0 0.0
    %3702 = vmatpush2.msra.mxu0 0.0
    %3703 = vmatprep.subr.mxu0 0.0
    %3704 = vmatpush2.msra.mxu0 0.0
    %3705 = vmatprep.subr.mxu0 0.0
    %3706 = vmatpush2.msra.mxu0 0.0
    %3707 = vmatprep.subr.mxu0 0.0
    %3708 = vmatpush2.msra.mxu0 0.0
    %3709 = vmatprep.subr.mxu0 0.0
    %3710 = vmatpush2.msra.mxu0 0.0
    %3711 = vmatprep.subr.mxu0 0.0
    %3712 = vmatpush2.msra.mxu0 0.0
    %3713 = vmatprep.subr.mxu0 0.0
    %3714 = vmatpush2.msra.mxu0 0.0
    %3715 = vmatprep.subr.mxu0 0.0
    %3716 = vmatpush2.msra.mxu0 0.0
    %3717 = vmatprep.mubr.f32.mxu0 0.0
    %v3718 = vand.u32 %v50, 4294901760
    %3719 = vmatmul.mubr.f32.gmra.mxu0 %v3718
    %v3720 = vpop.f32.mrf.mxu0
    %v3721 = vadd.f32 %v3648, %v3720
    %v3722 = vpop.f32.mrf.mxu0
    %3723 = vdwg.mxu0
    %v3725 = vsel %vm48, %v508, 0
    %3727 = vmatprep.subr.mxu0 0.0
    %3728 = vmatpush1.msra.mxu0 0.0
    %3729 = vmatprep.subr.mxu0 0.0
    %3730 = vmatpush1.msra.mxu0 0.0
    %3731 = vmatprep.subr.mxu0 0.0
    %3732 = vmatpush1.msra.mxu0 0.0
    %3733 = vmatprep.subr.mxu0 0.0
    %3734 = vmatpush1.msra.mxu0 0.0
    %3735 = vmatprep.subr.mxu0 0.0
    %3736 = vmatpush1.msra.mxu0 0.0
    %3737 = vmatprep.subr.mxu0 0.0
    %3738 = vmatpush1.msra.mxu0 0.0
    %3739 = vmatprep.subr.mxu0 0.0
    %3740 = vmatpush1.msra.mxu0 0.0
    %3741 = vmatprep.subr.mxu0 0.0
    %3742 = vmatpush1.msra.mxu0 0.0
    %3743 = vmatprep.subr.mxu0 0.0
    %3744 = vmatpush1.msra.mxu0 0.0
    %3745 = vmatprep.subr.mxu0 0.0
    %3746 = vmatpush1.msra.mxu0 0.0
    %3747 = vmatprep.subr.mxu0 0.0
    %3748 = vmatpush1.msra.mxu0 0.0
    %3749 = vmatprep.subr.mxu0 0.0
    %3750 = vmatpush1.msra.mxu0 0.0
    %3751 = vmatprep.subr.mxu0 0.0
    %3752 = vmatpush1.msra.mxu0 0.0
    %3753 = vmatprep.subr.mxu0 0.0
    %3754 = vmatpush1.msra.mxu0 0.0
    %3755 = vmatprep.subr.mxu0 0.0
    %v3756 = vand.u32 %v47, 4294901760
    %3757 = vmatpush1.msra.mxu0 %v3756
    %3758 = vmatprep.subr.mxu0 0.0
    %v3759 = vand.u32 %v46, 4294901760
    %3760 = vmatpush1.msra.mxu0 %v3759
    %3761 = vmatprep.subr.mxu0 0.0
    %3762 = vmatpush2.msra.mxu0 0.0
    %3763 = vmatprep.subr.mxu0 0.0
    %3764 = vmatpush2.msra.mxu0 0.0
    %3765 = vmatprep.subr.mxu0 0.0
    %3766 = vmatpush2.msra.mxu0 0.0
    %3767 = vmatprep.subr.mxu0 0.0
    %3768 = vmatpush2.msra.mxu0 0.0
    %3769 = vmatprep.subr.mxu0 0.0
    %3770 = vmatpush2.msra.mxu0 0.0
    %3771 = vmatprep.subr.mxu0 0.0
    %3772 = vmatpush2.msra.mxu0 0.0
    %3773 = vmatprep.subr.mxu0 0.0
    %3774 = vmatpush2.msra.mxu0 0.0
    %3775 = vmatprep.subr.mxu0 0.0
    %3776 = vmatpush2.msra.mxu0 0.0
    %3777 = vmatprep.subr.mxu0 0.0
    %3778 = vmatpush2.msra.mxu0 0.0
    %3779 = vmatprep.subr.mxu0 0.0
    %3780 = vmatpush2.msra.mxu0 0.0
    %3781 = vmatprep.subr.mxu0 0.0
    %3782 = vmatpush2.msra.mxu0 0.0
    %3783 = vmatprep.subr.mxu0 0.0
    %3784 = vmatpush2.msra.mxu0 0.0
    %3785 = vmatprep.subr.mxu0 0.0
    %3786 = vmatpush2.msra.mxu0 0.0
    %3787 = vmatprep.subr.mxu0 0.0
    %3788 = vmatpush2.msra.mxu0 0.0
    %3789 = vmatprep.subr.mxu0 0.0
    %3790 = vmatpush2.msra.mxu0 0.0
    %3791 = vmatprep.subr.mxu0 0.0
    %3792 = vmatpush2.msra.mxu0 0.0
    %3793 = vmatprep.mubr.f32.mxu0 0.0
    %v3794 = vand.u32 %v3725, 4294901760
    %v3795 = vsub.f32 %v3725, %v3794
    %v3796 = vand.u32 %v3795, 4294901760
    %v3797 = vsub.f32 %v3795, %v3796
    %v3798 = vand.u32 %v3797, 4294901760
    %3799 = vmatmul.mubr.f32.gmra.mxu0 %v3798
    %v3800 = vpop.f32.mrf.mxu0
    %v3801 = vadd.f32 0.0, %v3800
    %v3802 = vpop.f32.mrf.mxu0
    %3803 = vdwg.mxu0
    %3804 = vmatprep.subr.mxu0 0.0
    %3805 = vmatpush1.msra.mxu0 0.0
    %3806 = vmatprep.subr.mxu0 0.0
    %3807 = vmatpush1.msra.mxu0 0.0
    %3808 = vmatprep.subr.mxu0 0.0
    %3809 = vmatpush1.msra.mxu0 0.0
    %3810 = vmatprep.subr.mxu0 0.0
    %3811 = vmatpush1.msra.mxu0 0.0
    %3812 = vmatprep.subr.mxu0 0.0
    %3813 = vmatpush1.msra.mxu0 0.0
    %3814 = vmatprep.subr.mxu0 0.0
    %3815 = vmatpush1.msra.mxu0 0.0
    %3816 = vmatprep.subr.mxu0 0.0
    %3817 = vmatpush1.msra.mxu0 0.0
    %3818 = vmatprep.subr.mxu0 0.0
    %3819 = vmatpush1.msra.mxu0 0.0
    %3820 = vmatprep.subr.mxu0 0.0
    %3821 = vmatpush1.msra.mxu0 0.0
    %3822 = vmatprep.subr.mxu0 0.0
    %3823 = vmatpush1.msra.mxu0 0.0
    %3824 = vmatprep.subr.mxu0 0.0
    %3825 = vmatpush1.msra.mxu0 0.0
    %3826 = vmatprep.subr.mxu0 0.0
    %3827 = vmatpush1.msra.mxu0 0.0
    %3828 = vmatprep.subr.mxu0 0.0
    %3829 = vmatpush1.msra.mxu0 0.0
    %3830 = vmatprep.subr.mxu0 0.0
    %3831 = vmatpush1.msra.mxu0 0.0
    %3832 = vmatprep.subr.mxu0 0.0
    %v3833 = vand.u32 %v47, 4294901760
    %v3834 = vsub.f32 %v47, %v3833
    %v3835 = vand.u32 %v3834, 4294901760
    %v3836 = vsub.f32 %v3834, %v3835
    %v3837 = vand.u32 %v3836, 4294901760
    %3838 = vmatpush1.msra.mxu0 %v3837
    %3839 = vmatprep.subr.mxu0 0.0
    %v3840 = vand.u32 %v46, 4294901760
    %v3841 = vsub.f32 %v46, %v3840
    %v3842 = vand.u32 %v3841, 4294901760
    %v3843 = vsub.f32 %v3841, %v3842
    %v3844 = vand.u32 %v3843, 4294901760
    %3845 = vmatpush1.msra.mxu0 %v3844
    %3846 = vmatprep.subr.mxu0 0.0
    %3847 = vmatpush2.msra.mxu0 0.0
    %3848 = vmatprep.subr.mxu0 0.0
    %3849 = vmatpush2.msra.mxu0 0.0
    %3850 = vmatprep.subr.mxu0 0.0
    %3851 = vmatpush2.msra.mxu0 0.0
    %3852 = vmatprep.subr.mxu0 0.0
    %3853 = vmatpush2.msra.mxu0 0.0
    %3854 = vmatprep.subr.mxu0 0.0
    %3855 = vmatpush2.msra.mxu0 0.0
    %3856 = vmatprep.subr.mxu0 0.0
    %3857 = vmatpush2.msra.mxu0 0.0
    %3858 = vmatprep.subr.mxu0 0.0
    %3859 = vmatpush2.msra.mxu0 0.0
    %3860 = vmatprep.subr.mxu0 0.0
    %3861 = vmatpush2.msra.mxu0 0.0
    %3862 = vmatprep.subr.mxu0 0.0
    %3863 = vmatpush2.msra.mxu0 0.0
    %3864 = vmatprep.subr.mxu0 0.0
    %3865 = vmatpush2.msra.mxu0 0.0
    %3866 = vmatprep.subr.mxu0 0.0
    %3867 = vmatpush2.msra.mxu0 0.0
    %3868 = vmatprep.subr.mxu0 0.0
    %3869 = vmatpush2.msra.mxu0 0.0
    %3870 = vmatprep.subr.mxu0 0.0
    %3871 = vmatpush2.msra.mxu0 0.0
    %3872 = vmatprep.subr.mxu0 0.0
    %3873 = vmatpush2.msra.mxu0 0.0
    %3874 = vmatprep.subr.mxu0 0.0
    %3875 = vmatpush2.msra.mxu0 0.0
    %3876 = vmatprep.subr.mxu0 0.0
    %3877 = vmatpush2.msra.mxu0 0.0
    %3878 = vmatprep.mubr.f32.mxu0 0.0
    %v3879 = vand.u32 %v3725, 4294901760
    %3880 = vmatmul.mubr.f32.gmra.mxu0 %v3879
    %v3881 = vpop.f32.mrf.mxu0
    %v3882 = vadd.f32 %v3801, %v3881
    %v3883 = vpop.f32.mrf.mxu0
    %3884 = vdwg.mxu0
    %3885 = vmatprep.subr.mxu0 0.0
    %3886 = vmatpush1.msra.mxu0 0.0
    %3887 = vmatprep.subr.mxu0 0.0
    %3888 = vmatpush1.msra.mxu0 0.0
    %3889 = vmatprep.subr.mxu0 0.0
    %3890 = vmatpush1.msra.mxu0 0.0
    %3891 = vmatprep.subr.mxu0 0.0
    %3892 = vmatpush1.msra.mxu0 0.0
    %3893 = vmatprep.subr.mxu0 0.0
    %3894 = vmatpush1.msra.mxu0 0.0
    %3895 = vmatprep.subr.mxu0 0.0
    %3896 = vmatpush1.msra.mxu0 0.0
    %3897 = vmatprep.subr.mxu0 0.0
    %3898 = vmatpush1.msra.mxu0 0.0
    %3899 = vmatprep.subr.mxu0 0.0
    %3900 = vmatpush1.msra.mxu0 0.0
    %3901 = vmatprep.subr.mxu0 0.0
    %3902 = vmatpush1.msra.mxu0 0.0
    %3903 = vmatprep.subr.mxu0 0.0
    %3904 = vmatpush1.msra.mxu0 0.0
    %3905 = vmatprep.subr.mxu0 0.0
    %3906 = vmatpush1.msra.mxu0 0.0
    %3907 = vmatprep.subr.mxu0 0.0
    %3908 = vmatpush1.msra.mxu0 0.0
    %3909 = vmatprep.subr.mxu0 0.0
    %3910 = vmatpush1.msra.mxu0 0.0
    %3911 = vmatprep.subr.mxu0 0.0
    %3912 = vmatpush1.msra.mxu0 0.0
    %3913 = vmatprep.subr.mxu0 0.0
    %v3914 = vand.u32 %v47, 4294901760
    %v3915 = vsub.f32 %v47, %v3914
    %3916 = vmatpush1.msra.mxu0 %v3915
    %3917 = vmatprep.subr.mxu0 0.0
    %v3918 = vand.u32 %v46, 4294901760
    %v3919 = vsub.f32 %v46, %v3918
    %3920 = vmatpush1.msra.mxu0 %v3919
    %3921 = vmatprep.subr.mxu0 0.0
    %3922 = vmatpush2.msra.mxu0 0.0
    %3923 = vmatprep.subr.mxu0 0.0
    %3924 = vmatpush2.msra.mxu0 0.0
    %3925 = vmatprep.subr.mxu0 0.0
    %3926 = vmatpush2.msra.mxu0 0.0
    %3927 = vmatprep.subr.mxu0 0.0
    %3928 = vmatpush2.msra.mxu0 0.0
    %3929 = vmatprep.subr.mxu0 0.0
    %3930 = vmatpush2.msra.mxu0 0.0
    %3931 = vmatprep.subr.mxu0 0.0
    %3932 = vmatpush2.msra.mxu0 0.0
    %3933 = vmatprep.subr.mxu0 0.0
    %3934 = vmatpush2.msra.mxu0 0.0
    %3935 = vmatprep.subr.mxu0 0.0
    %3936 = vmatpush2.msra.mxu0 0.0
    %3937 = vmatprep.subr.mxu0 0.0
    %3938 = vmatpush2.msra.mxu0 0.0
    %3939 = vmatprep.subr.mxu0 0.0
    %3940 = vmatpush2.msra.mxu0 0.0
    %3941 = vmatprep.subr.mxu0 0.0
    %3942 = vmatpush2.msra.mxu0 0.0
    %3943 = vmatprep.subr.mxu0 0.0
    %3944 = vmatpush2.msra.mxu0 0.0
    %3945 = vmatprep.subr.mxu0 0.0
    %3946 = vmatpush2.msra.mxu0 0.0
    %3947 = vmatprep.subr.mxu0 0.0
    %3948 = vmatpush2.msra.mxu0 0.0
    %3949 = vmatprep.subr.mxu0 0.0
    %3950 = vmatpush2.msra.mxu0 0.0
    %3951 = vmatprep.subr.mxu0 0.0
    %3952 = vmatpush2.msra.mxu0 0.0
    %3953 = vmatprep.mubr.f32.mxu0 0.0
    %v3954 = vand.u32 %v3725, 4294901760
    %v3955 = vsub.f32 %v3725, %v3954
    %3956 = vmatmul.mubr.f32.gmra.mxu0 %v3955
    %v3957 = vpop.f32.mrf.mxu0
    %v3958 = vadd.f32 %v3882, %v3957
    %v3959 = vpop.f32.mrf.mxu0
    %3960 = vdwg.mxu0
    %3961 = vmatprep.subr.mxu0 0.0
    %3962 = vmatpush1.msra.mxu0 0.0
    %3963 = vmatprep.subr.mxu0 0.0
    %3964 = vmatpush1.msra.mxu0 0.0
    %3965 = vmatprep.subr.mxu0 0.0
    %3966 = vmatpush1.msra.mxu0 0.0
    %3967 = vmatprep.subr.mxu0 0.0
    %3968 = vmatpush1.msra.mxu0 0.0
    %3969 = vmatprep.subr.mxu0 0.0
    %3970 = vmatpush1.msra.mxu0 0.0
    %3971 = vmatprep.subr.mxu0 0.0
    %3972 = vmatpush1.msra.mxu0 0.0
    %3973 = vmatprep.subr.mxu0 0.0
    %3974 = vmatpush1.msra.mxu0 0.0
    %3975 = vmatprep.subr.mxu0 0.0
    %3976 = vmatpush1.msra.mxu0 0.0
    %3977 = vmatprep.subr.mxu0 0.0
    %3978 = vmatpush1.msra.mxu0 0.0
    %3979 = vmatprep.subr.mxu0 0.0
    %3980 = vmatpush1.msra.mxu0 0.0
    %3981 = vmatprep.subr.mxu0 0.0
    %3982 = vmatpush1.msra.mxu0 0.0
    %3983 = vmatprep.subr.mxu0 0.0
    %3984 = vmatpush1.msra.mxu0 0.0
    %3985 = vmatprep.subr.mxu0 0.0
    %3986 = vmatpush1.msra.mxu0 0.0
    %3987 = vmatprep.subr.mxu0 0.0
    %3988 = vmatpush1.msra.mxu0 0.0
    %3989 = vmatprep.subr.mxu0 0.0
    %v3990 = vand.u32 %v47, 4294901760
    %3991 = vmatpush1.msra.mxu0 %v3990
    %3992 = vmatprep.subr.mxu0 0.0
    %v3993 = vand.u32 %v46, 4294901760
    %3994 = vmatpush1.msra.mxu0 %v3993
    %3995 = vmatprep.subr.mxu0 0.0
    %3996 = vmatpush2.msra.mxu0 0.0
    %3997 = vmatprep.subr.mxu0 0.0
    %3998 = vmatpush2.msra.mxu0 0.0
    %3999 = vmatprep.subr.mxu0 0.0
    %4000 = vmatpush2.msra.mxu0 0.0
    %4001 = vmatprep.subr.mxu0 0.0
    %4002 = vmatpush2.msra.mxu0 0.0
    %4003 = vmatprep.subr.mxu0 0.0
    %4004 = vmatpush2.msra.mxu0 0.0
    %4005 = vmatprep.subr.mxu0 0.0
    %4006 = vmatpush2.msra.mxu0 0.0
    %4007 = vmatprep.subr.mxu0 0.0
    %4008 = vmatpush2.msra.mxu0 0.0
    %4009 = vmatprep.subr.mxu0 0.0
    %4010 = vmatpush2.msra.mxu0 0.0
    %4011 = vmatprep.subr.mxu0 0.0
    %4012 = vmatpush2.msra.mxu0 0.0
    %4013 = vmatprep.subr.mxu0 0.0
    %4014 = vmatpush2.msra.mxu0 0.0
    %4015 = vmatprep.subr.mxu0 0.0
    %4016 = vmatpush2.msra.mxu0 0.0
    %4017 = vmatprep.subr.mxu0 0.0
    %4018 = vmatpush2.msra.mxu0 0.0
    %4019 = vmatprep.subr.mxu0 0.0
    %4020 = vmatpush2.msra.mxu0 0.0
    %4021 = vmatprep.subr.mxu0 0.0
    %4022 = vmatpush2.msra.mxu0 0.0
    %4023 = vmatprep.subr.mxu0 0.0
    %4024 = vmatpush2.msra.mxu0 0.0
    %4025 = vmatprep.subr.mxu0 0.0
    %4026 = vmatpush2.msra.mxu0 0.0
    %4027 = vmatprep.mubr.f32.mxu0 0.0
    %v4028 = vand.u32 %v3725, 4294901760
    %v4029 = vsub.f32 %v3725, %v4028
    %v4030 = vand.u32 %v4029, 4294901760
    %4031 = vmatmul.mubr.f32.gmra.mxu0 %v4030
    %v4032 = vpop.f32.mrf.mxu0
    %v4033 = vadd.f32 %v3958, %v4032
    %v4034 = vpop.f32.mrf.mxu0
    %4035 = vdwg.mxu0
    %4036 = vmatprep.subr.mxu0 0.0
    %4037 = vmatpush1.msra.mxu0 0.0
    %4038 = vmatprep.subr.mxu0 0.0
    %4039 = vmatpush1.msra.mxu0 0.0
    %4040 = vmatprep.subr.mxu0 0.0
    %4041 = vmatpush1.msra.mxu0 0.0
    %4042 = vmatprep.subr.mxu0 0.0
    %4043 = vmatpush1.msra.mxu0 0.0
    %4044 = vmatprep.subr.mxu0 0.0
    %4045 = vmatpush1.msra.mxu0 0.0
    %4046 = vmatprep.subr.mxu0 0.0
    %4047 = vmatpush1.msra.mxu0 0.0
    %4048 = vmatprep.subr.mxu0 0.0
    %4049 = vmatpush1.msra.mxu0 0.0
    %4050 = vmatprep.subr.mxu0 0.0
    %4051 = vmatpush1.msra.mxu0 0.0
    %4052 = vmatprep.subr.mxu0 0.0
    %4053 = vmatpush1.msra.mxu0 0.0
    %4054 = vmatprep.subr.mxu0 0.0
    %4055 = vmatpush1.msra.mxu0 0.0
    %4056 = vmatprep.subr.mxu0 0.0
    %4057 = vmatpush1.msra.mxu0 0.0
    %4058 = vmatprep.subr.mxu0 0.0
    %4059 = vmatpush1.msra.mxu0 0.0
    %4060 = vmatprep.subr.mxu0 0.0
    %4061 = vmatpush1.msra.mxu0 0.0
    %4062 = vmatprep.subr.mxu0 0.0
    %4063 = vmatpush1.msra.mxu0 0.0
    %4064 = vmatprep.subr.mxu0 0.0
    %v4065 = vand.u32 %v47, 4294901760
    %v4066 = vsub.f32 %v47, %v4065
    %v4067 = vand.u32 %v4066, 4294901760
    %4068 = vmatpush1.msra.mxu0 %v4067
    %4069 = vmatprep.subr.mxu0 0.0
    %v4070 = vand.u32 %v46, 4294901760
    %v4071 = vsub.f32 %v46, %v4070
    %v4072 = vand.u32 %v4071, 4294901760
    %4073 = vmatpush1.msra.mxu0 %v4072
    %4074 = vmatprep.subr.mxu0 0.0
    %4075 = vmatpush2.msra.mxu0 0.0
    %4076 = vmatprep.subr.mxu0 0.0
    %4077 = vmatpush2.msra.mxu0 0.0
    %4078 = vmatprep.subr.mxu0 0.0
    %4079 = vmatpush2.msra.mxu0 0.0
    %4080 = vmatprep.subr.mxu0 0.0
    %4081 = vmatpush2.msra.mxu0 0.0
    %4082 = vmatprep.subr.mxu0 0.0
    %4083 = vmatpush2.msra.mxu0 0.0
    %4084 = vmatprep.subr.mxu0 0.0
    %4085 = vmatpush2.msra.mxu0 0.0
    %4086 = vmatprep.subr.mxu0 0.0
    %4087 = vmatpush2.msra.mxu0 0.0
    %4088 = vmatprep.subr.mxu0 0.0
    %4089 = vmatpush2.msra.mxu0 0.0
    %4090 = vmatprep.subr.mxu0 0.0
    %4091 = vmatpush2.msra.mxu0 0.0
    %4092 = vmatprep.subr.mxu0 0.0
    %4093 = vmatpush2.msra.mxu0 0.0
    %4094 = vmatprep.subr.mxu0 0.0
    %4095 = vmatpush2.msra.mxu0 0.0
    %4096 = vmatprep.subr.mxu0 0.0
    %4097 = vmatpush2.msra.mxu0 0.0
    %4098 = vmatprep.subr.mxu0 0.0
    %4099 = vmatpush2.msra.mxu0 0.0
    %4100 = vmatprep.subr.mxu0 0.0
    %4101 = vmatpush2.msra.mxu0 0.0
    %4102 = vmatprep.subr.mxu0 0.0
    %4103 = vmatpush2.msra.mxu0 0.0
    %4104 = vmatprep.subr.mxu0 0.0
    %4105 = vmatpush2.msra.mxu0 0.0
    %4106 = vmatprep.mubr.f32.mxu0 0.0
    %v4107 = vand.u32 %v3725, 4294901760
    %4108 = vmatmul.mubr.f32.gmra.mxu0 %v4107
    %v4109 = vpop.f32.mrf.mxu0
    %v4110 = vadd.f32 %v4033, %v4109
    %v4111 = vpop.f32.mrf.mxu0
    %4112 = vdwg.mxu0
    %4113 = vmatprep.subr.mxu0 0.0
    %4114 = vmatpush1.msra.mxu0 0.0
    %4115 = vmatprep.subr.mxu0 0.0
    %4116 = vmatpush1.msra.mxu0 0.0
    %4117 = vmatprep.subr.mxu0 0.0
    %4118 = vmatpush1.msra.mxu0 0.0
    %4119 = vmatprep.subr.mxu0 0.0
    %4120 = vmatpush1.msra.mxu0 0.0
    %4121 = vmatprep.subr.mxu0 0.0
    %4122 = vmatpush1.msra.mxu0 0.0
    %4123 = vmatprep.subr.mxu0 0.0
    %4124 = vmatpush1.msra.mxu0 0.0
    %4125 = vmatprep.subr.mxu0 0.0
    %4126 = vmatpush1.msra.mxu0 0.0
    %4127 = vmatprep.subr.mxu0 0.0
    %4128 = vmatpush1.msra.mxu0 0.0
    %4129 = vmatprep.subr.mxu0 0.0
    %4130 = vmatpush1.msra.mxu0 0.0
    %4131 = vmatprep.subr.mxu0 0.0
    %4132 = vmatpush1.msra.mxu0 0.0
    %4133 = vmatprep.subr.mxu0 0.0
    %4134 = vmatpush1.msra.mxu0 0.0
    %4135 = vmatprep.subr.mxu0 0.0
    %4136 = vmatpush1.msra.mxu0 0.0
    %4137 = vmatprep.subr.mxu0 0.0
    %4138 = vmatpush1.msra.mxu0 0.0
    %4139 = vmatprep.subr.mxu0 0.0
    %4140 = vmatpush1.msra.mxu0 0.0
    %4141 = vmatprep.subr.mxu0 0.0
    %v4142 = vand.u32 %v47, 4294901760
    %4143 = vmatpush1.msra.mxu0 %v4142
    %4144 = vmatprep.subr.mxu0 0.0
    %v4145 = vand.u32 %v46, 4294901760
    %4146 = vmatpush1.msra.mxu0 %v4145
    %4147 = vmatprep.subr.mxu0 0.0
    %4148 = vmatpush2.msra.mxu0 0.0
    %4149 = vmatprep.subr.mxu0 0.0
    %4150 = vmatpush2.msra.mxu0 0.0
    %4151 = vmatprep.subr.mxu0 0.0
    %4152 = vmatpush2.msra.mxu0 0.0
    %4153 = vmatprep.subr.mxu0 0.0
    %4154 = vmatpush2.msra.mxu0 0.0
    %4155 = vmatprep.subr.mxu0 0.0
    %4156 = vmatpush2.msra.mxu0 0.0
    %4157 = vmatprep.subr.mxu0 0.0
    %4158 = vmatpush2.msra.mxu0 0.0
    %4159 = vmatprep.subr.mxu0 0.0
    %4160 = vmatpush2.msra.mxu0 0.0
    %4161 = vmatprep.subr.mxu0 0.0
    %4162 = vmatpush2.msra.mxu0 0.0
    %4163 = vmatprep.subr.mxu0 0.0
    %4164 = vmatpush2.msra.mxu0 0.0
    %4165 = vmatprep.subr.mxu0 0.0
    %4166 = vmatpush2.msra.mxu0 0.0
    %4167 = vmatprep.subr.mxu0 0.0
    %4168 = vmatpush2.msra.mxu0 0.0
    %4169 = vmatprep.subr.mxu0 0.0
    %4170 = vmatpush2.msra.mxu0 0.0
    %4171 = vmatprep.subr.mxu0 0.0
    %4172 = vmatpush2.msra.mxu0 0.0
    %4173 = vmatprep.subr.mxu0 0.0
    %4174 = vmatpush2.msra.mxu0 0.0
    %4175 = vmatprep.subr.mxu0 0.0
    %4176 = vmatpush2.msra.mxu0 0.0
    %4177 = vmatprep.subr.mxu0 0.0
    %4178 = vmatpush2.msra.mxu0 0.0
    %4179 = vmatprep.mubr.f32.mxu0 0.0
    %v4180 = vand.u32 %v3725, 4294901760
    %4181 = vmatmul.mubr.f32.gmra.mxu0 %v4180
    %v4182 = vpop.f32.mrf.mxu0
    %v4183 = vadd.f32 %v4110, %v4182
    %v4184 = vpop.f32.mrf.mxu0
    %4185 = vdwg.mxu0
    %v4187 = vsel %vm48, %v967, 0
    %4189 = vmatprep.subr.mxu0 0.0
    %4190 = vmatpush1.msra.mxu0 0.0
    %4191 = vmatprep.subr.mxu0 0.0
    %4192 = vmatpush1.msra.mxu0 0.0
    %4193 = vmatprep.subr.mxu0 0.0
    %4194 = vmatpush1.msra.mxu0 0.0
    %4195 = vmatprep.subr.mxu0 0.0
    %4196 = vmatpush1.msra.mxu0 0.0
    %4197 = vmatprep.subr.mxu0 0.0
    %4198 = vmatpush1.msra.mxu0 0.0
    %4199 = vmatprep.subr.mxu0 0.0
    %4200 = vmatpush1.msra.mxu0 0.0
    %4201 = vmatprep.subr.mxu0 0.0
    %4202 = vmatpush1.msra.mxu0 0.0
    %4203 = vmatprep.subr.mxu0 0.0
    %4204 = vmatpush1.msra.mxu0 0.0
    %4205 = vmatprep.subr.mxu0 0.0
    %4206 = vmatpush1.msra.mxu0 0.0
    %4207 = vmatprep.subr.mxu0 0.0
    %4208 = vmatpush1.msra.mxu0 0.0
    %4209 = vmatprep.subr.mxu0 0.0
    %4210 = vmatpush1.msra.mxu0 0.0
    %4211 = vmatprep.subr.mxu0 0.0
    %4212 = vmatpush1.msra.mxu0 0.0
    %4213 = vmatprep.subr.mxu0 0.0
    %4214 = vmatpush1.msra.mxu0 0.0
    %4215 = vmatprep.subr.mxu0 0.0
    %4216 = vmatpush1.msra.mxu0 0.0
    %4217 = vmatprep.subr.mxu0 0.0
    %v4218 = vand.u32 %v47, 4294901760
    %4219 = vmatpush1.msra.mxu0 %v4218
    %4220 = vmatprep.subr.mxu0 0.0
    %v4221 = vand.u32 %v46, 4294901760
    %4222 = vmatpush1.msra.mxu0 %v4221
    %4223 = vmatprep.subr.mxu0 0.0
    %4224 = vmatpush2.msra.mxu0 0.0
    %4225 = vmatprep.subr.mxu0 0.0
    %4226 = vmatpush2.msra.mxu0 0.0
    %4227 = vmatprep.subr.mxu0 0.0
    %4228 = vmatpush2.msra.mxu0 0.0
    %4229 = vmatprep.subr.mxu0 0.0
    %4230 = vmatpush2.msra.mxu0 0.0
    %4231 = vmatprep.subr.mxu0 0.0
    %4232 = vmatpush2.msra.mxu0 0.0
    %4233 = vmatprep.subr.mxu0 0.0
    %4234 = vmatpush2.msra.mxu0 0.0
    %4235 = vmatprep.subr.mxu0 0.0
    %4236 = vmatpush2.msra.mxu0 0.0
    %4237 = vmatprep.subr.mxu0 0.0
    %4238 = vmatpush2.msra.mxu0 0.0
    %4239 = vmatprep.subr.mxu0 0.0
    %4240 = vmatpush2.msra.mxu0 0.0
    %4241 = vmatprep.subr.mxu0 0.0
    %4242 = vmatpush2.msra.mxu0 0.0
    %4243 = vmatprep.subr.mxu0 0.0
    %4244 = vmatpush2.msra.mxu0 0.0
    %4245 = vmatprep.subr.mxu0 0.0
    %4246 = vmatpush2.msra.mxu0 0.0
    %4247 = vmatprep.subr.mxu0 0.0
    %4248 = vmatpush2.msra.mxu0 0.0
    %4249 = vmatprep.subr.mxu0 0.0
    %4250 = vmatpush2.msra.mxu0 0.0
    %4251 = vmatprep.subr.mxu0 0.0
    %4252 = vmatpush2.msra.mxu0 0.0
    %4253 = vmatprep.subr.mxu0 0.0
    %4254 = vmatpush2.msra.mxu0 0.0
    %4255 = vmatprep.mubr.f32.mxu0 0.0
    %v4256 = vand.u32 %v4187, 4294901760
    %v4257 = vsub.f32 %v4187, %v4256
    %v4258 = vand.u32 %v4257, 4294901760
    %v4259 = vsub.f32 %v4257, %v4258
    %v4260 = vand.u32 %v4259, 4294901760
    %4261 = vmatmul.mubr.f32.gmra.mxu0 %v4260
    %v4262 = vpop.f32.mrf.mxu0
    %v4263 = vadd.f32 0.0, %v4262
    %v4264 = vpop.f32.mrf.mxu0
    %4265 = vdwg.mxu0
    %4266 = vmatprep.subr.mxu0 0.0
    %4267 = vmatpush1.msra.mxu0 0.0
    %4268 = vmatprep.subr.mxu0 0.0
    %4269 = vmatpush1.msra.mxu0 0.0
    %4270 = vmatprep.subr.mxu0 0.0
    %4271 = vmatpush1.msra.mxu0 0.0
    %4272 = vmatprep.subr.mxu0 0.0
    %4273 = vmatpush1.msra.mxu0 0.0
    %4274 = vmatprep.subr.mxu0 0.0
    %4275 = vmatpush1.msra.mxu0 0.0
    %4276 = vmatprep.subr.mxu0 0.0
    %4277 = vmatpush1.msra.mxu0 0.0
    %4278 = vmatprep.subr.mxu0 0.0
    %4279 = vmatpush1.msra.mxu0 0.0
    %4280 = vmatprep.subr.mxu0 0.0
    %4281 = vmatpush1.msra.mxu0 0.0
    %4282 = vmatprep.subr.mxu0 0.0
    %4283 = vmatpush1.msra.mxu0 0.0
    %4284 = vmatprep.subr.mxu0 0.0
    %4285 = vmatpush1.msra.mxu0 0.0
    %4286 = vmatprep.subr.mxu0 0.0
    %4287 = vmatpush1.msra.mxu0 0.0
    %4288 = vmatprep.subr.mxu0 0.0
    %4289 = vmatpush1.msra.mxu0 0.0
    %4290 = vmatprep.subr.mxu0 0.0
    %4291 = vmatpush1.msra.mxu0 0.0
    %4292 = vmatprep.subr.mxu0 0.0
    %4293 = vmatpush1.msra.mxu0 0.0
    %4294 = vmatprep.subr.mxu0 0.0
    %v4295 = vand.u32 %v47, 4294901760
    %v4296 = vsub.f32 %v47, %v4295
    %v4297 = vand.u32 %v4296, 4294901760
    %v4298 = vsub.f32 %v4296, %v4297
    %v4299 = vand.u32 %v4298, 4294901760
    %4300 = vmatpush1.msra.mxu0 %v4299
    %4301 = vmatprep.subr.mxu0 0.0
    %v4302 = vand.u32 %v46, 4294901760
    %v4303 = vsub.f32 %v46, %v4302
    %v4304 = vand.u32 %v4303, 4294901760
    %v4305 = vsub.f32 %v4303, %v4304
    %v4306 = vand.u32 %v4305, 4294901760
    %4307 = vmatpush1.msra.mxu0 %v4306
    %4308 = vmatprep.subr.mxu0 0.0
    %4309 = vmatpush2.msra.mxu0 0.0
    %4310 = vmatprep.subr.mxu0 0.0
    %4311 = vmatpush2.msra.mxu0 0.0
    %4312 = vmatprep.subr.mxu0 0.0
    %4313 = vmatpush2.msra.mxu0 0.0
    %4314 = vmatprep.subr.mxu0 0.0
    %4315 = vmatpush2.msra.mxu0 0.0
    %4316 = vmatprep.subr.mxu0 0.0
    %4317 = vmatpush2.msra.mxu0 0.0
    %4318 = vmatprep.subr.mxu0 0.0
    %4319 = vmatpush2.msra.mxu0 0.0
    %4320 = vmatprep.subr.mxu0 0.0
    %4321 = vmatpush2.msra.mxu0 0.0
    %4322 = vmatprep.subr.mxu0 0.0
    %4323 = vmatpush2.msra.mxu0 0.0
    %4324 = vmatprep.subr.mxu0 0.0
    %4325 = vmatpush2.msra.mxu0 0.0
    %4326 = vmatprep.subr.mxu0 0.0
    %4327 = vmatpush2.msra.mxu0 0.0
    %4328 = vmatprep.subr.mxu0 0.0
    %4329 = vmatpush2.msra.mxu0 0.0
    %4330 = vmatprep.subr.mxu0 0.0
    %4331 = vmatpush2.msra.mxu0 0.0
    %4332 = vmatprep.subr.mxu0 0.0
    %4333 = vmatpush2.msra.mxu0 0.0
    %4334 = vmatprep.subr.mxu0 0.0
    %4335 = vmatpush2.msra.mxu0 0.0
    %4336 = vmatprep.subr.mxu0 0.0
    %4337 = vmatpush2.msra.mxu0 0.0
    %4338 = vmatprep.subr.mxu0 0.0
    %4339 = vmatpush2.msra.mxu0 0.0
    %4340 = vmatprep.mubr.f32.mxu0 0.0
    %v4341 = vand.u32 %v4187, 4294901760
    %4342 = vmatmul.mubr.f32.gmra.mxu0 %v4341
    %v4343 = vpop.f32.mrf.mxu0
    %v4344 = vadd.f32 %v4263, %v4343
    %v4345 = vpop.f32.mrf.mxu0
    %4346 = vdwg.mxu0
    %4347 = vmatprep.subr.mxu0 0.0
    %4348 = vmatpush1.msra.mxu0 0.0
    %4349 = vmatprep.subr.mxu0 0.0
    %4350 = vmatpush1.msra.mxu0 0.0
    %4351 = vmatprep.subr.mxu0 0.0
    %4352 = vmatpush1.msra.mxu0 0.0
    %4353 = vmatprep.subr.mxu0 0.0
    %4354 = vmatpush1.msra.mxu0 0.0
    %4355 = vmatprep.subr.mxu0 0.0
    %4356 = vmatpush1.msra.mxu0 0.0
    %4357 = vmatprep.subr.mxu0 0.0
    %4358 = vmatpush1.msra.mxu0 0.0
    %4359 = vmatprep.subr.mxu0 0.0
    %4360 = vmatpush1.msra.mxu0 0.0
    %4361 = vmatprep.subr.mxu0 0.0
    %4362 = vmatpush1.msra.mxu0 0.0
    %4363 = vmatprep.subr.mxu0 0.0
    %4364 = vmatpush1.msra.mxu0 0.0
    %4365 = vmatprep.subr.mxu0 0.0
    %4366 = vmatpush1.msra.mxu0 0.0
    %4367 = vmatprep.subr.mxu0 0.0
    %4368 = vmatpush1.msra.mxu0 0.0
    %4369 = vmatprep.subr.mxu0 0.0
    %4370 = vmatpush1.msra.mxu0 0.0
    %4371 = vmatprep.subr.mxu0 0.0
    %4372 = vmatpush1.msra.mxu0 0.0
    %4373 = vmatprep.subr.mxu0 0.0
    %4374 = vmatpush1.msra.mxu0 0.0
    %4375 = vmatprep.subr.mxu0 0.0
    %v4376 = vand.u32 %v47, 4294901760
    %v4377 = vsub.f32 %v47, %v4376
    %4378 = vmatpush1.msra.mxu0 %v4377
    %4379 = vmatprep.subr.mxu0 0.0
    %v4380 = vand.u32 %v46, 4294901760
    %v4381 = vsub.f32 %v46, %v4380
    %4382 = vmatpush1.msra.mxu0 %v4381
    %4383 = vmatprep.subr.mxu0 0.0
    %4384 = vmatpush2.msra.mxu0 0.0
    %4385 = vmatprep.subr.mxu0 0.0
    %4386 = vmatpush2.msra.mxu0 0.0
    %4387 = vmatprep.subr.mxu0 0.0
    %4388 = vmatpush2.msra.mxu0 0.0
    %4389 = vmatprep.subr.mxu0 0.0
    %4390 = vmatpush2.msra.mxu0 0.0
    %4391 = vmatprep.subr.mxu0 0.0
    %4392 = vmatpush2.msra.mxu0 0.0
    %4393 = vmatprep.subr.mxu0 0.0
    %4394 = vmatpush2.msra.mxu0 0.0
    %4395 = vmatprep.subr.mxu0 0.0
    %4396 = vmatpush2.msra.mxu0 0.0
    %4397 = vmatprep.subr.mxu0 0.0
    %4398 = vmatpush2.msra.mxu0 0.0
    %4399 = vmatprep.subr.mxu0 0.0
    %4400 = vmatpush2.msra.mxu0 0.0
    %4401 = vmatprep.subr.mxu0 0.0
    %4402 = vmatpush2.msra.mxu0 0.0
    %4403 = vmatprep.subr.mxu0 0.0
    %4404 = vmatpush2.msra.mxu0 0.0
    %4405 = vmatprep.subr.mxu0 0.0
    %4406 = vmatpush2.msra.mxu0 0.0
    %4407 = vmatprep.subr.mxu0 0.0
    %4408 = vmatpush2.msra.mxu0 0.0
    %4409 = vmatprep.subr.mxu0 0.0
    %4410 = vmatpush2.msra.mxu0 0.0
    %4411 = vmatprep.subr.mxu0 0.0
    %4412 = vmatpush2.msra.mxu0 0.0
    %4413 = vmatprep.subr.mxu0 0.0
    %4414 = vmatpush2.msra.mxu0 0.0
    %4415 = vmatprep.mubr.f32.mxu0 0.0
    %v4416 = vand.u32 %v4187, 4294901760
    %v4417 = vsub.f32 %v4187, %v4416
    %4418 = vmatmul.mubr.f32.gmra.mxu0 %v4417
    %v4419 = vpop.f32.mrf.mxu0
    %v4420 = vadd.f32 %v4344, %v4419
    %v4421 = vpop.f32.mrf.mxu0
    %4422 = vdwg.mxu0
    %4423 = vmatprep.subr.mxu0 0.0
    %4424 = vmatpush1.msra.mxu0 0.0
    %4425 = vmatprep.subr.mxu0 0.0
    %4426 = vmatpush1.msra.mxu0 0.0
    %4427 = vmatprep.subr.mxu0 0.0
    %4428 = vmatpush1.msra.mxu0 0.0
    %4429 = vmatprep.subr.mxu0 0.0
    %4430 = vmatpush1.msra.mxu0 0.0
    %4431 = vmatprep.subr.mxu0 0.0
    %4432 = vmatpush1.msra.mxu0 0.0
    %4433 = vmatprep.subr.mxu0 0.0
    %4434 = vmatpush1.msra.mxu0 0.0
    %4435 = vmatprep.subr.mxu0 0.0
    %4436 = vmatpush1.msra.mxu0 0.0
    %4437 = vmatprep.subr.mxu0 0.0
    %4438 = vmatpush1.msra.mxu0 0.0
    %4439 = vmatprep.subr.mxu0 0.0
    %4440 = vmatpush1.msra.mxu0 0.0
    %4441 = vmatprep.subr.mxu0 0.0
    %4442 = vmatpush1.msra.mxu0 0.0
    %4443 = vmatprep.subr.mxu0 0.0
    %4444 = vmatpush1.msra.mxu0 0.0
    %4445 = vmatprep.subr.mxu0 0.0
    %4446 = vmatpush1.msra.mxu0 0.0
    %4447 = vmatprep.subr.mxu0 0.0
    %4448 = vmatpush1.msra.mxu0 0.0
    %4449 = vmatprep.subr.mxu0 0.0
    %4450 = vmatpush1.msra.mxu0 0.0
    %4451 = vmatprep.subr.mxu0 0.0
    %v4452 = vand.u32 %v47, 4294901760
    %4453 = vmatpush1.msra.mxu0 %v4452
    %4454 = vmatprep.subr.mxu0 0.0
    %v4455 = vand.u32 %v46, 4294901760
    %4456 = vmatpush1.msra.mxu0 %v4455
    %4457 = vmatprep.subr.mxu0 0.0
    %4458 = vmatpush2.msra.mxu0 0.0
    %4459 = vmatprep.subr.mxu0 0.0
    %4460 = vmatpush2.msra.mxu0 0.0
    %4461 = vmatprep.subr.mxu0 0.0
    %4462 = vmatpush2.msra.mxu0 0.0
    %4463 = vmatprep.subr.mxu0 0.0
    %4464 = vmatpush2.msra.mxu0 0.0
    %4465 = vmatprep.subr.mxu0 0.0
    %4466 = vmatpush2.msra.mxu0 0.0
    %4467 = vmatprep.subr.mxu0 0.0
    %4468 = vmatpush2.msra.mxu0 0.0
    %4469 = vmatprep.subr.mxu0 0.0
    %4470 = vmatpush2.msra.mxu0 0.0
    %4471 = vmatprep.subr.mxu0 0.0
    %4472 = vmatpush2.msra.mxu0 0.0
    %4473 = vmatprep.subr.mxu0 0.0
    %4474 = vmatpush2.msra.mxu0 0.0
    %4475 = vmatprep.subr.mxu0 0.0
    %4476 = vmatpush2.msra.mxu0 0.0
    %4477 = vmatprep.subr.mxu0 0.0
    %4478 = vmatpush2.msra.mxu0 0.0
    %4479 = vmatprep.subr.mxu0 0.0
    %4480 = vmatpush2.msra.mxu0 0.0
    %4481 = vmatprep.subr.mxu0 0.0
    %4482 = vmatpush2.msra.mxu0 0.0
    %4483 = vmatprep.subr.mxu0 0.0
    %4484 = vmatpush2.msra.mxu0 0.0
    %4485 = vmatprep.subr.mxu0 0.0
    %4486 = vmatpush2.msra.mxu0 0.0
    %4487 = vmatprep.subr.mxu0 0.0
    %4488 = vmatpush2.msra.mxu0 0.0
    %4489 = vmatprep.mubr.f32.mxu0 0.0
    %v4490 = vand.u32 %v4187, 4294901760
    %v4491 = vsub.f32 %v4187, %v4490
    %v4492 = vand.u32 %v4491, 4294901760
    %4493 = vmatmul.mubr.f32.gmra.mxu0 %v4492
    %v4494 = vpop.f32.mrf.mxu0
    %v4495 = vadd.f32 %v4420, %v4494
    %v4496 = vpop.f32.mrf.mxu0
    %4497 = vdwg.mxu0
    %4498 = vmatprep.subr.mxu0 0.0
    %4499 = vmatpush1.msra.mxu0 0.0
    %4500 = vmatprep.subr.mxu0 0.0
    %4501 = vmatpush1.msra.mxu0 0.0
    %4502 = vmatprep.subr.mxu0 0.0
    %4503 = vmatpush1.msra.mxu0 0.0
    %4504 = vmatprep.subr.mxu0 0.0
    %4505 = vmatpush1.msra.mxu0 0.0
    %4506 = vmatprep.subr.mxu0 0.0
    %4507 = vmatpush1.msra.mxu0 0.0
    %4508 = vmatprep.subr.mxu0 0.0
    %4509 = vmatpush1.msra.mxu0 0.0
    %4510 = vmatprep.subr.mxu0 0.0
    %4511 = vmatpush1.msra.mxu0 0.0
    %4512 = vmatprep.subr.mxu0 0.0
    %4513 = vmatpush1.msra.mxu0 0.0
    %4514 = vmatprep.subr.mxu0 0.0
    %4515 = vmatpush1.msra.mxu0 0.0
    %4516 = vmatprep.subr.mxu0 0.0
    %4517 = vmatpush1.msra.mxu0 0.0
    %4518 = vmatprep.subr.mxu0 0.0
    %4519 = vmatpush1.msra.mxu0 0.0
    %4520 = vmatprep.subr.mxu0 0.0
    %4521 = vmatpush1.msra.mxu0 0.0
    %4522 = vmatprep.subr.mxu0 0.0
    %4523 = vmatpush1.msra.mxu0 0.0
    %4524 = vmatprep.subr.mxu0 0.0
    %4525 = vmatpush1.msra.mxu0 0.0
    %4526 = vmatprep.subr.mxu0 0.0
    %v4527 = vand.u32 %v47, 4294901760
    %v4528 = vsub.f32 %v47, %v4527
    %v4529 = vand.u32 %v4528, 4294901760
    %4530 = vmatpush1.msra.mxu0 %v4529
    %4531 = vmatprep.subr.mxu0 0.0
    %v4532 = vand.u32 %v46, 4294901760
    %v4533 = vsub.f32 %v46, %v4532
    %v4534 = vand.u32 %v4533, 4294901760
    %4535 = vmatpush1.msra.mxu0 %v4534
    %4536 = vmatprep.subr.mxu0 0.0
    %4537 = vmatpush2.msra.mxu0 0.0
    %4538 = vmatprep.subr.mxu0 0.0
    %4539 = vmatpush2.msra.mxu0 0.0
    %4540 = vmatprep.subr.mxu0 0.0
    %4541 = vmatpush2.msra.mxu0 0.0
    %4542 = vmatprep.subr.mxu0 0.0
    %4543 = vmatpush2.msra.mxu0 0.0
    %4544 = vmatprep.subr.mxu0 0.0
    %4545 = vmatpush2.msra.mxu0 0.0
    %4546 = vmatprep.subr.mxu0 0.0
    %4547 = vmatpush2.msra.mxu0 0.0
    %4548 = vmatprep.subr.mxu0 0.0
    %4549 = vmatpush2.msra.mxu0 0.0
    %4550 = vmatprep.subr.mxu0 0.0
    %4551 = vmatpush2.msra.mxu0 0.0
    %4552 = vmatprep.subr.mxu0 0.0
    %4553 = vmatpush2.msra.mxu0 0.0
    %4554 = vmatprep.subr.mxu0 0.0
    %4555 = vmatpush2.msra.mxu0 0.0
    %4556 = vmatprep.subr.mxu0 0.0
    %4557 = vmatpush2.msra.mxu0 0.0
    %4558 = vmatprep.subr.mxu0 0.0
    %4559 = vmatpush2.msra.mxu0 0.0
    %4560 = vmatprep.subr.mxu0 0.0
    %4561 = vmatpush2.msra.mxu0 0.0
    %4562 = vmatprep.subr.mxu0 0.0
    %4563 = vmatpush2.msra.mxu0 0.0
    %4564 = vmatprep.subr.mxu0 0.0
    %4565 = vmatpush2.msra.mxu0 0.0
    %4566 = vmatprep.subr.mxu0 0.0
    %4567 = vmatpush2.msra.mxu0 0.0
    %4568 = vmatprep.mubr.f32.mxu0 0.0
    %v4569 = vand.u32 %v4187, 4294901760
    %4570 = vmatmul.mubr.f32.gmra.mxu0 %v4569
    %v4571 = vpop.f32.mrf.mxu0
    %v4572 = vadd.f32 %v4495, %v4571
    %v4573 = vpop.f32.mrf.mxu0
    %4574 = vdwg.mxu0
    %4575 = vmatprep.subr.mxu0 0.0
    %4576 = vmatpush1.msra.mxu0 0.0
    %4577 = vmatprep.subr.mxu0 0.0
    %4578 = vmatpush1.msra.mxu0 0.0
    %4579 = vmatprep.subr.mxu0 0.0
    %4580 = vmatpush1.msra.mxu0 0.0
    %4581 = vmatprep.subr.mxu0 0.0
    %4582 = vmatpush1.msra.mxu0 0.0
    %4583 = vmatprep.subr.mxu0 0.0
    %4584 = vmatpush1.msra.mxu0 0.0
    %4585 = vmatprep.subr.mxu0 0.0
    %4586 = vmatpush1.msra.mxu0 0.0
    %4587 = vmatprep.subr.mxu0 0.0
    %4588 = vmatpush1.msra.mxu0 0.0
    %4589 = vmatprep.subr.mxu0 0.0
    %4590 = vmatpush1.msra.mxu0 0.0
    %4591 = vmatprep.subr.mxu0 0.0
    %4592 = vmatpush1.msra.mxu0 0.0
    %4593 = vmatprep.subr.mxu0 0.0
    %4594 = vmatpush1.msra.mxu0 0.0
    %4595 = vmatprep.subr.mxu0 0.0
    %4596 = vmatpush1.msra.mxu0 0.0
    %4597 = vmatprep.subr.mxu0 0.0
    %4598 = vmatpush1.msra.mxu0 0.0
    %4599 = vmatprep.subr.mxu0 0.0
    %4600 = vmatpush1.msra.mxu0 0.0
    %4601 = vmatprep.subr.mxu0 0.0
    %4602 = vmatpush1.msra.mxu0 0.0
    %4603 = vmatprep.subr.mxu0 0.0
    %v4604 = vand.u32 %v47, 4294901760
    %4605 = vmatpush1.msra.mxu0 %v4604
    %4606 = vmatprep.subr.mxu0 0.0
    %v4607 = vand.u32 %v46, 4294901760
    %4608 = vmatpush1.msra.mxu0 %v4607
    %4609 = vmatprep.subr.mxu0 0.0
    %4610 = vmatpush2.msra.mxu0 0.0
    %4611 = vmatprep.subr.mxu0 0.0
    %4612 = vmatpush2.msra.mxu0 0.0
    %4613 = vmatprep.subr.mxu0 0.0
    %4614 = vmatpush2.msra.mxu0 0.0
    %4615 = vmatprep.subr.mxu0 0.0
    %4616 = vmatpush2.msra.mxu0 0.0
    %4617 = vmatprep.subr.mxu0 0.0
    %4618 = vmatpush2.msra.mxu0 0.0
    %4619 = vmatprep.subr.mxu0 0.0
    %4620 = vmatpush2.msra.mxu0 0.0
    %4621 = vmatprep.subr.mxu0 0.0
    %4622 = vmatpush2.msra.mxu0 0.0
    %4623 = vmatprep.subr.mxu0 0.0
    %4624 = vmatpush2.msra.mxu0 0.0
    %4625 = vmatprep.subr.mxu0 0.0
    %4626 = vmatpush2.msra.mxu0 0.0
    %4627 = vmatprep.subr.mxu0 0.0
    %4628 = vmatpush2.msra.mxu0 0.0
    %4629 = vmatprep.subr.mxu0 0.0
    %4630 = vmatpush2.msra.mxu0 0.0
    %4631 = vmatprep.subr.mxu0 0.0
    %4632 = vmatpush2.msra.mxu0 0.0
    %4633 = vmatprep.subr.mxu0 0.0
    %4634 = vmatpush2.msra.mxu0 0.0
    %4635 = vmatprep.subr.mxu0 0.0
    %4636 = vmatpush2.msra.mxu0 0.0
    %4637 = vmatprep.subr.mxu0 0.0
    %4638 = vmatpush2.msra.mxu0 0.0
    %4639 = vmatprep.subr.mxu0 0.0
    %4640 = vmatpush2.msra.mxu0 0.0
    %4641 = vmatprep.mubr.f32.mxu0 0.0
    %v4642 = vand.u32 %v4187, 4294901760
    %4643 = vmatmul.mubr.f32.gmra.mxu0 %v4642
    %v4644 = vpop.f32.mrf.mxu0
    %v4645 = vadd.f32 %v4572, %v4644
    %v4646 = vpop.f32.mrf.mxu0
    %4647 = vdwg.mxu0
    %v4649 = vsel %vm48, %v1426, 0
    %4651 = vmatprep.subr.mxu0 0.0
    %4652 = vmatpush1.msra.mxu0 0.0
    %4653 = vmatprep.subr.mxu0 0.0
    %4654 = vmatpush1.msra.mxu0 0.0
    %4655 = vmatprep.subr.mxu0 0.0
    %4656 = vmatpush1.msra.mxu0 0.0
    %4657 = vmatprep.subr.mxu0 0.0
    %4658 = vmatpush1.msra.mxu0 0.0
    %4659 = vmatprep.subr.mxu0 0.0
    %4660 = vmatpush1.msra.mxu0 0.0
    %4661 = vmatprep.subr.mxu0 0.0
    %4662 = vmatpush1.msra.mxu0 0.0
    %4663 = vmatprep.subr.mxu0 0.0
    %4664 = vmatpush1.msra.mxu0 0.0
    %4665 = vmatprep.subr.mxu0 0.0
    %4666 = vmatpush1.msra.mxu0 0.0
    %4667 = vmatprep.subr.mxu0 0.0
    %4668 = vmatpush1.msra.mxu0 0.0
    %4669 = vmatprep.subr.mxu0 0.0
    %4670 = vmatpush1.msra.mxu0 0.0
    %4671 = vmatprep.subr.mxu0 0.0
    %4672 = vmatpush1.msra.mxu0 0.0
    %4673 = vmatprep.subr.mxu0 0.0
    %4674 = vmatpush1.msra.mxu0 0.0
    %4675 = vmatprep.subr.mxu0 0.0
    %4676 = vmatpush1.msra.mxu0 0.0
    %4677 = vmatprep.subr.mxu0 0.0
    %4678 = vmatpush1.msra.mxu0 0.0
    %4679 = vmatprep.subr.mxu0 0.0
    %v4680 = vand.u32 %v47, 4294901760
    %4681 = vmatpush1.msra.mxu0 %v4680
    %4682 = vmatprep.subr.mxu0 0.0
    %v4683 = vand.u32 %v46, 4294901760
    %4684 = vmatpush1.msra.mxu0 %v4683
    %4685 = vmatprep.subr.mxu0 0.0
    %4686 = vmatpush2.msra.mxu0 0.0
    %4687 = vmatprep.subr.mxu0 0.0
    %4688 = vmatpush2.msra.mxu0 0.0
    %4689 = vmatprep.subr.mxu0 0.0
    %4690 = vmatpush2.msra.mxu0 0.0
    %4691 = vmatprep.subr.mxu0 0.0
    %4692 = vmatpush2.msra.mxu0 0.0
    %4693 = vmatprep.subr.mxu0 0.0
    %4694 = vmatpush2.msra.mxu0 0.0
    %4695 = vmatprep.subr.mxu0 0.0
    %4696 = vmatpush2.msra.mxu0 0.0
    %4697 = vmatprep.subr.mxu0 0.0
    %4698 = vmatpush2.msra.mxu0 0.0
    %4699 = vmatprep.subr.mxu0 0.0
    %4700 = vmatpush2.msra.mxu0 0.0
    %4701 = vmatprep.subr.mxu0 0.0
    %4702 = vmatpush2.msra.mxu0 0.0
    %4703 = vmatprep.subr.mxu0 0.0
    %4704 = vmatpush2.msra.mxu0 0.0
    %4705 = vmatprep.subr.mxu0 0.0
    %4706 = vmatpush2.msra.mxu0 0.0
    %4707 = vmatprep.subr.mxu0 0.0
    %4708 = vmatpush2.msra.mxu0 0.0
    %4709 = vmatprep.subr.mxu0 0.0
    %4710 = vmatpush2.msra.mxu0 0.0
    %4711 = vmatprep.subr.mxu0 0.0
    %4712 = vmatpush2.msra.mxu0 0.0
    %4713 = vmatprep.subr.mxu0 0.0
    %4714 = vmatpush2.msra.mxu0 0.0
    %4715 = vmatprep.subr.mxu0 0.0
    %4716 = vmatpush2.msra.mxu0 0.0
    %4717 = vmatprep.mubr.f32.mxu0 0.0
    %v4718 = vand.u32 %v4649, 4294901760
    %v4719 = vsub.f32 %v4649, %v4718
    %v4720 = vand.u32 %v4719, 4294901760
    %v4721 = vsub.f32 %v4719, %v4720
    %v4722 = vand.u32 %v4721, 4294901760
    %4723 = vmatmul.mubr.f32.gmra.mxu0 %v4722
    %v4724 = vpop.f32.mrf.mxu0
    %v4725 = vadd.f32 0.0, %v4724
    %v4726 = vpop.f32.mrf.mxu0
    %4727 = vdwg.mxu0
    %4728 = vmatprep.subr.mxu0 0.0
    %4729 = vmatpush1.msra.mxu0 0.0
    %4730 = vmatprep.subr.mxu0 0.0
    %4731 = vmatpush1.msra.mxu0 0.0
    %4732 = vmatprep.subr.mxu0 0.0
    %4733 = vmatpush1.msra.mxu0 0.0
    %4734 = vmatprep.subr.mxu0 0.0
    %4735 = vmatpush1.msra.mxu0 0.0
    %4736 = vmatprep.subr.mxu0 0.0
    %4737 = vmatpush1.msra.mxu0 0.0
    %4738 = vmatprep.subr.mxu0 0.0
    %4739 = vmatpush1.msra.mxu0 0.0
    %4740 = vmatprep.subr.mxu0 0.0
    %4741 = vmatpush1.msra.mxu0 0.0
    %4742 = vmatprep.subr.mxu0 0.0
    %4743 = vmatpush1.msra.mxu0 0.0
    %4744 = vmatprep.subr.mxu0 0.0
    %4745 = vmatpush1.msra.mxu0 0.0
    %4746 = vmatprep.subr.mxu0 0.0
    %4747 = vmatpush1.msra.mxu0 0.0
    %4748 = vmatprep.subr.mxu0 0.0
    %4749 = vmatpush1.msra.mxu0 0.0
    %4750 = vmatprep.subr.mxu0 0.0
    %4751 = vmatpush1.msra.mxu0 0.0
    %4752 = vmatprep.subr.mxu0 0.0
    %4753 = vmatpush1.msra.mxu0 0.0
    %4754 = vmatprep.subr.mxu0 0.0
    %4755 = vmatpush1.msra.mxu0 0.0
    %4756 = vmatprep.subr.mxu0 0.0
    %v4757 = vand.u32 %v47, 4294901760
    %v4758 = vsub.f32 %v47, %v4757
    %v4759 = vand.u32 %v4758, 4294901760
    %v4760 = vsub.f32 %v4758, %v4759
    %v4761 = vand.u32 %v4760, 4294901760
    %4762 = vmatpush1.msra.mxu0 %v4761
    %4763 = vmatprep.subr.mxu0 0.0
    %v4764 = vand.u32 %v46, 4294901760
    %v4765 = vsub.f32 %v46, %v4764
    %v4766 = vand.u32 %v4765, 4294901760
    %v4767 = vsub.f32 %v4765, %v4766
    %v4768 = vand.u32 %v4767, 4294901760
    %4769 = vmatpush1.msra.mxu0 %v4768
    %4770 = vmatprep.subr.mxu0 0.0
    %4771 = vmatpush2.msra.mxu0 0.0
    %4772 = vmatprep.subr.mxu0 0.0
    %4773 = vmatpush2.msra.mxu0 0.0
    %4774 = vmatprep.subr.mxu0 0.0
    %4775 = vmatpush2.msra.mxu0 0.0
    %4776 = vmatprep.subr.mxu0 0.0
    %4777 = vmatpush2.msra.mxu0 0.0
    %4778 = vmatprep.subr.mxu0 0.0
    %4779 = vmatpush2.msra.mxu0 0.0
    %4780 = vmatprep.subr.mxu0 0.0
    %4781 = vmatpush2.msra.mxu0 0.0
    %4782 = vmatprep.subr.mxu0 0.0
    %4783 = vmatpush2.msra.mxu0 0.0
    %4784 = vmatprep.subr.mxu0 0.0
    %4785 = vmatpush2.msra.mxu0 0.0
    %4786 = vmatprep.subr.mxu0 0.0
    %4787 = vmatpush2.msra.mxu0 0.0
    %4788 = vmatprep.subr.mxu0 0.0
    %4789 = vmatpush2.msra.mxu0 0.0
    %4790 = vmatprep.subr.mxu0 0.0
    %4791 = vmatpush2.msra.mxu0 0.0
    %4792 = vmatprep.subr.mxu0 0.0
    %4793 = vmatpush2.msra.mxu0 0.0
    %4794 = vmatprep.subr.mxu0 0.0
    %4795 = vmatpush2.msra.mxu0 0.0
    %4796 = vmatprep.subr.mxu0 0.0
    %4797 = vmatpush2.msra.mxu0 0.0
    %4798 = vmatprep.subr.mxu0 0.0
    %4799 = vmatpush2.msra.mxu0 0.0
    %4800 = vmatprep.subr.mxu0 0.0
    %4801 = vmatpush2.msra.mxu0 0.0
    %4802 = vmatprep.mubr.f32.mxu0 0.0
    %v4803 = vand.u32 %v4649, 4294901760
    %4804 = vmatmul.mubr.f32.gmra.mxu0 %v4803
    %v4805 = vpop.f32.mrf.mxu0
    %v4806 = vadd.f32 %v4725, %v4805
    %v4807 = vpop.f32.mrf.mxu0
    %4808 = vdwg.mxu0
    %4809 = vmatprep.subr.mxu0 0.0
    %4810 = vmatpush1.msra.mxu0 0.0
    %4811 = vmatprep.subr.mxu0 0.0
    %4812 = vmatpush1.msra.mxu0 0.0
    %4813 = vmatprep.subr.mxu0 0.0
    %4814 = vmatpush1.msra.mxu0 0.0
    %4815 = vmatprep.subr.mxu0 0.0
    %4816 = vmatpush1.msra.mxu0 0.0
    %4817 = vmatprep.subr.mxu0 0.0
    %4818 = vmatpush1.msra.mxu0 0.0
    %4819 = vmatprep.subr.mxu0 0.0
    %4820 = vmatpush1.msra.mxu0 0.0
    %4821 = vmatprep.subr.mxu0 0.0
    %4822 = vmatpush1.msra.mxu0 0.0
    %4823 = vmatprep.subr.mxu0 0.0
    %4824 = vmatpush1.msra.mxu0 0.0
    %4825 = vmatprep.subr.mxu0 0.0
    %4826 = vmatpush1.msra.mxu0 0.0
    %4827 = vmatprep.subr.mxu0 0.0
    %4828 = vmatpush1.msra.mxu0 0.0
    %4829 = vmatprep.subr.mxu0 0.0
    %4830 = vmatpush1.msra.mxu0 0.0
    %4831 = vmatprep.subr.mxu0 0.0
    %4832 = vmatpush1.msra.mxu0 0.0
    %4833 = vmatprep.subr.mxu0 0.0
    %4834 = vmatpush1.msra.mxu0 0.0
    %4835 = vmatprep.subr.mxu0 0.0
    %4836 = vmatpush1.msra.mxu0 0.0
    %4837 = vmatprep.subr.mxu0 0.0
    %v4838 = vand.u32 %v47, 4294901760
    %v4839 = vsub.f32 %v47, %v4838
    %4840 = vmatpush1.msra.mxu0 %v4839
    %4841 = vmatprep.subr.mxu0 0.0
    %v4842 = vand.u32 %v46, 4294901760
    %v4843 = vsub.f32 %v46, %v4842
    %4844 = vmatpush1.msra.mxu0 %v4843
    %4845 = vmatprep.subr.mxu0 0.0
    %4846 = vmatpush2.msra.mxu0 0.0
    %4847 = vmatprep.subr.mxu0 0.0
    %4848 = vmatpush2.msra.mxu0 0.0
    %4849 = vmatprep.subr.mxu0 0.0
    %4850 = vmatpush2.msra.mxu0 0.0
    %4851 = vmatprep.subr.mxu0 0.0
    %4852 = vmatpush2.msra.mxu0 0.0
    %4853 = vmatprep.subr.mxu0 0.0
    %4854 = vmatpush2.msra.mxu0 0.0
    %4855 = vmatprep.subr.mxu0 0.0
    %4856 = vmatpush2.msra.mxu0 0.0
    %4857 = vmatprep.subr.mxu0 0.0
    %4858 = vmatpush2.msra.mxu0 0.0
    %4859 = vmatprep.subr.mxu0 0.0
    %4860 = vmatpush2.msra.mxu0 0.0
    %4861 = vmatprep.subr.mxu0 0.0
    %4862 = vmatpush2.msra.mxu0 0.0
    %4863 = vmatprep.subr.mxu0 0.0
    %4864 = vmatpush2.msra.mxu0 0.0
    %4865 = vmatprep.subr.mxu0 0.0
    %4866 = vmatpush2.msra.mxu0 0.0
    %4867 = vmatprep.subr.mxu0 0.0
    %4868 = vmatpush2.msra.mxu0 0.0
    %4869 = vmatprep.subr.mxu0 0.0
    %4870 = vmatpush2.msra.mxu0 0.0
    %4871 = vmatprep.subr.mxu0 0.0
    %4872 = vmatpush2.msra.mxu0 0.0
    %4873 = vmatprep.subr.mxu0 0.0
    %4874 = vmatpush2.msra.mxu0 0.0
    %4875 = vmatprep.subr.mxu0 0.0
    %4876 = vmatpush2.msra.mxu0 0.0
    %4877 = vmatprep.mubr.f32.mxu0 0.0
    %v4878 = vand.u32 %v4649, 4294901760
    %v4879 = vsub.f32 %v4649, %v4878
    %4880 = vmatmul.mubr.f32.gmra.mxu0 %v4879
    %v4881 = vpop.f32.mrf.mxu0
    %v4882 = vadd.f32 %v4806, %v4881
    %v4883 = vpop.f32.mrf.mxu0
    %4884 = vdwg.mxu0
    %4885 = vmatprep.subr.mxu0 0.0
    %4886 = vmatpush1.msra.mxu0 0.0
    %4887 = vmatprep.subr.mxu0 0.0
    %4888 = vmatpush1.msra.mxu0 0.0
    %4889 = vmatprep.subr.mxu0 0.0
    %4890 = vmatpush1.msra.mxu0 0.0
    %4891 = vmatprep.subr.mxu0 0.0
    %4892 = vmatpush1.msra.mxu0 0.0
    %4893 = vmatprep.subr.mxu0 0.0
    %4894 = vmatpush1.msra.mxu0 0.0
    %4895 = vmatprep.subr.mxu0 0.0
    %4896 = vmatpush1.msra.mxu0 0.0
    %4897 = vmatprep.subr.mxu0 0.0
    %4898 = vmatpush1.msra.mxu0 0.0
    %4899 = vmatprep.subr.mxu0 0.0
    %4900 = vmatpush1.msra.mxu0 0.0
    %4901 = vmatprep.subr.mxu0 0.0
    %4902 = vmatpush1.msra.mxu0 0.0
    %4903 = vmatprep.subr.mxu0 0.0
    %4904 = vmatpush1.msra.mxu0 0.0
    %4905 = vmatprep.subr.mxu0 0.0
    %4906 = vmatpush1.msra.mxu0 0.0
    %4907 = vmatprep.subr.mxu0 0.0
    %4908 = vmatpush1.msra.mxu0 0.0
    %4909 = vmatprep.subr.mxu0 0.0
    %4910 = vmatpush1.msra.mxu0 0.0
    %4911 = vmatprep.subr.mxu0 0.0
    %4912 = vmatpush1.msra.mxu0 0.0
    %4913 = vmatprep.subr.mxu0 0.0
    %v4914 = vand.u32 %v47, 4294901760
    %4915 = vmatpush1.msra.mxu0 %v4914
    %4916 = vmatprep.subr.mxu0 0.0
    %v4917 = vand.u32 %v46, 4294901760
    %4918 = vmatpush1.msra.mxu0 %v4917
    %4919 = vmatprep.subr.mxu0 0.0
    %4920 = vmatpush2.msra.mxu0 0.0
    %4921 = vmatprep.subr.mxu0 0.0
    %4922 = vmatpush2.msra.mxu0 0.0
    %4923 = vmatprep.subr.mxu0 0.0
    %4924 = vmatpush2.msra.mxu0 0.0
    %4925 = vmatprep.subr.mxu0 0.0
    %4926 = vmatpush2.msra.mxu0 0.0
    %4927 = vmatprep.subr.mxu0 0.0
    %4928 = vmatpush2.msra.mxu0 0.0
    %4929 = vmatprep.subr.mxu0 0.0
    %4930 = vmatpush2.msra.mxu0 0.0
    %4931 = vmatprep.subr.mxu0 0.0
    %4932 = vmatpush2.msra.mxu0 0.0
    %4933 = vmatprep.subr.mxu0 0.0
    %4934 = vmatpush2.msra.mxu0 0.0
    %4935 = vmatprep.subr.mxu0 0.0
    %4936 = vmatpush2.msra.mxu0 0.0
    %4937 = vmatprep.subr.mxu0 0.0
    %4938 = vmatpush2.msra.mxu0 0.0
    %4939 = vmatprep.subr.mxu0 0.0
    %4940 = vmatpush2.msra.mxu0 0.0
    %4941 = vmatprep.subr.mxu0 0.0
    %4942 = vmatpush2.msra.mxu0 0.0
    %4943 = vmatprep.subr.mxu0 0.0
    %4944 = vmatpush2.msra.mxu0 0.0
    %4945 = vmatprep.subr.mxu0 0.0
    %4946 = vmatpush2.msra.mxu0 0.0
    %4947 = vmatprep.subr.mxu0 0.0
    %4948 = vmatpush2.msra.mxu0 0.0
    %4949 = vmatprep.subr.mxu0 0.0
    %4950 = vmatpush2.msra.mxu0 0.0
    %4951 = vmatprep.mubr.f32.mxu0 0.0
    %v4952 = vand.u32 %v4649, 4294901760
    %v4953 = vsub.f32 %v4649, %v4952
    %v4954 = vand.u32 %v4953, 4294901760
    %4955 = vmatmul.mubr.f32.gmra.mxu0 %v4954
    %v4956 = vpop.f32.mrf.mxu0
    %v4957 = vadd.f32 %v4882, %v4956
    %v4958 = vpop.f32.mrf.mxu0
    %4959 = vdwg.mxu0
    %4960 = vmatprep.subr.mxu0 0.0
    %4961 = vmatpush1.msra.mxu0 0.0
    %4962 = vmatprep.subr.mxu0 0.0
    %4963 = vmatpush1.msra.mxu0 0.0
    %4964 = vmatprep.subr.mxu0 0.0
    %4965 = vmatpush1.msra.mxu0 0.0
    %4966 = vmatprep.subr.mxu0 0.0
    %4967 = vmatpush1.msra.mxu0 0.0
    %4968 = vmatprep.subr.mxu0 0.0
    %4969 = vmatpush1.msra.mxu0 0.0
    %4970 = vmatprep.subr.mxu0 0.0
    %4971 = vmatpush1.msra.mxu0 0.0
    %4972 = vmatprep.subr.mxu0 0.0
    %4973 = vmatpush1.msra.mxu0 0.0
    %4974 = vmatprep.subr.mxu0 0.0
    %4975 = vmatpush1.msra.mxu0 0.0
    %4976 = vmatprep.subr.mxu0 0.0
    %4977 = vmatpush1.msra.mxu0 0.0
    %4978 = vmatprep.subr.mxu0 0.0
    %4979 = vmatpush1.msra.mxu0 0.0
    %4980 = vmatprep.subr.mxu0 0.0
    %4981 = vmatpush1.msra.mxu0 0.0
    %4982 = vmatprep.subr.mxu0 0.0
    %4983 = vmatpush1.msra.mxu0 0.0
    %4984 = vmatprep.subr.mxu0 0.0
    %4985 = vmatpush1.msra.mxu0 0.0
    %4986 = vmatprep.subr.mxu0 0.0
    %4987 = vmatpush1.msra.mxu0 0.0
    %4988 = vmatprep.subr.mxu0 0.0
    %v4989 = vand.u32 %v47, 4294901760
    %v4990 = vsub.f32 %v47, %v4989
    %v4991 = vand.u32 %v4990, 4294901760
    %4992 = vmatpush1.msra.mxu0 %v4991
    %4993 = vmatprep.subr.mxu0 0.0
    %v4994 = vand.u32 %v46, 4294901760
    %v4995 = vsub.f32 %v46, %v4994
    %v4996 = vand.u32 %v4995, 4294901760
    %4997 = vmatpush1.msra.mxu0 %v4996
    %4998 = vmatprep.subr.mxu0 0.0
    %4999 = vmatpush2.msra.mxu0 0.0
    %5000 = vmatprep.subr.mxu0 0.0
    %5001 = vmatpush2.msra.mxu0 0.0
    %5002 = vmatprep.subr.mxu0 0.0
    %5003 = vmatpush2.msra.mxu0 0.0
    %5004 = vmatprep.subr.mxu0 0.0
    %5005 = vmatpush2.msra.mxu0 0.0
    %5006 = vmatprep.subr.mxu0 0.0
    %5007 = vmatpush2.msra.mxu0 0.0
    %5008 = vmatprep.subr.mxu0 0.0
    %5009 = vmatpush2.msra.mxu0 0.0
    %5010 = vmatprep.subr.mxu0 0.0
    %5011 = vmatpush2.msra.mxu0 0.0
    %5012 = vmatprep.subr.mxu0 0.0
    %5013 = vmatpush2.msra.mxu0 0.0
    %5014 = vmatprep.subr.mxu0 0.0
    %5015 = vmatpush2.msra.mxu0 0.0
    %5016 = vmatprep.subr.mxu0 0.0
    %5017 = vmatpush2.msra.mxu0 0.0
    %5018 = vmatprep.subr.mxu0 0.0
    %5019 = vmatpush2.msra.mxu0 0.0
    %5020 = vmatprep.subr.mxu0 0.0
    %5021 = vmatpush2.msra.mxu0 0.0
    %5022 = vmatprep.subr.mxu0 0.0
    %5023 = vmatpush2.msra.mxu0 0.0
    %5024 = vmatprep.subr.mxu0 0.0
    %5025 = vmatpush2.msra.mxu0 0.0
    %5026 = vmatprep.subr.mxu0 0.0
    %5027 = vmatpush2.msra.mxu0 0.0
    %5028 = vmatprep.subr.mxu0 0.0
    %5029 = vmatpush2.msra.mxu0 0.0
    %5030 = vmatprep.mubr.f32.mxu0 0.0
    %v5031 = vand.u32 %v4649, 4294901760
    %5032 = vmatmul.mubr.f32.gmra.mxu0 %v5031
    %v5033 = vpop.f32.mrf.mxu0
    %v5034 = vadd.f32 %v4957, %v5033
    %v5035 = vpop.f32.mrf.mxu0
    %5036 = vdwg.mxu0
    %5037 = vmatprep.subr.mxu0 0.0
    %5038 = vmatpush1.msra.mxu0 0.0
    %5039 = vmatprep.subr.mxu0 0.0
    %5040 = vmatpush1.msra.mxu0 0.0
    %5041 = vmatprep.subr.mxu0 0.0
    %5042 = vmatpush1.msra.mxu0 0.0
    %5043 = vmatprep.subr.mxu0 0.0
    %5044 = vmatpush1.msra.mxu0 0.0
    %5045 = vmatprep.subr.mxu0 0.0
    %5046 = vmatpush1.msra.mxu0 0.0
    %5047 = vmatprep.subr.mxu0 0.0
    %5048 = vmatpush1.msra.mxu0 0.0
    %5049 = vmatprep.subr.mxu0 0.0
    %5050 = vmatpush1.msra.mxu0 0.0
    %5051 = vmatprep.subr.mxu0 0.0
    %5052 = vmatpush1.msra.mxu0 0.0
    %5053 = vmatprep.subr.mxu0 0.0
    %5054 = vmatpush1.msra.mxu0 0.0
    %5055 = vmatprep.subr.mxu0 0.0
    %5056 = vmatpush1.msra.mxu0 0.0
    %5057 = vmatprep.subr.mxu0 0.0
    %5058 = vmatpush1.msra.mxu0 0.0
    %5059 = vmatprep.subr.mxu0 0.0
    %5060 = vmatpush1.msra.mxu0 0.0
    %5061 = vmatprep.subr.mxu0 0.0
    %5062 = vmatpush1.msra.mxu0 0.0
    %5063 = vmatprep.subr.mxu0 0.0
    %5064 = vmatpush1.msra.mxu0 0.0
    %5065 = vmatprep.subr.mxu0 0.0
    %v5066 = vand.u32 %v47, 4294901760
    %5067 = vmatpush1.msra.mxu0 %v5066
    %5068 = vmatprep.subr.mxu0 0.0
    %v5069 = vand.u32 %v46, 4294901760
    %5070 = vmatpush1.msra.mxu0 %v5069
    %5071 = vmatprep.subr.mxu0 0.0
    %5072 = vmatpush2.msra.mxu0 0.0
    %5073 = vmatprep.subr.mxu0 0.0
    %5074 = vmatpush2.msra.mxu0 0.0
    %5075 = vmatprep.subr.mxu0 0.0
    %5076 = vmatpush2.msra.mxu0 0.0
    %5077 = vmatprep.subr.mxu0 0.0
    %5078 = vmatpush2.msra.mxu0 0.0
    %5079 = vmatprep.subr.mxu0 0.0
    %5080 = vmatpush2.msra.mxu0 0.0
    %5081 = vmatprep.subr.mxu0 0.0
    %5082 = vmatpush2.msra.mxu0 0.0
    %5083 = vmatprep.subr.mxu0 0.0
    %5084 = vmatpush2.msra.mxu0 0.0
    %5085 = vmatprep.subr.mxu0 0.0
    %5086 = vmatpush2.msra.mxu0 0.0
    %5087 = vmatprep.subr.mxu0 0.0
    %5088 = vmatpush2.msra.mxu0 0.0
    %5089 = vmatprep.subr.mxu0 0.0
    %5090 = vmatpush2.msra.mxu0 0.0
    %5091 = vmatprep.subr.mxu0 0.0
    %5092 = vmatpush2.msra.mxu0 0.0
    %5093 = vmatprep.subr.mxu0 0.0
    %5094 = vmatpush2.msra.mxu0 0.0
    %5095 = vmatprep.subr.mxu0 0.0
    %5096 = vmatpush2.msra.mxu0 0.0
    %5097 = vmatprep.subr.mxu0 0.0
    %5098 = vmatpush2.msra.mxu0 0.0
    %5099 = vmatprep.subr.mxu0 0.0
    %5100 = vmatpush2.msra.mxu0 0.0
    %5101 = vmatprep.subr.mxu0 0.0
    %5102 = vmatpush2.msra.mxu0 0.0
    %5103 = vmatprep.mubr.f32.mxu0 0.0
    %v5104 = vand.u32 %v4649, 4294901760
    %5105 = vmatmul.mubr.f32.gmra.mxu0 %v5104
    %v5106 = vpop.f32.mrf.mxu0
    %v5107 = vadd.f32 %v5034, %v5106
    %v5108 = vpop.f32.mrf.mxu0
    %5109 = vdwg.mxu0
    %v5111 = vsel %vm48, %v1885, 0
    %5113 = vmatprep.subr.mxu0 0.0
    %5114 = vmatpush1.msra.mxu0 0.0
    %5115 = vmatprep.subr.mxu0 0.0
    %5116 = vmatpush1.msra.mxu0 0.0
    %5117 = vmatprep.subr.mxu0 0.0
    %5118 = vmatpush1.msra.mxu0 0.0
    %5119 = vmatprep.subr.mxu0 0.0
    %5120 = vmatpush1.msra.mxu0 0.0
    %5121 = vmatprep.subr.mxu0 0.0
    %5122 = vmatpush1.msra.mxu0 0.0
    %5123 = vmatprep.subr.mxu0 0.0
    %5124 = vmatpush1.msra.mxu0 0.0
    %5125 = vmatprep.subr.mxu0 0.0
    %5126 = vmatpush1.msra.mxu0 0.0
    %5127 = vmatprep.subr.mxu0 0.0
    %5128 = vmatpush1.msra.mxu0 0.0
    %5129 = vmatprep.subr.mxu0 0.0
    %5130 = vmatpush1.msra.mxu0 0.0
    %5131 = vmatprep.subr.mxu0 0.0
    %5132 = vmatpush1.msra.mxu0 0.0
    %5133 = vmatprep.subr.mxu0 0.0
    %5134 = vmatpush1.msra.mxu0 0.0
    %5135 = vmatprep.subr.mxu0 0.0
    %5136 = vmatpush1.msra.mxu0 0.0
    %5137 = vmatprep.subr.mxu0 0.0
    %5138 = vmatpush1.msra.mxu0 0.0
    %5139 = vmatprep.subr.mxu0 0.0
    %5140 = vmatpush1.msra.mxu0 0.0
    %5141 = vmatprep.subr.mxu0 0.0
    %v5142 = vand.u32 %v47, 4294901760
    %5143 = vmatpush1.msra.mxu0 %v5142
    %5144 = vmatprep.subr.mxu0 0.0
    %v5145 = vand.u32 %v46, 4294901760
    %5146 = vmatpush1.msra.mxu0 %v5145
    %5147 = vmatprep.subr.mxu0 0.0
    %5148 = vmatpush2.msra.mxu0 0.0
    %5149 = vmatprep.subr.mxu0 0.0
    %5150 = vmatpush2.msra.mxu0 0.0
    %5151 = vmatprep.subr.mxu0 0.0
    %5152 = vmatpush2.msra.mxu0 0.0
    %5153 = vmatprep.subr.mxu0 0.0
    %5154 = vmatpush2.msra.mxu0 0.0
    %5155 = vmatprep.subr.mxu0 0.0
    %5156 = vmatpush2.msra.mxu0 0.0
    %5157 = vmatprep.subr.mxu0 0.0
    %5158 = vmatpush2.msra.mxu0 0.0
    %5159 = vmatprep.subr.mxu0 0.0
    %5160 = vmatpush2.msra.mxu0 0.0
    %5161 = vmatprep.subr.mxu0 0.0
    %5162 = vmatpush2.msra.mxu0 0.0
    %5163 = vmatprep.subr.mxu0 0.0
    %5164 = vmatpush2.msra.mxu0 0.0
    %5165 = vmatprep.subr.mxu0 0.0
    %5166 = vmatpush2.msra.mxu0 0.0
    %5167 = vmatprep.subr.mxu0 0.0
    %5168 = vmatpush2.msra.mxu0 0.0
    %5169 = vmatprep.subr.mxu0 0.0
    %5170 = vmatpush2.msra.mxu0 0.0
    %5171 = vmatprep.subr.mxu0 0.0
    %5172 = vmatpush2.msra.mxu0 0.0
    %5173 = vmatprep.subr.mxu0 0.0
    %5174 = vmatpush2.msra.mxu0 0.0
    %5175 = vmatprep.subr.mxu0 0.0
    %5176 = vmatpush2.msra.mxu0 0.0
    %5177 = vmatprep.subr.mxu0 0.0
    %5178 = vmatpush2.msra.mxu0 0.0
    %5179 = vmatprep.mubr.f32.mxu0 0.0
    %v5180 = vand.u32 %v5111, 4294901760
    %v5181 = vsub.f32 %v5111, %v5180
    %v5182 = vand.u32 %v5181, 4294901760
    %v5183 = vsub.f32 %v5181, %v5182
    %v5184 = vand.u32 %v5183, 4294901760
    %5185 = vmatmul.mubr.f32.gmra.mxu0 %v5184
    %v5186 = vpop.f32.mrf.mxu0
    %v5187 = vadd.f32 0.0, %v5186
    %v5188 = vpop.f32.mrf.mxu0
    %5189 = vdwg.mxu0
    %5190 = vmatprep.subr.mxu0 0.0
    %5191 = vmatpush1.msra.mxu0 0.0
    %5192 = vmatprep.subr.mxu0 0.0
    %5193 = vmatpush1.msra.mxu0 0.0
    %5194 = vmatprep.subr.mxu0 0.0
    %5195 = vmatpush1.msra.mxu0 0.0
    %5196 = vmatprep.subr.mxu0 0.0
    %5197 = vmatpush1.msra.mxu0 0.0
    %5198 = vmatprep.subr.mxu0 0.0
    %5199 = vmatpush1.msra.mxu0 0.0
    %5200 = vmatprep.subr.mxu0 0.0
    %5201 = vmatpush1.msra.mxu0 0.0
    %5202 = vmatprep.subr.mxu0 0.0
    %5203 = vmatpush1.msra.mxu0 0.0
    %5204 = vmatprep.subr.mxu0 0.0
    %5205 = vmatpush1.msra.mxu0 0.0
    %5206 = vmatprep.subr.mxu0 0.0
    %5207 = vmatpush1.msra.mxu0 0.0
    %5208 = vmatprep.subr.mxu0 0.0
    %5209 = vmatpush1.msra.mxu0 0.0
    %5210 = vmatprep.subr.mxu0 0.0
    %5211 = vmatpush1.msra.mxu0 0.0
    %5212 = vmatprep.subr.mxu0 0.0
    %5213 = vmatpush1.msra.mxu0 0.0
    %5214 = vmatprep.subr.mxu0 0.0
    %5215 = vmatpush1.msra.mxu0 0.0
    %5216 = vmatprep.subr.mxu0 0.0
    %5217 = vmatpush1.msra.mxu0 0.0
    %5218 = vmatprep.subr.mxu0 0.0
    %v5219 = vand.u32 %v47, 4294901760
    %v5220 = vsub.f32 %v47, %v5219
    %v5221 = vand.u32 %v5220, 4294901760
    %v5222 = vsub.f32 %v5220, %v5221
    %v5223 = vand.u32 %v5222, 4294901760
    %5224 = vmatpush1.msra.mxu0 %v5223
    %5225 = vmatprep.subr.mxu0 0.0
    %v5226 = vand.u32 %v46, 4294901760
    %v5227 = vsub.f32 %v46, %v5226
    %v5228 = vand.u32 %v5227, 4294901760
    %v5229 = vsub.f32 %v5227, %v5228
    %v5230 = vand.u32 %v5229, 4294901760
    %5231 = vmatpush1.msra.mxu0 %v5230
    %5232 = vmatprep.subr.mxu0 0.0
    %5233 = vmatpush2.msra.mxu0 0.0
    %5234 = vmatprep.subr.mxu0 0.0
    %5235 = vmatpush2.msra.mxu0 0.0
    %5236 = vmatprep.subr.mxu0 0.0
    %5237 = vmatpush2.msra.mxu0 0.0
    %5238 = vmatprep.subr.mxu0 0.0
    %5239 = vmatpush2.msra.mxu0 0.0
    %5240 = vmatprep.subr.mxu0 0.0
    %5241 = vmatpush2.msra.mxu0 0.0
    %5242 = vmatprep.subr.mxu0 0.0
    %5243 = vmatpush2.msra.mxu0 0.0
    %5244 = vmatprep.subr.mxu0 0.0
    %5245 = vmatpush2.msra.mxu0 0.0
    %5246 = vmatprep.subr.mxu0 0.0
    %5247 = vmatpush2.msra.mxu0 0.0
    %5248 = vmatprep.subr.mxu0 0.0
    %5249 = vmatpush2.msra.mxu0 0.0
    %5250 = vmatprep.subr.mxu0 0.0
    %5251 = vmatpush2.msra.mxu0 0.0
    %5252 = vmatprep.subr.mxu0 0.0
    %5253 = vmatpush2.msra.mxu0 0.0
    %5254 = vmatprep.subr.mxu0 0.0
    %5255 = vmatpush2.msra.mxu0 0.0
    %5256 = vmatprep.subr.mxu0 0.0
    %5257 = vmatpush2.msra.mxu0 0.0
    %5258 = vmatprep.subr.mxu0 0.0
    %5259 = vmatpush2.msra.mxu0 0.0
    %5260 = vmatprep.subr.mxu0 0.0
    %5261 = vmatpush2.msra.mxu0 0.0
    %5262 = vmatprep.subr.mxu0 0.0
    %5263 = vmatpush2.msra.mxu0 0.0
    %5264 = vmatprep.mubr.f32.mxu0 0.0
    %v5265 = vand.u32 %v5111, 4294901760
    %5266 = vmatmul.mubr.f32.gmra.mxu0 %v5265
    %v5267 = vpop.f32.mrf.mxu0
    %v5268 = vadd.f32 %v5187, %v5267
    %v5269 = vpop.f32.mrf.mxu0
    %5270 = vdwg.mxu0
    %5271 = vmatprep.subr.mxu0 0.0
    %5272 = vmatpush1.msra.mxu0 0.0
    %5273 = vmatprep.subr.mxu0 0.0
    %5274 = vmatpush1.msra.mxu0 0.0
    %5275 = vmatprep.subr.mxu0 0.0
    %5276 = vmatpush1.msra.mxu0 0.0
    %5277 = vmatprep.subr.mxu0 0.0
    %5278 = vmatpush1.msra.mxu0 0.0
    %5279 = vmatprep.subr.mxu0 0.0
    %5280 = vmatpush1.msra.mxu0 0.0
    %5281 = vmatprep.subr.mxu0 0.0
    %5282 = vmatpush1.msra.mxu0 0.0
    %5283 = vmatprep.subr.mxu0 0.0
    %5284 = vmatpush1.msra.mxu0 0.0
    %5285 = vmatprep.subr.mxu0 0.0
    %5286 = vmatpush1.msra.mxu0 0.0
    %5287 = vmatprep.subr.mxu0 0.0
    %5288 = vmatpush1.msra.mxu0 0.0
    %5289 = vmatprep.subr.mxu0 0.0
    %5290 = vmatpush1.msra.mxu0 0.0
    %5291 = vmatprep.subr.mxu0 0.0
    %5292 = vmatpush1.msra.mxu0 0.0
    %5293 = vmatprep.subr.mxu0 0.0
    %5294 = vmatpush1.msra.mxu0 0.0
    %5295 = vmatprep.subr.mxu0 0.0
    %5296 = vmatpush1.msra.mxu0 0.0
    %5297 = vmatprep.subr.mxu0 0.0
    %5298 = vmatpush1.msra.mxu0 0.0
    %5299 = vmatprep.subr.mxu0 0.0
    %v5300 = vand.u32 %v47, 4294901760
    %v5301 = vsub.f32 %v47, %v5300
    %5302 = vmatpush1.msra.mxu0 %v5301
    %5303 = vmatprep.subr.mxu0 0.0
    %v5304 = vand.u32 %v46, 4294901760
    %v5305 = vsub.f32 %v46, %v5304
    %5306 = vmatpush1.msra.mxu0 %v5305
    %5307 = vmatprep.subr.mxu0 0.0
    %5308 = vmatpush2.msra.mxu0 0.0
    %5309 = vmatprep.subr.mxu0 0.0
    %5310 = vmatpush2.msra.mxu0 0.0
    %5311 = vmatprep.subr.mxu0 0.0
    %5312 = vmatpush2.msra.mxu0 0.0
    %5313 = vmatprep.subr.mxu0 0.0
    %5314 = vmatpush2.msra.mxu0 0.0
    %5315 = vmatprep.subr.mxu0 0.0
    %5316 = vmatpush2.msra.mxu0 0.0
    %5317 = vmatprep.subr.mxu0 0.0
    %5318 = vmatpush2.msra.mxu0 0.0
    %5319 = vmatprep.subr.mxu0 0.0
    %5320 = vmatpush2.msra.mxu0 0.0
    %5321 = vmatprep.subr.mxu0 0.0
    %5322 = vmatpush2.msra.mxu0 0.0
    %5323 = vmatprep.subr.mxu0 0.0
    %5324 = vmatpush2.msra.mxu0 0.0
    %5325 = vmatprep.subr.mxu0 0.0
    %5326 = vmatpush2.msra.mxu0 0.0
    %5327 = vmatprep.subr.mxu0 0.0
    %5328 = vmatpush2.msra.mxu0 0.0
    %5329 = vmatprep.subr.mxu0 0.0
    %5330 = vmatpush2.msra.mxu0 0.0
    %5331 = vmatprep.subr.mxu0 0.0
    %5332 = vmatpush2.msra.mxu0 0.0
    %5333 = vmatprep.subr.mxu0 0.0
    %5334 = vmatpush2.msra.mxu0 0.0
    %5335 = vmatprep.subr.mxu0 0.0
    %5336 = vmatpush2.msra.mxu0 0.0
    %5337 = vmatprep.subr.mxu0 0.0
    %5338 = vmatpush2.msra.mxu0 0.0
    %5339 = vmatprep.mubr.f32.mxu0 0.0
    %v5340 = vand.u32 %v5111, 4294901760
    %v5341 = vsub.f32 %v5111, %v5340
    %5342 = vmatmul.mubr.f32.gmra.mxu0 %v5341
    %v5343 = vpop.f32.mrf.mxu0
    %v5344 = vadd.f32 %v5268, %v5343
    %v5345 = vpop.f32.mrf.mxu0
    %5346 = vdwg.mxu0
    %5347 = vmatprep.subr.mxu0 0.0
    %5348 = vmatpush1.msra.mxu0 0.0
    %5349 = vmatprep.subr.mxu0 0.0
    %5350 = vmatpush1.msra.mxu0 0.0
    %5351 = vmatprep.subr.mxu0 0.0
    %5352 = vmatpush1.msra.mxu0 0.0
    %5353 = vmatprep.subr.mxu0 0.0
    %5354 = vmatpush1.msra.mxu0 0.0
    %5355 = vmatprep.subr.mxu0 0.0
    %5356 = vmatpush1.msra.mxu0 0.0
    %5357 = vmatprep.subr.mxu0 0.0
    %5358 = vmatpush1.msra.mxu0 0.0
    %5359 = vmatprep.subr.mxu0 0.0
    %5360 = vmatpush1.msra.mxu0 0.0
    %5361 = vmatprep.subr.mxu0 0.0
    %5362 = vmatpush1.msra.mxu0 0.0
    %5363 = vmatprep.subr.mxu0 0.0
    %5364 = vmatpush1.msra.mxu0 0.0
    %5365 = vmatprep.subr.mxu0 0.0
    %5366 = vmatpush1.msra.mxu0 0.0
    %5367 = vmatprep.subr.mxu0 0.0
    %5368 = vmatpush1.msra.mxu0 0.0
    %5369 = vmatprep.subr.mxu0 0.0
    %5370 = vmatpush1.msra.mxu0 0.0
    %5371 = vmatprep.subr.mxu0 0.0
    %5372 = vmatpush1.msra.mxu0 0.0
    %5373 = vmatprep.subr.mxu0 0.0
    %5374 = vmatpush1.msra.mxu0 0.0
    %5375 = vmatprep.subr.mxu0 0.0
    %v5376 = vand.u32 %v47, 4294901760
    %5377 = vmatpush1.msra.mxu0 %v5376
    %5378 = vmatprep.subr.mxu0 0.0
    %v5379 = vand.u32 %v46, 4294901760
    %5380 = vmatpush1.msra.mxu0 %v5379
    %5381 = vmatprep.subr.mxu0 0.0
    %5382 = vmatpush2.msra.mxu0 0.0
    %5383 = vmatprep.subr.mxu0 0.0
    %5384 = vmatpush2.msra.mxu0 0.0
    %5385 = vmatprep.subr.mxu0 0.0
    %5386 = vmatpush2.msra.mxu0 0.0
    %5387 = vmatprep.subr.mxu0 0.0
    %5388 = vmatpush2.msra.mxu0 0.0
    %5389 = vmatprep.subr.mxu0 0.0
    %5390 = vmatpush2.msra.mxu0 0.0
    %5391 = vmatprep.subr.mxu0 0.0
    %5392 = vmatpush2.msra.mxu0 0.0
    %5393 = vmatprep.subr.mxu0 0.0
    %5394 = vmatpush2.msra.mxu0 0.0
    %5395 = vmatprep.subr.mxu0 0.0
    %5396 = vmatpush2.msra.mxu0 0.0
    %5397 = vmatprep.subr.mxu0 0.0
    %5398 = vmatpush2.msra.mxu0 0.0
    %5399 = vmatprep.subr.mxu0 0.0
    %5400 = vmatpush2.msra.mxu0 0.0
    %5401 = vmatprep.subr.mxu0 0.0
    %5402 = vmatpush2.msra.mxu0 0.0
    %5403 = vmatprep.subr.mxu0 0.0
    %5404 = vmatpush2.msra.mxu0 0.0
    %5405 = vmatprep.subr.mxu0 0.0
    %5406 = vmatpush2.msra.mxu0 0.0
    %5407 = vmatprep.subr.mxu0 0.0
    %5408 = vmatpush2.msra.mxu0 0.0
    %5409 = vmatprep.subr.mxu0 0.0
    %5410 = vmatpush2.msra.mxu0 0.0
    %5411 = vmatprep.subr.mxu0 0.0
    %5412 = vmatpush2.msra.mxu0 0.0
    %5413 = vmatprep.mubr.f32.mxu0 0.0
    %v5414 = vand.u32 %v5111, 4294901760
    %v5415 = vsub.f32 %v5111, %v5414
    %v5416 = vand.u32 %v5415, 4294901760
    %5417 = vmatmul.mubr.f32.gmra.mxu0 %v5416
    %v5418 = vpop.f32.mrf.mxu0
    %v5419 = vadd.f32 %v5344, %v5418
    %v5420 = vpop.f32.mrf.mxu0
    %5421 = vdwg.mxu0
    %5422 = vmatprep.subr.mxu0 0.0
    %5423 = vmatpush1.msra.mxu0 0.0
    %5424 = vmatprep.subr.mxu0 0.0
    %5425 = vmatpush1.msra.mxu0 0.0
    %5426 = vmatprep.subr.mxu0 0.0
    %5427 = vmatpush1.msra.mxu0 0.0
    %5428 = vmatprep.subr.mxu0 0.0
    %5429 = vmatpush1.msra.mxu0 0.0
    %5430 = vmatprep.subr.mxu0 0.0
    %5431 = vmatpush1.msra.mxu0 0.0
    %5432 = vmatprep.subr.mxu0 0.0
    %5433 = vmatpush1.msra.mxu0 0.0
    %5434 = vmatprep.subr.mxu0 0.0
    %5435 = vmatpush1.msra.mxu0 0.0
    %5436 = vmatprep.subr.mxu0 0.0
    %5437 = vmatpush1.msra.mxu0 0.0
    %5438 = vmatprep.subr.mxu0 0.0
    %5439 = vmatpush1.msra.mxu0 0.0
    %5440 = vmatprep.subr.mxu0 0.0
    %5441 = vmatpush1.msra.mxu0 0.0
    %5442 = vmatprep.subr.mxu0 0.0
    %5443 = vmatpush1.msra.mxu0 0.0
    %5444 = vmatprep.subr.mxu0 0.0
    %5445 = vmatpush1.msra.mxu0 0.0
    %5446 = vmatprep.subr.mxu0 0.0
    %5447 = vmatpush1.msra.mxu0 0.0
    %5448 = vmatprep.subr.mxu0 0.0
    %5449 = vmatpush1.msra.mxu0 0.0
    %5450 = vmatprep.subr.mxu0 0.0
    %v5451 = vand.u32 %v47, 4294901760
    %v5452 = vsub.f32 %v47, %v5451
    %v5453 = vand.u32 %v5452, 4294901760
    %5454 = vmatpush1.msra.mxu0 %v5453
    %5455 = vmatprep.subr.mxu0 0.0
    %v5456 = vand.u32 %v46, 4294901760
    %v5457 = vsub.f32 %v46, %v5456
    %v5458 = vand.u32 %v5457, 4294901760
    %5459 = vmatpush1.msra.mxu0 %v5458
    %5460 = vmatprep.subr.mxu0 0.0
    %5461 = vmatpush2.msra.mxu0 0.0
    %5462 = vmatprep.subr.mxu0 0.0
    %5463 = vmatpush2.msra.mxu0 0.0
    %5464 = vmatprep.subr.mxu0 0.0
    %5465 = vmatpush2.msra.mxu0 0.0
    %5466 = vmatprep.subr.mxu0 0.0
    %5467 = vmatpush2.msra.mxu0 0.0
    %5468 = vmatprep.subr.mxu0 0.0
    %5469 = vmatpush2.msra.mxu0 0.0
    %5470 = vmatprep.subr.mxu0 0.0
    %5471 = vmatpush2.msra.mxu0 0.0
    %5472 = vmatprep.subr.mxu0 0.0
    %5473 = vmatpush2.msra.mxu0 0.0
    %5474 = vmatprep.subr.mxu0 0.0
    %5475 = vmatpush2.msra.mxu0 0.0
    %5476 = vmatprep.subr.mxu0 0.0
    %5477 = vmatpush2.msra.mxu0 0.0
    %5478 = vmatprep.subr.mxu0 0.0
    %5479 = vmatpush2.msra.mxu0 0.0
    %5480 = vmatprep.subr.mxu0 0.0
    %5481 = vmatpush2.msra.mxu0 0.0
    %5482 = vmatprep.subr.mxu0 0.0
    %5483 = vmatpush2.msra.mxu0 0.0
    %5484 = vmatprep.subr.mxu0 0.0
    %5485 = vmatpush2.msra.mxu0 0.0
    %5486 = vmatprep.subr.mxu0 0.0
    %5487 = vmatpush2.msra.mxu0 0.0
    %5488 = vmatprep.subr.mxu0 0.0
    %5489 = vmatpush2.msra.mxu0 0.0
    %5490 = vmatprep.subr.mxu0 0.0
    %5491 = vmatpush2.msra.mxu0 0.0
    %5492 = vmatprep.mubr.f32.mxu0 0.0
    %v5493 = vand.u32 %v5111, 4294901760
    %5494 = vmatmul.mubr.f32.gmra.mxu0 %v5493
    %v5495 = vpop.f32.mrf.mxu0
    %v5496 = vadd.f32 %v5419, %v5495
    %v5497 = vpop.f32.mrf.mxu0
    %5498 = vdwg.mxu0
    %5499 = vmatprep.subr.mxu0 0.0
    %5500 = vmatpush1.msra.mxu0 0.0
    %5501 = vmatprep.subr.mxu0 0.0
    %5502 = vmatpush1.msra.mxu0 0.0
    %5503 = vmatprep.subr.mxu0 0.0
    %5504 = vmatpush1.msra.mxu0 0.0
    %5505 = vmatprep.subr.mxu0 0.0
    %5506 = vmatpush1.msra.mxu0 0.0
    %5507 = vmatprep.subr.mxu0 0.0
    %5508 = vmatpush1.msra.mxu0 0.0
    %5509 = vmatprep.subr.mxu0 0.0
    %5510 = vmatpush1.msra.mxu0 0.0
    %5511 = vmatprep.subr.mxu0 0.0
    %5512 = vmatpush1.msra.mxu0 0.0
    %5513 = vmatprep.subr.mxu0 0.0
    %5514 = vmatpush1.msra.mxu0 0.0
    %5515 = vmatprep.subr.mxu0 0.0
    %5516 = vmatpush1.msra.mxu0 0.0
    %5517 = vmatprep.subr.mxu0 0.0
    %5518 = vmatpush1.msra.mxu0 0.0
    %5519 = vmatprep.subr.mxu0 0.0
    %5520 = vmatpush1.msra.mxu0 0.0
    %5521 = vmatprep.subr.mxu0 0.0
    %5522 = vmatpush1.msra.mxu0 0.0
    %5523 = vmatprep.subr.mxu0 0.0
    %5524 = vmatpush1.msra.mxu0 0.0
    %5525 = vmatprep.subr.mxu0 0.0
    %5526 = vmatpush1.msra.mxu0 0.0
    %5527 = vmatprep.subr.mxu0 0.0
    %v5528 = vand.u32 %v47, 4294901760
    %5529 = vmatpush1.msra.mxu0 %v5528
    %5530 = vmatprep.subr.mxu0 0.0
    %v5531 = vand.u32 %v46, 4294901760
    %5532 = vmatpush1.msra.mxu0 %v5531
    %5533 = vmatprep.subr.mxu0 0.0
    %5534 = vmatpush2.msra.mxu0 0.0
    %5535 = vmatprep.subr.mxu0 0.0
    %5536 = vmatpush2.msra.mxu0 0.0
    %5537 = vmatprep.subr.mxu0 0.0
    %5538 = vmatpush2.msra.mxu0 0.0
    %5539 = vmatprep.subr.mxu0 0.0
    %5540 = vmatpush2.msra.mxu0 0.0
    %5541 = vmatprep.subr.mxu0 0.0
    %5542 = vmatpush2.msra.mxu0 0.0
    %5543 = vmatprep.subr.mxu0 0.0
    %5544 = vmatpush2.msra.mxu0 0.0
    %5545 = vmatprep.subr.mxu0 0.0
    %5546 = vmatpush2.msra.mxu0 0.0
    %5547 = vmatprep.subr.mxu0 0.0
    %5548 = vmatpush2.msra.mxu0 0.0
    %5549 = vmatprep.subr.mxu0 0.0
    %5550 = vmatpush2.msra.mxu0 0.0
    %5551 = vmatprep.subr.mxu0 0.0
    %5552 = vmatpush2.msra.mxu0 0.0
    %5553 = vmatprep.subr.mxu0 0.0
    %5554 = vmatpush2.msra.mxu0 0.0
    %5555 = vmatprep.subr.mxu0 0.0
    %5556 = vmatpush2.msra.mxu0 0.0
    %5557 = vmatprep.subr.mxu0 0.0
    %5558 = vmatpush2.msra.mxu0 0.0
    %5559 = vmatprep.subr.mxu0 0.0
    %5560 = vmatpush2.msra.mxu0 0.0
    %5561 = vmatprep.subr.mxu0 0.0
    %5562 = vmatpush2.msra.mxu0 0.0
    %5563 = vmatprep.subr.mxu0 0.0
    %5564 = vmatpush2.msra.mxu0 0.0
    %5565 = vmatprep.mubr.f32.mxu0 0.0
    %v5566 = vand.u32 %v5111, 4294901760
    %5567 = vmatmul.mubr.f32.gmra.mxu0 %v5566
    %v5568 = vpop.f32.mrf.mxu0
    %v5569 = vadd.f32 %v5496, %v5568
    %v5570 = vpop.f32.mrf.mxu0
    %5571 = vdwg.mxu0
    %v5573 = vsel %vm48, %v2344, 0
    %5575 = vmatprep.subr.mxu0 0.0
    %5576 = vmatpush1.msra.mxu0 0.0
    %5577 = vmatprep.subr.mxu0 0.0
    %5578 = vmatpush1.msra.mxu0 0.0
    %5579 = vmatprep.subr.mxu0 0.0
    %5580 = vmatpush1.msra.mxu0 0.0
    %5581 = vmatprep.subr.mxu0 0.0
    %5582 = vmatpush1.msra.mxu0 0.0
    %5583 = vmatprep.subr.mxu0 0.0
    %5584 = vmatpush1.msra.mxu0 0.0
    %5585 = vmatprep.subr.mxu0 0.0
    %5586 = vmatpush1.msra.mxu0 0.0
    %5587 = vmatprep.subr.mxu0 0.0
    %5588 = vmatpush1.msra.mxu0 0.0
    %5589 = vmatprep.subr.mxu0 0.0
    %5590 = vmatpush1.msra.mxu0 0.0
    %5591 = vmatprep.subr.mxu0 0.0
    %5592 = vmatpush1.msra.mxu0 0.0
    %5593 = vmatprep.subr.mxu0 0.0
    %5594 = vmatpush1.msra.mxu0 0.0
    %5595 = vmatprep.subr.mxu0 0.0
    %5596 = vmatpush1.msra.mxu0 0.0
    %5597 = vmatprep.subr.mxu0 0.0
    %5598 = vmatpush1.msra.mxu0 0.0
    %5599 = vmatprep.subr.mxu0 0.0
    %5600 = vmatpush1.msra.mxu0 0.0
    %5601 = vmatprep.subr.mxu0 0.0
    %5602 = vmatpush1.msra.mxu0 0.0
    %5603 = vmatprep.subr.mxu0 0.0
    %v5604 = vand.u32 %v47, 4294901760
    %5605 = vmatpush1.msra.mxu0 %v5604
    %5606 = vmatprep.subr.mxu0 0.0
    %v5607 = vand.u32 %v46, 4294901760
    %5608 = vmatpush1.msra.mxu0 %v5607
    %5609 = vmatprep.subr.mxu0 0.0
    %5610 = vmatpush2.msra.mxu0 0.0
    %5611 = vmatprep.subr.mxu0 0.0
    %5612 = vmatpush2.msra.mxu0 0.0
    %5613 = vmatprep.subr.mxu0 0.0
    %5614 = vmatpush2.msra.mxu0 0.0
    %5615 = vmatprep.subr.mxu0 0.0
    %5616 = vmatpush2.msra.mxu0 0.0
    %5617 = vmatprep.subr.mxu0 0.0
    %5618 = vmatpush2.msra.mxu0 0.0
    %5619 = vmatprep.subr.mxu0 0.0
    %5620 = vmatpush2.msra.mxu0 0.0
    %5621 = vmatprep.subr.mxu0 0.0
    %5622 = vmatpush2.msra.mxu0 0.0
    %5623 = vmatprep.subr.mxu0 0.0
    %5624 = vmatpush2.msra.mxu0 0.0
    %5625 = vmatprep.subr.mxu0 0.0
    %5626 = vmatpush2.msra.mxu0 0.0
    %5627 = vmatprep.subr.mxu0 0.0
    %5628 = vmatpush2.msra.mxu0 0.0
    %5629 = vmatprep.subr.mxu0 0.0
    %5630 = vmatpush2.msra.mxu0 0.0
    %5631 = vmatprep.subr.mxu0 0.0
    %5632 = vmatpush2.msra.mxu0 0.0
    %5633 = vmatprep.subr.mxu0 0.0
    %5634 = vmatpush2.msra.mxu0 0.0
    %5635 = vmatprep.subr.mxu0 0.0
    %5636 = vmatpush2.msra.mxu0 0.0
    %5637 = vmatprep.subr.mxu0 0.0
    %5638 = vmatpush2.msra.mxu0 0.0
    %5639 = vmatprep.subr.mxu0 0.0
    %5640 = vmatpush2.msra.mxu0 0.0
    %5641 = vmatprep.mubr.f32.mxu0 0.0
    %v5642 = vand.u32 %v5573, 4294901760
    %v5643 = vsub.f32 %v5573, %v5642
    %v5644 = vand.u32 %v5643, 4294901760
    %v5645 = vsub.f32 %v5643, %v5644
    %v5646 = vand.u32 %v5645, 4294901760
    %5647 = vmatmul.mubr.f32.gmra.mxu0 %v5646
    %v5648 = vpop.f32.mrf.mxu0
    %v5649 = vadd.f32 0.0, %v5648
    %v5650 = vpop.f32.mrf.mxu0
    %5651 = vdwg.mxu0
    %5652 = vmatprep.subr.mxu0 0.0
    %5653 = vmatpush1.msra.mxu0 0.0
    %5654 = vmatprep.subr.mxu0 0.0
    %5655 = vmatpush1.msra.mxu0 0.0
    %5656 = vmatprep.subr.mxu0 0.0
    %5657 = vmatpush1.msra.mxu0 0.0
    %5658 = vmatprep.subr.mxu0 0.0
    %5659 = vmatpush1.msra.mxu0 0.0
    %5660 = vmatprep.subr.mxu0 0.0
    %5661 = vmatpush1.msra.mxu0 0.0
    %5662 = vmatprep.subr.mxu0 0.0
    %5663 = vmatpush1.msra.mxu0 0.0
    %5664 = vmatprep.subr.mxu0 0.0
    %5665 = vmatpush1.msra.mxu0 0.0
    %5666 = vmatprep.subr.mxu0 0.0
    %5667 = vmatpush1.msra.mxu0 0.0
    %5668 = vmatprep.subr.mxu0 0.0
    %5669 = vmatpush1.msra.mxu0 0.0
    %5670 = vmatprep.subr.mxu0 0.0
    %5671 = vmatpush1.msra.mxu0 0.0
    %5672 = vmatprep.subr.mxu0 0.0
    %5673 = vmatpush1.msra.mxu0 0.0
    %5674 = vmatprep.subr.mxu0 0.0
    %5675 = vmatpush1.msra.mxu0 0.0
    %5676 = vmatprep.subr.mxu0 0.0
    %5677 = vmatpush1.msra.mxu0 0.0
    %5678 = vmatprep.subr.mxu0 0.0
    %5679 = vmatpush1.msra.mxu0 0.0
    %5680 = vmatprep.subr.mxu0 0.0
    %v5681 = vand.u32 %v47, 4294901760
    %v5682 = vsub.f32 %v47, %v5681
    %v5683 = vand.u32 %v5682, 4294901760
    %v5684 = vsub.f32 %v5682, %v5683
    %v5685 = vand.u32 %v5684, 4294901760
    %5686 = vmatpush1.msra.mxu0 %v5685
    %5687 = vmatprep.subr.mxu0 0.0
    %v5688 = vand.u32 %v46, 4294901760
    %v5689 = vsub.f32 %v46, %v5688
    %v5690 = vand.u32 %v5689, 4294901760
    %v5691 = vsub.f32 %v5689, %v5690
    %v5692 = vand.u32 %v5691, 4294901760
    %5693 = vmatpush1.msra.mxu0 %v5692
    %5694 = vmatprep.subr.mxu0 0.0
    %5695 = vmatpush2.msra.mxu0 0.0
    %5696 = vmatprep.subr.mxu0 0.0
    %5697 = vmatpush2.msra.mxu0 0.0
    %5698 = vmatprep.subr.mxu0 0.0
    %5699 = vmatpush2.msra.mxu0 0.0
    %5700 = vmatprep.subr.mxu0 0.0
    %5701 = vmatpush2.msra.mxu0 0.0
    %5702 = vmatprep.subr.mxu0 0.0
    %5703 = vmatpush2.msra.mxu0 0.0
    %5704 = vmatprep.subr.mxu0 0.0
    %5705 = vmatpush2.msra.mxu0 0.0
    %5706 = vmatprep.subr.mxu0 0.0
    %5707 = vmatpush2.msra.mxu0 0.0
    %5708 = vmatprep.subr.mxu0 0.0
    %5709 = vmatpush2.msra.mxu0 0.0
    %5710 = vmatprep.subr.mxu0 0.0
    %5711 = vmatpush2.msra.mxu0 0.0
    %5712 = vmatprep.subr.mxu0 0.0
    %5713 = vmatpush2.msra.mxu0 0.0
    %5714 = vmatprep.subr.mxu0 0.0
    %5715 = vmatpush2.msra.mxu0 0.0
    %5716 = vmatprep.subr.mxu0 0.0
    %5717 = vmatpush2.msra.mxu0 0.0
    %5718 = vmatprep.subr.mxu0 0.0
    %5719 = vmatpush2.msra.mxu0 0.0
    %5720 = vmatprep.subr.mxu0 0.0
    %5721 = vmatpush2.msra.mxu0 0.0
    %5722 = vmatprep.subr.mxu0 0.0
    %5723 = vmatpush2.msra.mxu0 0.0
    %5724 = vmatprep.subr.mxu0 0.0
    %5725 = vmatpush2.msra.mxu0 0.0
    %5726 = vmatprep.mubr.f32.mxu0 0.0
    %v5727 = vand.u32 %v5573, 4294901760
    %5728 = vmatmul.mubr.f32.gmra.mxu0 %v5727
    %v5729 = vpop.f32.mrf.mxu0
    %v5730 = vadd.f32 %v5649, %v5729
    %v5731 = vpop.f32.mrf.mxu0
    %5732 = vdwg.mxu0
    %5733 = vmatprep.subr.mxu0 0.0
    %5734 = vmatpush1.msra.mxu0 0.0
    %5735 = vmatprep.subr.mxu0 0.0
    %5736 = vmatpush1.msra.mxu0 0.0
    %5737 = vmatprep.subr.mxu0 0.0
    %5738 = vmatpush1.msra.mxu0 0.0
    %5739 = vmatprep.subr.mxu0 0.0
    %5740 = vmatpush1.msra.mxu0 0.0
    %5741 = vmatprep.subr.mxu0 0.0
    %5742 = vmatpush1.msra.mxu0 0.0
    %5743 = vmatprep.subr.mxu0 0.0
    %5744 = vmatpush1.msra.mxu0 0.0
    %5745 = vmatprep.subr.mxu0 0.0
    %5746 = vmatpush1.msra.mxu0 0.0
    %5747 = vmatprep.subr.mxu0 0.0
    %5748 = vmatpush1.msra.mxu0 0.0
    %5749 = vmatprep.subr.mxu0 0.0
    %5750 = vmatpush1.msra.mxu0 0.0
    %5751 = vmatprep.subr.mxu0 0.0
    %5752 = vmatpush1.msra.mxu0 0.0
    %5753 = vmatprep.subr.mxu0 0.0
    %5754 = vmatpush1.msra.mxu0 0.0
    %5755 = vmatprep.subr.mxu0 0.0
    %5756 = vmatpush1.msra.mxu0 0.0
    %5757 = vmatprep.subr.mxu0 0.0
    %5758 = vmatpush1.msra.mxu0 0.0
    %5759 = vmatprep.subr.mxu0 0.0
    %5760 = vmatpush1.msra.mxu0 0.0
    %5761 = vmatprep.subr.mxu0 0.0
    %v5762 = vand.u32 %v47, 4294901760
    %v5763 = vsub.f32 %v47, %v5762
    %5764 = vmatpush1.msra.mxu0 %v5763
    %5765 = vmatprep.subr.mxu0 0.0
    %v5766 = vand.u32 %v46, 4294901760
    %v5767 = vsub.f32 %v46, %v5766
    %5768 = vmatpush1.msra.mxu0 %v5767
    %5769 = vmatprep.subr.mxu0 0.0
    %5770 = vmatpush2.msra.mxu0 0.0
    %5771 = vmatprep.subr.mxu0 0.0
    %5772 = vmatpush2.msra.mxu0 0.0
    %5773 = vmatprep.subr.mxu0 0.0
    %5774 = vmatpush2.msra.mxu0 0.0
    %5775 = vmatprep.subr.mxu0 0.0
    %5776 = vmatpush2.msra.mxu0 0.0
    %5777 = vmatprep.subr.mxu0 0.0
    %5778 = vmatpush2.msra.mxu0 0.0
    %5779 = vmatprep.subr.mxu0 0.0
    %5780 = vmatpush2.msra.mxu0 0.0
    %5781 = vmatprep.subr.mxu0 0.0
    %5782 = vmatpush2.msra.mxu0 0.0
    %5783 = vmatprep.subr.mxu0 0.0
    %5784 = vmatpush2.msra.mxu0 0.0
    %5785 = vmatprep.subr.mxu0 0.0
    %5786 = vmatpush2.msra.mxu0 0.0
    %5787 = vmatprep.subr.mxu0 0.0
    %5788 = vmatpush2.msra.mxu0 0.0
    %5789 = vmatprep.subr.mxu0 0.0
    %5790 = vmatpush2.msra.mxu0 0.0
    %5791 = vmatprep.subr.mxu0 0.0
    %5792 = vmatpush2.msra.mxu0 0.0
    %5793 = vmatprep.subr.mxu0 0.0
    %5794 = vmatpush2.msra.mxu0 0.0
    %5795 = vmatprep.subr.mxu0 0.0
    %5796 = vmatpush2.msra.mxu0 0.0
    %5797 = vmatprep.subr.mxu0 0.0
    %5798 = vmatpush2.msra.mxu0 0.0
    %5799 = vmatprep.subr.mxu0 0.0
    %5800 = vmatpush2.msra.mxu0 0.0
    %5801 = vmatprep.mubr.f32.mxu0 0.0
    %v5802 = vand.u32 %v5573, 4294901760
    %v5803 = vsub.f32 %v5573, %v5802
    %5804 = vmatmul.mubr.f32.gmra.mxu0 %v5803
    %v5805 = vpop.f32.mrf.mxu0
    %v5806 = vadd.f32 %v5730, %v5805
    %v5807 = vpop.f32.mrf.mxu0
    %5808 = vdwg.mxu0
    %5809 = vmatprep.subr.mxu0 0.0
    %5810 = vmatpush1.msra.mxu0 0.0
    %5811 = vmatprep.subr.mxu0 0.0
    %5812 = vmatpush1.msra.mxu0 0.0
    %5813 = vmatprep.subr.mxu0 0.0
    %5814 = vmatpush1.msra.mxu0 0.0
    %5815 = vmatprep.subr.mxu0 0.0
    %5816 = vmatpush1.msra.mxu0 0.0
    %5817 = vmatprep.subr.mxu0 0.0
    %5818 = vmatpush1.msra.mxu0 0.0
    %5819 = vmatprep.subr.mxu0 0.0
    %5820 = vmatpush1.msra.mxu0 0.0
    %5821 = vmatprep.subr.mxu0 0.0
    %5822 = vmatpush1.msra.mxu0 0.0
    %5823 = vmatprep.subr.mxu0 0.0
    %5824 = vmatpush1.msra.mxu0 0.0
    %5825 = vmatprep.subr.mxu0 0.0
    %5826 = vmatpush1.msra.mxu0 0.0
    %5827 = vmatprep.subr.mxu0 0.0
    %5828 = vmatpush1.msra.mxu0 0.0
    %5829 = vmatprep.subr.mxu0 0.0
    %5830 = vmatpush1.msra.mxu0 0.0
    %5831 = vmatprep.subr.mxu0 0.0
    %5832 = vmatpush1.msra.mxu0 0.0
    %5833 = vmatprep.subr.mxu0 0.0
    %5834 = vmatpush1.msra.mxu0 0.0
    %5835 = vmatprep.subr.mxu0 0.0
    %5836 = vmatpush1.msra.mxu0 0.0
    %5837 = vmatprep.subr.mxu0 0.0
    %v5838 = vand.u32 %v47, 4294901760
    %5839 = vmatpush1.msra.mxu0 %v5838
    %5840 = vmatprep.subr.mxu0 0.0
    %v5841 = vand.u32 %v46, 4294901760
    %5842 = vmatpush1.msra.mxu0 %v5841
    %5843 = vmatprep.subr.mxu0 0.0
    %5844 = vmatpush2.msra.mxu0 0.0
    %5845 = vmatprep.subr.mxu0 0.0
    %5846 = vmatpush2.msra.mxu0 0.0
    %5847 = vmatprep.subr.mxu0 0.0
    %5848 = vmatpush2.msra.mxu0 0.0
    %5849 = vmatprep.subr.mxu0 0.0
    %5850 = vmatpush2.msra.mxu0 0.0
    %5851 = vmatprep.subr.mxu0 0.0
    %5852 = vmatpush2.msra.mxu0 0.0
    %5853 = vmatprep.subr.mxu0 0.0
    %5854 = vmatpush2.msra.mxu0 0.0
    %5855 = vmatprep.subr.mxu0 0.0
    %5856 = vmatpush2.msra.mxu0 0.0
    %5857 = vmatprep.subr.mxu0 0.0
    %5858 = vmatpush2.msra.mxu0 0.0
    %5859 = vmatprep.subr.mxu0 0.0
    %5860 = vmatpush2.msra.mxu0 0.0
    %5861 = vmatprep.subr.mxu0 0.0
    %5862 = vmatpush2.msra.mxu0 0.0
    %5863 = vmatprep.subr.mxu0 0.0
    %5864 = vmatpush2.msra.mxu0 0.0
    %5865 = vmatprep.subr.mxu0 0.0
    %5866 = vmatpush2.msra.mxu0 0.0
    %5867 = vmatprep.subr.mxu0 0.0
    %5868 = vmatpush2.msra.mxu0 0.0
    %5869 = vmatprep.subr.mxu0 0.0
    %5870 = vmatpush2.msra.mxu0 0.0
    %5871 = vmatprep.subr.mxu0 0.0
    %5872 = vmatpush2.msra.mxu0 0.0
    %5873 = vmatprep.subr.mxu0 0.0
    %5874 = vmatpush2.msra.mxu0 0.0
    %5875 = vmatprep.mubr.f32.mxu0 0.0
    %v5876 = vand.u32 %v5573, 4294901760
    %v5877 = vsub.f32 %v5573, %v5876
    %v5878 = vand.u32 %v5877, 4294901760
    %5879 = vmatmul.mubr.f32.gmra.mxu0 %v5878
    %v5880 = vpop.f32.mrf.mxu0
    %v5881 = vadd.f32 %v5806, %v5880
    %v5882 = vpop.f32.mrf.mxu0
    %5883 = vdwg.mxu0
    %5884 = vmatprep.subr.mxu0 0.0
    %5885 = vmatpush1.msra.mxu0 0.0
    %5886 = vmatprep.subr.mxu0 0.0
    %5887 = vmatpush1.msra.mxu0 0.0
    %5888 = vmatprep.subr.mxu0 0.0
    %5889 = vmatpush1.msra.mxu0 0.0
    %5890 = vmatprep.subr.mxu0 0.0
    %5891 = vmatpush1.msra.mxu0 0.0
    %5892 = vmatprep.subr.mxu0 0.0
    %5893 = vmatpush1.msra.mxu0 0.0
    %5894 = vmatprep.subr.mxu0 0.0
    %5895 = vmatpush1.msra.mxu0 0.0
    %5896 = vmatprep.subr.mxu0 0.0
    %5897 = vmatpush1.msra.mxu0 0.0
    %5898 = vmatprep.subr.mxu0 0.0
    %5899 = vmatpush1.msra.mxu0 0.0
    %5900 = vmatprep.subr.mxu0 0.0
    %5901 = vmatpush1.msra.mxu0 0.0
    %5902 = vmatprep.subr.mxu0 0.0
    %5903 = vmatpush1.msra.mxu0 0.0
    %5904 = vmatprep.subr.mxu0 0.0
    %5905 = vmatpush1.msra.mxu0 0.0
    %5906 = vmatprep.subr.mxu0 0.0
    %5907 = vmatpush1.msra.mxu0 0.0
    %5908 = vmatprep.subr.mxu0 0.0
    %5909 = vmatpush1.msra.mxu0 0.0
    %5910 = vmatprep.subr.mxu0 0.0
    %5911 = vmatpush1.msra.mxu0 0.0
    %5912 = vmatprep.subr.mxu0 0.0
    %v5913 = vand.u32 %v47, 4294901760
    %v5914 = vsub.f32 %v47, %v5913
    %v5915 = vand.u32 %v5914, 4294901760
    %5916 = vmatpush1.msra.mxu0 %v5915
    %5917 = vmatprep.subr.mxu0 0.0
    %v5918 = vand.u32 %v46, 4294901760
    %v5919 = vsub.f32 %v46, %v5918
    %v5920 = vand.u32 %v5919, 4294901760
    %5921 = vmatpush1.msra.mxu0 %v5920
    %5922 = vmatprep.subr.mxu0 0.0
    %5923 = vmatpush2.msra.mxu0 0.0
    %5924 = vmatprep.subr.mxu0 0.0
    %5925 = vmatpush2.msra.mxu0 0.0
    %5926 = vmatprep.subr.mxu0 0.0
    %5927 = vmatpush2.msra.mxu0 0.0
    %5928 = vmatprep.subr.mxu0 0.0
    %5929 = vmatpush2.msra.mxu0 0.0
    %5930 = vmatprep.subr.mxu0 0.0
    %5931 = vmatpush2.msra.mxu0 0.0
    %5932 = vmatprep.subr.mxu0 0.0
    %5933 = vmatpush2.msra.mxu0 0.0
    %5934 = vmatprep.subr.mxu0 0.0
    %5935 = vmatpush2.msra.mxu0 0.0
    %5936 = vmatprep.subr.mxu0 0.0
    %5937 = vmatpush2.msra.mxu0 0.0
    %5938 = vmatprep.subr.mxu0 0.0
    %5939 = vmatpush2.msra.mxu0 0.0
    %5940 = vmatprep.subr.mxu0 0.0
    %5941 = vmatpush2.msra.mxu0 0.0
    %5942 = vmatprep.subr.mxu0 0.0
    %5943 = vmatpush2.msra.mxu0 0.0
    %5944 = vmatprep.subr.mxu0 0.0
    %5945 = vmatpush2.msra.mxu0 0.0
    %5946 = vmatprep.subr.mxu0 0.0
    %5947 = vmatpush2.msra.mxu0 0.0
    %5948 = vmatprep.subr.mxu0 0.0
    %5949 = vmatpush2.msra.mxu0 0.0
    %5950 = vmatprep.subr.mxu0 0.0
    %5951 = vmatpush2.msra.mxu0 0.0
    %5952 = vmatprep.subr.mxu0 0.0
    %5953 = vmatpush2.msra.mxu0 0.0
    %5954 = vmatprep.mubr.f32.mxu0 0.0
    %v5955 = vand.u32 %v5573, 4294901760
    %5956 = vmatmul.mubr.f32.gmra.mxu0 %v5955
    %v5957 = vpop.f32.mrf.mxu0
    %v5958 = vadd.f32 %v5881, %v5957
    %v5959 = vpop.f32.mrf.mxu0
    %5960 = vdwg.mxu0
    %5961 = vmatprep.subr.mxu0 0.0
    %5962 = vmatpush1.msra.mxu0 0.0
    %5963 = vmatprep.subr.mxu0 0.0
    %5964 = vmatpush1.msra.mxu0 0.0
    %5965 = vmatprep.subr.mxu0 0.0
    %5966 = vmatpush1.msra.mxu0 0.0
    %5967 = vmatprep.subr.mxu0 0.0
    %5968 = vmatpush1.msra.mxu0 0.0
    %5969 = vmatprep.subr.mxu0 0.0
    %5970 = vmatpush1.msra.mxu0 0.0
    %5971 = vmatprep.subr.mxu0 0.0
    %5972 = vmatpush1.msra.mxu0 0.0
    %5973 = vmatprep.subr.mxu0 0.0
    %5974 = vmatpush1.msra.mxu0 0.0
    %5975 = vmatprep.subr.mxu0 0.0
    %5976 = vmatpush1.msra.mxu0 0.0
    %5977 = vmatprep.subr.mxu0 0.0
    %5978 = vmatpush1.msra.mxu0 0.0
    %5979 = vmatprep.subr.mxu0 0.0
    %5980 = vmatpush1.msra.mxu0 0.0
    %5981 = vmatprep.subr.mxu0 0.0
    %5982 = vmatpush1.msra.mxu0 0.0
    %5983 = vmatprep.subr.mxu0 0.0
    %5984 = vmatpush1.msra.mxu0 0.0
    %5985 = vmatprep.subr.mxu0 0.0
    %5986 = vmatpush1.msra.mxu0 0.0
    %5987 = vmatprep.subr.mxu0 0.0
    %5988 = vmatpush1.msra.mxu0 0.0
    %5989 = vmatprep.subr.mxu0 0.0
    %v5990 = vand.u32 %v47, 4294901760
    %5991 = vmatpush1.msra.mxu0 %v5990
    %5992 = vmatprep.subr.mxu0 0.0
    %v5993 = vand.u32 %v46, 4294901760
    %5994 = vmatpush1.msra.mxu0 %v5993
    %5995 = vmatprep.subr.mxu0 0.0
    %5996 = vmatpush2.msra.mxu0 0.0
    %5997 = vmatprep.subr.mxu0 0.0
    %5998 = vmatpush2.msra.mxu0 0.0
    %5999 = vmatprep.subr.mxu0 0.0
    %6000 = vmatpush2.msra.mxu0 0.0
    %6001 = vmatprep.subr.mxu0 0.0
    %6002 = vmatpush2.msra.mxu0 0.0
    %6003 = vmatprep.subr.mxu0 0.0
    %6004 = vmatpush2.msra.mxu0 0.0
    %6005 = vmatprep.subr.mxu0 0.0
    %6006 = vmatpush2.msra.mxu0 0.0
    %6007 = vmatprep.subr.mxu0 0.0
    %6008 = vmatpush2.msra.mxu0 0.0
    %6009 = vmatprep.subr.mxu0 0.0
    %6010 = vmatpush2.msra.mxu0 0.0
    %6011 = vmatprep.subr.mxu0 0.0
    %6012 = vmatpush2.msra.mxu0 0.0
    %6013 = vmatprep.subr.mxu0 0.0
    %6014 = vmatpush2.msra.mxu0 0.0
    %6015 = vmatprep.subr.mxu0 0.0
    %6016 = vmatpush2.msra.mxu0 0.0
    %6017 = vmatprep.subr.mxu0 0.0
    %6018 = vmatpush2.msra.mxu0 0.0
    %6019 = vmatprep.subr.mxu0 0.0
    %6020 = vmatpush2.msra.mxu0 0.0
    %6021 = vmatprep.subr.mxu0 0.0
    %6022 = vmatpush2.msra.mxu0 0.0
    %6023 = vmatprep.subr.mxu0 0.0
    %6024 = vmatpush2.msra.mxu0 0.0
    %6025 = vmatprep.subr.mxu0 0.0
    %6026 = vmatpush2.msra.mxu0 0.0
    %6027 = vmatprep.mubr.f32.mxu0 0.0
    %v6028 = vand.u32 %v5573, 4294901760
    %6029 = vmatmul.mubr.f32.gmra.mxu0 %v6028
    %v6030 = vpop.f32.mrf.mxu0
    %v6031 = vadd.f32 %v5958, %v6030
    %v6032 = vpop.f32.mrf.mxu0
    %6033 = vdwg.mxu0
    %v6035 = vsel %vm48, %v2803, 0
    %6037 = vmatprep.subr.mxu0 0.0
    %6038 = vmatpush1.msra.mxu0 0.0
    %6039 = vmatprep.subr.mxu0 0.0
    %6040 = vmatpush1.msra.mxu0 0.0
    %6041 = vmatprep.subr.mxu0 0.0
    %6042 = vmatpush1.msra.mxu0 0.0
    %6043 = vmatprep.subr.mxu0 0.0
    %6044 = vmatpush1.msra.mxu0 0.0
    %6045 = vmatprep.subr.mxu0 0.0
    %6046 = vmatpush1.msra.mxu0 0.0
    %6047 = vmatprep.subr.mxu0 0.0
    %6048 = vmatpush1.msra.mxu0 0.0
    %6049 = vmatprep.subr.mxu0 0.0
    %6050 = vmatpush1.msra.mxu0 0.0
    %6051 = vmatprep.subr.mxu0 0.0
    %6052 = vmatpush1.msra.mxu0 0.0
    %6053 = vmatprep.subr.mxu0 0.0
    %6054 = vmatpush1.msra.mxu0 0.0
    %6055 = vmatprep.subr.mxu0 0.0
    %6056 = vmatpush1.msra.mxu0 0.0
    %6057 = vmatprep.subr.mxu0 0.0
    %6058 = vmatpush1.msra.mxu0 0.0
    %6059 = vmatprep.subr.mxu0 0.0
    %6060 = vmatpush1.msra.mxu0 0.0
    %6061 = vmatprep.subr.mxu0 0.0
    %6062 = vmatpush1.msra.mxu0 0.0
    %6063 = vmatprep.subr.mxu0 0.0
    %6064 = vmatpush1.msra.mxu0 0.0
    %6065 = vmatprep.subr.mxu0 0.0
    %v6066 = vand.u32 %v47, 4294901760
    %6067 = vmatpush1.msra.mxu0 %v6066
    %6068 = vmatprep.subr.mxu0 0.0
    %v6069 = vand.u32 %v46, 4294901760
    %6070 = vmatpush1.msra.mxu0 %v6069
    %6071 = vmatprep.subr.mxu0 0.0
    %6072 = vmatpush2.msra.mxu0 0.0
    %6073 = vmatprep.subr.mxu0 0.0
    %6074 = vmatpush2.msra.mxu0 0.0
    %6075 = vmatprep.subr.mxu0 0.0
    %6076 = vmatpush2.msra.mxu0 0.0
    %6077 = vmatprep.subr.mxu0 0.0
    %6078 = vmatpush2.msra.mxu0 0.0
    %6079 = vmatprep.subr.mxu0 0.0
    %6080 = vmatpush2.msra.mxu0 0.0
    %6081 = vmatprep.subr.mxu0 0.0
    %6082 = vmatpush2.msra.mxu0 0.0
    %6083 = vmatprep.subr.mxu0 0.0
    %6084 = vmatpush2.msra.mxu0 0.0
    %6085 = vmatprep.subr.mxu0 0.0
    %6086 = vmatpush2.msra.mxu0 0.0
    %6087 = vmatprep.subr.mxu0 0.0
    %6088 = vmatpush2.msra.mxu0 0.0
    %6089 = vmatprep.subr.mxu0 0.0
    %6090 = vmatpush2.msra.mxu0 0.0
    %6091 = vmatprep.subr.mxu0 0.0
    %6092 = vmatpush2.msra.mxu0 0.0
    %6093 = vmatprep.subr.mxu0 0.0
    %6094 = vmatpush2.msra.mxu0 0.0
    %6095 = vmatprep.subr.mxu0 0.0
    %6096 = vmatpush2.msra.mxu0 0.0
    %6097 = vmatprep.subr.mxu0 0.0
    %6098 = vmatpush2.msra.mxu0 0.0
    %6099 = vmatprep.subr.mxu0 0.0
    %6100 = vmatpush2.msra.mxu0 0.0
    %6101 = vmatprep.subr.mxu0 0.0
    %6102 = vmatpush2.msra.mxu0 0.0
    %6103 = vmatprep.mubr.f32.mxu0 0.0
    %v6104 = vand.u32 %v6035, 4294901760
    %v6105 = vsub.f32 %v6035, %v6104
    %v6106 = vand.u32 %v6105, 4294901760
    %v6107 = vsub.f32 %v6105, %v6106
    %v6108 = vand.u32 %v6107, 4294901760
    %6109 = vmatmul.mubr.f32.gmra.mxu0 %v6108
    %v6110 = vpop.f32.mrf.mxu0
    %v6111 = vadd.f32 0.0, %v6110
    %v6112 = vpop.f32.mrf.mxu0
    %6113 = vdwg.mxu0
    %6114 = vmatprep.subr.mxu0 0.0
    %6115 = vmatpush1.msra.mxu0 0.0
    %6116 = vmatprep.subr.mxu0 0.0
    %6117 = vmatpush1.msra.mxu0 0.0
    %6118 = vmatprep.subr.mxu0 0.0
    %6119 = vmatpush1.msra.mxu0 0.0
    %6120 = vmatprep.subr.mxu0 0.0
    %6121 = vmatpush1.msra.mxu0 0.0
    %6122 = vmatprep.subr.mxu0 0.0
    %6123 = vmatpush1.msra.mxu0 0.0
    %6124 = vmatprep.subr.mxu0 0.0
    %6125 = vmatpush1.msra.mxu0 0.0
    %6126 = vmatprep.subr.mxu0 0.0
    %6127 = vmatpush1.msra.mxu0 0.0
    %6128 = vmatprep.subr.mxu0 0.0
    %6129 = vmatpush1.msra.mxu0 0.0
    %6130 = vmatprep.subr.mxu0 0.0
    %6131 = vmatpush1.msra.mxu0 0.0
    %6132 = vmatprep.subr.mxu0 0.0
    %6133 = vmatpush1.msra.mxu0 0.0
    %6134 = vmatprep.subr.mxu0 0.0
    %6135 = vmatpush1.msra.mxu0 0.0
    %6136 = vmatprep.subr.mxu0 0.0
    %6137 = vmatpush1.msra.mxu0 0.0
    %6138 = vmatprep.subr.mxu0 0.0
    %6139 = vmatpush1.msra.mxu0 0.0
    %6140 = vmatprep.subr.mxu0 0.0
    %6141 = vmatpush1.msra.mxu0 0.0
    %6142 = vmatprep.subr.mxu0 0.0
    %v6143 = vand.u32 %v47, 4294901760
    %v6144 = vsub.f32 %v47, %v6143
    %v6145 = vand.u32 %v6144, 4294901760
    %v6146 = vsub.f32 %v6144, %v6145
    %v6147 = vand.u32 %v6146, 4294901760
    %6148 = vmatpush1.msra.mxu0 %v6147
    %6149 = vmatprep.subr.mxu0 0.0
    %v6150 = vand.u32 %v46, 4294901760
    %v6151 = vsub.f32 %v46, %v6150
    %v6152 = vand.u32 %v6151, 4294901760
    %v6153 = vsub.f32 %v6151, %v6152
    %v6154 = vand.u32 %v6153, 4294901760
    %6155 = vmatpush1.msra.mxu0 %v6154
    %6156 = vmatprep.subr.mxu0 0.0
    %6157 = vmatpush2.msra.mxu0 0.0
    %6158 = vmatprep.subr.mxu0 0.0
    %6159 = vmatpush2.msra.mxu0 0.0
    %6160 = vmatprep.subr.mxu0 0.0
    %6161 = vmatpush2.msra.mxu0 0.0
    %6162 = vmatprep.subr.mxu0 0.0
    %6163 = vmatpush2.msra.mxu0 0.0
    %6164 = vmatprep.subr.mxu0 0.0
    %6165 = vmatpush2.msra.mxu0 0.0
    %6166 = vmatprep.subr.mxu0 0.0
    %6167 = vmatpush2.msra.mxu0 0.0
    %6168 = vmatprep.subr.mxu0 0.0
    %6169 = vmatpush2.msra.mxu0 0.0
    %6170 = vmatprep.subr.mxu0 0.0
    %6171 = vmatpush2.msra.mxu0 0.0
    %6172 = vmatprep.subr.mxu0 0.0
    %6173 = vmatpush2.msra.mxu0 0.0
    %6174 = vmatprep.subr.mxu0 0.0
    %6175 = vmatpush2.msra.mxu0 0.0
    %6176 = vmatprep.subr.mxu0 0.0
    %6177 = vmatpush2.msra.mxu0 0.0
    %6178 = vmatprep.subr.mxu0 0.0
    %6179 = vmatpush2.msra.mxu0 0.0
    %6180 = vmatprep.subr.mxu0 0.0
    %6181 = vmatpush2.msra.mxu0 0.0
    %6182 = vmatprep.subr.mxu0 0.0
    %6183 = vmatpush2.msra.mxu0 0.0
    %6184 = vmatprep.subr.mxu0 0.0
    %6185 = vmatpush2.msra.mxu0 0.0
    %6186 = vmatprep.subr.mxu0 0.0
    %6187 = vmatpush2.msra.mxu0 0.0
    %6188 = vmatprep.mubr.f32.mxu0 0.0
    %v6189 = vand.u32 %v6035, 4294901760
    %6190 = vmatmul.mubr.f32.gmra.mxu0 %v6189
    %v6191 = vpop.f32.mrf.mxu0
    %v6192 = vadd.f32 %v6111, %v6191
    %v6193 = vpop.f32.mrf.mxu0
    %6194 = vdwg.mxu0
    %6195 = vmatprep.subr.mxu0 0.0
    %6196 = vmatpush1.msra.mxu0 0.0
    %6197 = vmatprep.subr.mxu0 0.0
    %6198 = vmatpush1.msra.mxu0 0.0
    %6199 = vmatprep.subr.mxu0 0.0
    %6200 = vmatpush1.msra.mxu0 0.0
    %6201 = vmatprep.subr.mxu0 0.0
    %6202 = vmatpush1.msra.mxu0 0.0
    %6203 = vmatprep.subr.mxu0 0.0
    %6204 = vmatpush1.msra.mxu0 0.0
    %6205 = vmatprep.subr.mxu0 0.0
    %6206 = vmatpush1.msra.mxu0 0.0
    %6207 = vmatprep.subr.mxu0 0.0
    %6208 = vmatpush1.msra.mxu0 0.0
    %6209 = vmatprep.subr.mxu0 0.0
    %6210 = vmatpush1.msra.mxu0 0.0
    %6211 = vmatprep.subr.mxu0 0.0
    %6212 = vmatpush1.msra.mxu0 0.0
    %6213 = vmatprep.subr.mxu0 0.0
    %6214 = vmatpush1.msra.mxu0 0.0
    %6215 = vmatprep.subr.mxu0 0.0
    %6216 = vmatpush1.msra.mxu0 0.0
    %6217 = vmatprep.subr.mxu0 0.0
    %6218 = vmatpush1.msra.mxu0 0.0
    %6219 = vmatprep.subr.mxu0 0.0
    %6220 = vmatpush1.msra.mxu0 0.0
    %6221 = vmatprep.subr.mxu0 0.0
    %6222 = vmatpush1.msra.mxu0 0.0
    %6223 = vmatprep.subr.mxu0 0.0
    %v6224 = vand.u32 %v47, 4294901760
    %v6225 = vsub.f32 %v47, %v6224
    %6226 = vmatpush1.msra.mxu0 %v6225
    %6227 = vmatprep.subr.mxu0 0.0
    %v6228 = vand.u32 %v46, 4294901760
    %v6229 = vsub.f32 %v46, %v6228
    %6230 = vmatpush1.msra.mxu0 %v6229
    %6231 = vmatprep.subr.mxu0 0.0
    %6232 = vmatpush2.msra.mxu0 0.0
    %6233 = vmatprep.subr.mxu0 0.0
    %6234 = vmatpush2.msra.mxu0 0.0
    %6235 = vmatprep.subr.mxu0 0.0
    %6236 = vmatpush2.msra.mxu0 0.0
    %6237 = vmatprep.subr.mxu0 0.0
    %6238 = vmatpush2.msra.mxu0 0.0
    %6239 = vmatprep.subr.mxu0 0.0
    %6240 = vmatpush2.msra.mxu0 0.0
    %6241 = vmatprep.subr.mxu0 0.0
    %6242 = vmatpush2.msra.mxu0 0.0
    %6243 = vmatprep.subr.mxu0 0.0
    %6244 = vmatpush2.msra.mxu0 0.0
    %6245 = vmatprep.subr.mxu0 0.0
    %6246 = vmatpush2.msra.mxu0 0.0
    %6247 = vmatprep.subr.mxu0 0.0
    %6248 = vmatpush2.msra.mxu0 0.0
    %6249 = vmatprep.subr.mxu0 0.0
    %6250 = vmatpush2.msra.mxu0 0.0
    %6251 = vmatprep.subr.mxu0 0.0
    %6252 = vmatpush2.msra.mxu0 0.0
    %6253 = vmatprep.subr.mxu0 0.0
    %6254 = vmatpush2.msra.mxu0 0.0
    %6255 = vmatprep.subr.mxu0 0.0
    %6256 = vmatpush2.msra.mxu0 0.0
    %6257 = vmatprep.subr.mxu0 0.0
    %6258 = vmatpush2.msra.mxu0 0.0
    %6259 = vmatprep.subr.mxu0 0.0
    %6260 = vmatpush2.msra.mxu0 0.0
    %6261 = vmatprep.subr.mxu0 0.0
    %6262 = vmatpush2.msra.mxu0 0.0
    %6263 = vmatprep.mubr.f32.mxu0 0.0
    %v6264 = vand.u32 %v6035, 4294901760
    %v6265 = vsub.f32 %v6035, %v6264
    %6266 = vmatmul.mubr.f32.gmra.mxu0 %v6265
    %v6267 = vpop.f32.mrf.mxu0
    %v6268 = vadd.f32 %v6192, %v6267
    %v6269 = vpop.f32.mrf.mxu0
    %6270 = vdwg.mxu0
    %6271 = vmatprep.subr.mxu0 0.0
    %6272 = vmatpush1.msra.mxu0 0.0
    %6273 = vmatprep.subr.mxu0 0.0
    %6274 = vmatpush1.msra.mxu0 0.0
    %6275 = vmatprep.subr.mxu0 0.0
    %6276 = vmatpush1.msra.mxu0 0.0
    %6277 = vmatprep.subr.mxu0 0.0
    %6278 = vmatpush1.msra.mxu0 0.0
    %6279 = vmatprep.subr.mxu0 0.0
    %6280 = vmatpush1.msra.mxu0 0.0
    %6281 = vmatprep.subr.mxu0 0.0
    %6282 = vmatpush1.msra.mxu0 0.0
    %6283 = vmatprep.subr.mxu0 0.0
    %6284 = vmatpush1.msra.mxu0 0.0
    %6285 = vmatprep.subr.mxu0 0.0
    %6286 = vmatpush1.msra.mxu0 0.0
    %6287 = vmatprep.subr.mxu0 0.0
    %6288 = vmatpush1.msra.mxu0 0.0
    %6289 = vmatprep.subr.mxu0 0.0
    %6290 = vmatpush1.msra.mxu0 0.0
    %6291 = vmatprep.subr.mxu0 0.0
    %6292 = vmatpush1.msra.mxu0 0.0
    %6293 = vmatprep.subr.mxu0 0.0
    %6294 = vmatpush1.msra.mxu0 0.0
    %6295 = vmatprep.subr.mxu0 0.0
    %6296 = vmatpush1.msra.mxu0 0.0
    %6297 = vmatprep.subr.mxu0 0.0
    %6298 = vmatpush1.msra.mxu0 0.0
    %6299 = vmatprep.subr.mxu0 0.0
    %v6300 = vand.u32 %v47, 4294901760
    %6301 = vmatpush1.msra.mxu0 %v6300
    %6302 = vmatprep.subr.mxu0 0.0
    %v6303 = vand.u32 %v46, 4294901760
    %6304 = vmatpush1.msra.mxu0 %v6303
    %6305 = vmatprep.subr.mxu0 0.0
    %6306 = vmatpush2.msra.mxu0 0.0
    %6307 = vmatprep.subr.mxu0 0.0
    %6308 = vmatpush2.msra.mxu0 0.0
    %6309 = vmatprep.subr.mxu0 0.0
    %6310 = vmatpush2.msra.mxu0 0.0
    %6311 = vmatprep.subr.mxu0 0.0
    %6312 = vmatpush2.msra.mxu0 0.0
    %6313 = vmatprep.subr.mxu0 0.0
    %6314 = vmatpush2.msra.mxu0 0.0
    %6315 = vmatprep.subr.mxu0 0.0
    %6316 = vmatpush2.msra.mxu0 0.0
    %6317 = vmatprep.subr.mxu0 0.0
    %6318 = vmatpush2.msra.mxu0 0.0
    %6319 = vmatprep.subr.mxu0 0.0
    %6320 = vmatpush2.msra.mxu0 0.0
    %6321 = vmatprep.subr.mxu0 0.0
    %6322 = vmatpush2.msra.mxu0 0.0
    %6323 = vmatprep.subr.mxu0 0.0
    %6324 = vmatpush2.msra.mxu0 0.0
    %6325 = vmatprep.subr.mxu0 0.0
    %6326 = vmatpush2.msra.mxu0 0.0
    %6327 = vmatprep.subr.mxu0 0.0
    %6328 = vmatpush2.msra.mxu0 0.0
    %6329 = vmatprep.subr.mxu0 0.0
    %6330 = vmatpush2.msra.mxu0 0.0
    %6331 = vmatprep.subr.mxu0 0.0
    %6332 = vmatpush2.msra.mxu0 0.0
    %6333 = vmatprep.subr.mxu0 0.0
    %6334 = vmatpush2.msra.mxu0 0.0
    %6335 = vmatprep.subr.mxu0 0.0
    %6336 = vmatpush2.msra.mxu0 0.0
    %6337 = vmatprep.mubr.f32.mxu0 0.0
    %v6338 = vand.u32 %v6035, 4294901760
    %v6339 = vsub.f32 %v6035, %v6338
    %v6340 = vand.u32 %v6339, 4294901760
    %6341 = vmatmul.mubr.f32.gmra.mxu0 %v6340
    %v6342 = vpop.f32.mrf.mxu0
    %v6343 = vadd.f32 %v6268, %v6342
    %v6344 = vpop.f32.mrf.mxu0
    %6345 = vdwg.mxu0
    %6346 = vmatprep.subr.mxu0 0.0
    %6347 = vmatpush1.msra.mxu0 0.0
    %6348 = vmatprep.subr.mxu0 0.0
    %6349 = vmatpush1.msra.mxu0 0.0
    %6350 = vmatprep.subr.mxu0 0.0
    %6351 = vmatpush1.msra.mxu0 0.0
    %6352 = vmatprep.subr.mxu0 0.0
    %6353 = vmatpush1.msra.mxu0 0.0
    %6354 = vmatprep.subr.mxu0 0.0
    %6355 = vmatpush1.msra.mxu0 0.0
    %6356 = vmatprep.subr.mxu0 0.0
    %6357 = vmatpush1.msra.mxu0 0.0
    %6358 = vmatprep.subr.mxu0 0.0
    %6359 = vmatpush1.msra.mxu0 0.0
    %6360 = vmatprep.subr.mxu0 0.0
    %6361 = vmatpush1.msra.mxu0 0.0
    %6362 = vmatprep.subr.mxu0 0.0
    %6363 = vmatpush1.msra.mxu0 0.0
    %6364 = vmatprep.subr.mxu0 0.0
    %6365 = vmatpush1.msra.mxu0 0.0
    %6366 = vmatprep.subr.mxu0 0.0
    %6367 = vmatpush1.msra.mxu0 0.0
    %6368 = vmatprep.subr.mxu0 0.0
    %6369 = vmatpush1.msra.mxu0 0.0
    %6370 = vmatprep.subr.mxu0 0.0
    %6371 = vmatpush1.msra.mxu0 0.0
    %6372 = vmatprep.subr.mxu0 0.0
    %6373 = vmatpush1.msra.mxu0 0.0
    %6374 = vmatprep.subr.mxu0 0.0
    %v6375 = vand.u32 %v47, 4294901760
    %v6376 = vsub.f32 %v47, %v6375
    %v6377 = vand.u32 %v6376, 4294901760
    %6378 = vmatpush1.msra.mxu0 %v6377
    %6379 = vmatprep.subr.mxu0 0.0
    %v6380 = vand.u32 %v46, 4294901760
    %v6381 = vsub.f32 %v46, %v6380
    %v6382 = vand.u32 %v6381, 4294901760
    %6383 = vmatpush1.msra.mxu0 %v6382
    %6384 = vmatprep.subr.mxu0 0.0
    %6385 = vmatpush2.msra.mxu0 0.0
    %6386 = vmatprep.subr.mxu0 0.0
    %6387 = vmatpush2.msra.mxu0 0.0
    %6388 = vmatprep.subr.mxu0 0.0
    %6389 = vmatpush2.msra.mxu0 0.0
    %6390 = vmatprep.subr.mxu0 0.0
    %6391 = vmatpush2.msra.mxu0 0.0
    %6392 = vmatprep.subr.mxu0 0.0
    %6393 = vmatpush2.msra.mxu0 0.0
    %6394 = vmatprep.subr.mxu0 0.0
    %6395 = vmatpush2.msra.mxu0 0.0
    %6396 = vmatprep.subr.mxu0 0.0
    %6397 = vmatpush2.msra.mxu0 0.0
    %6398 = vmatprep.subr.mxu0 0.0
    %6399 = vmatpush2.msra.mxu0 0.0
    %6400 = vmatprep.subr.mxu0 0.0
    %6401 = vmatpush2.msra.mxu0 0.0
    %6402 = vmatprep.subr.mxu0 0.0
    %6403 = vmatpush2.msra.mxu0 0.0
    %6404 = vmatprep.subr.mxu0 0.0
    %6405 = vmatpush2.msra.mxu0 0.0
    %6406 = vmatprep.subr.mxu0 0.0
    %6407 = vmatpush2.msra.mxu0 0.0
    %6408 = vmatprep.subr.mxu0 0.0
    %6409 = vmatpush2.msra.mxu0 0.0
    %6410 = vmatprep.subr.mxu0 0.0
    %6411 = vmatpush2.msra.mxu0 0.0
    %6412 = vmatprep.subr.mxu0 0.0
    %6413 = vmatpush2.msra.mxu0 0.0
    %6414 = vmatprep.subr.mxu0 0.0
    %6415 = vmatpush2.msra.mxu0 0.0
    %6416 = vmatprep.mubr.f32.mxu0 0.0
    %v6417 = vand.u32 %v6035, 4294901760
    %6418 = vmatmul.mubr.f32.gmra.mxu0 %v6417
    %v6419 = vpop.f32.mrf.mxu0
    %v6420 = vadd.f32 %v6343, %v6419
    %v6421 = vpop.f32.mrf.mxu0
    %6422 = vdwg.mxu0
    %6423 = vmatprep.subr.mxu0 0.0
    %6424 = vmatpush1.msra.mxu0 0.0
    %6425 = vmatprep.subr.mxu0 0.0
    %6426 = vmatpush1.msra.mxu0 0.0
    %6427 = vmatprep.subr.mxu0 0.0
    %6428 = vmatpush1.msra.mxu0 0.0
    %6429 = vmatprep.subr.mxu0 0.0
    %6430 = vmatpush1.msra.mxu0 0.0
    %6431 = vmatprep.subr.mxu0 0.0
    %6432 = vmatpush1.msra.mxu0 0.0
    %6433 = vmatprep.subr.mxu0 0.0
    %6434 = vmatpush1.msra.mxu0 0.0
    %6435 = vmatprep.subr.mxu0 0.0
    %6436 = vmatpush1.msra.mxu0 0.0
    %6437 = vmatprep.subr.mxu0 0.0
    %6438 = vmatpush1.msra.mxu0 0.0
    %6439 = vmatprep.subr.mxu0 0.0
    %6440 = vmatpush1.msra.mxu0 0.0
    %6441 = vmatprep.subr.mxu0 0.0
    %6442 = vmatpush1.msra.mxu0 0.0
    %6443 = vmatprep.subr.mxu0 0.0
    %6444 = vmatpush1.msra.mxu0 0.0
    %6445 = vmatprep.subr.mxu0 0.0
    %6446 = vmatpush1.msra.mxu0 0.0
    %6447 = vmatprep.subr.mxu0 0.0
    %6448 = vmatpush1.msra.mxu0 0.0
    %6449 = vmatprep.subr.mxu0 0.0
    %6450 = vmatpush1.msra.mxu0 0.0
    %6451 = vmatprep.subr.mxu0 0.0
    %v6452 = vand.u32 %v47, 4294901760
    %6453 = vmatpush1.msra.mxu0 %v6452
    %6454 = vmatprep.subr.mxu0 0.0
    %v6455 = vand.u32 %v46, 4294901760
    %6456 = vmatpush1.msra.mxu0 %v6455
    %6457 = vmatprep.subr.mxu0 0.0
    %6458 = vmatpush2.msra.mxu0 0.0
    %6459 = vmatprep.subr.mxu0 0.0
    %6460 = vmatpush2.msra.mxu0 0.0
    %6461 = vmatprep.subr.mxu0 0.0
    %6462 = vmatpush2.msra.mxu0 0.0
    %6463 = vmatprep.subr.mxu0 0.0
    %6464 = vmatpush2.msra.mxu0 0.0
    %6465 = vmatprep.subr.mxu0 0.0
    %6466 = vmatpush2.msra.mxu0 0.0
    %6467 = vmatprep.subr.mxu0 0.0
    %6468 = vmatpush2.msra.mxu0 0.0
    %6469 = vmatprep.subr.mxu0 0.0
    %6470 = vmatpush2.msra.mxu0 0.0
    %6471 = vmatprep.subr.mxu0 0.0
    %6472 = vmatpush2.msra.mxu0 0.0
    %6473 = vmatprep.subr.mxu0 0.0
    %6474 = vmatpush2.msra.mxu0 0.0
    %6475 = vmatprep.subr.mxu0 0.0
    %6476 = vmatpush2.msra.mxu0 0.0
    %6477 = vmatprep.subr.mxu0 0.0
    %6478 = vmatpush2.msra.mxu0 0.0
    %6479 = vmatprep.subr.mxu0 0.0
    %6480 = vmatpush2.msra.mxu0 0.0
    %6481 = vmatprep.subr.mxu0 0.0
    %6482 = vmatpush2.msra.mxu0 0.0
    %6483 = vmatprep.subr.mxu0 0.0
    %6484 = vmatpush2.msra.mxu0 0.0
    %6485 = vmatprep.subr.mxu0 0.0
    %6486 = vmatpush2.msra.mxu0 0.0
    %6487 = vmatprep.subr.mxu0 0.0
    %6488 = vmatpush2.msra.mxu0 0.0
    %6489 = vmatprep.mubr.f32.mxu0 0.0
    %v6490 = vand.u32 %v6035, 4294901760
    %6491 = vmatmul.mubr.f32.gmra.mxu0 %v6490
    %v6492 = vpop.f32.mrf.mxu0
    %v6493 = vadd.f32 %v6420, %v6492
    %v6494 = vpop.f32.mrf.mxu0
    %6495 = vdwg.mxu0
    %v6497 = vsel %vm48, %v3262, 0
    %6499 = vmatprep.subr.mxu0 0.0
    %6500 = vmatpush1.msra.mxu0 0.0
    %6501 = vmatprep.subr.mxu0 0.0
    %6502 = vmatpush1.msra.mxu0 0.0
    %6503 = vmatprep.subr.mxu0 0.0
    %6504 = vmatpush1.msra.mxu0 0.0
    %6505 = vmatprep.subr.mxu0 0.0
    %6506 = vmatpush1.msra.mxu0 0.0
    %6507 = vmatprep.subr.mxu0 0.0
    %6508 = vmatpush1.msra.mxu0 0.0
    %6509 = vmatprep.subr.mxu0 0.0
    %6510 = vmatpush1.msra.mxu0 0.0
    %6511 = vmatprep.subr.mxu0 0.0
    %6512 = vmatpush1.msra.mxu0 0.0
    %6513 = vmatprep.subr.mxu0 0.0
    %6514 = vmatpush1.msra.mxu0 0.0
    %6515 = vmatprep.subr.mxu0 0.0
    %6516 = vmatpush1.msra.mxu0 0.0
    %6517 = vmatprep.subr.mxu0 0.0
    %6518 = vmatpush1.msra.mxu0 0.0
    %6519 = vmatprep.subr.mxu0 0.0
    %6520 = vmatpush1.msra.mxu0 0.0
    %6521 = vmatprep.subr.mxu0 0.0
    %6522 = vmatpush1.msra.mxu0 0.0
    %6523 = vmatprep.subr.mxu0 0.0
    %6524 = vmatpush1.msra.mxu0 0.0
    %6525 = vmatprep.subr.mxu0 0.0
    %6526 = vmatpush1.msra.mxu0 0.0
    %6527 = vmatprep.subr.mxu0 0.0
    %v6528 = vand.u32 %v47, 4294901760
    %6529 = vmatpush1.msra.mxu0 %v6528
    %6530 = vmatprep.subr.mxu0 0.0
    %v6531 = vand.u32 %v46, 4294901760
    %6532 = vmatpush1.msra.mxu0 %v6531
    %6533 = vmatprep.subr.mxu0 0.0
    %6534 = vmatpush2.msra.mxu0 0.0
    %6535 = vmatprep.subr.mxu0 0.0
    %6536 = vmatpush2.msra.mxu0 0.0
    %6537 = vmatprep.subr.mxu0 0.0
    %6538 = vmatpush2.msra.mxu0 0.0
    %6539 = vmatprep.subr.mxu0 0.0
    %6540 = vmatpush2.msra.mxu0 0.0
    %6541 = vmatprep.subr.mxu0 0.0
    %6542 = vmatpush2.msra.mxu0 0.0
    %6543 = vmatprep.subr.mxu0 0.0
    %6544 = vmatpush2.msra.mxu0 0.0
    %6545 = vmatprep.subr.mxu0 0.0
    %6546 = vmatpush2.msra.mxu0 0.0
    %6547 = vmatprep.subr.mxu0 0.0
    %6548 = vmatpush2.msra.mxu0 0.0
    %6549 = vmatprep.subr.mxu0 0.0
    %6550 = vmatpush2.msra.mxu0 0.0
    %6551 = vmatprep.subr.mxu0 0.0
    %6552 = vmatpush2.msra.mxu0 0.0
    %6553 = vmatprep.subr.mxu0 0.0
    %6554 = vmatpush2.msra.mxu0 0.0
    %6555 = vmatprep.subr.mxu0 0.0
    %6556 = vmatpush2.msra.mxu0 0.0
    %6557 = vmatprep.subr.mxu0 0.0
    %6558 = vmatpush2.msra.mxu0 0.0
    %6559 = vmatprep.subr.mxu0 0.0
    %6560 = vmatpush2.msra.mxu0 0.0
    %6561 = vmatprep.subr.mxu0 0.0
    %6562 = vmatpush2.msra.mxu0 0.0
    %6563 = vmatprep.subr.mxu0 0.0
    %6564 = vmatpush2.msra.mxu0 0.0
    %6565 = vmatprep.mubr.f32.mxu0 0.0
    %v6566 = vand.u32 %v6497, 4294901760
    %v6567 = vsub.f32 %v6497, %v6566
    %v6568 = vand.u32 %v6567, 4294901760
    %v6569 = vsub.f32 %v6567, %v6568
    %v6570 = vand.u32 %v6569, 4294901760
    %6571 = vmatmul.mubr.f32.gmra.mxu0 %v6570
    %v6572 = vpop.f32.mrf.mxu0
    %v6573 = vadd.f32 0.0, %v6572
    %v6574 = vpop.f32.mrf.mxu0
    %6575 = vdwg.mxu0
    %6576 = vmatprep.subr.mxu0 0.0
    %6577 = vmatpush1.msra.mxu0 0.0
    %6578 = vmatprep.subr.mxu0 0.0
    %6579 = vmatpush1.msra.mxu0 0.0
    %6580 = vmatprep.subr.mxu0 0.0
    %6581 = vmatpush1.msra.mxu0 0.0
    %6582 = vmatprep.subr.mxu0 0.0
    %6583 = vmatpush1.msra.mxu0 0.0
    %6584 = vmatprep.subr.mxu0 0.0
    %6585 = vmatpush1.msra.mxu0 0.0
    %6586 = vmatprep.subr.mxu0 0.0
    %6587 = vmatpush1.msra.mxu0 0.0
    %6588 = vmatprep.subr.mxu0 0.0
    %6589 = vmatpush1.msra.mxu0 0.0
    %6590 = vmatprep.subr.mxu0 0.0
    %6591 = vmatpush1.msra.mxu0 0.0
    %6592 = vmatprep.subr.mxu0 0.0
    %6593 = vmatpush1.msra.mxu0 0.0
    %6594 = vmatprep.subr.mxu0 0.0
    %6595 = vmatpush1.msra.mxu0 0.0
    %6596 = vmatprep.subr.mxu0 0.0
    %6597 = vmatpush1.msra.mxu0 0.0
    %6598 = vmatprep.subr.mxu0 0.0
    %6599 = vmatpush1.msra.mxu0 0.0
    %6600 = vmatprep.subr.mxu0 0.0
    %6601 = vmatpush1.msra.mxu0 0.0
    %6602 = vmatprep.subr.mxu0 0.0
    %6603 = vmatpush1.msra.mxu0 0.0
    %6604 = vmatprep.subr.mxu0 0.0
    %v6605 = vand.u32 %v47, 4294901760
    %v6606 = vsub.f32 %v47, %v6605
    %v6607 = vand.u32 %v6606, 4294901760
    %v6608 = vsub.f32 %v6606, %v6607
    %v6609 = vand.u32 %v6608, 4294901760
    %6610 = vmatpush1.msra.mxu0 %v6609
    %6611 = vmatprep.subr.mxu0 0.0
    %v6612 = vand.u32 %v46, 4294901760
    %v6613 = vsub.f32 %v46, %v6612
    %v6614 = vand.u32 %v6613, 4294901760
    %v6615 = vsub.f32 %v6613, %v6614
    %v6616 = vand.u32 %v6615, 4294901760
    %6617 = vmatpush1.msra.mxu0 %v6616
    %6618 = vmatprep.subr.mxu0 0.0
    %6619 = vmatpush2.msra.mxu0 0.0
    %6620 = vmatprep.subr.mxu0 0.0
    %6621 = vmatpush2.msra.mxu0 0.0
    %6622 = vmatprep.subr.mxu0 0.0
    %6623 = vmatpush2.msra.mxu0 0.0
    %6624 = vmatprep.subr.mxu0 0.0
    %6625 = vmatpush2.msra.mxu0 0.0
    %6626 = vmatprep.subr.mxu0 0.0
    %6627 = vmatpush2.msra.mxu0 0.0
    %6628 = vmatprep.subr.mxu0 0.0
    %6629 = vmatpush2.msra.mxu0 0.0
    %6630 = vmatprep.subr.mxu0 0.0
    %6631 = vmatpush2.msra.mxu0 0.0
    %6632 = vmatprep.subr.mxu0 0.0
    %6633 = vmatpush2.msra.mxu0 0.0
    %6634 = vmatprep.subr.mxu0 0.0
    %6635 = vmatpush2.msra.mxu0 0.0
    %6636 = vmatprep.subr.mxu0 0.0
    %6637 = vmatpush2.msra.mxu0 0.0
    %6638 = vmatprep.subr.mxu0 0.0
    %6639 = vmatpush2.msra.mxu0 0.0
    %6640 = vmatprep.subr.mxu0 0.0
    %6641 = vmatpush2.msra.mxu0 0.0
    %6642 = vmatprep.subr.mxu0 0.0
    %6643 = vmatpush2.msra.mxu0 0.0
    %6644 = vmatprep.subr.mxu0 0.0
    %6645 = vmatpush2.msra.mxu0 0.0
    %6646 = vmatprep.subr.mxu0 0.0
    %6647 = vmatpush2.msra.mxu0 0.0
    %6648 = vmatprep.subr.mxu0 0.0
    %6649 = vmatpush2.msra.mxu0 0.0
    %6650 = vmatprep.mubr.f32.mxu0 0.0
    %v6651 = vand.u32 %v6497, 4294901760
    %6652 = vmatmul.mubr.f32.gmra.mxu0 %v6651
    %v6653 = vpop.f32.mrf.mxu0
    %v6654 = vadd.f32 %v6573, %v6653
    %v6655 = vpop.f32.mrf.mxu0
    %6656 = vdwg.mxu0
    %6657 = vmatprep.subr.mxu0 0.0
    %6658 = vmatpush1.msra.mxu0 0.0
    %6659 = vmatprep.subr.mxu0 0.0
    %6660 = vmatpush1.msra.mxu0 0.0
    %6661 = vmatprep.subr.mxu0 0.0
    %6662 = vmatpush1.msra.mxu0 0.0
    %6663 = vmatprep.subr.mxu0 0.0
    %6664 = vmatpush1.msra.mxu0 0.0
    %6665 = vmatprep.subr.mxu0 0.0
    %6666 = vmatpush1.msra.mxu0 0.0
    %6667 = vmatprep.subr.mxu0 0.0
    %6668 = vmatpush1.msra.mxu0 0.0
    %6669 = vmatprep.subr.mxu0 0.0
    %6670 = vmatpush1.msra.mxu0 0.0
    %6671 = vmatprep.subr.mxu0 0.0
    %6672 = vmatpush1.msra.mxu0 0.0
    %6673 = vmatprep.subr.mxu0 0.0
    %6674 = vmatpush1.msra.mxu0 0.0
    %6675 = vmatprep.subr.mxu0 0.0
    %6676 = vmatpush1.msra.mxu0 0.0
    %6677 = vmatprep.subr.mxu0 0.0
    %6678 = vmatpush1.msra.mxu0 0.0
    %6679 = vmatprep.subr.mxu0 0.0
    %6680 = vmatpush1.msra.mxu0 0.0
    %6681 = vmatprep.subr.mxu0 0.0
    %6682 = vmatpush1.msra.mxu0 0.0
    %6683 = vmatprep.subr.mxu0 0.0
    %6684 = vmatpush1.msra.mxu0 0.0
    %6685 = vmatprep.subr.mxu0 0.0
    %v6686 = vand.u32 %v47, 4294901760
    %v6687 = vsub.f32 %v47, %v6686
    %6688 = vmatpush1.msra.mxu0 %v6687
    %6689 = vmatprep.subr.mxu0 0.0
    %v6690 = vand.u32 %v46, 4294901760
    %v6691 = vsub.f32 %v46, %v6690
    %6692 = vmatpush1.msra.mxu0 %v6691
    %6693 = vmatprep.subr.mxu0 0.0
    %6694 = vmatpush2.msra.mxu0 0.0
    %6695 = vmatprep.subr.mxu0 0.0
    %6696 = vmatpush2.msra.mxu0 0.0
    %6697 = vmatprep.subr.mxu0 0.0
    %6698 = vmatpush2.msra.mxu0 0.0
    %6699 = vmatprep.subr.mxu0 0.0
    %6700 = vmatpush2.msra.mxu0 0.0
    %6701 = vmatprep.subr.mxu0 0.0
    %6702 = vmatpush2.msra.mxu0 0.0
    %6703 = vmatprep.subr.mxu0 0.0
    %6704 = vmatpush2.msra.mxu0 0.0
    %6705 = vmatprep.subr.mxu0 0.0
    %6706 = vmatpush2.msra.mxu0 0.0
    %6707 = vmatprep.subr.mxu0 0.0
    %6708 = vmatpush2.msra.mxu0 0.0
    %6709 = vmatprep.subr.mxu0 0.0
    %6710 = vmatpush2.msra.mxu0 0.0
    %6711 = vmatprep.subr.mxu0 0.0
    %6712 = vmatpush2.msra.mxu0 0.0
    %6713 = vmatprep.subr.mxu0 0.0
    %6714 = vmatpush2.msra.mxu0 0.0
    %6715 = vmatprep.subr.mxu0 0.0
    %6716 = vmatpush2.msra.mxu0 0.0
    %6717 = vmatprep.subr.mxu0 0.0
    %6718 = vmatpush2.msra.mxu0 0.0
    %6719 = vmatprep.subr.mxu0 0.0
    %6720 = vmatpush2.msra.mxu0 0.0
    %6721 = vmatprep.subr.mxu0 0.0
    %6722 = vmatpush2.msra.mxu0 0.0
    %6723 = vmatprep.subr.mxu0 0.0
    %6724 = vmatpush2.msra.mxu0 0.0
    %6725 = vmatprep.mubr.f32.mxu0 0.0
    %v6726 = vand.u32 %v6497, 4294901760
    %v6727 = vsub.f32 %v6497, %v6726
    %6728 = vmatmul.mubr.f32.gmra.mxu0 %v6727
    %v6729 = vpop.f32.mrf.mxu0
    %v6730 = vadd.f32 %v6654, %v6729
    %v6731 = vpop.f32.mrf.mxu0
    %6732 = vdwg.mxu0
    %6733 = vmatprep.subr.mxu0 0.0
    %6734 = vmatpush1.msra.mxu0 0.0
    %6735 = vmatprep.subr.mxu0 0.0
    %6736 = vmatpush1.msra.mxu0 0.0
    %6737 = vmatprep.subr.mxu0 0.0
    %6738 = vmatpush1.msra.mxu0 0.0
    %6739 = vmatprep.subr.mxu0 0.0
    %6740 = vmatpush1.msra.mxu0 0.0
    %6741 = vmatprep.subr.mxu0 0.0
    %6742 = vmatpush1.msra.mxu0 0.0
    %6743 = vmatprep.subr.mxu0 0.0
    %6744 = vmatpush1.msra.mxu0 0.0
    %6745 = vmatprep.subr.mxu0 0.0
    %6746 = vmatpush1.msra.mxu0 0.0
    %6747 = vmatprep.subr.mxu0 0.0
    %6748 = vmatpush1.msra.mxu0 0.0
    %6749 = vmatprep.subr.mxu0 0.0
    %6750 = vmatpush1.msra.mxu0 0.0
    %6751 = vmatprep.subr.mxu0 0.0
    %6752 = vmatpush1.msra.mxu0 0.0
    %6753 = vmatprep.subr.mxu0 0.0
    %6754 = vmatpush1.msra.mxu0 0.0
    %6755 = vmatprep.subr.mxu0 0.0
    %6756 = vmatpush1.msra.mxu0 0.0
    %6757 = vmatprep.subr.mxu0 0.0
    %6758 = vmatpush1.msra.mxu0 0.0
    %6759 = vmatprep.subr.mxu0 0.0
    %6760 = vmatpush1.msra.mxu0 0.0
    %6761 = vmatprep.subr.mxu0 0.0
    %v6762 = vand.u32 %v47, 4294901760
    %6763 = vmatpush1.msra.mxu0 %v6762
    %6764 = vmatprep.subr.mxu0 0.0
    %v6765 = vand.u32 %v46, 4294901760
    %6766 = vmatpush1.msra.mxu0 %v6765
    %6767 = vmatprep.subr.mxu0 0.0
    %6768 = vmatpush2.msra.mxu0 0.0
    %6769 = vmatprep.subr.mxu0 0.0
    %6770 = vmatpush2.msra.mxu0 0.0
    %6771 = vmatprep.subr.mxu0 0.0
    %6772 = vmatpush2.msra.mxu0 0.0
    %6773 = vmatprep.subr.mxu0 0.0
    %6774 = vmatpush2.msra.mxu0 0.0
    %6775 = vmatprep.subr.mxu0 0.0
    %6776 = vmatpush2.msra.mxu0 0.0
    %6777 = vmatprep.subr.mxu0 0.0
    %6778 = vmatpush2.msra.mxu0 0.0
    %6779 = vmatprep.subr.mxu0 0.0
    %6780 = vmatpush2.msra.mxu0 0.0
    %6781 = vmatprep.subr.mxu0 0.0
    %6782 = vmatpush2.msra.mxu0 0.0
    %6783 = vmatprep.subr.mxu0 0.0
    %6784 = vmatpush2.msra.mxu0 0.0
    %6785 = vmatprep.subr.mxu0 0.0
    %6786 = vmatpush2.msra.mxu0 0.0
    %6787 = vmatprep.subr.mxu0 0.0
    %6788 = vmatpush2.msra.mxu0 0.0
    %6789 = vmatprep.subr.mxu0 0.0
    %6790 = vmatpush2.msra.mxu0 0.0
    %6791 = vmatprep.subr.mxu0 0.0
    %6792 = vmatpush2.msra.mxu0 0.0
    %6793 = vmatprep.subr.mxu0 0.0
    %6794 = vmatpush2.msra.mxu0 0.0
    %6795 = vmatprep.subr.mxu0 0.0
    %6796 = vmatpush2.msra.mxu0 0.0
    %6797 = vmatprep.subr.mxu0 0.0
    %6798 = vmatpush2.msra.mxu0 0.0
    %6799 = vmatprep.mubr.f32.mxu0 0.0
    %v6800 = vand.u32 %v6497, 4294901760
    %v6801 = vsub.f32 %v6497, %v6800
    %v6802 = vand.u32 %v6801, 4294901760
    %6803 = vmatmul.mubr.f32.gmra.mxu0 %v6802
    %v6804 = vpop.f32.mrf.mxu0
    %v6805 = vadd.f32 %v6730, %v6804
    %v6806 = vpop.f32.mrf.mxu0
    %6807 = vdwg.mxu0
    %6808 = vmatprep.subr.mxu0 0.0
    %6809 = vmatpush1.msra.mxu0 0.0
    %6810 = vmatprep.subr.mxu0 0.0
    %6811 = vmatpush1.msra.mxu0 0.0
    %6812 = vmatprep.subr.mxu0 0.0
    %6813 = vmatpush1.msra.mxu0 0.0
    %6814 = vmatprep.subr.mxu0 0.0
    %6815 = vmatpush1.msra.mxu0 0.0
    %6816 = vmatprep.subr.mxu0 0.0
    %6817 = vmatpush1.msra.mxu0 0.0
    %6818 = vmatprep.subr.mxu0 0.0
    %6819 = vmatpush1.msra.mxu0 0.0
    %6820 = vmatprep.subr.mxu0 0.0
    %6821 = vmatpush1.msra.mxu0 0.0
    %6822 = vmatprep.subr.mxu0 0.0
    %6823 = vmatpush1.msra.mxu0 0.0
    %6824 = vmatprep.subr.mxu0 0.0
    %6825 = vmatpush1.msra.mxu0 0.0
    %6826 = vmatprep.subr.mxu0 0.0
    %6827 = vmatpush1.msra.mxu0 0.0
    %6828 = vmatprep.subr.mxu0 0.0
    %6829 = vmatpush1.msra.mxu0 0.0
    %6830 = vmatprep.subr.mxu0 0.0
    %6831 = vmatpush1.msra.mxu0 0.0
    %6832 = vmatprep.subr.mxu0 0.0
    %6833 = vmatpush1.msra.mxu0 0.0
    %6834 = vmatprep.subr.mxu0 0.0
    %6835 = vmatpush1.msra.mxu0 0.0
    %6836 = vmatprep.subr.mxu0 0.0
    %v6837 = vand.u32 %v47, 4294901760
    %v6838 = vsub.f32 %v47, %v6837
    %v6839 = vand.u32 %v6838, 4294901760
    %6840 = vmatpush1.msra.mxu0 %v6839
    %6841 = vmatprep.subr.mxu0 0.0
    %v6842 = vand.u32 %v46, 4294901760
    %v6843 = vsub.f32 %v46, %v6842
    %v6844 = vand.u32 %v6843, 4294901760
    %6845 = vmatpush1.msra.mxu0 %v6844
    %6846 = vmatprep.subr.mxu0 0.0
    %6847 = vmatpush2.msra.mxu0 0.0
    %6848 = vmatprep.subr.mxu0 0.0
    %6849 = vmatpush2.msra.mxu0 0.0
    %6850 = vmatprep.subr.mxu0 0.0
    %6851 = vmatpush2.msra.mxu0 0.0
    %6852 = vmatprep.subr.mxu0 0.0
    %6853 = vmatpush2.msra.mxu0 0.0
    %6854 = vmatprep.subr.mxu0 0.0
    %6855 = vmatpush2.msra.mxu0 0.0
    %6856 = vmatprep.subr.mxu0 0.0
    %6857 = vmatpush2.msra.mxu0 0.0
    %6858 = vmatprep.subr.mxu0 0.0
    %6859 = vmatpush2.msra.mxu0 0.0
    %6860 = vmatprep.subr.mxu0 0.0
    %6861 = vmatpush2.msra.mxu0 0.0
    %6862 = vmatprep.subr.mxu0 0.0
    %6863 = vmatpush2.msra.mxu0 0.0
    %6864 = vmatprep.subr.mxu0 0.0
    %6865 = vmatpush2.msra.mxu0 0.0
    %6866 = vmatprep.subr.mxu0 0.0
    %6867 = vmatpush2.msra.mxu0 0.0
    %6868 = vmatprep.subr.mxu0 0.0
    %6869 = vmatpush2.msra.mxu0 0.0
    %6870 = vmatprep.subr.mxu0 0.0
    %6871 = vmatpush2.msra.mxu0 0.0
    %6872 = vmatprep.subr.mxu0 0.0
    %6873 = vmatpush2.msra.mxu0 0.0
    %6874 = vmatprep.subr.mxu0 0.0
    %6875 = vmatpush2.msra.mxu0 0.0
    %6876 = vmatprep.subr.mxu0 0.0
    %6877 = vmatpush2.msra.mxu0 0.0
    %6878 = vmatprep.mubr.f32.mxu0 0.0
    %v6879 = vand.u32 %v6497, 4294901760
    %6880 = vmatmul.mubr.f32.gmra.mxu0 %v6879
    %v6881 = vpop.f32.mrf.mxu0
    %v6882 = vadd.f32 %v6805, %v6881
    %v6883 = vpop.f32.mrf.mxu0
    %6884 = vdwg.mxu0
    %6885 = vmatprep.subr.mxu0 0.0
    %6886 = vmatpush1.msra.mxu0 0.0
    %6887 = vmatprep.subr.mxu0 0.0
    %6888 = vmatpush1.msra.mxu0 0.0
    %6889 = vmatprep.subr.mxu0 0.0
    %6890 = vmatpush1.msra.mxu0 0.0
    %6891 = vmatprep.subr.mxu0 0.0
    %6892 = vmatpush1.msra.mxu0 0.0
    %6893 = vmatprep.subr.mxu0 0.0
    %6894 = vmatpush1.msra.mxu0 0.0
    %6895 = vmatprep.subr.mxu0 0.0
    %6896 = vmatpush1.msra.mxu0 0.0
    %6897 = vmatprep.subr.mxu0 0.0
    %6898 = vmatpush1.msra.mxu0 0.0
    %6899 = vmatprep.subr.mxu0 0.0
    %6900 = vmatpush1.msra.mxu0 0.0
    %6901 = vmatprep.subr.mxu0 0.0
    %6902 = vmatpush1.msra.mxu0 0.0
    %6903 = vmatprep.subr.mxu0 0.0
    %6904 = vmatpush1.msra.mxu0 0.0
    %6905 = vmatprep.subr.mxu0 0.0
    %6906 = vmatpush1.msra.mxu0 0.0
    %6907 = vmatprep.subr.mxu0 0.0
    %6908 = vmatpush1.msra.mxu0 0.0
    %6909 = vmatprep.subr.mxu0 0.0
    %6910 = vmatpush1.msra.mxu0 0.0
    %6911 = vmatprep.subr.mxu0 0.0
    %6912 = vmatpush1.msra.mxu0 0.0
    %6913 = vmatprep.subr.mxu0 0.0
    %v6914 = vand.u32 %v47, 4294901760
    %6915 = vmatpush1.msra.mxu0 %v6914
    %6916 = vmatprep.subr.mxu0 0.0
    %v6917 = vand.u32 %v46, 4294901760
    %6918 = vmatpush1.msra.mxu0 %v6917
    %6919 = vmatprep.subr.mxu0 0.0
    %6920 = vmatpush2.msra.mxu0 0.0
    %6921 = vmatprep.subr.mxu0 0.0
    %6922 = vmatpush2.msra.mxu0 0.0
    %6923 = vmatprep.subr.mxu0 0.0
    %6924 = vmatpush2.msra.mxu0 0.0
    %6925 = vmatprep.subr.mxu0 0.0
    %6926 = vmatpush2.msra.mxu0 0.0
    %6927 = vmatprep.subr.mxu0 0.0
    %6928 = vmatpush2.msra.mxu0 0.0
    %6929 = vmatprep.subr.mxu0 0.0
    %6930 = vmatpush2.msra.mxu0 0.0
    %6931 = vmatprep.subr.mxu0 0.0
    %6932 = vmatpush2.msra.mxu0 0.0
    %6933 = vmatprep.subr.mxu0 0.0
    %6934 = vmatpush2.msra.mxu0 0.0
    %6935 = vmatprep.subr.mxu0 0.0
    %6936 = vmatpush2.msra.mxu0 0.0
    %6937 = vmatprep.subr.mxu0 0.0
    %6938 = vmatpush2.msra.mxu0 0.0
    %6939 = vmatprep.subr.mxu0 0.0
    %6940 = vmatpush2.msra.mxu0 0.0
    %6941 = vmatprep.subr.mxu0 0.0
    %6942 = vmatpush2.msra.mxu0 0.0
    %6943 = vmatprep.subr.mxu0 0.0
    %6944 = vmatpush2.msra.mxu0 0.0
    %6945 = vmatprep.subr.mxu0 0.0
    %6946 = vmatpush2.msra.mxu0 0.0
    %6947 = vmatprep.subr.mxu0 0.0
    %6948 = vmatpush2.msra.mxu0 0.0
    %6949 = vmatprep.subr.mxu0 0.0
    %6950 = vmatpush2.msra.mxu0 0.0
    %6951 = vmatprep.mubr.f32.mxu0 0.0
    %v6952 = vand.u32 %v6497, 4294901760
    %6953 = vmatmul.mubr.f32.gmra.mxu0 %v6952
    %v6954 = vpop.f32.mrf.mxu0
    %v6955 = vadd.f32 %v6882, %v6954
    %v6956 = vpop.f32.mrf.mxu0
    %6957 = vdwg.mxu0
    %v6959 = vsel %vm48, %v3721, 0
    %6961 = vmatprep.subr.mxu0 0.0
    %6962 = vmatpush1.msra.mxu0 0.0
    %6963 = vmatprep.subr.mxu0 0.0
    %6964 = vmatpush1.msra.mxu0 0.0
    %6965 = vmatprep.subr.mxu0 0.0
    %6966 = vmatpush1.msra.mxu0 0.0
    %6967 = vmatprep.subr.mxu0 0.0
    %6968 = vmatpush1.msra.mxu0 0.0
    %6969 = vmatprep.subr.mxu0 0.0
    %6970 = vmatpush1.msra.mxu0 0.0
    %6971 = vmatprep.subr.mxu0 0.0
    %6972 = vmatpush1.msra.mxu0 0.0
    %6973 = vmatprep.subr.mxu0 0.0
    %6974 = vmatpush1.msra.mxu0 0.0
    %6975 = vmatprep.subr.mxu0 0.0
    %6976 = vmatpush1.msra.mxu0 0.0
    %6977 = vmatprep.subr.mxu0 0.0
    %6978 = vmatpush1.msra.mxu0 0.0
    %6979 = vmatprep.subr.mxu0 0.0
    %6980 = vmatpush1.msra.mxu0 0.0
    %6981 = vmatprep.subr.mxu0 0.0
    %6982 = vmatpush1.msra.mxu0 0.0
    %6983 = vmatprep.subr.mxu0 0.0
    %6984 = vmatpush1.msra.mxu0 0.0
    %6985 = vmatprep.subr.mxu0 0.0
    %6986 = vmatpush1.msra.mxu0 0.0
    %6987 = vmatprep.subr.mxu0 0.0
    %6988 = vmatpush1.msra.mxu0 0.0
    %6989 = vmatprep.subr.mxu0 0.0
    %v6990 = vand.u32 %v47, 4294901760
    %6991 = vmatpush1.msra.mxu0 %v6990
    %6992 = vmatprep.subr.mxu0 0.0
    %v6993 = vand.u32 %v46, 4294901760
    %6994 = vmatpush1.msra.mxu0 %v6993
    %6995 = vmatprep.subr.mxu0 0.0
    %6996 = vmatpush2.msra.mxu0 0.0
    %6997 = vmatprep.subr.mxu0 0.0
    %6998 = vmatpush2.msra.mxu0 0.0
    %6999 = vmatprep.subr.mxu0 0.0
    %7000 = vmatpush2.msra.mxu0 0.0
    %7001 = vmatprep.subr.mxu0 0.0
    %7002 = vmatpush2.msra.mxu0 0.0
    %7003 = vmatprep.subr.mxu0 0.0
    %7004 = vmatpush2.msra.mxu0 0.0
    %7005 = vmatprep.subr.mxu0 0.0
    %7006 = vmatpush2.msra.mxu0 0.0
    %7007 = vmatprep.subr.mxu0 0.0
    %7008 = vmatpush2.msra.mxu0 0.0
    %7009 = vmatprep.subr.mxu0 0.0
    %7010 = vmatpush2.msra.mxu0 0.0
    %7011 = vmatprep.subr.mxu0 0.0
    %7012 = vmatpush2.msra.mxu0 0.0
    %7013 = vmatprep.subr.mxu0 0.0
    %7014 = vmatpush2.msra.mxu0 0.0
    %7015 = vmatprep.subr.mxu0 0.0
    %7016 = vmatpush2.msra.mxu0 0.0
    %7017 = vmatprep.subr.mxu0 0.0
    %7018 = vmatpush2.msra.mxu0 0.0
    %7019 = vmatprep.subr.mxu0 0.0
    %7020 = vmatpush2.msra.mxu0 0.0
    %7021 = vmatprep.subr.mxu0 0.0
    %7022 = vmatpush2.msra.mxu0 0.0
    %7023 = vmatprep.subr.mxu0 0.0
    %7024 = vmatpush2.msra.mxu0 0.0
    %7025 = vmatprep.subr.mxu0 0.0
    %7026 = vmatpush2.msra.mxu0 0.0
    %7027 = vmatprep.mubr.f32.mxu0 0.0
    %v7028 = vand.u32 %v6959, 4294901760
    %v7029 = vsub.f32 %v6959, %v7028
    %v7030 = vand.u32 %v7029, 4294901760
    %v7031 = vsub.f32 %v7029, %v7030
    %v7032 = vand.u32 %v7031, 4294901760
    %7033 = vmatmul.mubr.f32.gmra.mxu0 %v7032
    %v7034 = vpop.f32.mrf.mxu0
    %v7035 = vadd.f32 0.0, %v7034
    %v7036 = vpop.f32.mrf.mxu0
    %7037 = vdwg.mxu0
    %7038 = vmatprep.subr.mxu0 0.0
    %7039 = vmatpush1.msra.mxu0 0.0
    %7040 = vmatprep.subr.mxu0 0.0
    %7041 = vmatpush1.msra.mxu0 0.0
    %7042 = vmatprep.subr.mxu0 0.0
    %7043 = vmatpush1.msra.mxu0 0.0
    %7044 = vmatprep.subr.mxu0 0.0
    %7045 = vmatpush1.msra.mxu0 0.0
    %7046 = vmatprep.subr.mxu0 0.0
    %7047 = vmatpush1.msra.mxu0 0.0
    %7048 = vmatprep.subr.mxu0 0.0
    %7049 = vmatpush1.msra.mxu0 0.0
    %7050 = vmatprep.subr.mxu0 0.0
    %7051 = vmatpush1.msra.mxu0 0.0
    %7052 = vmatprep.subr.mxu0 0.0
    %7053 = vmatpush1.msra.mxu0 0.0
    %7054 = vmatprep.subr.mxu0 0.0
    %7055 = vmatpush1.msra.mxu0 0.0
    %7056 = vmatprep.subr.mxu0 0.0
    %7057 = vmatpush1.msra.mxu0 0.0
    %7058 = vmatprep.subr.mxu0 0.0
    %7059 = vmatpush1.msra.mxu0 0.0
    %7060 = vmatprep.subr.mxu0 0.0
    %7061 = vmatpush1.msra.mxu0 0.0
    %7062 = vmatprep.subr.mxu0 0.0
    %7063 = vmatpush1.msra.mxu0 0.0
    %7064 = vmatprep.subr.mxu0 0.0
    %7065 = vmatpush1.msra.mxu0 0.0
    %7066 = vmatprep.subr.mxu0 0.0
    %v7067 = vand.u32 %v47, 4294901760
    %v7068 = vsub.f32 %v47, %v7067
    %v7069 = vand.u32 %v7068, 4294901760
    %v7070 = vsub.f32 %v7068, %v7069
    %v7071 = vand.u32 %v7070, 4294901760
    %7072 = vmatpush1.msra.mxu0 %v7071
    %7073 = vmatprep.subr.mxu0 0.0
    %v7074 = vand.u32 %v46, 4294901760
    %v7075 = vsub.f32 %v46, %v7074
    %v7076 = vand.u32 %v7075, 4294901760
    %v7077 = vsub.f32 %v7075, %v7076
    %v7078 = vand.u32 %v7077, 4294901760
    %7079 = vmatpush1.msra.mxu0 %v7078
    %7080 = vmatprep.subr.mxu0 0.0
    %7081 = vmatpush2.msra.mxu0 0.0
    %7082 = vmatprep.subr.mxu0 0.0
    %7083 = vmatpush2.msra.mxu0 0.0
    %7084 = vmatprep.subr.mxu0 0.0
    %7085 = vmatpush2.msra.mxu0 0.0
    %7086 = vmatprep.subr.mxu0 0.0
    %7087 = vmatpush2.msra.mxu0 0.0
    %7088 = vmatprep.subr.mxu0 0.0
    %7089 = vmatpush2.msra.mxu0 0.0
    %7090 = vmatprep.subr.mxu0 0.0
    %7091 = vmatpush2.msra.mxu0 0.0
    %7092 = vmatprep.subr.mxu0 0.0
    %7093 = vmatpush2.msra.mxu0 0.0
    %7094 = vmatprep.subr.mxu0 0.0
    %7095 = vmatpush2.msra.mxu0 0.0
    %7096 = vmatprep.subr.mxu0 0.0
    %7097 = vmatpush2.msra.mxu0 0.0
    %7098 = vmatprep.subr.mxu0 0.0
    %7099 = vmatpush2.msra.mxu0 0.0
    %7100 = vmatprep.subr.mxu0 0.0
    %7101 = vmatpush2.msra.mxu0 0.0
    %7102 = vmatprep.subr.mxu0 0.0
    %7103 = vmatpush2.msra.mxu0 0.0
    %7104 = vmatprep.subr.mxu0 0.0
    %7105 = vmatpush2.msra.mxu0 0.0
    %7106 = vmatprep.subr.mxu0 0.0
    %7107 = vmatpush2.msra.mxu0 0.0
    %7108 = vmatprep.subr.mxu0 0.0
    %7109 = vmatpush2.msra.mxu0 0.0
    %7110 = vmatprep.subr.mxu0 0.0
    %7111 = vmatpush2.msra.mxu0 0.0
    %7112 = vmatprep.mubr.f32.mxu0 0.0
    %v7113 = vand.u32 %v6959, 4294901760
    %7114 = vmatmul.mubr.f32.gmra.mxu0 %v7113
    %v7115 = vpop.f32.mrf.mxu0
    %v7116 = vadd.f32 %v7035, %v7115
    %v7117 = vpop.f32.mrf.mxu0
    %7118 = vdwg.mxu0
    %7119 = vmatprep.subr.mxu0 0.0
    %7120 = vmatpush1.msra.mxu0 0.0
    %7121 = vmatprep.subr.mxu0 0.0
    %7122 = vmatpush1.msra.mxu0 0.0
    %7123 = vmatprep.subr.mxu0 0.0
    %7124 = vmatpush1.msra.mxu0 0.0
    %7125 = vmatprep.subr.mxu0 0.0
    %7126 = vmatpush1.msra.mxu0 0.0
    %7127 = vmatprep.subr.mxu0 0.0
    %7128 = vmatpush1.msra.mxu0 0.0
    %7129 = vmatprep.subr.mxu0 0.0
    %7130 = vmatpush1.msra.mxu0 0.0
    %7131 = vmatprep.subr.mxu0 0.0
    %7132 = vmatpush1.msra.mxu0 0.0
    %7133 = vmatprep.subr.mxu0 0.0
    %7134 = vmatpush1.msra.mxu0 0.0
    %7135 = vmatprep.subr.mxu0 0.0
    %7136 = vmatpush1.msra.mxu0 0.0
    %7137 = vmatprep.subr.mxu0 0.0
    %7138 = vmatpush1.msra.mxu0 0.0
    %7139 = vmatprep.subr.mxu0 0.0
    %7140 = vmatpush1.msra.mxu0 0.0
    %7141 = vmatprep.subr.mxu0 0.0
    %7142 = vmatpush1.msra.mxu0 0.0
    %7143 = vmatprep.subr.mxu0 0.0
    %7144 = vmatpush1.msra.mxu0 0.0
    %7145 = vmatprep.subr.mxu0 0.0
    %7146 = vmatpush1.msra.mxu0 0.0
    %7147 = vmatprep.subr.mxu0 0.0
    %v7148 = vand.u32 %v47, 4294901760
    %v7149 = vsub.f32 %v47, %v7148
    %7150 = vmatpush1.msra.mxu0 %v7149
    %7151 = vmatprep.subr.mxu0 0.0
    %v7152 = vand.u32 %v46, 4294901760
    %v7153 = vsub.f32 %v46, %v7152
    %7154 = vmatpush1.msra.mxu0 %v7153
    %7155 = vmatprep.subr.mxu0 0.0
    %7156 = vmatpush2.msra.mxu0 0.0
    %7157 = vmatprep.subr.mxu0 0.0
    %7158 = vmatpush2.msra.mxu0 0.0
    %7159 = vmatprep.subr.mxu0 0.0
    %7160 = vmatpush2.msra.mxu0 0.0
    %7161 = vmatprep.subr.mxu0 0.0
    %7162 = vmatpush2.msra.mxu0 0.0
    %7163 = vmatprep.subr.mxu0 0.0
    %7164 = vmatpush2.msra.mxu0 0.0
    %7165 = vmatprep.subr.mxu0 0.0
    %7166 = vmatpush2.msra.mxu0 0.0
    %7167 = vmatprep.subr.mxu0 0.0
    %7168 = vmatpush2.msra.mxu0 0.0
    %7169 = vmatprep.subr.mxu0 0.0
    %7170 = vmatpush2.msra.mxu0 0.0
    %7171 = vmatprep.subr.mxu0 0.0
    %7172 = vmatpush2.msra.mxu0 0.0
    %7173 = vmatprep.subr.mxu0 0.0
    %7174 = vmatpush2.msra.mxu0 0.0
    %7175 = vmatprep.subr.mxu0 0.0
    %7176 = vmatpush2.msra.mxu0 0.0
    %7177 = vmatprep.subr.mxu0 0.0
    %7178 = vmatpush2.msra.mxu0 0.0
    %7179 = vmatprep.subr.mxu0 0.0
    %7180 = vmatpush2.msra.mxu0 0.0
    %7181 = vmatprep.subr.mxu0 0.0
    %7182 = vmatpush2.msra.mxu0 0.0
    %7183 = vmatprep.subr.mxu0 0.0
    %7184 = vmatpush2.msra.mxu0 0.0
    %7185 = vmatprep.subr.mxu0 0.0
    %7186 = vmatpush2.msra.mxu0 0.0
    %7187 = vmatprep.mubr.f32.mxu0 0.0
    %v7188 = vand.u32 %v6959, 4294901760
    %v7189 = vsub.f32 %v6959, %v7188
    %7190 = vmatmul.mubr.f32.gmra.mxu0 %v7189
    %v7191 = vpop.f32.mrf.mxu0
    %v7192 = vadd.f32 %v7116, %v7191
    %v7193 = vpop.f32.mrf.mxu0
    %7194 = vdwg.mxu0
    %7195 = vmatprep.subr.mxu0 0.0
    %7196 = vmatpush1.msra.mxu0 0.0
    %7197 = vmatprep.subr.mxu0 0.0
    %7198 = vmatpush1.msra.mxu0 0.0
    %7199 = vmatprep.subr.mxu0 0.0
    %7200 = vmatpush1.msra.mxu0 0.0
    %7201 = vmatprep.subr.mxu0 0.0
    %7202 = vmatpush1.msra.mxu0 0.0
    %7203 = vmatprep.subr.mxu0 0.0
    %7204 = vmatpush1.msra.mxu0 0.0
    %7205 = vmatprep.subr.mxu0 0.0
    %7206 = vmatpush1.msra.mxu0 0.0
    %7207 = vmatprep.subr.mxu0 0.0
    %7208 = vmatpush1.msra.mxu0 0.0
    %7209 = vmatprep.subr.mxu0 0.0
    %7210 = vmatpush1.msra.mxu0 0.0
    %7211 = vmatprep.subr.mxu0 0.0
    %7212 = vmatpush1.msra.mxu0 0.0
    %7213 = vmatprep.subr.mxu0 0.0
    %7214 = vmatpush1.msra.mxu0 0.0
    %7215 = vmatprep.subr.mxu0 0.0
    %7216 = vmatpush1.msra.mxu0 0.0
    %7217 = vmatprep.subr.mxu0 0.0
    %7218 = vmatpush1.msra.mxu0 0.0
    %7219 = vmatprep.subr.mxu0 0.0
    %7220 = vmatpush1.msra.mxu0 0.0
    %7221 = vmatprep.subr.mxu0 0.0
    %7222 = vmatpush1.msra.mxu0 0.0
    %7223 = vmatprep.subr.mxu0 0.0
    %v7224 = vand.u32 %v47, 4294901760
    %7225 = vmatpush1.msra.mxu0 %v7224
    %7226 = vmatprep.subr.mxu0 0.0
    %v7227 = vand.u32 %v46, 4294901760
    %7228 = vmatpush1.msra.mxu0 %v7227
    %7229 = vmatprep.subr.mxu0 0.0
    %7230 = vmatpush2.msra.mxu0 0.0
    %7231 = vmatprep.subr.mxu0 0.0
    %7232 = vmatpush2.msra.mxu0 0.0
    %7233 = vmatprep.subr.mxu0 0.0
    %7234 = vmatpush2.msra.mxu0 0.0
    %7235 = vmatprep.subr.mxu0 0.0
    %7236 = vmatpush2.msra.mxu0 0.0
    %7237 = vmatprep.subr.mxu0 0.0
    %7238 = vmatpush2.msra.mxu0 0.0
    %7239 = vmatprep.subr.mxu0 0.0
    %7240 = vmatpush2.msra.mxu0 0.0
    %7241 = vmatprep.subr.mxu0 0.0
    %7242 = vmatpush2.msra.mxu0 0.0
    %7243 = vmatprep.subr.mxu0 0.0
    %7244 = vmatpush2.msra.mxu0 0.0
    %7245 = vmatprep.subr.mxu0 0.0
    %7246 = vmatpush2.msra.mxu0 0.0
    %7247 = vmatprep.subr.mxu0 0.0
    %7248 = vmatpush2.msra.mxu0 0.0
    %7249 = vmatprep.subr.mxu0 0.0
    %7250 = vmatpush2.msra.mxu0 0.0
    %7251 = vmatprep.subr.mxu0 0.0
    %7252 = vmatpush2.msra.mxu0 0.0
    %7253 = vmatprep.subr.mxu0 0.0
    %7254 = vmatpush2.msra.mxu0 0.0
    %7255 = vmatprep.subr.mxu0 0.0
    %7256 = vmatpush2.msra.mxu0 0.0
    %7257 = vmatprep.subr.mxu0 0.0
    %7258 = vmatpush2.msra.mxu0 0.0
    %7259 = vmatprep.subr.mxu0 0.0
    %7260 = vmatpush2.msra.mxu0 0.0
    %7261 = vmatprep.mubr.f32.mxu0 0.0
    %v7262 = vand.u32 %v6959, 4294901760
    %v7263 = vsub.f32 %v6959, %v7262
    %v7264 = vand.u32 %v7263, 4294901760
    %7265 = vmatmul.mubr.f32.gmra.mxu0 %v7264
    %v7266 = vpop.f32.mrf.mxu0
    %v7267 = vadd.f32 %v7192, %v7266
    %v7268 = vpop.f32.mrf.mxu0
    %7269 = vdwg.mxu0
    %7270 = vmatprep.subr.mxu0 0.0
    %7271 = vmatpush1.msra.mxu0 0.0
    %7272 = vmatprep.subr.mxu0 0.0
    %7273 = vmatpush1.msra.mxu0 0.0
    %7274 = vmatprep.subr.mxu0 0.0
    %7275 = vmatpush1.msra.mxu0 0.0
    %7276 = vmatprep.subr.mxu0 0.0
    %7277 = vmatpush1.msra.mxu0 0.0
    %7278 = vmatprep.subr.mxu0 0.0
    %7279 = vmatpush1.msra.mxu0 0.0
    %7280 = vmatprep.subr.mxu0 0.0
    %7281 = vmatpush1.msra.mxu0 0.0
    %7282 = vmatprep.subr.mxu0 0.0
    %7283 = vmatpush1.msra.mxu0 0.0
    %7284 = vmatprep.subr.mxu0 0.0
    %7285 = vmatpush1.msra.mxu0 0.0
    %7286 = vmatprep.subr.mxu0 0.0
    %7287 = vmatpush1.msra.mxu0 0.0
    %7288 = vmatprep.subr.mxu0 0.0
    %7289 = vmatpush1.msra.mxu0 0.0
    %7290 = vmatprep.subr.mxu0 0.0
    %7291 = vmatpush1.msra.mxu0 0.0
    %7292 = vmatprep.subr.mxu0 0.0
    %7293 = vmatpush1.msra.mxu0 0.0
    %7294 = vmatprep.subr.mxu0 0.0
    %7295 = vmatpush1.msra.mxu0 0.0
    %7296 = vmatprep.subr.mxu0 0.0
    %7297 = vmatpush1.msra.mxu0 0.0
    %7298 = vmatprep.subr.mxu0 0.0
    %v7299 = vand.u32 %v47, 4294901760
    %v7300 = vsub.f32 %v47, %v7299
    %v7301 = vand.u32 %v7300, 4294901760
    %7302 = vmatpush1.msra.mxu0 %v7301
    %7303 = vmatprep.subr.mxu0 0.0
    %v7304 = vand.u32 %v46, 4294901760
    %v7305 = vsub.f32 %v46, %v7304
    %v7306 = vand.u32 %v7305, 4294901760
    %7307 = vmatpush1.msra.mxu0 %v7306
    %7308 = vmatprep.subr.mxu0 0.0
    %7309 = vmatpush2.msra.mxu0 0.0
    %7310 = vmatprep.subr.mxu0 0.0
    %7311 = vmatpush2.msra.mxu0 0.0
    %7312 = vmatprep.subr.mxu0 0.0
    %7313 = vmatpush2.msra.mxu0 0.0
    %7314 = vmatprep.subr.mxu0 0.0
    %7315 = vmatpush2.msra.mxu0 0.0
    %7316 = vmatprep.subr.mxu0 0.0
    %7317 = vmatpush2.msra.mxu0 0.0
    %7318 = vmatprep.subr.mxu0 0.0
    %7319 = vmatpush2.msra.mxu0 0.0
    %7320 = vmatprep.subr.mxu0 0.0
    %7321 = vmatpush2.msra.mxu0 0.0
    %7322 = vmatprep.subr.mxu0 0.0
    %7323 = vmatpush2.msra.mxu0 0.0
    %7324 = vmatprep.subr.mxu0 0.0
    %7325 = vmatpush2.msra.mxu0 0.0
    %7326 = vmatprep.subr.mxu0 0.0
    %7327 = vmatpush2.msra.mxu0 0.0
    %7328 = vmatprep.subr.mxu0 0.0
    %7329 = vmatpush2.msra.mxu0 0.0
    %7330 = vmatprep.subr.mxu0 0.0
    %7331 = vmatpush2.msra.mxu0 0.0
    %7332 = vmatprep.subr.mxu0 0.0
    %7333 = vmatpush2.msra.mxu0 0.0
    %7334 = vmatprep.subr.mxu0 0.0
    %7335 = vmatpush2.msra.mxu0 0.0
    %7336 = vmatprep.subr.mxu0 0.0
    %7337 = vmatpush2.msra.mxu0 0.0
    %7338 = vmatprep.subr.mxu0 0.0
    %7339 = vmatpush2.msra.mxu0 0.0
    %7340 = vmatprep.mubr.f32.mxu0 0.0
    %v7341 = vand.u32 %v6959, 4294901760
    %7342 = vmatmul.mubr.f32.gmra.mxu0 %v7341
    %v7343 = vpop.f32.mrf.mxu0
    %v7344 = vadd.f32 %v7267, %v7343
    %v7345 = vpop.f32.mrf.mxu0
    %7346 = vdwg.mxu0
    %7347 = vmatprep.subr.mxu0 0.0
    %7348 = vmatpush1.msra.mxu0 0.0
    %7349 = vmatprep.subr.mxu0 0.0
    %7350 = vmatpush1.msra.mxu0 0.0
    %7351 = vmatprep.subr.mxu0 0.0
    %7352 = vmatpush1.msra.mxu0 0.0
    %7353 = vmatprep.subr.mxu0 0.0
    %7354 = vmatpush1.msra.mxu0 0.0
    %7355 = vmatprep.subr.mxu0 0.0
    %7356 = vmatpush1.msra.mxu0 0.0
    %7357 = vmatprep.subr.mxu0 0.0
    %7358 = vmatpush1.msra.mxu0 0.0
    %7359 = vmatprep.subr.mxu0 0.0
    %7360 = vmatpush1.msra.mxu0 0.0
    %7361 = vmatprep.subr.mxu0 0.0
    %7362 = vmatpush1.msra.mxu0 0.0
    %7363 = vmatprep.subr.mxu0 0.0
    %7364 = vmatpush1.msra.mxu0 0.0
    %7365 = vmatprep.subr.mxu0 0.0
    %7366 = vmatpush1.msra.mxu0 0.0
    %7367 = vmatprep.subr.mxu0 0.0
    %7368 = vmatpush1.msra.mxu0 0.0
    %7369 = vmatprep.subr.mxu0 0.0
    %7370 = vmatpush1.msra.mxu0 0.0
    %7371 = vmatprep.subr.mxu0 0.0
    %7372 = vmatpush1.msra.mxu0 0.0
    %7373 = vmatprep.subr.mxu0 0.0
    %7374 = vmatpush1.msra.mxu0 0.0
    %7375 = vmatprep.subr.mxu0 0.0
    %v7376 = vand.u32 %v47, 4294901760
    %7377 = vmatpush1.msra.mxu0 %v7376
    %7378 = vmatprep.subr.mxu0 0.0
    %v7379 = vand.u32 %v46, 4294901760
    %7380 = vmatpush1.msra.mxu0 %v7379
    %7381 = vmatprep.subr.mxu0 0.0
    %7382 = vmatpush2.msra.mxu0 0.0
    %7383 = vmatprep.subr.mxu0 0.0
    %7384 = vmatpush2.msra.mxu0 0.0
    %7385 = vmatprep.subr.mxu0 0.0
    %7386 = vmatpush2.msra.mxu0 0.0
    %7387 = vmatprep.subr.mxu0 0.0
    %7388 = vmatpush2.msra.mxu0 0.0
    %7389 = vmatprep.subr.mxu0 0.0
    %7390 = vmatpush2.msra.mxu0 0.0
    %7391 = vmatprep.subr.mxu0 0.0
    %7392 = vmatpush2.msra.mxu0 0.0
    %7393 = vmatprep.subr.mxu0 0.0
    %7394 = vmatpush2.msra.mxu0 0.0
    %7395 = vmatprep.subr.mxu0 0.0
    %7396 = vmatpush2.msra.mxu0 0.0
    %7397 = vmatprep.subr.mxu0 0.0
    %7398 = vmatpush2.msra.mxu0 0.0
    %7399 = vmatprep.subr.mxu0 0.0
    %7400 = vmatpush2.msra.mxu0 0.0
    %7401 = vmatprep.subr.mxu0 0.0
    %7402 = vmatpush2.msra.mxu0 0.0
    %7403 = vmatprep.subr.mxu0 0.0
    %7404 = vmatpush2.msra.mxu0 0.0
    %7405 = vmatprep.subr.mxu0 0.0
    %7406 = vmatpush2.msra.mxu0 0.0
    %7407 = vmatprep.subr.mxu0 0.0
    %7408 = vmatpush2.msra.mxu0 0.0
    %7409 = vmatprep.subr.mxu0 0.0
    %7410 = vmatpush2.msra.mxu0 0.0
    %7411 = vmatprep.subr.mxu0 0.0
    %7412 = vmatpush2.msra.mxu0 0.0
    %7413 = vmatprep.mubr.f32.mxu0 0.0
    %v7414 = vand.u32 %v6959, 4294901760
    %7415 = vmatmul.mubr.f32.gmra.mxu0 %v7414
    %v7416 = vpop.f32.mrf.mxu0
    %v7417 = vadd.f32 %v7344, %v7416
    %v7418 = vpop.f32.mrf.mxu0
    %7419 = vdwg.mxu0
    %vm7420 = vcmask 64512
    %7421 = vst.msk [vmem:[#allocation5] sm:$0xff] %vm7420, %v4183
    %7422 = vst.msk [vmem:[#allocation5 + $0x8] sm:$0xff] %vm7420, %v4645
    %7423 = vst.msk [vmem:[#allocation5 + $0x10] sm:$0xff] %vm7420, %v5107
    %7424 = vst.msk [vmem:[#allocation5 + $0x18] sm:$0xff] %vm7420, %v5569
    %7425 = vst.msk [vmem:[#allocation5 + $0x20] sm:$0xff] %vm7420, %v6031
    %7426 = vst.msk [vmem:[#allocation5 + $0x28] sm:$0xff] %vm7420, %v6493
    %7427 = vst.msk [vmem:[#allocation5 + $0x30] sm:$0xff] %vm7420, %v6955
    %7428 = vst.msk [vmem:[#allocation5 + $0x38] sm:$0xff] %vm7420, %v7417
    // Predicated region
    $region18: #{tpu_custom_call.1} parent=1 // pred_check
      _
    $region19: #{tpu_custom_call.1} parent=1 // pred_check_branch
      %7430 = sbr.rel (0) target = $region21
    $region20: #{tpu_custom_call.1} parent=1 // pred_region
      %s7432 = ssub.s32 1024, 1024
      %7433 = vsyncadd [#allocation4], %s7432
      %s7434 = sshll.u32 [#allocation5], 4
      %s7435 = int_to_ptr.vmem [resolvable:$true] %s7434
      %7440 = dma.vmem_to_hbm [thread:$0]  %s7435, 1024, %s3, [#allocation4], 128, 128, 8
    $region21: #{tpu_custom_call.1} parent=1 // pred_fallthru
      _
    // Predicated region
    $region22: #{tpu_custom_call.1} parent=1 // pred_check
      _
    $region23: #{tpu_custom_call.1} parent=1 // pred_check_branch
      %7442 = sbr.rel (0) target = $region25
    $region24: #{tpu_custom_call.1} parent=1 // pred_region
      %7443 = dma.done [#allocation4], 1024
    $region25: #{tpu_custom_call.1} parent=1 // pred_fallthru
      _
    %7444 = vsyncpa [#allocation3], 1
    %7445 = vsyncpa [#allocation4], 1

</llo_original>
